<compile_context>
chip_gen: v5e
topology: v5e:2x2
jax: 0.10.0
libtpu: 0.0.40
codegen_flags: <defaults>
</compile_context>

<pallas_src>
import functools

import jax
import jax.numpy as jnp
import numpy as np
from jax.experimental import pallas as pl
from jax.experimental.pallas import tpu as pltpu

EPS = 1e-5  # nn.InstanceNorm2d default


def _resblock_kernel(x_ref, w1_ref, b1_ref, w2_ref, b2_ref, o_ref, halo_ref,
                     *, H, W, CP):
    HW = H * W
    PAD = W                      # zero-padding rows above/below the image data
    hdt = halo_ref.dtype         # bf16 (or f32 fallback) MXU operand dtype
    f32 = jnp.float32

    zrow = jnp.zeros((1, CP), f32)

    # Zero the halo padding bands once per grid step; they supply the zero padding
    # in the h direction and are never touched by the per-conv fills below.
    for p in range(3):
        halo_ref[p, :PAD, :] = jnp.zeros((PAD, CP), hdt)
        halo_ref[p, PAD + HW:, :] = jnp.zeros((PAD, CP), hdt)

    def inorm_relu(v):
        # InstanceNorm2d (affine=False, biased variance) + ReLU, single-pass stats.
        mean = jnp.sum(v, axis=0, keepdims=True) * (1.0 / HW)
        ex2 = jnp.sum(v * v, axis=0, keepdims=True) * (1.0 / HW)
        var = ex2 - mean * mean
        return jnp.maximum((v - mean) * jax.lax.rsqrt(var + EPS), 0.0)

    def fill_halo(act):
        # plane[kw][PAD + j] = act[j + (kw-1)] * (j's column valid for this kw),
        # so every tap read below is a plain, aligned offset load.
        # The two edge masks are recomputed per conv (one cheap pass) rather than
        # kept live across both convs (which would pin ~32 vregs).
        halo_ref[1, pl.ds(PAD, HW), :] = act.astype(hdt)
        col = jax.lax.broadcasted_iota(jnp.int32, (HW, CP), 0) % W
        sm = jnp.concatenate([zrow, act[:HW - 1, :]], axis=0)          # act[j-1]
        halo_ref[0, pl.ds(PAD, HW), :] = jnp.where(col != 0, sm, 0.0).astype(hdt)
        sp = jnp.concatenate([act[1:, :], zrow], axis=0)               # act[j+1]
        halo_ref[2, pl.ds(PAD, HW), :] = jnp.where(col != W - 1, sp, 0.0).astype(hdt)

    def conv3x3(w_ref, b_ref):
        acc = None
        for t in range(9):                          # static unroll of the 9 taps
            dy, kw = divmod(t, 3)
            start = PAD + (dy - 1) * W              # static, 16-row aligned offset
            lhs = halo_ref[kw, pl.ds(start, HW), :]
            d = jnp.dot(lhs, w_ref[t], preferred_element_type=f32)
            acc = d if acc is None else acc + d
        return acc + b_ref[...].astype(f32)         # (1, CP) broadcast bias

    # out = conv1(relu(IN(x)))
    fill_halo(inorm_relu(x_ref[0].astype(f32)))
    c1 = conv3x3(w1_ref, b1_ref)
    # out = conv2(relu(IN(out)))
    fill_halo(inorm_relu(c1))
    c2 = conv3x3(w2_ref, b2_ref)
    # Residual: re-load x here instead of keeping it live across both convs.
    o_ref[0] = (c2 + x_ref[0].astype(f32)).astype(o_ref.dtype)


def resblock_pallas(x_nchw, w1, b1, w2, b2):
    """x_nchw: (N, C, H, W); w*: (C, C, 3, 3) OIHW; b*: (C,)."""
    N, C, H, W = x_nchw.shape
    HW = H * W

    # Pad batch to even and pack image pairs along channels -> 2C (=128) lanes.
    Np = N + (N % 2)
    if Np != N:
        x_nchw = jnp.concatenate(
            [x_nchw, jnp.zeros((Np - N,) + x_nchw.shape[1:], x_nchw.dtype)], axis=0)
    NP = Np // 2
    CP = 2 * C

    x_nhwc = jnp.transpose(x_nchw, (0, 2, 3, 1))                       # (Np,H,W,C)
    x_pack = (x_nhwc.reshape(NP, 2, H, W, C)
              .transpose(0, 2, 3, 1, 4)
              .reshape(NP, HW, CP))

    # bf16 MXU operands when the halo tap offsets stay 16-row aligned; otherwise
    # fall back to f32 so all halo loads/stores remain layout-aligned.
    mm_dtype = jnp.bfloat16 if (W % 16 == 0) else jnp.float32

    def pack_w(w):
        # OIHW -> 9 taps of (Cin, Cout), block-diagonal over the 2 packed images.
        wt = jnp.transpose(w, (2, 3, 1, 0)).reshape(9, C, C)
        z = jnp.zeros((9, C, C), wt.dtype)
        top = jnp.concatenate([wt, z], axis=2)
        bot = jnp.concatenate([z, wt], axis=2)
        return jnp.concatenate([top, bot], axis=1).astype(mm_dtype)    # (9, CP, CP)

    w1_p, w2_p = pack_w(w1), pack_w(w2)
    b1_p = jnp.concatenate([b1, b1]).reshape(1, CP).astype(jnp.float32)
    b2_p = jnp.concatenate([b2, b2]).reshape(1, CP).astype(jnp.float32)

    kernel = functools.partial(_resblock_kernel, H=H, W=W, CP=CP)
    halo_rows = HW + 2 * W

    out_pack = pl.pallas_call(
        kernel,
        out_shape=jax.ShapeDtypeStruct((NP, HW, CP), x_nchw.dtype),
        grid_spec=pltpu.PrefetchScalarGridSpec(
            num_scalar_prefetch=0,
            grid=(NP,),
            in_specs=[
                pl.BlockSpec((1, HW, CP), lambda b: (b, 0, 0)),
                pl.BlockSpec((9, CP, CP), lambda b: (0, 0, 0)),   # weights resident
                pl.BlockSpec((1, CP), lambda b: (0, 0)),
                pl.BlockSpec((9, CP, CP), lambda b: (0, 0, 0)),
                pl.BlockSpec((1, CP), lambda b: (0, 0)),
            ],
            out_specs=pl.BlockSpec((1, HW, CP), lambda b: (b, 0, 0)),
            scratch_shapes=[pltpu.VMEM((3, halo_rows, CP), mm_dtype)],
        ),
        compiler_params=pltpu.CompilerParams(
            dimension_semantics=("parallel",)),
    )(x_pack, w1_p, b1_p, w2_p, b2_p)

    # TODO(synk): on v7x with a single packed pair (grid=(1,)), add an HW-tile grid
    # axis with a 1-row halo so the second TensorCore is not idle at tiny batch.

    out = (out_pack.reshape(NP, H, W, 2, C)
           .transpose(0, 3, 1, 2, 4)
           .reshape(Np, H, W, C))
    return jnp.transpose(out, (0, 3, 1, 2))[:N]


# ---------------- pure-JAX reference (for verification) ----------------
def _instance_norm_ref(x):
    mean = jnp.mean(x, axis=(2, 3), keepdims=True)
    var = jnp.mean((x - mean) ** 2, axis=(2, 3), keepdims=True)
    return (x - mean) * jax.lax.rsqrt(var + EPS)


def _resblock_ref(x, w1, b1, w2, b2):
    def conv(a, w, b):
        y = jax.lax.conv_general_dilated(
            a, w, window_strides=(1, 1), padding=((1, 1), (1, 1)),
            dimension_numbers=("NCHW", "OIHW", "NCHW"))
        return y + b[None, :, None, None]

    out = conv(jnp.maximum(_instance_norm_ref(x), 0.0), w1, b1)
    out = conv(jnp.maximum(_instance_norm_ref(out), 0.0), w2, b2)
    return out + x


if __name__ == "__main__":
    N, C, H, W = 2, 64, 16, 16  # C=64 fixed by the module; small N/H/W

    key = jax.random.PRNGKey(0)
    kx, k1, k2, k3, k4 = jax.random.split(key, 5)

    x = jax.random.normal(kx, (N, C, H, W), dtype=jnp.float32)
    scale = 1.0 / np.sqrt(C * 9)
    w1 = jax.random.normal(k1, (C, C, 3, 3), dtype=jnp.float32) * scale
    b1 = jax.random.normal(k2, (C,), dtype=jnp.float32) * 0.1
    w2 = jax.random.normal(k3, (C, C, 3, 3), dtype=jnp.float32) * scale
    b2 = jax.random.normal(k4, (C,), dtype=jnp.float32) * 0.1

    out = jax.block_until_ready(resblock_pallas(x, w1, b1, w2, b2))
    ref = jax.block_until_ready(_resblock_ref(x, w1, b1, w2, b2))

    # bf16 MXU operands (activations + weights) => tolerance sized for bf16 input
    # quantization; structural bugs (wrong tap/mask) would still be far outside it.
    np.testing.assert_allclose(np.asarray(out), np.asarray(ref),
                               rtol=1e-2, atol=2e-2)
    print("KERNEL_OK")
</pallas_src>

<mosaic_0001>
module attributes {stable_mosaic.version = 11 : i64} {
  func.func @_resblock_kernel(%arg0: i32, %arg1: memref<1x256x128xf32, #tpu.memory_space<vmem>>, %arg2: memref<9x128x128xbf16, #tpu.memory_space<vmem>>, %arg3: memref<1x128xf32, #tpu.memory_space<vmem>>, %arg4: memref<9x128x128xbf16, #tpu.memory_space<vmem>>, %arg5: memref<1x128xf32, #tpu.memory_space<vmem>>, %arg6: memref<1x256x128xf32, #tpu.memory_space<vmem>>, %arg7: memref<3x288x128xbf16, #tpu.memory_space<vmem>>) attributes {dimension_semantics = [#tpu.dimension_semantics<parallel>], iteration_bounds = array<i64: 1>, scalar_prefetch = 0 : i64, scratch_operands = 1 : i64, tpu.core_type = #tpu.core_type<tc>, window_params = [{transform_indices = @transform_0, window_bounds = array<i64: 1, 256, 128>}, {pipeline_mode = #tpu.pipeline_mode<synchronous>, transform_indices = @transform_1, window_bounds = array<i64: 9, 128, 128>}, {pipeline_mode = #tpu.pipeline_mode<synchronous>, transform_indices = @transform_2, window_bounds = array<i64: 1, 128>}, {pipeline_mode = #tpu.pipeline_mode<synchronous>, transform_indices = @transform_3, window_bounds = array<i64: 9, 128, 128>}, {pipeline_mode = #tpu.pipeline_mode<synchronous>, transform_indices = @transform_4, window_bounds = array<i64: 1, 128>}, {transform_indices = @transform_5, window_bounds = array<i64: 1, 256, 128>}]} {
    %cst = arith.constant 0.000000e+00 : f32
    %0 = vector.broadcast %cst : f32 to vector<1x128xf32>
    %cst_0 = arith.constant 0.000000e+00 : bf16
    %1 = vector.broadcast %cst_0 : bf16 to vector<16x128xbf16>
    %c0 = arith.constant 0 : index
    %c0_1 = arith.constant 0 : index
    %c0_2 = arith.constant 0 : index
    %2 = vector.load %arg7[%c0, %c0_1, %c0_2] : memref<3x288x128xbf16, #tpu.memory_space<vmem>>, vector<1x16x128xbf16>
    %3 = vector.shape_cast %2 : vector<1x16x128xbf16> to vector<16x128xbf16>
    %4 = vector.shape_cast %1 : vector<16x128xbf16> to vector<1x16x128xbf16>
    tpu.vector_store %arg7[%c0, %c0_1, %c0_2], %4 {strides = array<i32>} : memref<3x288x128xbf16, #tpu.memory_space<vmem>>, vector<1x16x128xbf16>,
    %cst_3 = arith.constant 0.000000e+00 : bf16
    %5 = vector.broadcast %cst_3 : bf16 to vector<16x128xbf16>
    %c0_4 = arith.constant 0 : index
    %c272 = arith.constant 272 : index
    %c0_5 = arith.constant 0 : index
    %6 = vector.load %arg7[%c0_4, %c272, %c0_5] : memref<3x288x128xbf16, #tpu.memory_space<vmem>>, vector<1x16x128xbf16>
    %7 = vector.shape_cast %6 : vector<1x16x128xbf16> to vector<16x128xbf16>
    %8 = vector.shape_cast %5 : vector<16x128xbf16> to vector<1x16x128xbf16>
    tpu.vector_store %arg7[%c0_4, %c272, %c0_5], %8 {strides = array<i32>} : memref<3x288x128xbf16, #tpu.memory_space<vmem>>, vector<1x16x128xbf16>,
    %cst_6 = arith.constant 0.000000e+00 : bf16
    %9 = vector.broadcast %cst_6 : bf16 to vector<16x128xbf16>
    %c1 = arith.constant 1 : index
    %c0_7 = arith.constant 0 : index
    %c0_8 = arith.constant 0 : index
    %10 = vector.load %arg7[%c1, %c0_7, %c0_8] : memref<3x288x128xbf16, #tpu.memory_space<vmem>>, vector<1x16x128xbf16>
    %11 = vector.shape_cast %10 : vector<1x16x128xbf16> to vector<16x128xbf16>
    %12 = vector.shape_cast %9 : vector<16x128xbf16> to vector<1x16x128xbf16>
    tpu.vector_store %arg7[%c1, %c0_7, %c0_8], %12 {strides = array<i32>} : memref<3x288x128xbf16, #tpu.memory_space<vmem>>, vector<1x16x128xbf16>,
    %cst_9 = arith.constant 0.000000e+00 : bf16
    %13 = vector.broadcast %cst_9 : bf16 to vector<16x128xbf16>
    %c1_10 = arith.constant 1 : index
    %c272_11 = arith.constant 272 : index
    %c0_12 = arith.constant 0 : index
    %14 = vector.load %arg7[%c1_10, %c272_11, %c0_12] : memref<3x288x128xbf16, #tpu.memory_space<vmem>>, vector<1x16x128xbf16>
    %15 = vector.shape_cast %14 : vector<1x16x128xbf16> to vector<16x128xbf16>
    %16 = vector.shape_cast %13 : vector<16x128xbf16> to vector<1x16x128xbf16>
    tpu.vector_store %arg7[%c1_10, %c272_11, %c0_12], %16 {strides = array<i32>} : memref<3x288x128xbf16, #tpu.memory_space<vmem>>, vector<1x16x128xbf16>,
    %cst_13 = arith.constant 0.000000e+00 : bf16
    %17 = vector.broadcast %cst_13 : bf16 to vector<16x128xbf16>
    %c2 = arith.constant 2 : index
    %c0_14 = arith.constant 0 : index
    %c0_15 = arith.constant 0 : index
    %18 = vector.load %arg7[%c2, %c0_14, %c0_15] : memref<3x288x128xbf16, #tpu.memory_space<vmem>>, vector<1x16x128xbf16>
    %19 = vector.shape_cast %18 : vector<1x16x128xbf16> to vector<16x128xbf16>
    %20 = vector.shape_cast %17 : vector<16x128xbf16> to vector<1x16x128xbf16>
    tpu.vector_store %arg7[%c2, %c0_14, %c0_15], %20 {strides = array<i32>} : memref<3x288x128xbf16, #tpu.memory_space<vmem>>, vector<1x16x128xbf16>,
    %cst_16 = arith.constant 0.000000e+00 : bf16
    %21 = vector.broadcast %cst_16 : bf16 to vector<16x128xbf16>
    %c2_17 = arith.constant 2 : index
    %c272_18 = arith.constant 272 : index
    %c0_19 = arith.constant 0 : index
    %22 = vector.load %arg7[%c2_17, %c272_18, %c0_19] : memref<3x288x128xbf16, #tpu.memory_space<vmem>>, vector<1x16x128xbf16>
    %23 = vector.shape_cast %22 : vector<1x16x128xbf16> to vector<16x128xbf16>
    %24 = vector.shape_cast %21 : vector<16x128xbf16> to vector<1x16x128xbf16>
    tpu.vector_store %arg7[%c2_17, %c272_18, %c0_19], %24 {strides = array<i32>} : memref<3x288x128xbf16, #tpu.memory_space<vmem>>, vector<1x16x128xbf16>,
    %c0_20 = arith.constant 0 : index
    %c0_21 = arith.constant 0 : index
    %c0_22 = arith.constant 0 : index
    %25 = vector.load %arg1[%c0_20, %c0_21, %c0_22] : memref<1x256x128xf32, #tpu.memory_space<vmem>>, vector<1x256x128xf32>
    %26 = vector.shape_cast %25 : vector<1x256x128xf32> to vector<256x128xf32>
    %cst_23 = arith.constant dense<0.000000e+00> : vector<128xf32>
    %27 = vector.multi_reduction <add>, %26, %cst_23 [0] : vector<256x128xf32> to vector<128xf32>
    %28 = vector.shape_cast %27 : vector<128xf32> to vector<1x128xf32>
    %cst_24 = arith.constant 3.906250e-03 : f32
    %29 = vector.broadcast %cst_24 : f32 to vector<1x128xf32>
    %30 = arith.mulf %28, %29 : vector<1x128xf32>
    %31 = arith.mulf %26, %26 : vector<256x128xf32>
    %cst_25 = arith.constant dense<0.000000e+00> : vector<128xf32>
    %32 = vector.multi_reduction <add>, %31, %cst_25 [0] : vector<256x128xf32> to vector<128xf32>
    %33 = vector.shape_cast %32 : vector<128xf32> to vector<1x128xf32>
    %cst_26 = arith.constant 3.906250e-03 : f32
    %34 = vector.broadcast %cst_26 : f32 to vector<1x128xf32>
    %35 = arith.mulf %33, %34 : vector<1x128xf32>
    %36 = arith.mulf %30, %30 : vector<1x128xf32>
    %37 = arith.subf %35, %36 : vector<1x128xf32>
    %38 = vector.broadcast %30 : vector<1x128xf32> to vector<256x128xf32>
    %39 = arith.subf %26, %38 : vector<256x128xf32>
    %cst_27 = arith.constant 9.99999974E-6 : f32
    %40 = vector.broadcast %cst_27 : f32 to vector<1x128xf32>
    %41 = arith.addf %37, %40 : vector<1x128xf32>
    %42 = math.rsqrt %41 : vector<1x128xf32>
    %43 = vector.broadcast %42 : vector<1x128xf32> to vector<256x128xf32>
    %44 = arith.mulf %39, %43 : vector<256x128xf32>
    %cst_28 = arith.constant 0.000000e+00 : f32
    %45 = vector.broadcast %cst_28 : f32 to vector<256x128xf32>
    %46 = arith.maximumf %44, %45 : vector<256x128xf32>
    %47 = arith.truncf %46 : vector<256x128xf32> to vector<256x128xbf16>
    %c1_29 = arith.constant 1 : index
    %c16 = arith.constant 16 : index
    %c0_30 = arith.constant 0 : index
    %48 = vector.load %arg7[%c1_29, %c16, %c0_30] : memref<3x288x128xbf16, #tpu.memory_space<vmem>>, vector<1x256x128xbf16>
    %49 = vector.shape_cast %48 : vector<1x256x128xbf16> to vector<256x128xbf16>
    %50 = vector.shape_cast %47 : vector<256x128xbf16> to vector<1x256x128xbf16>
    tpu.vector_store %arg7[%c1_29, %c16, %c0_30], %50 {strides = array<i32>} : memref<3x288x128xbf16, #tpu.memory_space<vmem>>, vector<1x256x128xbf16>,
    %51 = tpu.iota {dimensions = array<i32: 0>} : vector<256x128xi32>
    %c16_i32 = arith.constant 16 : i32
    %c0_i32 = arith.constant 0 : i32
    %52 = arith.cmpi eq, %c16_i32, %c0_i32 : i32
    %c1_i32 = arith.constant 1 : i32
    %53 = arith.select %52, %c1_i32, %c16_i32 : i32
    %54 = vector.broadcast %53 : i32 to vector<256x128xi32>
    %55 = arith.remsi %51, %54 : vector<256x128xi32>
    %c0_i32_31 = arith.constant 0 : i32
    %56 = vector.broadcast %c0_i32_31 : i32 to vector<256x128xi32>
    %57 = arith.cmpi ne, %55, %56 : vector<256x128xi32>
    %c0_i32_32 = arith.constant 0 : i32
    %58 = vector.broadcast %c0_i32_32 : i32 to vector<256x128xi32>
    %59 = arith.cmpi slt, %55, %58 : vector<256x128xi32>
    %c0_i32_33 = arith.constant 0 : i32
    %60 = arith.cmpi slt, %53, %c0_i32_33 : i32
    %61 = vector.broadcast %60 : i1 to vector<256x128xi1>
    %62 = vector.broadcast %61 : vector<256x128xi1> to vector<256x128xi1>
    %63 = arith.xori %59, %62 : vector<256x128xi1>
    %64 = arith.andi %63, %57 : vector<256x128xi1>
    %65 = vector.broadcast %53 : i32 to vector<256x128xi32>
    %66 = arith.addi %55, %65 : vector<256x128xi32>
    %67 = arith.select %64, %66, %55 : vector<256x128xi1>, vector<256x128xi32>
    %68 = vector.extract_strided_slice %46 {offsets = [0, 0], sizes = [255, 128], strides = [1, 1]} : vector<256x128xf32> to vector<255x128xf32>
    %69 = tpu.concatenate %0, %68 in 0 : vector<1x128xf32>, vector<255x128xf32> -> vector<256x128xf32>
    %c0_i32_34 = arith.constant 0 : i32
    %70 = vector.broadcast %c0_i32_34 : i32 to vector<256x128xi32>
    %71 = arith.cmpi ne, %67, %70 : vector<256x128xi32>
    %cst_35 = arith.constant 0.000000e+00 : f32
    %72 = vector.broadcast %cst_35 : f32 to vector<256x128xf32>
    %73 = arith.select %71, %69, %72 : vector<256x128xi1>, vector<256x128xf32>
    %74 = arith.truncf %73 : vector<256x128xf32> to vector<256x128xbf16>
    %c0_36 = arith.constant 0 : index
    %c16_37 = arith.constant 16 : index
    %c0_38 = arith.constant 0 : index
    %75 = vector.load %arg7[%c0_36, %c16_37, %c0_38] : memref<3x288x128xbf16, #tpu.memory_space<vmem>>, vector<1x256x128xbf16>
    %76 = vector.shape_cast %75 : vector<1x256x128xbf16> to vector<256x128xbf16>
    %77 = vector.shape_cast %74 : vector<256x128xbf16> to vector<1x256x128xbf16>
    tpu.vector_store %arg7[%c0_36, %c16_37, %c0_38], %77 {strides = array<i32>} : memref<3x288x128xbf16, #tpu.memory_space<vmem>>, vector<1x256x128xbf16>,
    %78 = vector.extract_strided_slice %46 {offsets = [1, 0], sizes = [255, 128], strides = [1, 1]} : vector<256x128xf32> to vector<255x128xf32>
    %79 = tpu.concatenate %78, %0 in 0 : vector<255x128xf32>, vector<1x128xf32> -> vector<256x128xf32>
    %c15_i32 = arith.constant 15 : i32
    %80 = vector.broadcast %c15_i32 : i32 to vector<256x128xi32>
    %81 = arith.cmpi ne, %67, %80 : vector<256x128xi32>
    %cst_39 = arith.constant 0.000000e+00 : f32
    %82 = vector.broadcast %cst_39 : f32 to vector<256x128xf32>
    %83 = arith.select %81, %79, %82 : vector<256x128xi1>, vector<256x128xf32>
    %84 = arith.truncf %83 : vector<256x128xf32> to vector<256x128xbf16>
    %c2_40 = arith.constant 2 : index
    %c16_41 = arith.constant 16 : index
    %c0_42 = arith.constant 0 : index
    %85 = vector.load %arg7[%c2_40, %c16_41, %c0_42] : memref<3x288x128xbf16, #tpu.memory_space<vmem>>, vector<1x256x128xbf16>
    %86 = vector.shape_cast %85 : vector<1x256x128xbf16> to vector<256x128xbf16>
    %87 = vector.shape_cast %84 : vector<256x128xbf16> to vector<1x256x128xbf16>
    tpu.vector_store %arg7[%c2_40, %c16_41, %c0_42], %87 {strides = array<i32>} : memref<3x288x128xbf16, #tpu.memory_space<vmem>>, vector<1x256x128xbf16>,
    %c0_43 = arith.constant 0 : index
    %c0_44 = arith.constant 0 : index
    %c0_45 = arith.constant 0 : index
    %88 = vector.load %arg7[%c0_43, %c0_44, %c0_45] : memref<3x288x128xbf16, #tpu.memory_space<vmem>>, vector<1x256x128xbf16>
    %89 = vector.shape_cast %88 : vector<1x256x128xbf16> to vector<256x128xbf16>
    %c0_46 = arith.constant 0 : index
    %c0_47 = arith.constant 0 : index
    %c0_48 = arith.constant 0 : index
    %90 = vector.load %arg2[%c0_46, %c0_47, %c0_48] : memref<9x128x128xbf16, #tpu.memory_space<vmem>>, vector<1x128x128xbf16>
    %91 = vector.shape_cast %90 : vector<1x128x128xbf16> to vector<128x128xbf16>
    %cst_49 = arith.constant dense<0.000000e+00> : vector<256x128xf32>
    %92 = tpu.matmul %89, %91, %cst_49 {dimension_numbers = #tpu.dot_dimension_numbers<[1], [0], [0], [1], [0, 0, 1, 1], [], []>} : vector<256x128xbf16>, vector<128x128xbf16>, vector<256x128xf32> -> vector<256x128xf32>
    %c1_50 = arith.constant 1 : index
    %c0_51 = arith.constant 0 : index
    %c0_52 = arith.constant 0 : index
    %93 = vector.load %arg7[%c1_50, %c0_51, %c0_52] : memref<3x288x128xbf16, #tpu.memory_space<vmem>>, vector<1x256x128xbf16>
    %94 = vector.shape_cast %93 : vector<1x256x128xbf16> to vector<256x128xbf16>
    %c1_53 = arith.constant 1 : index
    %c0_54 = arith.constant 0 : index
    %c0_55 = arith.constant 0 : index
    %95 = vector.load %arg2[%c1_53, %c0_54, %c0_55] : memref<9x128x128xbf16, #tpu.memory_space<vmem>>, vector<1x128x128xbf16>
    %96 = vector.shape_cast %95 : vector<1x128x128xbf16> to vector<128x128xbf16>
    %cst_56 = arith.constant dense<0.000000e+00> : vector<256x128xf32>
    %97 = tpu.matmul %94, %96, %cst_56 {dimension_numbers = #tpu.dot_dimension_numbers<[1], [0], [0], [1], [0, 0, 1, 1], [], []>} : vector<256x128xbf16>, vector<128x128xbf16>, vector<256x128xf32> -> vector<256x128xf32>
    %98 = arith.addf %92, %97 : vector<256x128xf32>
    %c2_57 = arith.constant 2 : index
    %c0_58 = arith.constant 0 : index
    %c0_59 = arith.constant 0 : index
    %99 = vector.load %arg7[%c2_57, %c0_58, %c0_59] : memref<3x288x128xbf16, #tpu.memory_space<vmem>>, vector<1x256x128xbf16>
    %100 = vector.shape_cast %99 : vector<1x256x128xbf16> to vector<256x128xbf16>
    %c2_60 = arith.constant 2 : index
    %c0_61 = arith.constant 0 : index
    %c0_62 = arith.constant 0 : index
    %101 = vector.load %arg2[%c2_60, %c0_61, %c0_62] : memref<9x128x128xbf16, #tpu.memory_space<vmem>>, vector<1x128x128xbf16>
    %102 = vector.shape_cast %101 : vector<1x128x128xbf16> to vector<128x128xbf16>
    %cst_63 = arith.constant dense<0.000000e+00> : vector<256x128xf32>
    %103 = tpu.matmul %100, %102, %cst_63 {dimension_numbers = #tpu.dot_dimension_numbers<[1], [0], [0], [1], [0, 0, 1, 1], [], []>} : vector<256x128xbf16>, vector<128x128xbf16>, vector<256x128xf32> -> vector<256x128xf32>
    %104 = arith.addf %98, %103 : vector<256x128xf32>
    %c0_64 = arith.constant 0 : index
    %c16_65 = arith.constant 16 : index
    %c0_66 = arith.constant 0 : index
    %105 = vector.load %arg7[%c0_64, %c16_65, %c0_66] : memref<3x288x128xbf16, #tpu.memory_space<vmem>>, vector<1x256x128xbf16>
    %106 = vector.shape_cast %105 : vector<1x256x128xbf16> to vector<256x128xbf16>
    %c3 = arith.constant 3 : index
    %c0_67 = arith.constant 0 : index
    %c0_68 = arith.constant 0 : index
    %107 = vector.load %arg2[%c3, %c0_67, %c0_68] : memref<9x128x128xbf16, #tpu.memory_space<vmem>>, vector<1x128x128xbf16>
    %108 = vector.shape_cast %107 : vector<1x128x128xbf16> to vector<128x128xbf16>
    %cst_69 = arith.constant dense<0.000000e+00> : vector<256x128xf32>
    %109 = tpu.matmul %106, %108, %cst_69 {dimension_numbers = #tpu.dot_dimension_numbers<[1], [0], [0], [1], [0, 0, 1, 1], [], []>} : vector<256x128xbf16>, vector<128x128xbf16>, vector<256x128xf32> -> vector<256x128xf32>
    %110 = arith.addf %104, %109 : vector<256x128xf32>
    %c1_70 = arith.constant 1 : index
    %c16_71 = arith.constant 16 : index
    %c0_72 = arith.constant 0 : index
    %111 = vector.load %arg7[%c1_70, %c16_71, %c0_72] : memref<3x288x128xbf16, #tpu.memory_space<vmem>>, vector<1x256x128xbf16>
    %112 = vector.shape_cast %111 : vector<1x256x128xbf16> to vector<256x128xbf16>
    %c4 = arith.constant 4 : index
    %c0_73 = arith.constant 0 : index
    %c0_74 = arith.constant 0 : index
    %113 = vector.load %arg2[%c4, %c0_73, %c0_74] : memref<9x128x128xbf16, #tpu.memory_space<vmem>>, vector<1x128x128xbf16>
    %114 = vector.shape_cast %113 : vector<1x128x128xbf16> to vector<128x128xbf16>
    %cst_75 = arith.constant dense<0.000000e+00> : vector<256x128xf32>
    %115 = tpu.matmul %112, %114, %cst_75 {dimension_numbers = #tpu.dot_dimension_numbers<[1], [0], [0], [1], [0, 0, 1, 1], [], []>} : vector<256x128xbf16>, vector<128x128xbf16>, vector<256x128xf32> -> vector<256x128xf32>
    %116 = arith.addf %110, %115 : vector<256x128xf32>
    %c2_76 = arith.constant 2 : index
    %c16_77 = arith.constant 16 : index
    %c0_78 = arith.constant 0 : index
    %117 = vector.load %arg7[%c2_76, %c16_77, %c0_78] : memref<3x288x128xbf16, #tpu.memory_space<vmem>>, vector<1x256x128xbf16>
    %118 = vector.shape_cast %117 : vector<1x256x128xbf16> to vector<256x128xbf16>
    %c5 = arith.constant 5 : index
    %c0_79 = arith.constant 0 : index
    %c0_80 = arith.constant 0 : index
    %119 = vector.load %arg2[%c5, %c0_79, %c0_80] : memref<9x128x128xbf16, #tpu.memory_space<vmem>>, vector<1x128x128xbf16>
    %120 = vector.shape_cast %119 : vector<1x128x128xbf16> to vector<128x128xbf16>
    %cst_81 = arith.constant dense<0.000000e+00> : vector<256x128xf32>
    %121 = tpu.matmul %118, %120, %cst_81 {dimension_numbers = #tpu.dot_dimension_numbers<[1], [0], [0], [1], [0, 0, 1, 1], [], []>} : vector<256x128xbf16>, vector<128x128xbf16>, vector<256x128xf32> -> vector<256x128xf32>
    %122 = arith.addf %116, %121 : vector<256x128xf32>
    %c0_82 = arith.constant 0 : index
    %c32 = arith.constant 32 : index
    %c0_83 = arith.constant 0 : index
    %123 = vector.load %arg7[%c0_82, %c32, %c0_83] : memref<3x288x128xbf16, #tpu.memory_space<vmem>>, vector<1x256x128xbf16>
    %124 = vector.shape_cast %123 : vector<1x256x128xbf16> to vector<256x128xbf16>
    %c6 = arith.constant 6 : index
    %c0_84 = arith.constant 0 : index
    %c0_85 = arith.constant 0 : index
    %125 = vector.load %arg2[%c6, %c0_84, %c0_85] : memref<9x128x128xbf16, #tpu.memory_space<vmem>>, vector<1x128x128xbf16>
    %126 = vector.shape_cast %125 : vector<1x128x128xbf16> to vector<128x128xbf16>
    %cst_86 = arith.constant dense<0.000000e+00> : vector<256x128xf32>
    %127 = tpu.matmul %124, %126, %cst_86 {dimension_numbers = #tpu.dot_dimension_numbers<[1], [0], [0], [1], [0, 0, 1, 1], [], []>} : vector<256x128xbf16>, vector<128x128xbf16>, vector<256x128xf32> -> vector<256x128xf32>
    %128 = arith.addf %122, %127 : vector<256x128xf32>
    %c1_87 = arith.constant 1 : index
    %c32_88 = arith.constant 32 : index
    %c0_89 = arith.constant 0 : index
    %129 = vector.load %arg7[%c1_87, %c32_88, %c0_89] : memref<3x288x128xbf16, #tpu.memory_space<vmem>>, vector<1x256x128xbf16>
    %130 = vector.shape_cast %129 : vector<1x256x128xbf16> to vector<256x128xbf16>
    %c7 = arith.constant 7 : index
    %c0_90 = arith.constant 0 : index
    %c0_91 = arith.constant 0 : index
    %131 = vector.load %arg2[%c7, %c0_90, %c0_91] : memref<9x128x128xbf16, #tpu.memory_space<vmem>>, vector<1x128x128xbf16>
    %132 = vector.shape_cast %131 : vector<1x128x128xbf16> to vector<128x128xbf16>
    %cst_92 = arith.constant dense<0.000000e+00> : vector<256x128xf32>
    %133 = tpu.matmul %130, %132, %cst_92 {dimension_numbers = #tpu.dot_dimension_numbers<[1], [0], [0], [1], [0, 0, 1, 1], [], []>} : vector<256x128xbf16>, vector<128x128xbf16>, vector<256x128xf32> -> vector<256x128xf32>
    %134 = arith.addf %128, %133 : vector<256x128xf32>
    %c2_93 = arith.constant 2 : index
    %c32_94 = arith.constant 32 : index
    %c0_95 = arith.constant 0 : index
    %135 = vector.load %arg7[%c2_93, %c32_94, %c0_95] : memref<3x288x128xbf16, #tpu.memory_space<vmem>>, vector<1x256x128xbf16>
    %136 = vector.shape_cast %135 : vector<1x256x128xbf16> to vector<256x128xbf16>
    %c8 = arith.constant 8 : index
    %c0_96 = arith.constant 0 : index
    %c0_97 = arith.constant 0 : index
    %137 = vector.load %arg2[%c8, %c0_96, %c0_97] : memref<9x128x128xbf16, #tpu.memory_space<vmem>>, vector<1x128x128xbf16>
    %138 = vector.shape_cast %137 : vector<1x128x128xbf16> to vector<128x128xbf16>
    %cst_98 = arith.constant dense<0.000000e+00> : vector<256x128xf32>
    %139 = tpu.matmul %136, %138, %cst_98 {dimension_numbers = #tpu.dot_dimension_numbers<[1], [0], [0], [1], [0, 0, 1, 1], [], []>} : vector<256x128xbf16>, vector<128x128xbf16>, vector<256x128xf32> -> vector<256x128xf32>
    %140 = arith.addf %134, %139 : vector<256x128xf32>
    %c0_99 = arith.constant 0 : index
    %c0_100 = arith.constant 0 : index
    %141 = vector.load %arg3[%c0_99, %c0_100] : memref<1x128xf32, #tpu.memory_space<vmem>>, vector<1x128xf32>
    %142 = vector.broadcast %141 : vector<1x128xf32> to vector<256x128xf32>
    %143 = arith.addf %140, %142 : vector<256x128xf32>
    %cst_101 = arith.constant dense<0.000000e+00> : vector<128xf32>
    %144 = vector.multi_reduction <add>, %143, %cst_101 [0] : vector<256x128xf32> to vector<128xf32>
    %145 = vector.shape_cast %144 : vector<128xf32> to vector<1x128xf32>
    %cst_102 = arith.constant 3.906250e-03 : f32
    %146 = vector.broadcast %cst_102 : f32 to vector<1x128xf32>
    %147 = arith.mulf %145, %146 : vector<1x128xf32>
    %148 = arith.mulf %143, %143 : vector<256x128xf32>
    %cst_103 = arith.constant dense<0.000000e+00> : vector<128xf32>
    %149 = vector.multi_reduction <add>, %148, %cst_103 [0] : vector<256x128xf32> to vector<128xf32>
    %150 = vector.shape_cast %149 : vector<128xf32> to vector<1x128xf32>
    %cst_104 = arith.constant 3.906250e-03 : f32
    %151 = vector.broadcast %cst_104 : f32 to vector<1x128xf32>
    %152 = arith.mulf %150, %151 : vector<1x128xf32>
    %153 = arith.mulf %147, %147 : vector<1x128xf32>
    %154 = arith.subf %152, %153 : vector<1x128xf32>
    %155 = vector.broadcast %147 : vector<1x128xf32> to vector<256x128xf32>
    %156 = arith.subf %143, %155 : vector<256x128xf32>
    %cst_105 = arith.constant 9.99999974E-6 : f32
    %157 = vector.broadcast %cst_105 : f32 to vector<1x128xf32>
    %158 = arith.addf %154, %157 : vector<1x128xf32>
    %159 = math.rsqrt %158 : vector<1x128xf32>
    %160 = vector.broadcast %159 : vector<1x128xf32> to vector<256x128xf32>
    %161 = arith.mulf %156, %160 : vector<256x128xf32>
    %cst_106 = arith.constant 0.000000e+00 : f32
    %162 = vector.broadcast %cst_106 : f32 to vector<256x128xf32>
    %163 = arith.maximumf %161, %162 : vector<256x128xf32>
    %164 = arith.truncf %163 : vector<256x128xf32> to vector<256x128xbf16>
    %c1_107 = arith.constant 1 : index
    %c16_108 = arith.constant 16 : index
    %c0_109 = arith.constant 0 : index
    %165 = vector.load %arg7[%c1_107, %c16_108, %c0_109] : memref<3x288x128xbf16, #tpu.memory_space<vmem>>, vector<1x256x128xbf16>
    %166 = vector.shape_cast %165 : vector<1x256x128xbf16> to vector<256x128xbf16>
    %167 = vector.shape_cast %164 : vector<256x128xbf16> to vector<1x256x128xbf16>
    tpu.vector_store %arg7[%c1_107, %c16_108, %c0_109], %167 {strides = array<i32>} : memref<3x288x128xbf16, #tpu.memory_space<vmem>>, vector<1x256x128xbf16>,
    %168 = tpu.iota {dimensions = array<i32: 0>} : vector<256x128xi32>
    %c16_i32_110 = arith.constant 16 : i32
    %c0_i32_111 = arith.constant 0 : i32
    %169 = arith.cmpi eq, %c16_i32_110, %c0_i32_111 : i32
    %c1_i32_112 = arith.constant 1 : i32
    %170 = arith.select %169, %c1_i32_112, %c16_i32_110 : i32
    %171 = vector.broadcast %170 : i32 to vector<256x128xi32>
    %172 = arith.remsi %168, %171 : vector<256x128xi32>
    %c0_i32_113 = arith.constant 0 : i32
    %173 = vector.broadcast %c0_i32_113 : i32 to vector<256x128xi32>
    %174 = arith.cmpi ne, %172, %173 : vector<256x128xi32>
    %c0_i32_114 = arith.constant 0 : i32
    %175 = vector.broadcast %c0_i32_114 : i32 to vector<256x128xi32>
    %176 = arith.cmpi slt, %172, %175 : vector<256x128xi32>
    %c0_i32_115 = arith.constant 0 : i32
    %177 = arith.cmpi slt, %170, %c0_i32_115 : i32
    %178 = vector.broadcast %177 : i1 to vector<256x128xi1>
    %179 = vector.broadcast %178 : vector<256x128xi1> to vector<256x128xi1>
    %180 = arith.xori %176, %179 : vector<256x128xi1>
    %181 = arith.andi %180, %174 : vector<256x128xi1>
    %182 = vector.broadcast %170 : i32 to vector<256x128xi32>
    %183 = arith.addi %172, %182 : vector<256x128xi32>
    %184 = arith.select %181, %183, %172 : vector<256x128xi1>, vector<256x128xi32>
    %185 = vector.extract_strided_slice %163 {offsets = [0, 0], sizes = [255, 128], strides = [1, 1]} : vector<256x128xf32> to vector<255x128xf32>
    %186 = tpu.concatenate %0, %185 in 0 : vector<1x128xf32>, vector<255x128xf32> -> vector<256x128xf32>
    %c0_i32_116 = arith.constant 0 : i32
    %187 = vector.broadcast %c0_i32_116 : i32 to vector<256x128xi32>
    %188 = arith.cmpi ne, %184, %187 : vector<256x128xi32>
    %cst_117 = arith.constant 0.000000e+00 : f32
    %189 = vector.broadcast %cst_117 : f32 to vector<256x128xf32>
    %190 = arith.select %188, %186, %189 : vector<256x128xi1>, vector<256x128xf32>
    %191 = arith.truncf %190 : vector<256x128xf32> to vector<256x128xbf16>
    %c0_118 = arith.constant 0 : index
    %c16_119 = arith.constant 16 : index
    %c0_120 = arith.constant 0 : index
    %192 = vector.load %arg7[%c0_118, %c16_119, %c0_120] : memref<3x288x128xbf16, #tpu.memory_space<vmem>>, vector<1x256x128xbf16>
    %193 = vector.shape_cast %192 : vector<1x256x128xbf16> to vector<256x128xbf16>
    %194 = vector.shape_cast %191 : vector<256x128xbf16> to vector<1x256x128xbf16>
    tpu.vector_store %arg7[%c0_118, %c16_119, %c0_120], %194 {strides = array<i32>} : memref<3x288x128xbf16, #tpu.memory_space<vmem>>, vector<1x256x128xbf16>,
    %195 = vector.extract_strided_slice %163 {offsets = [1, 0], sizes = [255, 128], strides = [1, 1]} : vector<256x128xf32> to vector<255x128xf32>
    %196 = tpu.concatenate %195, %0 in 0 : vector<255x128xf32>, vector<1x128xf32> -> vector<256x128xf32>
    %c15_i32_121 = arith.constant 15 : i32
    %197 = vector.broadcast %c15_i32_121 : i32 to vector<256x128xi32>
    %198 = arith.cmpi ne, %184, %197 : vector<256x128xi32>
    %cst_122 = arith.constant 0.000000e+00 : f32
    %199 = vector.broadcast %cst_122 : f32 to vector<256x128xf32>
    %200 = arith.select %198, %196, %199 : vector<256x128xi1>, vector<256x128xf32>
    %201 = arith.truncf %200 : vector<256x128xf32> to vector<256x128xbf16>
    %c2_123 = arith.constant 2 : index
    %c16_124 = arith.constant 16 : index
    %c0_125 = arith.constant 0 : index
    %202 = vector.load %arg7[%c2_123, %c16_124, %c0_125] : memref<3x288x128xbf16, #tpu.memory_space<vmem>>, vector<1x256x128xbf16>
    %203 = vector.shape_cast %202 : vector<1x256x128xbf16> to vector<256x128xbf16>
    %204 = vector.shape_cast %201 : vector<256x128xbf16> to vector<1x256x128xbf16>
    tpu.vector_store %arg7[%c2_123, %c16_124, %c0_125], %204 {strides = array<i32>} : memref<3x288x128xbf16, #tpu.memory_space<vmem>>, vector<1x256x128xbf16>,
    %c0_126 = arith.constant 0 : index
    %c0_127 = arith.constant 0 : index
    %c0_128 = arith.constant 0 : index
    %205 = vector.load %arg7[%c0_126, %c0_127, %c0_128] : memref<3x288x128xbf16, #tpu.memory_space<vmem>>, vector<1x256x128xbf16>
    %206 = vector.shape_cast %205 : vector<1x256x128xbf16> to vector<256x128xbf16>
    %c0_129 = arith.constant 0 : index
    %c0_130 = arith.constant 0 : index
    %c0_131 = arith.constant 0 : index
    %207 = vector.load %arg4[%c0_129, %c0_130, %c0_131] : memref<9x128x128xbf16, #tpu.memory_space<vmem>>, vector<1x128x128xbf16>
    %208 = vector.shape_cast %207 : vector<1x128x128xbf16> to vector<128x128xbf16>
    %cst_132 = arith.constant dense<0.000000e+00> : vector<256x128xf32>
    %209 = tpu.matmul %206, %208, %cst_132 {dimension_numbers = #tpu.dot_dimension_numbers<[1], [0], [0], [1], [0, 0, 1, 1], [], []>} : vector<256x128xbf16>, vector<128x128xbf16>, vector<256x128xf32> -> vector<256x128xf32>
    %c1_133 = arith.constant 1 : index
    %c0_134 = arith.constant 0 : index
    %c0_135 = arith.constant 0 : index
    %210 = vector.load %arg7[%c1_133, %c0_134, %c0_135] : memref<3x288x128xbf16, #tpu.memory_space<vmem>>, vector<1x256x128xbf16>
    %211 = vector.shape_cast %210 : vector<1x256x128xbf16> to vector<256x128xbf16>
    %c1_136 = arith.constant 1 : index
    %c0_137 = arith.constant 0 : index
    %c0_138 = arith.constant 0 : index
    %212 = vector.load %arg4[%c1_136, %c0_137, %c0_138] : memref<9x128x128xbf16, #tpu.memory_space<vmem>>, vector<1x128x128xbf16>
    %213 = vector.shape_cast %212 : vector<1x128x128xbf16> to vector<128x128xbf16>
    %cst_139 = arith.constant dense<0.000000e+00> : vector<256x128xf32>
    %214 = tpu.matmul %211, %213, %cst_139 {dimension_numbers = #tpu.dot_dimension_numbers<[1], [0], [0], [1], [0, 0, 1, 1], [], []>} : vector<256x128xbf16>, vector<128x128xbf16>, vector<256x128xf32> -> vector<256x128xf32>
    %215 = arith.addf %209, %214 : vector<256x128xf32>
    %c2_140 = arith.constant 2 : index
    %c0_141 = arith.constant 0 : index
    %c0_142 = arith.constant 0 : index
    %216 = vector.load %arg7[%c2_140, %c0_141, %c0_142] : memref<3x288x128xbf16, #tpu.memory_space<vmem>>, vector<1x256x128xbf16>
    %217 = vector.shape_cast %216 : vector<1x256x128xbf16> to vector<256x128xbf16>
    %c2_143 = arith.constant 2 : index
    %c0_144 = arith.constant 0 : index
    %c0_145 = arith.constant 0 : index
    %218 = vector.load %arg4[%c2_143, %c0_144, %c0_145] : memref<9x128x128xbf16, #tpu.memory_space<vmem>>, vector<1x128x128xbf16>
    %219 = vector.shape_cast %218 : vector<1x128x128xbf16> to vector<128x128xbf16>
    %cst_146 = arith.constant dense<0.000000e+00> : vector<256x128xf32>
    %220 = tpu.matmul %217, %219, %cst_146 {dimension_numbers = #tpu.dot_dimension_numbers<[1], [0], [0], [1], [0, 0, 1, 1], [], []>} : vector<256x128xbf16>, vector<128x128xbf16>, vector<256x128xf32> -> vector<256x128xf32>
    %221 = arith.addf %215, %220 : vector<256x128xf32>
    %c0_147 = arith.constant 0 : index
    %c16_148 = arith.constant 16 : index
    %c0_149 = arith.constant 0 : index
    %222 = vector.load %arg7[%c0_147, %c16_148, %c0_149] : memref<3x288x128xbf16, #tpu.memory_space<vmem>>, vector<1x256x128xbf16>
    %223 = vector.shape_cast %222 : vector<1x256x128xbf16> to vector<256x128xbf16>
    %c3_150 = arith.constant 3 : index
    %c0_151 = arith.constant 0 : index
    %c0_152 = arith.constant 0 : index
    %224 = vector.load %arg4[%c3_150, %c0_151, %c0_152] : memref<9x128x128xbf16, #tpu.memory_space<vmem>>, vector<1x128x128xbf16>
    %225 = vector.shape_cast %224 : vector<1x128x128xbf16> to vector<128x128xbf16>
    %cst_153 = arith.constant dense<0.000000e+00> : vector<256x128xf32>
    %226 = tpu.matmul %223, %225, %cst_153 {dimension_numbers = #tpu.dot_dimension_numbers<[1], [0], [0], [1], [0, 0, 1, 1], [], []>} : vector<256x128xbf16>, vector<128x128xbf16>, vector<256x128xf32> -> vector<256x128xf32>
    %227 = arith.addf %221, %226 : vector<256x128xf32>
    %c1_154 = arith.constant 1 : index
    %c16_155 = arith.constant 16 : index
    %c0_156 = arith.constant 0 : index
    %228 = vector.load %arg7[%c1_154, %c16_155, %c0_156] : memref<3x288x128xbf16, #tpu.memory_space<vmem>>, vector<1x256x128xbf16>
    %229 = vector.shape_cast %228 : vector<1x256x128xbf16> to vector<256x128xbf16>
    %c4_157 = arith.constant 4 : index
    %c0_158 = arith.constant 0 : index
    %c0_159 = arith.constant 0 : index
    %230 = vector.load %arg4[%c4_157, %c0_158, %c0_159] : memref<9x128x128xbf16, #tpu.memory_space<vmem>>, vector<1x128x128xbf16>
    %231 = vector.shape_cast %230 : vector<1x128x128xbf16> to vector<128x128xbf16>
    %cst_160 = arith.constant dense<0.000000e+00> : vector<256x128xf32>
    %232 = tpu.matmul %229, %231, %cst_160 {dimension_numbers = #tpu.dot_dimension_numbers<[1], [0], [0], [1], [0, 0, 1, 1], [], []>} : vector<256x128xbf16>, vector<128x128xbf16>, vector<256x128xf32> -> vector<256x128xf32>
    %233 = arith.addf %227, %232 : vector<256x128xf32>
    %c2_161 = arith.constant 2 : index
    %c16_162 = arith.constant 16 : index
    %c0_163 = arith.constant 0 : index
    %234 = vector.load %arg7[%c2_161, %c16_162, %c0_163] : memref<3x288x128xbf16, #tpu.memory_space<vmem>>, vector<1x256x128xbf16>
    %235 = vector.shape_cast %234 : vector<1x256x128xbf16> to vector<256x128xbf16>
    %c5_164 = arith.constant 5 : index
    %c0_165 = arith.constant 0 : index
    %c0_166 = arith.constant 0 : index
    %236 = vector.load %arg4[%c5_164, %c0_165, %c0_166] : memref<9x128x128xbf16, #tpu.memory_space<vmem>>, vector<1x128x128xbf16>
    %237 = vector.shape_cast %236 : vector<1x128x128xbf16> to vector<128x128xbf16>
    %cst_167 = arith.constant dense<0.000000e+00> : vector<256x128xf32>
    %238 = tpu.matmul %235, %237, %cst_167 {dimension_numbers = #tpu.dot_dimension_numbers<[1], [0], [0], [1], [0, 0, 1, 1], [], []>} : vector<256x128xbf16>, vector<128x128xbf16>, vector<256x128xf32> -> vector<256x128xf32>
    %239 = arith.addf %233, %238 : vector<256x128xf32>
    %c0_168 = arith.constant 0 : index
    %c32_169 = arith.constant 32 : index
    %c0_170 = arith.constant 0 : index
    %240 = vector.load %arg7[%c0_168, %c32_169, %c0_170] : memref<3x288x128xbf16, #tpu.memory_space<vmem>>, vector<1x256x128xbf16>
    %241 = vector.shape_cast %240 : vector<1x256x128xbf16> to vector<256x128xbf16>
    %c6_171 = arith.constant 6 : index
    %c0_172 = arith.constant 0 : index
    %c0_173 = arith.constant 0 : index
    %242 = vector.load %arg4[%c6_171, %c0_172, %c0_173] : memref<9x128x128xbf16, #tpu.memory_space<vmem>>, vector<1x128x128xbf16>
    %243 = vector.shape_cast %242 : vector<1x128x128xbf16> to vector<128x128xbf16>
    %cst_174 = arith.constant dense<0.000000e+00> : vector<256x128xf32>
    %244 = tpu.matmul %241, %243, %cst_174 {dimension_numbers = #tpu.dot_dimension_numbers<[1], [0], [0], [1], [0, 0, 1, 1], [], []>} : vector<256x128xbf16>, vector<128x128xbf16>, vector<256x128xf32> -> vector<256x128xf32>
    %245 = arith.addf %239, %244 : vector<256x128xf32>
    %c1_175 = arith.constant 1 : index
    %c32_176 = arith.constant 32 : index
    %c0_177 = arith.constant 0 : index
    %246 = vector.load %arg7[%c1_175, %c32_176, %c0_177] : memref<3x288x128xbf16, #tpu.memory_space<vmem>>, vector<1x256x128xbf16>
    %247 = vector.shape_cast %246 : vector<1x256x128xbf16> to vector<256x128xbf16>
    %c7_178 = arith.constant 7 : index
    %c0_179 = arith.constant 0 : index
    %c0_180 = arith.constant 0 : index
    %248 = vector.load %arg4[%c7_178, %c0_179, %c0_180] : memref<9x128x128xbf16, #tpu.memory_space<vmem>>, vector<1x128x128xbf16>
    %249 = vector.shape_cast %248 : vector<1x128x128xbf16> to vector<128x128xbf16>
    %cst_181 = arith.constant dense<0.000000e+00> : vector<256x128xf32>
    %250 = tpu.matmul %247, %249, %cst_181 {dimension_numbers = #tpu.dot_dimension_numbers<[1], [0], [0], [1], [0, 0, 1, 1], [], []>} : vector<256x128xbf16>, vector<128x128xbf16>, vector<256x128xf32> -> vector<256x128xf32>
    %251 = arith.addf %245, %250 : vector<256x128xf32>
    %c2_182 = arith.constant 2 : index
    %c32_183 = arith.constant 32 : index
    %c0_184 = arith.constant 0 : index
    %252 = vector.load %arg7[%c2_182, %c32_183, %c0_184] : memref<3x288x128xbf16, #tpu.memory_space<vmem>>, vector<1x256x128xbf16>
    %253 = vector.shape_cast %252 : vector<1x256x128xbf16> to vector<256x128xbf16>
    %c8_185 = arith.constant 8 : index
    %c0_186 = arith.constant 0 : index
    %c0_187 = arith.constant 0 : index
    %254 = vector.load %arg4[%c8_185, %c0_186, %c0_187] : memref<9x128x128xbf16, #tpu.memory_space<vmem>>, vector<1x128x128xbf16>
    %255 = vector.shape_cast %254 : vector<1x128x128xbf16> to vector<128x128xbf16>
    %cst_188 = arith.constant dense<0.000000e+00> : vector<256x128xf32>
    %256 = tpu.matmul %253, %255, %cst_188 {dimension_numbers = #tpu.dot_dimension_numbers<[1], [0], [0], [1], [0, 0, 1, 1], [], []>} : vector<256x128xbf16>, vector<128x128xbf16>, vector<256x128xf32> -> vector<256x128xf32>
    %257 = arith.addf %251, %256 : vector<256x128xf32>
    %c0_189 = arith.constant 0 : index
    %c0_190 = arith.constant 0 : index
    %258 = vector.load %arg5[%c0_189, %c0_190] : memref<1x128xf32, #tpu.memory_space<vmem>>, vector<1x128xf32>
    %259 = vector.broadcast %258 : vector<1x128xf32> to vector<256x128xf32>
    %260 = arith.addf %257, %259 : vector<256x128xf32>
    %c0_191 = arith.constant 0 : index
    %c0_192 = arith.constant 0 : index
    %c0_193 = arith.constant 0 : index
    %261 = vector.load %arg1[%c0_191, %c0_192, %c0_193] : memref<1x256x128xf32, #tpu.memory_space<vmem>>, vector<1x256x128xf32>
    %262 = vector.shape_cast %261 : vector<1x256x128xf32> to vector<256x128xf32>
    %263 = arith.addf %260, %262 : vector<256x128xf32>
    %c0_194 = arith.constant 0 : index
    %c0_195 = arith.constant 0 : index
    %c0_196 = arith.constant 0 : index
    %264 = vector.load %arg6[%c0_194, %c0_195, %c0_196] : memref<1x256x128xf32, #tpu.memory_space<vmem>>, vector<1x256x128xf32>
    %265 = vector.shape_cast %264 : vector<1x256x128xf32> to vector<256x128xf32>
    %266 = vector.shape_cast %263 : vector<256x128xf32> to vector<1x256x128xf32>
    tpu.vector_store %arg6[%c0_194, %c0_195, %c0_196], %266 {strides = array<i32>} : memref<1x256x128xf32, #tpu.memory_space<vmem>>, vector<1x256x128xf32>,
    return
  }
  func.func @transform_0(%arg0: i32) -> (i32, i32, i32) {
    %c0_i32 = arith.constant 0 : i32
    %c0_i32_0 = arith.constant 0 : i32
    %c0_i32_1 = arith.constant 0 : i32
    return %arg0, %c0_i32, %c0_i32_0 : i32, i32, i32
  }
  func.func @transform_1(%arg0: i32) -> (i32, i32, i32) {
    %c0_i32 = arith.constant 0 : i32
    %c0_i32_0 = arith.constant 0 : i32
    %c0_i32_1 = arith.constant 0 : i32
    %c0_i32_2 = arith.constant 0 : i32
    return %c0_i32, %c0_i32_0, %c0_i32_1 : i32, i32, i32
  }
  func.func @transform_2(%arg0: i32) -> (i32, i32) {
    %c0_i32 = arith.constant 0 : i32
    %c0_i32_0 = arith.constant 0 : i32
    %c0_i32_1 = arith.constant 0 : i32
    return %c0_i32, %c0_i32_0 : i32, i32
  }
  func.func @transform_3(%arg0: i32) -> (i32, i32, i32) {
    %c0_i32 = arith.constant 0 : i32
    %c0_i32_0 = arith.constant 0 : i32
    %c0_i32_1 = arith.constant 0 : i32
    %c0_i32_2 = arith.constant 0 : i32
    return %c0_i32, %c0_i32_0, %c0_i32_1 : i32, i32, i32
  }
  func.func @transform_4(%arg0: i32) -> (i32, i32) {
    %c0_i32 = arith.constant 0 : i32
    %c0_i32_0 = arith.constant 0 : i32
    %c0_i32_1 = arith.constant 0 : i32
    return %c0_i32, %c0_i32_0 : i32, i32
  }
  func.func @transform_5(%arg0: i32) -> (i32, i32, i32) {
    %c0_i32 = arith.constant 0 : i32
    %c0_i32_0 = arith.constant 0 : i32
    %c0_i32_1 = arith.constant 0 : i32
    return %arg0, %c0_i32, %c0_i32_0 : i32, i32, i32
  }
}

</mosaic_0001>

<llo_original>
// kernel: tpu_custom_call.1
$region0: #{tpu_custom_call.1}
  #allocation0 [shape = 'u32[]', space=smem, size = 0x4, offset = 0x4, fixed_abs, tag = 'smem constant byte address 0x4 - core index']
  #allocation1 [shape = 'u32[72,128]{1,0:T(1,128)}', space=vmem, size = 0x9000, scoped, tag = 'internal scratch']
  #allocation2 [shape = 'bf16[3,288,128]{2,1,0:T(8,128)(2,1)}', space=vmem, size = 0x36000, scoped, tag = 'scratch operand']
  %s0 = inlined_call_operand.hbm [shape: f32[1,256,128], index: 0, kind: input, shape index: {}]
  %s1 = inlined_call_operand.hbm [shape: bf16[9,128,128], index: 1, kind: input, shape index: {}]
  %s2 = inlined_call_operand.vmem [shape: f32[1,128], index: 2, kind: input, shape index: {}]
  %s3 = inlined_call_operand.hbm [shape: bf16[9,128,128], index: 3, kind: input, shape index: {}]
  %s4 = inlined_call_operand.vmem [shape: f32[1,128], index: 4, kind: input, shape index: {}]
  %s5 = inlined_call_operand.hbm [shape: f32[1,256,128], index: 5, kind: output, shape index: {}]
  %s6 = sld [smem:[#allocation0]]
  $region42: #{tpu_custom_call.1} parent=0
    _
  %s8 = ssub.s32 1, %s6
  %s9 = scalar_select 0, %s8, %s6
  $region1: #{tpu_custom_call.1} parent=0
    #allocation3 [shape = 'u8[131072]{0}', space=vmem, size = 0x20000, scoped, tag = 'input window, operand 0, single buffered']
    #allocation4 [shape = 's32[1]{0}', space=sflag, size = 0x4, scoped, tag = 'scoped memory for tpu_custom_call.1']
    #allocation5 [shape = 's32[1]{0}', space=sflag, size = 0x4, scoped, tag = 'scoped memory for tpu_custom_call.1']
    #allocation6 [shape = 'u8[294912]{0}', space=vmem, size = 0x48000, scoped, tag = 'input window, operand 1, single buffered']
    #allocation7 [shape = 's32[1]{0}', space=sflag, size = 0x4, scoped, tag = 'scoped memory for tpu_custom_call.1']
    #allocation8 [shape = 'u8[294912]{0}', space=vmem, size = 0x48000, scoped, tag = 'input window, operand 3, single buffered']
    #allocation9 [shape = 'u8[131072]{0}', space=vmem, size = 0x20000, scoped, tag = 'output window, operand 0, single buffered']
    %10 = vsyncpa [#allocation4], 0
    %11 = vsyncpa [#allocation7], 0
    %12 = vsyncpa [#allocation5], 0
    // Predicated region
    $region2: #{tpu_custom_call.1} parent=1 // pred_check
      _
    $region3: #{tpu_custom_call.1} parent=1 // pred_check_branch
      %14 = sbr.rel (0) target = $region5
    $region4: #{tpu_custom_call.1} parent=1 // pred_region
      %16 = vsyncadd [#allocation4], 0
      %s17 = sshll.u32 %s0, 4
      %s18 = int_to_ptr.hbm [resolvable:$true] %s17
      %s19 = sshll.u32 [#allocation3], 4
      %s20 = int_to_ptr.vmem [resolvable:$true] %s19
      %25 = dma.hbm_to_vmem [thread:$0]  %s18, 4096, %s20, [#allocation4], 128, 128, 8
    $region5: #{tpu_custom_call.1} parent=1 // pred_fallthru
      _
    // Predicated region
    $region6: #{tpu_custom_call.1} parent=1 // pred_check
      _
    $region7: #{tpu_custom_call.1} parent=1 // pred_check_branch
      %27 = sbr.rel (0) target = $region9
    $region8: #{tpu_custom_call.1} parent=1 // pred_region
      %29 = vsyncadd [#allocation7], 0
      %s30 = sshll.u32 %s1, 4
      %s31 = int_to_ptr.hbm [resolvable:$true] %s30
      %s32 = sshll.u32 [#allocation6], 4
      %s33 = int_to_ptr.vmem [resolvable:$true] %s32
      %38 = dma.hbm_to_vmem [thread:$0]  %s31, 9216, %s33, [#allocation7], 64, 64, 4
    $region9: #{tpu_custom_call.1} parent=1 // pred_fallthru
      _
    // Predicated region
    $region10: #{tpu_custom_call.1} parent=1 // pred_check
      _
    $region11: #{tpu_custom_call.1} parent=1 // pred_check_branch
      %40 = sbr.rel (0) target = $region13
    $region12: #{tpu_custom_call.1} parent=1 // pred_region
      _
    $region13: #{tpu_custom_call.1} parent=1 // pred_fallthru
      _
    // Predicated region
    $region14: #{tpu_custom_call.1} parent=1 // pred_check
      _
    $region15: #{tpu_custom_call.1} parent=1 // pred_check_branch
      %42 = sbr.rel (0) target = $region17
    $region16: #{tpu_custom_call.1} parent=1 // pred_region
      %44 = vsyncadd [#allocation7], 0
      %s45 = sshll.u32 %s3, 4
      %s46 = int_to_ptr.hbm [resolvable:$true] %s45
      %s47 = sshll.u32 [#allocation8], 4
      %s48 = int_to_ptr.vmem [resolvable:$true] %s47
      %53 = dma.hbm_to_vmem [thread:$0]  %s46, 9216, %s48, [#allocation7], 64, 64, 4
    $region17: #{tpu_custom_call.1} parent=1 // pred_fallthru
      _
    // Predicated region
    $region18: #{tpu_custom_call.1} parent=1 // pred_check
      _
    $region19: #{tpu_custom_call.1} parent=1 // pred_check_branch
      %55 = sbr.rel (0) target = $region21
    $region20: #{tpu_custom_call.1} parent=1 // pred_region
      _
    $region21: #{tpu_custom_call.1} parent=1 // pred_fallthru
      _
    // Predicated region
    $region22: #{tpu_custom_call.1} parent=1 // pred_check
      _
    $region23: #{tpu_custom_call.1} parent=1 // pred_check_branch
      %57 = sbr.rel (0) target = $region25
    $region24: #{tpu_custom_call.1} parent=1 // pred_region
      %59 = dma.done [#allocation4], 4096
    $region25: #{tpu_custom_call.1} parent=1 // pred_fallthru
      _
    // Predicated region
    $region26: #{tpu_custom_call.1} parent=1 // pred_check
      _
    $region27: #{tpu_custom_call.1} parent=1 // pred_check_branch
      %61 = sbr.rel (0) target = $region29
    $region28: #{tpu_custom_call.1} parent=1 // pred_region
      %63 = dma.done [#allocation7], 9216
    $region29: #{tpu_custom_call.1} parent=1 // pred_fallthru
      _
    // Predicated region
    $region30: #{tpu_custom_call.1} parent=1 // pred_check
      _
    $region31: #{tpu_custom_call.1} parent=1 // pred_check_branch
      %65 = sbr.rel (0) target = $region33
    $region32: #{tpu_custom_call.1} parent=1 // pred_region
      %67 = dma.done [#allocation7], 9216
    $region33: #{tpu_custom_call.1} parent=1 // pred_fallthru
      _
    %69 = vst [vmem:[#allocation2] sm:$0xf] 0
    %70 = vst [vmem:[#allocation2 + $0x4] sm:$0xf] 0
    %71 = vst [vmem:[#allocation2 + $0x88] sm:$0xf] 0
    %72 = vst [vmem:[#allocation2 + $0x8c] sm:$0xf] 0
    %s73 = scalar_lea.vmem [#allocation2], 144
    %74 = vst [vmem:[%s73] sm:$0xf] 0
    %75 = vst [vmem:[%s73 + $0x4] sm:$0xf] 0
    %76 = vst [vmem:[%s73 + $0x88] sm:$0xf] 0
    %77 = vst [vmem:[%s73 + $0x8c] sm:$0xf] 0
    %s78 = scalar_lea.vmem [#allocation2], 288
    %79 = vst [vmem:[%s78] sm:$0xf] 0
    %80 = vst [vmem:[%s78 + $0x4] sm:$0xf] 0
    %81 = vst [vmem:[%s78 + $0x88] sm:$0xf] 0
    %82 = vst [vmem:[%s78 + $0x8c] sm:$0xf] 0
    %v83 = vld [vmem:[#allocation3] sm:$0xff]
    %v84 = vld [vmem:[#allocation3 + $0x8] sm:$0xff]
    %v85 = vld [vmem:[#allocation3 + $0x10] sm:$0xff]
    %v86 = vld [vmem:[#allocation3 + $0x18] sm:$0xff]
    %v87 = vld [vmem:[#allocation3 + $0x20] sm:$0xff]
    %v88 = vld [vmem:[#allocation3 + $0x28] sm:$0xff]
    %v89 = vld [vmem:[#allocation3 + $0x30] sm:$0xff]
    %v90 = vld [vmem:[#allocation3 + $0x38] sm:$0xff]
    %v91 = vld [vmem:[#allocation3 + $0x40] sm:$0xff]
    %v92 = vld [vmem:[#allocation3 + $0x48] sm:$0xff]
    %v93 = vld [vmem:[#allocation3 + $0x50] sm:$0xff]
    %v94 = vld [vmem:[#allocation3 + $0x58] sm:$0xff]
    %v95 = vld [vmem:[#allocation3 + $0x60] sm:$0xff]
    %v96 = vld [vmem:[#allocation3 + $0x68] sm:$0xff]
    %v97 = vld [vmem:[#allocation3 + $0x70] sm:$0xff]
    %v98 = vld [vmem:[#allocation3 + $0x78] sm:$0xff]
    %v99 = vld [vmem:[#allocation3 + $0x80] sm:$0xff]
    %v100 = vld [vmem:[#allocation3 + $0x88] sm:$0xff]
    %v101 = vld [vmem:[#allocation3 + $0x90] sm:$0xff]
    %v102 = vld [vmem:[#allocation3 + $0x98] sm:$0xff]
    %v103 = vld [vmem:[#allocation3 + $0xa0] sm:$0xff]
    %v104 = vld [vmem:[#allocation3 + $0xa8] sm:$0xff]
    %v105 = vld [vmem:[#allocation3 + $0xb0] sm:$0xff]
    %v106 = vld [vmem:[#allocation3 + $0xb8] sm:$0xff]
    %v107 = vld [vmem:[#allocation3 + $0xc0] sm:$0xff]
    %v108 = vld [vmem:[#allocation3 + $0xc8] sm:$0xff]
    %v109 = vld [vmem:[#allocation3 + $0xd0] sm:$0xff]
    %v110 = vld [vmem:[#allocation3 + $0xd8] sm:$0xff]
    %v111 = vld [vmem:[#allocation3 + $0xe0] sm:$0xff]
    %v112 = vld [vmem:[#allocation3 + $0xe8] sm:$0xff]
    %v113 = vld [vmem:[#allocation3 + $0xf0] sm:$0xff]
    %v114 = vld [vmem:[#allocation3 + $0xf8] sm:$0xff]
    %v115 = vadd.f32 %v83, %v84
    %v116 = vadd.f32 %v115, %v85
    %v117 = vadd.f32 %v116, %v86
    %v118 = vadd.f32 %v117, %v87
    %v119 = vadd.f32 %v118, %v88
    %v120 = vadd.f32 %v119, %v89
    %v121 = vadd.f32 %v120, %v90
    %v122 = vadd.f32 %v121, %v91
    %v123 = vadd.f32 %v122, %v92
    %v124 = vadd.f32 %v123, %v93
    %v125 = vadd.f32 %v124, %v94
    %v126 = vadd.f32 %v125, %v95
    %v127 = vadd.f32 %v126, %v96
    %v128 = vadd.f32 %v127, %v97
    %v129 = vadd.f32 %v128, %v98
    %v130 = vadd.f32 %v129, %v99
    %v131 = vadd.f32 %v130, %v100
    %v132 = vadd.f32 %v131, %v101
    %v133 = vadd.f32 %v132, %v102
    %v134 = vadd.f32 %v133, %v103
    %v135 = vadd.f32 %v134, %v104
    %v136 = vadd.f32 %v135, %v105
    %v137 = vadd.f32 %v136, %v106
    %v138 = vadd.f32 %v137, %v107
    %v139 = vadd.f32 %v138, %v108
    %v140 = vadd.f32 %v139, %v109
    %v141 = vadd.f32 %v140, %v110
    %v142 = vadd.f32 %v141, %v111
    %v143 = vadd.f32 %v142, %v112
    %v144 = vadd.f32 %v143, %v113
    %v145 = vadd.f32 %v144, %v114
    %v146 = vrot.slane %v145, 4
    %v147 = vadd.f32 %v145, %v146
    %v148 = vrot.slane %v147, 2
    %v149 = vadd.f32 %v147, %v148
    %v150 = vrot.slane %v149, 1
    %v151 = vadd.f32 %v149, %v150
    %v152 = vmul.f32 %v151, 0.00390625
    %v153 = vmul.f32 %v83, %v83
    %v154 = vmul.f32 %v84, %v84
    %v155 = vmul.f32 %v85, %v85
    %v156 = vmul.f32 %v86, %v86
    %v157 = vmul.f32 %v87, %v87
    %v158 = vmul.f32 %v88, %v88
    %v159 = vmul.f32 %v89, %v89
    %v160 = vmul.f32 %v90, %v90
    %v161 = vmul.f32 %v91, %v91
    %v162 = vmul.f32 %v92, %v92
    %v163 = vmul.f32 %v93, %v93
    %v164 = vmul.f32 %v94, %v94
    %v165 = vmul.f32 %v95, %v95
    %v166 = vmul.f32 %v96, %v96
    %v167 = vmul.f32 %v97, %v97
    %v168 = vmul.f32 %v98, %v98
    %v169 = vmul.f32 %v99, %v99
    %v170 = vmul.f32 %v100, %v100
    %v171 = vmul.f32 %v101, %v101
    %v172 = vmul.f32 %v102, %v102
    %v173 = vmul.f32 %v103, %v103
    %v174 = vmul.f32 %v104, %v104
    %v175 = vmul.f32 %v105, %v105
    %v176 = vmul.f32 %v106, %v106
    %v177 = vmul.f32 %v107, %v107
    %v178 = vmul.f32 %v108, %v108
    %v179 = vmul.f32 %v109, %v109
    %v180 = vmul.f32 %v110, %v110
    %v181 = vmul.f32 %v111, %v111
    %v182 = vmul.f32 %v112, %v112
    %v183 = vmul.f32 %v113, %v113
    %v184 = vmul.f32 %v114, %v114
    %v185 = vadd.f32 %v153, %v154
    %v186 = vadd.f32 %v185, %v155
    %v187 = vadd.f32 %v186, %v156
    %v188 = vadd.f32 %v187, %v157
    %v189 = vadd.f32 %v188, %v158
    %v190 = vadd.f32 %v189, %v159
    %v191 = vadd.f32 %v190, %v160
    %v192 = vadd.f32 %v191, %v161
    %v193 = vadd.f32 %v192, %v162
    %v194 = vadd.f32 %v193, %v163
    %v195 = vadd.f32 %v194, %v164
    %v196 = vadd.f32 %v195, %v165
    %v197 = vadd.f32 %v196, %v166
    %v198 = vadd.f32 %v197, %v167
    %v199 = vadd.f32 %v198, %v168
    %v200 = vadd.f32 %v199, %v169
    %v201 = vadd.f32 %v200, %v170
    %v202 = vadd.f32 %v201, %v171
    %v203 = vadd.f32 %v202, %v172
    %v204 = vadd.f32 %v203, %v173
    %v205 = vadd.f32 %v204, %v174
    %v206 = vadd.f32 %v205, %v175
    %v207 = vadd.f32 %v206, %v176
    %v208 = vadd.f32 %v207, %v177
    %v209 = vadd.f32 %v208, %v178
    %v210 = vadd.f32 %v209, %v179
    %v211 = vadd.f32 %v210, %v180
    %v212 = vadd.f32 %v211, %v181
    %v213 = vadd.f32 %v212, %v182
    %v214 = vadd.f32 %v213, %v183
    %v215 = vadd.f32 %v214, %v184
    %v216 = vrot.slane %v215, 4
    %v217 = vadd.f32 %v215, %v216
    %v218 = vrot.slane %v217, 2
    %v219 = vadd.f32 %v217, %v218
    %v220 = vrot.slane %v219, 1
    %v221 = vadd.f32 %v219, %v220
    %v222 = vmul.f32 %v221, 0.00390625
    %v223 = vmul.f32 %v152, %v152
    %v224 = vsub.f32 %v222, %v223
    %v225 = vsub.f32 %v83, %v152
    %v226 = vsub.f32 %v84, %v152
    %v227 = vsub.f32 %v85, %v152
    %v228 = vsub.f32 %v86, %v152
    %v229 = vsub.f32 %v87, %v152
    %v230 = vsub.f32 %v88, %v152
    %v231 = vsub.f32 %v89, %v152
    %v232 = vsub.f32 %v90, %v152
    %v233 = vsub.f32 %v91, %v152
    %v234 = vsub.f32 %v92, %v152
    %v235 = vsub.f32 %v93, %v152
    %v236 = vsub.f32 %v94, %v152
    %v237 = vsub.f32 %v95, %v152
    %v238 = vsub.f32 %v96, %v152
    %v239 = vsub.f32 %v97, %v152
    %v240 = vsub.f32 %v98, %v152
    %v241 = vsub.f32 %v99, %v152
    %v242 = vsub.f32 %v100, %v152
    %v243 = vsub.f32 %v101, %v152
    %v244 = vsub.f32 %v102, %v152
    %v245 = vsub.f32 %v103, %v152
    %v246 = vsub.f32 %v104, %v152
    %v247 = vsub.f32 %v105, %v152
    %v248 = vsub.f32 %v106, %v152
    %v249 = vsub.f32 %v107, %v152
    %v250 = vsub.f32 %v108, %v152
    %v251 = vsub.f32 %v109, %v152
    %v252 = vsub.f32 %v110, %v152
    %v253 = vsub.f32 %v111, %v152
    %v254 = vsub.f32 %v112, %v152
    %v255 = vsub.f32 %v113, %v152
    %v256 = vsub.f32 %v114, %v152
    %v257 = vadd.f32 %v224, 1e-05
    %v258 = vrsqrt.pop %v257
    %v259 = vmul.f32 %v258, %v257
    %v260 = vmul.f32 %v259, %v258
    %v261 = vmul.f32 0.5, %v260
    %v262 = vsub.f32 1.5, %v261
    %v263 = vmul.f32 %v258, %v262
    %vm264 = vweird.f32 %v257
    %vm265 = vweird.f32 %v258
    %vm266 = vmor %vm264, %vm265
    %v267 = vsel %vm266, %v258, %v263
    %v268 = vmul.f32 %v225, %v267
    %v269 = vmul.f32 %v226, %v267
    %v270 = vmul.f32 %v227, %v267
    %v271 = vmul.f32 %v228, %v267
    %v272 = vmul.f32 %v229, %v267
    %v273 = vmul.f32 %v230, %v267
    %v274 = vmul.f32 %v231, %v267
    %v275 = vmul.f32 %v232, %v267
    %v276 = vmul.f32 %v233, %v267
    %v277 = vmul.f32 %v234, %v267
    %v278 = vmul.f32 %v235, %v267
    %v279 = vmul.f32 %v236, %v267
    %v280 = vmul.f32 %v237, %v267
    %v281 = vmul.f32 %v238, %v267
    %v282 = vmul.f32 %v239, %v267
    %v283 = vmul.f32 %v240, %v267
    %v284 = vmul.f32 %v241, %v267
    %v285 = vmul.f32 %v242, %v267
    %v286 = vmul.f32 %v243, %v267
    %v287 = vmul.f32 %v244, %v267
    %v288 = vmul.f32 %v245, %v267
    %v289 = vmul.f32 %v246, %v267
    %v290 = vmul.f32 %v247, %v267
    %v291 = vmul.f32 %v248, %v267
    %v292 = vmul.f32 %v249, %v267
    %v293 = vmul.f32 %v250, %v267
    %v294 = vmul.f32 %v251, %v267
    %v295 = vmul.f32 %v252, %v267
    %v296 = vmul.f32 %v253, %v267
    %v297 = vmul.f32 %v254, %v267
    %v298 = vmul.f32 %v255, %v267
    %v299 = vmul.f32 %v256, %v267
    %v300 = vmax.f32 %v268, 0.0
    %v301 = vmax.f32 %v269, 0.0
    %v302 = vmax.f32 %v270, 0.0
    %v303 = vmax.f32 %v271, 0.0
    %v304 = vmax.f32 %v272, 0.0
    %v305 = vmax.f32 %v273, 0.0
    %v306 = vmax.f32 %v274, 0.0
    %v307 = vmax.f32 %v275, 0.0
    %v308 = vmax.f32 %v276, 0.0
    %v309 = vmax.f32 %v277, 0.0
    %v310 = vmax.f32 %v278, 0.0
    %v311 = vmax.f32 %v279, 0.0
    %v312 = vmax.f32 %v280, 0.0
    %v313 = vmax.f32 %v281, 0.0
    %v314 = vmax.f32 %v282, 0.0
    %v315 = vmax.f32 %v283, 0.0
    %v316 = vmax.f32 %v284, 0.0
    %v317 = vmax.f32 %v285, 0.0
    %v318 = vmax.f32 %v286, 0.0
    %v319 = vmax.f32 %v287, 0.0
    %v320 = vmax.f32 %v288, 0.0
    %v321 = vmax.f32 %v289, 0.0
    %v322 = vmax.f32 %v290, 0.0
    %v323 = vmax.f32 %v291, 0.0
    %v324 = vmax.f32 %v292, 0.0
    %v325 = vmax.f32 %v293, 0.0
    %v326 = vmax.f32 %v294, 0.0
    %v327 = vmax.f32 %v295, 0.0
    %v328 = vmax.f32 %v296, 0.0
    %v329 = vmax.f32 %v297, 0.0
    %v330 = vmax.f32 %v298, 0.0
    %v331 = vmax.f32 %v299, 0.0
    %v332 = vpack.c.bf16 %v300, %v300
    %v333 = vpack.c.bf16 %v301, %v301
    %v334 = vpack.c.bf16 %v302, %v302
    %v335 = vpack.c.bf16 %v303, %v303
    %v336 = vpack.c.bf16 %v304, %v304
    %v337 = vpack.c.bf16 %v305, %v305
    %v338 = vpack.c.bf16 %v306, %v306
    %v339 = vpack.c.bf16 %v307, %v307
    %v340 = vpack.c.bf16 %v308, %v308
    %v341 = vpack.c.bf16 %v309, %v309
    %v342 = vpack.c.bf16 %v310, %v310
    %v343 = vpack.c.bf16 %v311, %v311
    %v344 = vpack.c.bf16 %v312, %v312
    %v345 = vpack.c.bf16 %v313, %v313
    %v346 = vpack.c.bf16 %v314, %v314
    %v347 = vpack.c.bf16 %v315, %v315
    %v348 = vpack.c.bf16 %v316, %v316
    %v349 = vpack.c.bf16 %v317, %v317
    %v350 = vpack.c.bf16 %v318, %v318
    %v351 = vpack.c.bf16 %v319, %v319
    %v352 = vpack.c.bf16 %v320, %v320
    %v353 = vpack.c.bf16 %v321, %v321
    %v354 = vpack.c.bf16 %v322, %v322
    %v355 = vpack.c.bf16 %v323, %v323
    %v356 = vpack.c.bf16 %v324, %v324
    %v357 = vpack.c.bf16 %v325, %v325
    %v358 = vpack.c.bf16 %v326, %v326
    %v359 = vpack.c.bf16 %v327, %v327
    %v360 = vpack.c.bf16 %v328, %v328
    %v361 = vpack.c.bf16 %v329, %v329
    %v362 = vpack.c.bf16 %v330, %v330
    %v363 = vpack.c.bf16 %v331, %v331
    %364 = vst [vmem:[%s73 + $0x8] sm:$0xf] %v332
    %365 = vst [vmem:[%s73 + $0xc] sm:$0xf] %v333
    %366 = vst [vmem:[%s73 + $0x10] sm:$0xf] %v334
    %367 = vst [vmem:[%s73 + $0x14] sm:$0xf] %v335
    %368 = vst [vmem:[%s73 + $0x18] sm:$0xf] %v336
    %369 = vst [vmem:[%s73 + $0x1c] sm:$0xf] %v337
    %370 = vst [vmem:[%s73 + $0x20] sm:$0xf] %v338
    %371 = vst [vmem:[%s73 + $0x24] sm:$0xf] %v339
    %372 = vst [vmem:[%s73 + $0x28] sm:$0xf] %v340
    %373 = vst [vmem:[%s73 + $0x2c] sm:$0xf] %v341
    %374 = vst [vmem:[%s73 + $0x30] sm:$0xf] %v342
    %375 = vst [vmem:[%s73 + $0x34] sm:$0xf] %v343
    %376 = vst [vmem:[%s73 + $0x38] sm:$0xf] %v344
    %377 = vst [vmem:[%s73 + $0x3c] sm:$0xf] %v345
    %378 = vst [vmem:[%s73 + $0x40] sm:$0xf] %v346
    %379 = vst [vmem:[%s73 + $0x44] sm:$0xf] %v347
    %380 = vst [vmem:[%s73 + $0x48] sm:$0xf] %v348
    %381 = vst [vmem:[%s73 + $0x4c] sm:$0xf] %v349
    %382 = vst [vmem:[%s73 + $0x50] sm:$0xf] %v350
    %383 = vst [vmem:[%s73 + $0x54] sm:$0xf] %v351
    %384 = vst [vmem:[%s73 + $0x58] sm:$0xf] %v352
    %385 = vst [vmem:[%s73 + $0x5c] sm:$0xf] %v353
    %386 = vst [vmem:[%s73 + $0x60] sm:$0xf] %v354
    %387 = vst [vmem:[%s73 + $0x64] sm:$0xf] %v355
    %388 = vst [vmem:[%s73 + $0x68] sm:$0xf] %v356
    %389 = vst [vmem:[%s73 + $0x6c] sm:$0xf] %v357
    %390 = vst [vmem:[%s73 + $0x70] sm:$0xf] %v358
    %391 = vst [vmem:[%s73 + $0x74] sm:$0xf] %v359
    %392 = vst [vmem:[%s73 + $0x78] sm:$0xf] %v360
    %393 = vst [vmem:[%s73 + $0x7c] sm:$0xf] %v361
    %394 = vst [vmem:[%s73 + $0x80] sm:$0xf] %v362
    %395 = vst [vmem:[%s73 + $0x84] sm:$0xf] %v363
    %v396 = vlaneseq
    %v397 = vshrl.u32 %v396, 7
    %v398 = vadd.s32 %v397, 8
    %v399 = vadd.s32 %v397, 16
    %v400 = vadd.s32 %v397, 24
    %v401 = vadd.s32 %v397, 32
    %v402 = vadd.s32 %v397, 40
    %v403 = vadd.s32 %v397, 48
    %v404 = vadd.s32 %v397, 56
    %v405 = vadd.s32 %v397, 64
    %v406 = vadd.s32 %v397, 72
    %v407 = vadd.s32 %v397, 80
    %v408 = vadd.s32 %v397, 88
    %v409 = vadd.s32 %v397, 96
    %v410 = vadd.s32 %v397, 104
    %v411 = vadd.s32 %v397, 112
    %v412 = vadd.s32 %v397, 120
    %v413 = vadd.s32 %v397, 128
    %v414 = vadd.s32 %v397, 136
    %v415 = vadd.s32 %v397, 144
    %v416 = vadd.s32 %v397, 152
    %v417 = vadd.s32 %v397, 160
    %v418 = vadd.s32 %v397, 168
    %v419 = vadd.s32 %v397, 176
    %v420 = vadd.s32 %v397, 184
    %v421 = vadd.s32 %v397, 192
    %v422 = vadd.s32 %v397, 200
    %v423 = vadd.s32 %v397, 208
    %v424 = vadd.s32 %v397, 216
    %v425 = vadd.s32 %v397, 224
    %v426 = vadd.s32 %v397, 232
    %v427 = vadd.s32 %v397, 240
    %v428 = vadd.s32 %v397, 248
    %vm429 = vcmp.lt.s32.totalorder %v397, 0
    %v430 = vsub.s32 0, %v397
    %v431 = vsel %vm429, %v430, %v397
    %v432 = vshrl.u32 %v431, 4
    %v433 = vand.u32 %v431, 15
    %v434 = vsub.s32 0, %v433
    %v435 = vsel %vm429, %v434, %v433
    %vm436 = vcmp.lt.s32.totalorder %v398, 0
    %v437 = vsub.s32 0, %v398
    %v438 = vsel %vm436, %v437, %v398
    %v439 = vshrl.u32 %v438, 4
    %v440 = vand.u32 %v438, 15
    %v441 = vsub.s32 0, %v440
    %v442 = vsel %vm436, %v441, %v440
    %vm443 = vcmp.lt.s32.totalorder %v399, 0
    %v444 = vsub.s32 0, %v399
    %v445 = vsel %vm443, %v444, %v399
    %v446 = vshrl.u32 %v445, 4
    %v447 = vand.u32 %v445, 15
    %v448 = vsub.s32 0, %v447
    %v449 = vsel %vm443, %v448, %v447
    %vm450 = vcmp.lt.s32.totalorder %v400, 0
    %v451 = vsub.s32 0, %v400
    %v452 = vsel %vm450, %v451, %v400
    %v453 = vshrl.u32 %v452, 4
    %v454 = vand.u32 %v452, 15
    %v455 = vsub.s32 0, %v454
    %v456 = vsel %vm450, %v455, %v454
    %vm457 = vcmp.lt.s32.totalorder %v401, 0
    %v458 = vsub.s32 0, %v401
    %v459 = vsel %vm457, %v458, %v401
    %v460 = vshrl.u32 %v459, 4
    %v461 = vand.u32 %v459, 15
    %v462 = vsub.s32 0, %v461
    %v463 = vsel %vm457, %v462, %v461
    %vm464 = vcmp.lt.s32.totalorder %v402, 0
    %v465 = vsub.s32 0, %v402
    %v466 = vsel %vm464, %v465, %v402
    %v467 = vshrl.u32 %v466, 4
    %v468 = vand.u32 %v466, 15
    %v469 = vsub.s32 0, %v468
    %v470 = vsel %vm464, %v469, %v468
    %vm471 = vcmp.lt.s32.totalorder %v403, 0
    %v472 = vsub.s32 0, %v403
    %v473 = vsel %vm471, %v472, %v403
    %v474 = vshrl.u32 %v473, 4
    %v475 = vand.u32 %v473, 15
    %v476 = vsub.s32 0, %v475
    %v477 = vsel %vm471, %v476, %v475
    %vm478 = vcmp.lt.s32.totalorder %v404, 0
    %v479 = vsub.s32 0, %v404
    %v480 = vsel %vm478, %v479, %v404
    %v481 = vshrl.u32 %v480, 4
    %v482 = vand.u32 %v480, 15
    %v483 = vsub.s32 0, %v482
    %v484 = vsel %vm478, %v483, %v482
    %vm485 = vcmp.lt.s32.totalorder %v405, 0
    %v486 = vsub.s32 0, %v405
    %v487 = vsel %vm485, %v486, %v405
    %v488 = vshrl.u32 %v487, 4
    %v489 = vand.u32 %v487, 15
    %v490 = vsub.s32 0, %v489
    %v491 = vsel %vm485, %v490, %v489
    %vm492 = vcmp.lt.s32.totalorder %v406, 0
    %v493 = vsub.s32 0, %v406
    %v494 = vsel %vm492, %v493, %v406
    %v495 = vshrl.u32 %v494, 4
    %v496 = vand.u32 %v494, 15
    %v497 = vsub.s32 0, %v496
    %v498 = vsel %vm492, %v497, %v496
    %vm499 = vcmp.lt.s32.totalorder %v407, 0
    %v500 = vsub.s32 0, %v407
    %v501 = vsel %vm499, %v500, %v407
    %v502 = vshrl.u32 %v501, 4
    %v503 = vand.u32 %v501, 15
    %v504 = vsub.s32 0, %v503
    %v505 = vsel %vm499, %v504, %v503
    %vm506 = vcmp.lt.s32.totalorder %v408, 0
    %v507 = vsub.s32 0, %v408
    %v508 = vsel %vm506, %v507, %v408
    %v509 = vshrl.u32 %v508, 4
    %v510 = vand.u32 %v508, 15
    %v511 = vsub.s32 0, %v510
    %v512 = vsel %vm506, %v511, %v510
    %vm513 = vcmp.lt.s32.totalorder %v409, 0
    %v514 = vsub.s32 0, %v409
    %v515 = vsel %vm513, %v514, %v409
    %v516 = vshrl.u32 %v515, 4
    %v517 = vand.u32 %v515, 15
    %v518 = vsub.s32 0, %v517
    %v519 = vsel %vm513, %v518, %v517
    %vm520 = vcmp.lt.s32.totalorder %v410, 0
    %v521 = vsub.s32 0, %v410
    %v522 = vsel %vm520, %v521, %v410
    %v523 = vshrl.u32 %v522, 4
    %v524 = vand.u32 %v522, 15
    %v525 = vsub.s32 0, %v524
    %v526 = vsel %vm520, %v525, %v524
    %vm527 = vcmp.lt.s32.totalorder %v411, 0
    %v528 = vsub.s32 0, %v411
    %v529 = vsel %vm527, %v528, %v411
    %v530 = vshrl.u32 %v529, 4
    %v531 = vand.u32 %v529, 15
    %v532 = vsub.s32 0, %v531
    %v533 = vsel %vm527, %v532, %v531
    %vm534 = vcmp.lt.s32.totalorder %v412, 0
    %v535 = vsub.s32 0, %v412
    %v536 = vsel %vm534, %v535, %v412
    %v537 = vshrl.u32 %v536, 4
    %v538 = vand.u32 %v536, 15
    %v539 = vsub.s32 0, %v538
    %v540 = vsel %vm534, %v539, %v538
    %vm541 = vcmp.lt.s32.totalorder %v413, 0
    %v542 = vsub.s32 0, %v413
    %v543 = vsel %vm541, %v542, %v413
    %v544 = vshrl.u32 %v543, 4
    %v545 = vand.u32 %v543, 15
    %v546 = vsub.s32 0, %v545
    %v547 = vsel %vm541, %v546, %v545
    %vm548 = vcmp.lt.s32.totalorder %v414, 0
    %v549 = vsub.s32 0, %v414
    %v550 = vsel %vm548, %v549, %v414
    %v551 = vshrl.u32 %v550, 4
    %v552 = vand.u32 %v550, 15
    %v553 = vsub.s32 0, %v552
    %v554 = vsel %vm548, %v553, %v552
    %vm555 = vcmp.lt.s32.totalorder %v415, 0
    %v556 = vsub.s32 0, %v415
    %v557 = vsel %vm555, %v556, %v415
    %v558 = vshrl.u32 %v557, 4
    %v559 = vand.u32 %v557, 15
    %v560 = vsub.s32 0, %v559
    %v561 = vsel %vm555, %v560, %v559
    %vm562 = vcmp.lt.s32.totalorder %v416, 0
    %v563 = vsub.s32 0, %v416
    %v564 = vsel %vm562, %v563, %v416
    %v565 = vshrl.u32 %v564, 4
    %v566 = vand.u32 %v564, 15
    %v567 = vsub.s32 0, %v566
    %v568 = vsel %vm562, %v567, %v566
    %vm569 = vcmp.lt.s32.totalorder %v417, 0
    %v570 = vsub.s32 0, %v417
    %v571 = vsel %vm569, %v570, %v417
    %v572 = vshrl.u32 %v571, 4
    %v573 = vand.u32 %v571, 15
    %v574 = vsub.s32 0, %v573
    %v575 = vsel %vm569, %v574, %v573
    %vm576 = vcmp.lt.s32.totalorder %v418, 0
    %v577 = vsub.s32 0, %v418
    %v578 = vsel %vm576, %v577, %v418
    %v579 = vshrl.u32 %v578, 4
    %v580 = vand.u32 %v578, 15
    %v581 = vsub.s32 0, %v580
    %v582 = vsel %vm576, %v581, %v580
    %vm583 = vcmp.lt.s32.totalorder %v419, 0
    %v584 = vsub.s32 0, %v419
    %v585 = vsel %vm583, %v584, %v419
    %v586 = vshrl.u32 %v585, 4
    %v587 = vand.u32 %v585, 15
    %v588 = vsub.s32 0, %v587
    %v589 = vsel %vm583, %v588, %v587
    %vm590 = vcmp.lt.s32.totalorder %v420, 0
    %v591 = vsub.s32 0, %v420
    %v592 = vsel %vm590, %v591, %v420
    %v593 = vshrl.u32 %v592, 4
    %v594 = vand.u32 %v592, 15
    %v595 = vsub.s32 0, %v594
    %v596 = vsel %vm590, %v595, %v594
    %vm597 = vcmp.lt.s32.totalorder %v421, 0
    %v598 = vsub.s32 0, %v421
    %v599 = vsel %vm597, %v598, %v421
    %v600 = vshrl.u32 %v599, 4
    %v601 = vand.u32 %v599, 15
    %v602 = vsub.s32 0, %v601
    %v603 = vsel %vm597, %v602, %v601
    %vm604 = vcmp.lt.s32.totalorder %v422, 0
    %v605 = vsub.s32 0, %v422
    %v606 = vsel %vm604, %v605, %v422
    %v607 = vshrl.u32 %v606, 4
    %v608 = vand.u32 %v606, 15
    %v609 = vsub.s32 0, %v608
    %v610 = vsel %vm604, %v609, %v608
    %vm611 = vcmp.lt.s32.totalorder %v423, 0
    %v612 = vsub.s32 0, %v423
    %v613 = vsel %vm611, %v612, %v423
    %v614 = vshrl.u32 %v613, 4
    %v615 = vand.u32 %v613, 15
    %v616 = vsub.s32 0, %v615
    %v617 = vsel %vm611, %v616, %v615
    %vm618 = vcmp.lt.s32.totalorder %v424, 0
    %v619 = vsub.s32 0, %v424
    %v620 = vsel %vm618, %v619, %v424
    %v621 = vshrl.u32 %v620, 4
    %v622 = vand.u32 %v620, 15
    %v623 = vsub.s32 0, %v622
    %v624 = vsel %vm618, %v623, %v622
    %vm625 = vcmp.lt.s32.totalorder %v425, 0
    %v626 = vsub.s32 0, %v425
    %v627 = vsel %vm625, %v626, %v425
    %v628 = vshrl.u32 %v627, 4
    %v629 = vand.u32 %v627, 15
    %v630 = vsub.s32 0, %v629
    %v631 = vsel %vm625, %v630, %v629
    %vm632 = vcmp.lt.s32.totalorder %v426, 0
    %v633 = vsub.s32 0, %v426
    %v634 = vsel %vm632, %v633, %v426
    %v635 = vshrl.u32 %v634, 4
    %v636 = vand.u32 %v634, 15
    %v637 = vsub.s32 0, %v636
    %v638 = vsel %vm632, %v637, %v636
    %vm639 = vcmp.lt.s32.totalorder %v427, 0
    %v640 = vsub.s32 0, %v427
    %v641 = vsel %vm639, %v640, %v427
    %v642 = vshrl.u32 %v641, 4
    %v643 = vand.u32 %v641, 15
    %v644 = vsub.s32 0, %v643
    %v645 = vsel %vm639, %v644, %v643
    %vm646 = vcmp.lt.s32.totalorder %v428, 0
    %v647 = vsub.s32 0, %v428
    %v648 = vsel %vm646, %v647, %v428
    %v649 = vshrl.u32 %v648, 4
    %v650 = vand.u32 %v648, 15
    %v651 = vsub.s32 0, %v650
    %v652 = vsel %vm646, %v651, %v650
    %vm653 = vcmp.ne.s32.totalorder %v435, 0
    %vm654 = vcmp.ne.s32.totalorder %v442, 0
    %vm655 = vcmp.ne.s32.totalorder %v449, 0
    %vm656 = vcmp.ne.s32.totalorder %v456, 0
    %vm657 = vcmp.ne.s32.totalorder %v463, 0
    %vm658 = vcmp.ne.s32.totalorder %v470, 0
    %vm659 = vcmp.ne.s32.totalorder %v477, 0
    %vm660 = vcmp.ne.s32.totalorder %v484, 0
    %vm661 = vcmp.ne.s32.totalorder %v491, 0
    %vm662 = vcmp.ne.s32.totalorder %v498, 0
    %vm663 = vcmp.ne.s32.totalorder %v505, 0
    %vm664 = vcmp.ne.s32.totalorder %v512, 0
    %vm665 = vcmp.ne.s32.totalorder %v519, 0
    %vm666 = vcmp.ne.s32.totalorder %v526, 0
    %vm667 = vcmp.ne.s32.totalorder %v533, 0
    %vm668 = vcmp.ne.s32.totalorder %v540, 0
    %vm669 = vcmp.ne.s32.totalorder %v547, 0
    %vm670 = vcmp.ne.s32.totalorder %v554, 0
    %vm671 = vcmp.ne.s32.totalorder %v561, 0
    %vm672 = vcmp.ne.s32.totalorder %v568, 0
    %vm673 = vcmp.ne.s32.totalorder %v575, 0
    %vm674 = vcmp.ne.s32.totalorder %v582, 0
    %vm675 = vcmp.ne.s32.totalorder %v589, 0
    %vm676 = vcmp.ne.s32.totalorder %v596, 0
    %vm677 = vcmp.ne.s32.totalorder %v603, 0
    %vm678 = vcmp.ne.s32.totalorder %v610, 0
    %vm679 = vcmp.ne.s32.totalorder %v617, 0
    %vm680 = vcmp.ne.s32.totalorder %v624, 0
    %vm681 = vcmp.ne.s32.totalorder %v631, 0
    %vm682 = vcmp.ne.s32.totalorder %v638, 0
    %vm683 = vcmp.ne.s32.totalorder %v645, 0
    %vm684 = vcmp.ne.s32.totalorder %v652, 0
    %vm685 = vcmp.lt.s32.totalorder %v435, 0
    %vm686 = vcmp.lt.s32.totalorder %v442, 0
    %vm687 = vcmp.lt.s32.totalorder %v449, 0
    %vm688 = vcmp.lt.s32.totalorder %v456, 0
    %vm689 = vcmp.lt.s32.totalorder %v463, 0
    %vm690 = vcmp.lt.s32.totalorder %v470, 0
    %vm691 = vcmp.lt.s32.totalorder %v477, 0
    %vm692 = vcmp.lt.s32.totalorder %v484, 0
    %vm693 = vcmp.lt.s32.totalorder %v491, 0
    %vm694 = vcmp.lt.s32.totalorder %v498, 0
    %vm695 = vcmp.lt.s32.totalorder %v505, 0
    %vm696 = vcmp.lt.s32.totalorder %v512, 0
    %vm697 = vcmp.lt.s32.totalorder %v519, 0
    %vm698 = vcmp.lt.s32.totalorder %v526, 0
    %vm699 = vcmp.lt.s32.totalorder %v533, 0
    %vm700 = vcmp.lt.s32.totalorder %v540, 0
    %vm701 = vcmp.lt.s32.totalorder %v547, 0
    %vm702 = vcmp.lt.s32.totalorder %v554, 0
    %vm703 = vcmp.lt.s32.totalorder %v561, 0
    %vm704 = vcmp.lt.s32.totalorder %v568, 0
    %vm705 = vcmp.lt.s32.totalorder %v575, 0
    %vm706 = vcmp.lt.s32.totalorder %v582, 0
    %vm707 = vcmp.lt.s32.totalorder %v589, 0
    %vm708 = vcmp.lt.s32.totalorder %v596, 0
    %vm709 = vcmp.lt.s32.totalorder %v603, 0
    %vm710 = vcmp.lt.s32.totalorder %v610, 0
    %vm711 = vcmp.lt.s32.totalorder %v617, 0
    %vm712 = vcmp.lt.s32.totalorder %v624, 0
    %vm713 = vcmp.lt.s32.totalorder %v631, 0
    %vm714 = vcmp.lt.s32.totalorder %v638, 0
    %vm715 = vcmp.lt.s32.totalorder %v645, 0
    %vm716 = vcmp.lt.s32.totalorder %v652, 0
    %vm717 = vmand %vm685, %vm653
    %vm718 = vmand %vm686, %vm654
    %vm719 = vmand %vm687, %vm655
    %vm720 = vmand %vm688, %vm656
    %vm721 = vmand %vm689, %vm657
    %vm722 = vmand %vm690, %vm658
    %vm723 = vmand %vm691, %vm659
    %vm724 = vmand %vm692, %vm660
    %vm725 = vmand %vm693, %vm661
    %vm726 = vmand %vm694, %vm662
    %vm727 = vmand %vm695, %vm663
    %vm728 = vmand %vm696, %vm664
    %vm729 = vmand %vm697, %vm665
    %vm730 = vmand %vm698, %vm666
    %vm731 = vmand %vm699, %vm667
    %vm732 = vmand %vm700, %vm668
    %vm733 = vmand %vm701, %vm669
    %vm734 = vmand %vm702, %vm670
    %vm735 = vmand %vm703, %vm671
    %vm736 = vmand %vm704, %vm672
    %vm737 = vmand %vm705, %vm673
    %vm738 = vmand %vm706, %vm674
    %vm739 = vmand %vm707, %vm675
    %vm740 = vmand %vm708, %vm676
    %vm741 = vmand %vm709, %vm677
    %vm742 = vmand %vm710, %vm678
    %vm743 = vmand %vm711, %vm679
    %vm744 = vmand %vm712, %vm680
    %vm745 = vmand %vm713, %vm681
    %vm746 = vmand %vm714, %vm682
    %vm747 = vmand %vm715, %vm683
    %vm748 = vmand %vm716, %vm684
    %v749 = vadd.s32 %v435, 16
    %v750 = vadd.s32 %v442, 16
    %v751 = vadd.s32 %v449, 16
    %v752 = vadd.s32 %v456, 16
    %v753 = vadd.s32 %v463, 16
    %v754 = vadd.s32 %v470, 16
    %v755 = vadd.s32 %v477, 16
    %v756 = vadd.s32 %v484, 16
    %v757 = vadd.s32 %v491, 16
    %v758 = vadd.s32 %v498, 16
    %v759 = vadd.s32 %v505, 16
    %v760 = vadd.s32 %v512, 16
    %v761 = vadd.s32 %v519, 16
    %v762 = vadd.s32 %v526, 16
    %v763 = vadd.s32 %v533, 16
    %v764 = vadd.s32 %v540, 16
    %v765 = vadd.s32 %v547, 16
    %v766 = vadd.s32 %v554, 16
    %v767 = vadd.s32 %v561, 16
    %v768 = vadd.s32 %v568, 16
    %v769 = vadd.s32 %v575, 16
    %v770 = vadd.s32 %v582, 16
    %v771 = vadd.s32 %v589, 16
    %v772 = vadd.s32 %v596, 16
    %v773 = vadd.s32 %v603, 16
    %v774 = vadd.s32 %v610, 16
    %v775 = vadd.s32 %v617, 16
    %v776 = vadd.s32 %v624, 16
    %v777 = vadd.s32 %v631, 16
    %v778 = vadd.s32 %v638, 16
    %v779 = vadd.s32 %v645, 16
    %v780 = vadd.s32 %v652, 16
    %v781 = vsel %vm717, %v749, %v435
    %v782 = vsel %vm718, %v750, %v442
    %v783 = vsel %vm719, %v751, %v449
    %v784 = vsel %vm720, %v752, %v456
    %v785 = vsel %vm721, %v753, %v463
    %v786 = vsel %vm722, %v754, %v470
    %v787 = vsel %vm723, %v755, %v477
    %v788 = vsel %vm724, %v756, %v484
    %v789 = vsel %vm725, %v757, %v491
    %v790 = vsel %vm726, %v758, %v498
    %v791 = vsel %vm727, %v759, %v505
    %v792 = vsel %vm728, %v760, %v512
    %v793 = vsel %vm729, %v761, %v519
    %v794 = vsel %vm730, %v762, %v526
    %v795 = vsel %vm731, %v763, %v533
    %v796 = vsel %vm732, %v764, %v540
    %v797 = vsel %vm733, %v765, %v547
    %v798 = vsel %vm734, %v766, %v554
    %v799 = vsel %vm735, %v767, %v561
    %v800 = vsel %vm736, %v768, %v568
    %v801 = vsel %vm737, %v769, %v575
    %v802 = vsel %vm738, %v770, %v582
    %v803 = vsel %vm739, %v771, %v589
    %v804 = vsel %vm740, %v772, %v596
    %v805 = vsel %vm741, %v773, %v603
    %v806 = vsel %vm742, %v774, %v610
    %v807 = vsel %vm743, %v775, %v617
    %v808 = vsel %vm744, %v776, %v624
    %v809 = vsel %vm745, %v777, %v631
    %v810 = vsel %vm746, %v778, %v638
    %v811 = vsel %vm747, %v779, %v645
    %v812 = vsel %vm748, %v780, %v652
    %vm845 = vcmask 1040384
    %v846 = vrot.slane %v300, 7
    %v847 = vrot.slane %v301, 7
    %v848 = vsel %vm845, %v846, %v847
    %v849 = vrot.slane %v302, 7
    %v850 = vsel %vm845, %v847, %v849
    %v851 = vrot.slane %v303, 7
    %v852 = vsel %vm845, %v849, %v851
    %v853 = vrot.slane %v304, 7
    %v854 = vsel %vm845, %v851, %v853
    %v855 = vrot.slane %v305, 7
    %v856 = vsel %vm845, %v853, %v855
    %v857 = vrot.slane %v306, 7
    %v858 = vsel %vm845, %v855, %v857
    %v859 = vrot.slane %v307, 7
    %v860 = vsel %vm845, %v857, %v859
    %v861 = vrot.slane %v308, 7
    %v862 = vsel %vm845, %v859, %v861
    %v863 = vrot.slane %v309, 7
    %v864 = vsel %vm845, %v861, %v863
    %v865 = vrot.slane %v310, 7
    %v866 = vsel %vm845, %v863, %v865
    %v867 = vrot.slane %v311, 7
    %v868 = vsel %vm845, %v865, %v867
    %v869 = vrot.slane %v312, 7
    %v870 = vsel %vm845, %v867, %v869
    %v871 = vrot.slane %v313, 7
    %v872 = vsel %vm845, %v869, %v871
    %v873 = vrot.slane %v314, 7
    %v874 = vsel %vm845, %v871, %v873
    %v875 = vrot.slane %v315, 7
    %v876 = vsel %vm845, %v873, %v875
    %v877 = vrot.slane %v316, 7
    %v878 = vsel %vm845, %v875, %v877
    %v879 = vrot.slane %v317, 7
    %v880 = vsel %vm845, %v877, %v879
    %v881 = vrot.slane %v318, 7
    %v882 = vsel %vm845, %v879, %v881
    %v883 = vrot.slane %v319, 7
    %v884 = vsel %vm845, %v881, %v883
    %v885 = vrot.slane %v320, 7
    %v886 = vsel %vm845, %v883, %v885
    %v887 = vrot.slane %v321, 7
    %v888 = vsel %vm845, %v885, %v887
    %v889 = vrot.slane %v322, 7
    %v890 = vsel %vm845, %v887, %v889
    %v891 = vrot.slane %v323, 7
    %v892 = vsel %vm845, %v889, %v891
    %v893 = vrot.slane %v324, 7
    %v894 = vsel %vm845, %v891, %v893
    %v895 = vrot.slane %v325, 7
    %v896 = vsel %vm845, %v893, %v895
    %v897 = vrot.slane %v326, 7
    %v898 = vsel %vm845, %v895, %v897
    %v899 = vrot.slane %v327, 7
    %v900 = vsel %vm845, %v897, %v899
    %v901 = vrot.slane %v328, 7
    %v902 = vsel %vm845, %v899, %v901
    %v903 = vrot.slane %v329, 7
    %v904 = vsel %vm845, %v901, %v903
    %v905 = vrot.slane %v330, 7
    %v906 = vsel %vm845, %v903, %v905
    %v907 = vrot.slane %v331, 7
    %v908 = vsel %vm845, %v905, %v907
    %v941 = vsel %vm845, 0.0, %v846
    %vm942 = vcmp.ne.s32.totalorder %v781, 0
    %vm943 = vcmp.ne.s32.totalorder %v782, 0
    %vm944 = vcmp.ne.s32.totalorder %v783, 0
    %vm945 = vcmp.ne.s32.totalorder %v784, 0
    %vm946 = vcmp.ne.s32.totalorder %v785, 0
    %vm947 = vcmp.ne.s32.totalorder %v786, 0
    %vm948 = vcmp.ne.s32.totalorder %v787, 0
    %vm949 = vcmp.ne.s32.totalorder %v788, 0
    %vm950 = vcmp.ne.s32.totalorder %v789, 0
    %vm951 = vcmp.ne.s32.totalorder %v790, 0
    %vm952 = vcmp.ne.s32.totalorder %v791, 0
    %vm953 = vcmp.ne.s32.totalorder %v792, 0
    %vm954 = vcmp.ne.s32.totalorder %v793, 0
    %vm955 = vcmp.ne.s32.totalorder %v794, 0
    %vm956 = vcmp.ne.s32.totalorder %v795, 0
    %vm957 = vcmp.ne.s32.totalorder %v796, 0
    %vm958 = vcmp.ne.s32.totalorder %v797, 0
    %vm959 = vcmp.ne.s32.totalorder %v798, 0
    %vm960 = vcmp.ne.s32.totalorder %v799, 0
    %vm961 = vcmp.ne.s32.totalorder %v800, 0
    %vm962 = vcmp.ne.s32.totalorder %v801, 0
    %vm963 = vcmp.ne.s32.totalorder %v802, 0
    %vm964 = vcmp.ne.s32.totalorder %v803, 0
    %vm965 = vcmp.ne.s32.totalorder %v804, 0
    %vm966 = vcmp.ne.s32.totalorder %v805, 0
    %vm967 = vcmp.ne.s32.totalorder %v806, 0
    %vm968 = vcmp.ne.s32.totalorder %v807, 0
    %vm969 = vcmp.ne.s32.totalorder %v808, 0
    %vm970 = vcmp.ne.s32.totalorder %v809, 0
    %vm971 = vcmp.ne.s32.totalorder %v810, 0
    %vm972 = vcmp.ne.s32.totalorder %v811, 0
    %vm973 = vcmp.ne.s32.totalorder %v812, 0
    %v974 = vsel %vm942, %v941, 0.0
    %v975 = vsel %vm943, %v848, 0.0
    %v976 = vsel %vm944, %v850, 0.0
    %v977 = vsel %vm945, %v852, 0.0
    %v978 = vsel %vm946, %v854, 0.0
    %v979 = vsel %vm947, %v856, 0.0
    %v980 = vsel %vm948, %v858, 0.0
    %v981 = vsel %vm949, %v860, 0.0
    %v982 = vsel %vm950, %v862, 0.0
    %v983 = vsel %vm951, %v864, 0.0
    %v984 = vsel %vm952, %v866, 0.0
    %v985 = vsel %vm953, %v868, 0.0
    %v986 = vsel %vm954, %v870, 0.0
    %v987 = vsel %vm955, %v872, 0.0
    %v988 = vsel %vm956, %v874, 0.0
    %v989 = vsel %vm957, %v876, 0.0
    %v990 = vsel %vm958, %v878, 0.0
    %v991 = vsel %vm959, %v880, 0.0
    %v992 = vsel %vm960, %v882, 0.0
    %v993 = vsel %vm961, %v884, 0.0
    %v994 = vsel %vm962, %v886, 0.0
    %v995 = vsel %vm963, %v888, 0.0
    %v996 = vsel %vm964, %v890, 0.0
    %v997 = vsel %vm965, %v892, 0.0
    %v998 = vsel %vm966, %v894, 0.0
    %v999 = vsel %vm967, %v896, 0.0
    %v1000 = vsel %vm968, %v898, 0.0
    %v1001 = vsel %vm969, %v900, 0.0
    %v1002 = vsel %vm970, %v902, 0.0
    %v1003 = vsel %vm971, %v904, 0.0
    %v1004 = vsel %vm972, %v906, 0.0
    %v1005 = vsel %vm973, %v908, 0.0
    %v1006 = vpack.c.bf16 %v974, %v974
    %v1007 = vpack.c.bf16 %v975, %v975
    %v1008 = vpack.c.bf16 %v976, %v976
    %v1009 = vpack.c.bf16 %v977, %v977
    %v1010 = vpack.c.bf16 %v978, %v978
    %v1011 = vpack.c.bf16 %v979, %v979
    %v1012 = vpack.c.bf16 %v980, %v980
    %v1013 = vpack.c.bf16 %v981, %v981
    %v1014 = vpack.c.bf16 %v982, %v982
    %v1015 = vpack.c.bf16 %v983, %v983
    %v1016 = vpack.c.bf16 %v984, %v984
    %v1017 = vpack.c.bf16 %v985, %v985
    %v1018 = vpack.c.bf16 %v986, %v986
    %v1019 = vpack.c.bf16 %v987, %v987
    %v1020 = vpack.c.bf16 %v988, %v988
    %v1021 = vpack.c.bf16 %v989, %v989
    %v1022 = vpack.c.bf16 %v990, %v990
    %v1023 = vpack.c.bf16 %v991, %v991
    %v1024 = vpack.c.bf16 %v992, %v992
    %v1025 = vpack.c.bf16 %v993, %v993
    %v1026 = vpack.c.bf16 %v994, %v994
    %v1027 = vpack.c.bf16 %v995, %v995
    %v1028 = vpack.c.bf16 %v996, %v996
    %v1029 = vpack.c.bf16 %v997, %v997
    %v1030 = vpack.c.bf16 %v998, %v998
    %v1031 = vpack.c.bf16 %v999, %v999
    %v1032 = vpack.c.bf16 %v1000, %v1000
    %v1033 = vpack.c.bf16 %v1001, %v1001
    %v1034 = vpack.c.bf16 %v1002, %v1002
    %v1035 = vpack.c.bf16 %v1003, %v1003
    %v1036 = vpack.c.bf16 %v1004, %v1004
    %v1037 = vpack.c.bf16 %v1005, %v1005
    %1038 = vst [vmem:[#allocation2 + $0x8] sm:$0xf] %v1006
    %1039 = vst [vmem:[#allocation2 + $0xc] sm:$0xf] %v1007
    %1040 = vst [vmem:[#allocation2 + $0x10] sm:$0xf] %v1008
    %1041 = vst [vmem:[#allocation2 + $0x14] sm:$0xf] %v1009
    %1042 = vst [vmem:[#allocation2 + $0x18] sm:$0xf] %v1010
    %1043 = vst [vmem:[#allocation2 + $0x1c] sm:$0xf] %v1011
    %1044 = vst [vmem:[#allocation2 + $0x20] sm:$0xf] %v1012
    %1045 = vst [vmem:[#allocation2 + $0x24] sm:$0xf] %v1013
    %1046 = vst [vmem:[#allocation2 + $0x28] sm:$0xf] %v1014
    %1047 = vst [vmem:[#allocation2 + $0x2c] sm:$0xf] %v1015
    %1048 = vst [vmem:[#allocation2 + $0x30] sm:$0xf] %v1016
    %1049 = vst [vmem:[#allocation2 + $0x34] sm:$0xf] %v1017
    %1050 = vst [vmem:[#allocation2 + $0x38] sm:$0xf] %v1018
    %1051 = vst [vmem:[#allocation2 + $0x3c] sm:$0xf] %v1019
    %1052 = vst [vmem:[#allocation2 + $0x40] sm:$0xf] %v1020
    %1053 = vst [vmem:[#allocation2 + $0x44] sm:$0xf] %v1021
    %1054 = vst [vmem:[#allocation2 + $0x48] sm:$0xf] %v1022
    %1055 = vst [vmem:[#allocation2 + $0x4c] sm:$0xf] %v1023
    %1056 = vst [vmem:[#allocation2 + $0x50] sm:$0xf] %v1024
    %1057 = vst [vmem:[#allocation2 + $0x54] sm:$0xf] %v1025
    %1058 = vst [vmem:[#allocation2 + $0x58] sm:$0xf] %v1026
    %1059 = vst [vmem:[#allocation2 + $0x5c] sm:$0xf] %v1027
    %1060 = vst [vmem:[#allocation2 + $0x60] sm:$0xf] %v1028
    %1061 = vst [vmem:[#allocation2 + $0x64] sm:$0xf] %v1029
    %1062 = vst [vmem:[#allocation2 + $0x68] sm:$0xf] %v1030
    %1063 = vst [vmem:[#allocation2 + $0x6c] sm:$0xf] %v1031
    %1064 = vst [vmem:[#allocation2 + $0x70] sm:$0xf] %v1032
    %1065 = vst [vmem:[#allocation2 + $0x74] sm:$0xf] %v1033
    %1066 = vst [vmem:[#allocation2 + $0x78] sm:$0xf] %v1034
    %1067 = vst [vmem:[#allocation2 + $0x7c] sm:$0xf] %v1035
    %1068 = vst [vmem:[#allocation2 + $0x80] sm:$0xf] %v1036
    %1069 = vst [vmem:[#allocation2 + $0x84] sm:$0xf] %v1037
    %vm1070 = vcmask 1046528
    %v1071 = vrot.slane %v300, 1
    %v1072 = vrot.slane %v301, 1
    %v1073 = vsel %vm1070, %v1071, %v1072
    %v1074 = vrot.slane %v302, 1
    %v1075 = vsel %vm1070, %v1072, %v1074
    %v1076 = vrot.slane %v303, 1
    %v1077 = vsel %vm1070, %v1074, %v1076
    %v1078 = vrot.slane %v304, 1
    %v1079 = vsel %vm1070, %v1076, %v1078
    %v1080 = vrot.slane %v305, 1
    %v1081 = vsel %vm1070, %v1078, %v1080
    %v1082 = vrot.slane %v306, 1
    %v1083 = vsel %vm1070, %v1080, %v1082
    %v1084 = vrot.slane %v307, 1
    %v1085 = vsel %vm1070, %v1082, %v1084
    %v1086 = vrot.slane %v308, 1
    %v1087 = vsel %vm1070, %v1084, %v1086
    %v1088 = vrot.slane %v309, 1
    %v1089 = vsel %vm1070, %v1086, %v1088
    %v1090 = vrot.slane %v310, 1
    %v1091 = vsel %vm1070, %v1088, %v1090
    %v1092 = vrot.slane %v311, 1
    %v1093 = vsel %vm1070, %v1090, %v1092
    %v1094 = vrot.slane %v312, 1
    %v1095 = vsel %vm1070, %v1092, %v1094
    %v1096 = vrot.slane %v313, 1
    %v1097 = vsel %vm1070, %v1094, %v1096
    %v1098 = vrot.slane %v314, 1
    %v1099 = vsel %vm1070, %v1096, %v1098
    %v1100 = vrot.slane %v315, 1
    %v1101 = vsel %vm1070, %v1098, %v1100
    %v1102 = vrot.slane %v316, 1
    %v1103 = vsel %vm1070, %v1100, %v1102
    %v1104 = vrot.slane %v317, 1
    %v1105 = vsel %vm1070, %v1102, %v1104
    %v1106 = vrot.slane %v318, 1
    %v1107 = vsel %vm1070, %v1104, %v1106
    %v1108 = vrot.slane %v319, 1
    %v1109 = vsel %vm1070, %v1106, %v1108
    %v1110 = vrot.slane %v320, 1
    %v1111 = vsel %vm1070, %v1108, %v1110
    %v1112 = vrot.slane %v321, 1
    %v1113 = vsel %vm1070, %v1110, %v1112
    %v1114 = vrot.slane %v322, 1
    %v1115 = vsel %vm1070, %v1112, %v1114
    %v1116 = vrot.slane %v323, 1
    %v1117 = vsel %vm1070, %v1114, %v1116
    %v1118 = vrot.slane %v324, 1
    %v1119 = vsel %vm1070, %v1116, %v1118
    %v1120 = vrot.slane %v325, 1
    %v1121 = vsel %vm1070, %v1118, %v1120
    %v1122 = vrot.slane %v326, 1
    %v1123 = vsel %vm1070, %v1120, %v1122
    %v1124 = vrot.slane %v327, 1
    %v1125 = vsel %vm1070, %v1122, %v1124
    %v1126 = vrot.slane %v328, 1
    %v1127 = vsel %vm1070, %v1124, %v1126
    %v1128 = vrot.slane %v329, 1
    %v1129 = vsel %vm1070, %v1126, %v1128
    %v1130 = vrot.slane %v330, 1
    %v1131 = vsel %vm1070, %v1128, %v1130
    %v1132 = vrot.slane %v331, 1
    %v1133 = vsel %vm1070, %v1130, %v1132
    %v1166 = vsel %vm1070, %v1132, 0.0
    %vm1167 = vcmp.ne.s32.totalorder %v781, 15
    %vm1168 = vcmp.ne.s32.totalorder %v782, 15
    %vm1169 = vcmp.ne.s32.totalorder %v783, 15
    %vm1170 = vcmp.ne.s32.totalorder %v784, 15
    %vm1171 = vcmp.ne.s32.totalorder %v785, 15
    %vm1172 = vcmp.ne.s32.totalorder %v786, 15
    %vm1173 = vcmp.ne.s32.totalorder %v787, 15
    %vm1174 = vcmp.ne.s32.totalorder %v788, 15
    %vm1175 = vcmp.ne.s32.totalorder %v789, 15
    %vm1176 = vcmp.ne.s32.totalorder %v790, 15
    %vm1177 = vcmp.ne.s32.totalorder %v791, 15
    %vm1178 = vcmp.ne.s32.totalorder %v792, 15
    %vm1179 = vcmp.ne.s32.totalorder %v793, 15
    %vm1180 = vcmp.ne.s32.totalorder %v794, 15
    %vm1181 = vcmp.ne.s32.totalorder %v795, 15
    %vm1182 = vcmp.ne.s32.totalorder %v796, 15
    %vm1183 = vcmp.ne.s32.totalorder %v797, 15
    %vm1184 = vcmp.ne.s32.totalorder %v798, 15
    %vm1185 = vcmp.ne.s32.totalorder %v799, 15
    %vm1186 = vcmp.ne.s32.totalorder %v800, 15
    %vm1187 = vcmp.ne.s32.totalorder %v801, 15
    %vm1188 = vcmp.ne.s32.totalorder %v802, 15
    %vm1189 = vcmp.ne.s32.totalorder %v803, 15
    %vm1190 = vcmp.ne.s32.totalorder %v804, 15
    %vm1191 = vcmp.ne.s32.totalorder %v805, 15
    %vm1192 = vcmp.ne.s32.totalorder %v806, 15
    %vm1193 = vcmp.ne.s32.totalorder %v807, 15
    %vm1194 = vcmp.ne.s32.totalorder %v808, 15
    %vm1195 = vcmp.ne.s32.totalorder %v809, 15
    %vm1196 = vcmp.ne.s32.totalorder %v810, 15
    %vm1197 = vcmp.ne.s32.totalorder %v811, 15
    %vm1198 = vcmp.ne.s32.totalorder %v812, 15
    %v1199 = vsel %vm1167, %v1073, 0.0
    %v1200 = vsel %vm1168, %v1075, 0.0
    %v1201 = vsel %vm1169, %v1077, 0.0
    %v1202 = vsel %vm1170, %v1079, 0.0
    %v1203 = vsel %vm1171, %v1081, 0.0
    %v1204 = vsel %vm1172, %v1083, 0.0
    %v1205 = vsel %vm1173, %v1085, 0.0
    %v1206 = vsel %vm1174, %v1087, 0.0
    %v1207 = vsel %vm1175, %v1089, 0.0
    %v1208 = vsel %vm1176, %v1091, 0.0
    %v1209 = vsel %vm1177, %v1093, 0.0
    %v1210 = vsel %vm1178, %v1095, 0.0
    %v1211 = vsel %vm1179, %v1097, 0.0
    %v1212 = vsel %vm1180, %v1099, 0.0
    %v1213 = vsel %vm1181, %v1101, 0.0
    %v1214 = vsel %vm1182, %v1103, 0.0
    %v1215 = vsel %vm1183, %v1105, 0.0
    %v1216 = vsel %vm1184, %v1107, 0.0
    %v1217 = vsel %vm1185, %v1109, 0.0
    %v1218 = vsel %vm1186, %v1111, 0.0
    %v1219 = vsel %vm1187, %v1113, 0.0
    %v1220 = vsel %vm1188, %v1115, 0.0
    %v1221 = vsel %vm1189, %v1117, 0.0
    %v1222 = vsel %vm1190, %v1119, 0.0
    %v1223 = vsel %vm1191, %v1121, 0.0
    %v1224 = vsel %vm1192, %v1123, 0.0
    %v1225 = vsel %vm1193, %v1125, 0.0
    %v1226 = vsel %vm1194, %v1127, 0.0
    %v1227 = vsel %vm1195, %v1129, 0.0
    %v1228 = vsel %vm1196, %v1131, 0.0
    %v1229 = vsel %vm1197, %v1133, 0.0
    %v1230 = vsel %vm1198, %v1166, 0.0
    %v1231 = vpack.c.bf16 %v1199, %v1199
    %v1232 = vpack.c.bf16 %v1200, %v1200
    %v1233 = vpack.c.bf16 %v1201, %v1201
    %v1234 = vpack.c.bf16 %v1202, %v1202
    %v1235 = vpack.c.bf16 %v1203, %v1203
    %v1236 = vpack.c.bf16 %v1204, %v1204
    %v1237 = vpack.c.bf16 %v1205, %v1205
    %v1238 = vpack.c.bf16 %v1206, %v1206
    %v1239 = vpack.c.bf16 %v1207, %v1207
    %v1240 = vpack.c.bf16 %v1208, %v1208
    %v1241 = vpack.c.bf16 %v1209, %v1209
    %v1242 = vpack.c.bf16 %v1210, %v1210
    %v1243 = vpack.c.bf16 %v1211, %v1211
    %v1244 = vpack.c.bf16 %v1212, %v1212
    %v1245 = vpack.c.bf16 %v1213, %v1213
    %v1246 = vpack.c.bf16 %v1214, %v1214
    %v1247 = vpack.c.bf16 %v1215, %v1215
    %v1248 = vpack.c.bf16 %v1216, %v1216
    %v1249 = vpack.c.bf16 %v1217, %v1217
    %v1250 = vpack.c.bf16 %v1218, %v1218
    %v1251 = vpack.c.bf16 %v1219, %v1219
    %v1252 = vpack.c.bf16 %v1220, %v1220
    %v1253 = vpack.c.bf16 %v1221, %v1221
    %v1254 = vpack.c.bf16 %v1222, %v1222
    %v1255 = vpack.c.bf16 %v1223, %v1223
    %v1256 = vpack.c.bf16 %v1224, %v1224
    %v1257 = vpack.c.bf16 %v1225, %v1225
    %v1258 = vpack.c.bf16 %v1226, %v1226
    %v1259 = vpack.c.bf16 %v1227, %v1227
    %v1260 = vpack.c.bf16 %v1228, %v1228
    %v1261 = vpack.c.bf16 %v1229, %v1229
    %v1262 = vpack.c.bf16 %v1230, %v1230
    %1263 = vst [vmem:[%s78 + $0x8] sm:$0xf] %v1231
    %1264 = vst [vmem:[%s78 + $0xc] sm:$0xf] %v1232
    %1265 = vst [vmem:[%s78 + $0x10] sm:$0xf] %v1233
    %1266 = vst [vmem:[%s78 + $0x14] sm:$0xf] %v1234
    %1267 = vst [vmem:[%s78 + $0x18] sm:$0xf] %v1235
    %1268 = vst [vmem:[%s78 + $0x1c] sm:$0xf] %v1236
    %1269 = vst [vmem:[%s78 + $0x20] sm:$0xf] %v1237
    %1270 = vst [vmem:[%s78 + $0x24] sm:$0xf] %v1238
    %1271 = vst [vmem:[%s78 + $0x28] sm:$0xf] %v1239
    %1272 = vst [vmem:[%s78 + $0x2c] sm:$0xf] %v1240
    %1273 = vst [vmem:[%s78 + $0x30] sm:$0xf] %v1241
    %1274 = vst [vmem:[%s78 + $0x34] sm:$0xf] %v1242
    %1275 = vst [vmem:[%s78 + $0x38] sm:$0xf] %v1243
    %1276 = vst [vmem:[%s78 + $0x3c] sm:$0xf] %v1244
    %1277 = vst [vmem:[%s78 + $0x40] sm:$0xf] %v1245
    %1278 = vst [vmem:[%s78 + $0x44] sm:$0xf] %v1246
    %1279 = vst [vmem:[%s78 + $0x48] sm:$0xf] %v1247
    %1280 = vst [vmem:[%s78 + $0x4c] sm:$0xf] %v1248
    %1281 = vst [vmem:[%s78 + $0x50] sm:$0xf] %v1249
    %1282 = vst [vmem:[%s78 + $0x54] sm:$0xf] %v1250
    %1283 = vst [vmem:[%s78 + $0x58] sm:$0xf] %v1251
    %1284 = vst [vmem:[%s78 + $0x5c] sm:$0xf] %v1252
    %1285 = vst [vmem:[%s78 + $0x60] sm:$0xf] %v1253
    %1286 = vst [vmem:[%s78 + $0x64] sm:$0xf] %v1254
    %1287 = vst [vmem:[%s78 + $0x68] sm:$0xf] %v1255
    %1288 = vst [vmem:[%s78 + $0x6c] sm:$0xf] %v1256
    %1289 = vst [vmem:[%s78 + $0x70] sm:$0xf] %v1257
    %1290 = vst [vmem:[%s78 + $0x74] sm:$0xf] %v1258
    %1291 = vst [vmem:[%s78 + $0x78] sm:$0xf] %v1259
    %1292 = vst [vmem:[%s78 + $0x7c] sm:$0xf] %v1260
    %1293 = vst [vmem:[%s78 + $0x80] sm:$0xf] %v1261
    %1294 = vst [vmem:[%s78 + $0x84] sm:$0xf] %v1262
    %v1295 = vld [vmem:[#allocation2] sm:$0xf]
    %v1296 = vld [vmem:[#allocation2 + $0x4] sm:$0xf]
    %v1297 = vld [vmem:[#allocation2 + $0x8] sm:$0xf]
    %v1298 = vld [vmem:[#allocation2 + $0xc] sm:$0xf]
    %v1299 = vld [vmem:[#allocation2 + $0x10] sm:$0xf]
    %v1300 = vld [vmem:[#allocation2 + $0x14] sm:$0xf]
    %v1301 = vld [vmem:[#allocation2 + $0x18] sm:$0xf]
    %v1302 = vld [vmem:[#allocation2 + $0x1c] sm:$0xf]
    %v1303 = vld [vmem:[#allocation2 + $0x20] sm:$0xf]
    %v1304 = vld [vmem:[#allocation2 + $0x24] sm:$0xf]
    %v1305 = vld [vmem:[#allocation2 + $0x28] sm:$0xf]
    %v1306 = vld [vmem:[#allocation2 + $0x2c] sm:$0xf]
    %v1307 = vld [vmem:[#allocation2 + $0x30] sm:$0xf]
    %v1308 = vld [vmem:[#allocation2 + $0x34] sm:$0xf]
    %v1309 = vld [vmem:[#allocation2 + $0x38] sm:$0xf]
    %v1310 = vld [vmem:[#allocation2 + $0x3c] sm:$0xf]
    %v1311 = vld [vmem:[#allocation2 + $0x40] sm:$0xf]
    %v1312 = vld [vmem:[#allocation2 + $0x44] sm:$0xf]
    %v1313 = vld [vmem:[#allocation2 + $0x48] sm:$0xf]
    %v1314 = vld [vmem:[#allocation2 + $0x4c] sm:$0xf]
    %v1315 = vld [vmem:[#allocation2 + $0x50] sm:$0xf]
    %v1316 = vld [vmem:[#allocation2 + $0x54] sm:$0xf]
    %v1317 = vld [vmem:[#allocation2 + $0x58] sm:$0xf]
    %v1318 = vld [vmem:[#allocation2 + $0x5c] sm:$0xf]
    %v1319 = vld [vmem:[#allocation2 + $0x60] sm:$0xf]
    %v1320 = vld [vmem:[#allocation2 + $0x64] sm:$0xf]
    %v1321 = vld [vmem:[#allocation2 + $0x68] sm:$0xf]
    %v1322 = vld [vmem:[#allocation2 + $0x6c] sm:$0xf]
    %v1323 = vld [vmem:[#allocation2 + $0x70] sm:$0xf]
    %v1324 = vld [vmem:[#allocation2 + $0x74] sm:$0xf]
    %v1325 = vld [vmem:[#allocation2 + $0x78] sm:$0xf]
    %v1326 = vld [vmem:[#allocation2 + $0x7c] sm:$0xf]
    %v1327 = vld [vmem:[#allocation6] sm:$0xf]
    %v1328 = vld [vmem:[#allocation6 + $0x4] sm:$0xf]
    %v1329 = vld [vmem:[#allocation6 + $0x8] sm:$0xf]
    %v1330 = vld [vmem:[#allocation6 + $0xc] sm:$0xf]
    %v1331 = vld [vmem:[#allocation6 + $0x10] sm:$0xf]
    %v1332 = vld [vmem:[#allocation6 + $0x14] sm:$0xf]
    %v1333 = vld [vmem:[#allocation6 + $0x18] sm:$0xf]
    %v1334 = vld [vmem:[#allocation6 + $0x1c] sm:$0xf]
    %v1335 = vld [vmem:[#allocation6 + $0x20] sm:$0xf]
    %v1336 = vld [vmem:[#allocation6 + $0x24] sm:$0xf]
    %v1337 = vld [vmem:[#allocation6 + $0x28] sm:$0xf]
    %v1338 = vld [vmem:[#allocation6 + $0x2c] sm:$0xf]
    %v1339 = vld [vmem:[#allocation6 + $0x30] sm:$0xf]
    %v1340 = vld [vmem:[#allocation6 + $0x34] sm:$0xf]
    %v1341 = vld [vmem:[#allocation6 + $0x38] sm:$0xf]
    %v1342 = vld [vmem:[#allocation6 + $0x3c] sm:$0xf]
    %v1343 = vld [vmem:[%s73] sm:$0xf]
    %v1344 = vld [vmem:[%s73 + $0x4] sm:$0xf]
    %v1345 = vld [vmem:[%s73 + $0x8] sm:$0xf]
    %v1346 = vld [vmem:[%s73 + $0xc] sm:$0xf]
    %v1347 = vld [vmem:[%s73 + $0x10] sm:$0xf]
    %v1348 = vld [vmem:[%s73 + $0x14] sm:$0xf]
    %v1349 = vld [vmem:[%s73 + $0x18] sm:$0xf]
    %v1350 = vld [vmem:[%s73 + $0x1c] sm:$0xf]
    %v1351 = vld [vmem:[%s73 + $0x20] sm:$0xf]
    %v1352 = vld [vmem:[%s73 + $0x24] sm:$0xf]
    %v1353 = vld [vmem:[%s73 + $0x28] sm:$0xf]
    %v1354 = vld [vmem:[%s73 + $0x2c] sm:$0xf]
    %v1355 = vld [vmem:[%s73 + $0x30] sm:$0xf]
    %v1356 = vld [vmem:[%s73 + $0x34] sm:$0xf]
    %v1357 = vld [vmem:[%s73 + $0x38] sm:$0xf]
    %v1358 = vld [vmem:[%s73 + $0x3c] sm:$0xf]
    %v1359 = vld [vmem:[%s73 + $0x40] sm:$0xf]
    %v1360 = vld [vmem:[%s73 + $0x44] sm:$0xf]
    %v1361 = vld [vmem:[%s73 + $0x48] sm:$0xf]
    %v1362 = vld [vmem:[%s73 + $0x4c] sm:$0xf]
    %v1363 = vld [vmem:[%s73 + $0x50] sm:$0xf]
    %v1364 = vld [vmem:[%s73 + $0x54] sm:$0xf]
    %v1365 = vld [vmem:[%s73 + $0x58] sm:$0xf]
    %v1366 = vld [vmem:[%s73 + $0x5c] sm:$0xf]
    %v1367 = vld [vmem:[%s73 + $0x60] sm:$0xf]
    %v1368 = vld [vmem:[%s73 + $0x64] sm:$0xf]
    %v1369 = vld [vmem:[%s73 + $0x68] sm:$0xf]
    %v1370 = vld [vmem:[%s73 + $0x6c] sm:$0xf]
    %v1371 = vld [vmem:[%s73 + $0x70] sm:$0xf]
    %v1372 = vld [vmem:[%s73 + $0x74] sm:$0xf]
    %v1373 = vld [vmem:[%s73 + $0x78] sm:$0xf]
    %v1374 = vld [vmem:[%s73 + $0x7c] sm:$0xf]
    %s1375 = scalar_lea.vmem [#allocation6], 64
    %v1376 = vld [vmem:[%s1375] sm:$0xf]
    %v1377 = vld [vmem:[%s1375 + $0x4] sm:$0xf]
    %v1378 = vld [vmem:[%s1375 + $0x8] sm:$0xf]
    %v1379 = vld [vmem:[%s1375 + $0xc] sm:$0xf]
    %v1380 = vld [vmem:[%s1375 + $0x10] sm:$0xf]
    %v1381 = vld [vmem:[%s1375 + $0x14] sm:$0xf]
    %v1382 = vld [vmem:[%s1375 + $0x18] sm:$0xf]
    %v1383 = vld [vmem:[%s1375 + $0x1c] sm:$0xf]
    %v1384 = vld [vmem:[%s1375 + $0x20] sm:$0xf]
    %v1385 = vld [vmem:[%s1375 + $0x24] sm:$0xf]
    %v1386 = vld [vmem:[%s1375 + $0x28] sm:$0xf]
    %v1387 = vld [vmem:[%s1375 + $0x2c] sm:$0xf]
    %v1388 = vld [vmem:[%s1375 + $0x30] sm:$0xf]
    %v1389 = vld [vmem:[%s1375 + $0x34] sm:$0xf]
    %v1390 = vld [vmem:[%s1375 + $0x38] sm:$0xf]
    %v1391 = vld [vmem:[%s1375 + $0x3c] sm:$0xf]
    %v1424 = vunpack.c.l.b16 %v1343
    %v1425 = vunpack.c.l.b16 %v1344
    %v1426 = vunpack.c.l.b16 %v1345
    %v1427 = vunpack.c.l.b16 %v1346
    %v1428 = vunpack.c.l.b16 %v1347
    %v1429 = vunpack.c.l.b16 %v1348
    %v1430 = vunpack.c.l.b16 %v1349
    %v1431 = vunpack.c.l.b16 %v1350
    %v1432 = vunpack.c.l.b16 %v1351
    %v1433 = vunpack.c.l.b16 %v1352
    %v1434 = vunpack.c.l.b16 %v1353
    %v1435 = vunpack.c.l.b16 %v1354
    %v1436 = vunpack.c.l.b16 %v1355
    %v1437 = vunpack.c.l.b16 %v1356
    %v1438 = vunpack.c.l.b16 %v1357
    %v1439 = vunpack.c.l.b16 %v1358
    %v1440 = vunpack.c.l.b16 %v1359
    %v1441 = vunpack.c.l.b16 %v1360
    %v1442 = vunpack.c.l.b16 %v1361
    %v1443 = vunpack.c.l.b16 %v1362
    %v1444 = vunpack.c.l.b16 %v1363
    %v1445 = vunpack.c.l.b16 %v1364
    %v1446 = vunpack.c.l.b16 %v1365
    %v1447 = vunpack.c.l.b16 %v1366
    %v1448 = vunpack.c.l.b16 %v1367
    %v1449 = vunpack.c.l.b16 %v1368
    %v1450 = vunpack.c.l.b16 %v1369
    %v1451 = vunpack.c.l.b16 %v1370
    %v1452 = vunpack.c.l.b16 %v1371
    %v1453 = vunpack.c.l.b16 %v1372
    %v1454 = vunpack.c.l.b16 %v1373
    %v1455 = vunpack.c.l.b16 %v1374
    %v1456 = vpack.c.b16 %v1425, %v1424
    %v1457 = vpack.c.b16 %v1427, %v1426
    %v1458 = vpack.c.b16 %v1429, %v1428
    %v1459 = vpack.c.b16 %v1431, %v1430
    %v1460 = vpack.c.b16 %v1433, %v1432
    %v1461 = vpack.c.b16 %v1435, %v1434
    %v1462 = vpack.c.b16 %v1437, %v1436
    %v1463 = vpack.c.b16 %v1439, %v1438
    %v1464 = vpack.c.b16 %v1441, %v1440
    %v1465 = vpack.c.b16 %v1443, %v1442
    %v1466 = vpack.c.b16 %v1445, %v1444
    %v1467 = vpack.c.b16 %v1447, %v1446
    %v1468 = vpack.c.b16 %v1449, %v1448
    %v1469 = vpack.c.b16 %v1451, %v1450
    %v1470 = vpack.c.b16 %v1453, %v1452
    %v1471 = vpack.c.b16 %v1455, %v1454
    %v1504 = vunpack.c.l.b16 %v1376
    %v1505 = vunpack.c.l.b16 %v1377
    %v1506 = vunpack.c.l.b16 %v1378
    %v1507 = vunpack.c.l.b16 %v1379
    %v1508 = vunpack.c.l.b16 %v1380
    %v1509 = vunpack.c.l.b16 %v1381
    %v1510 = vunpack.c.l.b16 %v1382
    %v1511 = vunpack.c.l.b16 %v1383
    %v1512 = vunpack.c.l.b16 %v1384
    %v1513 = vunpack.c.l.b16 %v1385
    %v1514 = vunpack.c.l.b16 %v1386
    %v1515 = vunpack.c.l.b16 %v1387
    %v1516 = vunpack.c.l.b16 %v1388
    %v1517 = vunpack.c.l.b16 %v1389
    %v1518 = vunpack.c.l.b16 %v1390
    %v1519 = vunpack.c.l.b16 %v1391
    %v1520 = vpack.c.b16 %v1505, %v1504
    %v1521 = vpack.c.b16 %v1507, %v1506
    %v1522 = vpack.c.b16 %v1509, %v1508
    %v1523 = vpack.c.b16 %v1511, %v1510
    %v1524 = vpack.c.b16 %v1513, %v1512
    %v1525 = vpack.c.b16 %v1515, %v1514
    %v1526 = vpack.c.b16 %v1517, %v1516
    %v1527 = vpack.c.b16 %v1519, %v1518
    %1536 = vmatpush.bf16.msra.mxu0 %v1527
    %1537 = vmatpush.bf16.msra.mxu0 %v1526
    %1538 = vmatpush.bf16.msra.mxu0 %v1525
    %1539 = vmatpush.bf16.msra.mxu0 %v1524
    %1540 = vmatpush.bf16.msra.mxu0 %v1523
    %1541 = vmatpush.bf16.msra.mxu0 %v1522
    %1542 = vmatpush.bf16.msra.mxu0 %v1521
    %1543 = vmatpush.bf16.msra.mxu0 %v1520
    %1544 = vmatmul.bf16.gmra.mxu0 %v1456
    %v1545 = vpop.f32.mrf.mxu0
    %v1546 = vadd.f32 0.0, %v1545
    %v1547 = vpop.f32.mrf.mxu0
    %v1548 = vadd.f32 0.0, %v1547
    %1549 = vmatmul.bf16.gmra.mxu0 %v1457
    %v1550 = vpop.f32.mrf.mxu0
    %v1551 = vadd.f32 0.0, %v1550
    %v1552 = vpop.f32.mrf.mxu0
    %v1553 = vadd.f32 0.0, %v1552
    %1554 = vmatmul.bf16.gmra.mxu0 %v1458
    %v1555 = vpop.f32.mrf.mxu0
    %v1556 = vadd.f32 0.0, %v1555
    %v1557 = vpop.f32.mrf.mxu0
    %v1558 = vadd.f32 0.0, %v1557
    %1559 = vmatmul.bf16.gmra.mxu0 %v1459
    %v1560 = vpop.f32.mrf.mxu0
    %v1561 = vadd.f32 0.0, %v1560
    %v1562 = vpop.f32.mrf.mxu0
    %v1563 = vadd.f32 0.0, %v1562
    %1564 = vmatmul.bf16.gmra.mxu0 %v1460
    %v1565 = vpop.f32.mrf.mxu0
    %v1566 = vadd.f32 0.0, %v1565
    %v1567 = vpop.f32.mrf.mxu0
    %v1568 = vadd.f32 0.0, %v1567
    %1569 = vmatmul.bf16.gmra.mxu0 %v1461
    %v1570 = vpop.f32.mrf.mxu0
    %v1571 = vadd.f32 0.0, %v1570
    %v1572 = vpop.f32.mrf.mxu0
    %v1573 = vadd.f32 0.0, %v1572
    %1574 = vmatmul.bf16.gmra.mxu0 %v1462
    %v1575 = vpop.f32.mrf.mxu0
    %v1576 = vadd.f32 0.0, %v1575
    %v1577 = vpop.f32.mrf.mxu0
    %v1578 = vadd.f32 0.0, %v1577
    %1579 = vmatmul.bf16.gmra.mxu0 %v1463
    %v1580 = vpop.f32.mrf.mxu0
    %v1581 = vadd.f32 0.0, %v1580
    %v1582 = vpop.f32.mrf.mxu0
    %v1583 = vadd.f32 0.0, %v1582
    %1584 = vmatmul.bf16.gmra.mxu0 %v1464
    %v1585 = vpop.f32.mrf.mxu0
    %v1586 = vadd.f32 0.0, %v1585
    %v1587 = vpop.f32.mrf.mxu0
    %v1588 = vadd.f32 0.0, %v1587
    %1589 = vmatmul.bf16.gmra.mxu0 %v1465
    %v1590 = vpop.f32.mrf.mxu0
    %v1591 = vadd.f32 0.0, %v1590
    %v1592 = vpop.f32.mrf.mxu0
    %v1593 = vadd.f32 0.0, %v1592
    %1594 = vmatmul.bf16.gmra.mxu0 %v1466
    %v1595 = vpop.f32.mrf.mxu0
    %v1596 = vadd.f32 0.0, %v1595
    %v1597 = vpop.f32.mrf.mxu0
    %v1598 = vadd.f32 0.0, %v1597
    %1599 = vmatmul.bf16.gmra.mxu0 %v1467
    %v1600 = vpop.f32.mrf.mxu0
    %v1601 = vadd.f32 0.0, %v1600
    %v1602 = vpop.f32.mrf.mxu0
    %v1603 = vadd.f32 0.0, %v1602
    %1604 = vmatmul.bf16.gmra.mxu0 %v1468
    %v1605 = vpop.f32.mrf.mxu0
    %v1606 = vadd.f32 0.0, %v1605
    %v1607 = vpop.f32.mrf.mxu0
    %v1608 = vadd.f32 0.0, %v1607
    %1609 = vmatmul.bf16.gmra.mxu0 %v1469
    %v1610 = vpop.f32.mrf.mxu0
    %v1611 = vadd.f32 0.0, %v1610
    %v1612 = vpop.f32.mrf.mxu0
    %v1613 = vadd.f32 0.0, %v1612
    %1614 = vmatmul.bf16.gmra.mxu0 %v1470
    %v1615 = vpop.f32.mrf.mxu0
    %v1616 = vadd.f32 0.0, %v1615
    %v1617 = vpop.f32.mrf.mxu0
    %v1618 = vadd.f32 0.0, %v1617
    %1619 = vmatmul.bf16.gmra.mxu0 %v1471
    %v1620 = vpop.f32.mrf.mxu0
    %v1621 = vadd.f32 0.0, %v1620
    %v1622 = vpop.f32.mrf.mxu0
    %v1623 = vadd.f32 0.0, %v1622
    %1624 = vdwg.mxu0
    %v1657 = vunpack.c.l.b16 %v1295
    %v1658 = vunpack.c.l.b16 %v1296
    %v1659 = vunpack.c.l.b16 %v1297
    %v1660 = vunpack.c.l.b16 %v1298
    %v1661 = vunpack.c.l.b16 %v1299
    %v1662 = vunpack.c.l.b16 %v1300
    %v1663 = vunpack.c.l.b16 %v1301
    %v1664 = vunpack.c.l.b16 %v1302
    %v1665 = vunpack.c.l.b16 %v1303
    %v1666 = vunpack.c.l.b16 %v1304
    %v1667 = vunpack.c.l.b16 %v1305
    %v1668 = vunpack.c.l.b16 %v1306
    %v1669 = vunpack.c.l.b16 %v1307
    %v1670 = vunpack.c.l.b16 %v1308
    %v1671 = vunpack.c.l.b16 %v1309
    %v1672 = vunpack.c.l.b16 %v1310
    %v1673 = vunpack.c.l.b16 %v1311
    %v1674 = vunpack.c.l.b16 %v1312
    %v1675 = vunpack.c.l.b16 %v1313
    %v1676 = vunpack.c.l.b16 %v1314
    %v1677 = vunpack.c.l.b16 %v1315
    %v1678 = vunpack.c.l.b16 %v1316
    %v1679 = vunpack.c.l.b16 %v1317
    %v1680 = vunpack.c.l.b16 %v1318
    %v1681 = vunpack.c.l.b16 %v1319
    %v1682 = vunpack.c.l.b16 %v1320
    %v1683 = vunpack.c.l.b16 %v1321
    %v1684 = vunpack.c.l.b16 %v1322
    %v1685 = vunpack.c.l.b16 %v1323
    %v1686 = vunpack.c.l.b16 %v1324
    %v1687 = vunpack.c.l.b16 %v1325
    %v1688 = vunpack.c.l.b16 %v1326
    %v1689 = vpack.c.b16 %v1658, %v1657
    %v1690 = vpack.c.b16 %v1660, %v1659
    %v1691 = vpack.c.b16 %v1662, %v1661
    %v1692 = vpack.c.b16 %v1664, %v1663
    %v1693 = vpack.c.b16 %v1666, %v1665
    %v1694 = vpack.c.b16 %v1668, %v1667
    %v1695 = vpack.c.b16 %v1670, %v1669
    %v1696 = vpack.c.b16 %v1672, %v1671
    %v1697 = vpack.c.b16 %v1674, %v1673
    %v1698 = vpack.c.b16 %v1676, %v1675
    %v1699 = vpack.c.b16 %v1678, %v1677
    %v1700 = vpack.c.b16 %v1680, %v1679
    %v1701 = vpack.c.b16 %v1682, %v1681
    %v1702 = vpack.c.b16 %v1684, %v1683
    %v1703 = vpack.c.b16 %v1686, %v1685
    %v1704 = vpack.c.b16 %v1688, %v1687
    %v1737 = vunpack.c.l.b16 %v1327
    %v1738 = vunpack.c.l.b16 %v1328
    %v1739 = vunpack.c.l.b16 %v1329
    %v1740 = vunpack.c.l.b16 %v1330
    %v1741 = vunpack.c.l.b16 %v1331
    %v1742 = vunpack.c.l.b16 %v1332
    %v1743 = vunpack.c.l.b16 %v1333
    %v1744 = vunpack.c.l.b16 %v1334
    %v1745 = vunpack.c.l.b16 %v1335
    %v1746 = vunpack.c.l.b16 %v1336
    %v1747 = vunpack.c.l.b16 %v1337
    %v1748 = vunpack.c.l.b16 %v1338
    %v1749 = vunpack.c.l.b16 %v1339
    %v1750 = vunpack.c.l.b16 %v1340
    %v1751 = vunpack.c.l.b16 %v1341
    %v1752 = vunpack.c.l.b16 %v1342
    %v1753 = vpack.c.b16 %v1738, %v1737
    %v1754 = vpack.c.b16 %v1740, %v1739
    %v1755 = vpack.c.b16 %v1742, %v1741
    %v1756 = vpack.c.b16 %v1744, %v1743
    %v1757 = vpack.c.b16 %v1746, %v1745
    %v1758 = vpack.c.b16 %v1748, %v1747
    %v1759 = vpack.c.b16 %v1750, %v1749
    %v1760 = vpack.c.b16 %v1752, %v1751
    %1769 = vmatpush.bf16.msra.mxu0 %v1760
    %1770 = vmatpush.bf16.msra.mxu0 %v1759
    %1771 = vmatpush.bf16.msra.mxu0 %v1758
    %1772 = vmatpush.bf16.msra.mxu0 %v1757
    %1773 = vmatpush.bf16.msra.mxu0 %v1756
    %1774 = vmatpush.bf16.msra.mxu0 %v1755
    %1775 = vmatpush.bf16.msra.mxu0 %v1754
    %1776 = vmatpush.bf16.msra.mxu0 %v1753
    %1777 = vmatmul.bf16.gmra.mxu0 %v1689
    %v1778 = vpop.f32.mrf.mxu0
    %v1779 = vadd.f32 %v1546, %v1778
    %v1780 = vpop.f32.mrf.mxu0
    %v1781 = vadd.f32 %v1548, %v1780
    %1782 = vmatmul.bf16.gmra.mxu0 %v1690
    %v1783 = vpop.f32.mrf.mxu0
    %v1784 = vadd.f32 %v1551, %v1783
    %v1785 = vpop.f32.mrf.mxu0
    %v1786 = vadd.f32 %v1553, %v1785
    %1787 = vmatmul.bf16.gmra.mxu0 %v1691
    %v1788 = vpop.f32.mrf.mxu0
    %v1789 = vadd.f32 %v1556, %v1788
    %v1790 = vpop.f32.mrf.mxu0
    %v1791 = vadd.f32 %v1558, %v1790
    %1792 = vmatmul.bf16.gmra.mxu0 %v1692
    %v1793 = vpop.f32.mrf.mxu0
    %v1794 = vadd.f32 %v1561, %v1793
    %v1795 = vpop.f32.mrf.mxu0
    %v1796 = vadd.f32 %v1563, %v1795
    %1797 = vmatmul.bf16.gmra.mxu0 %v1693
    %v1798 = vpop.f32.mrf.mxu0
    %v1799 = vadd.f32 %v1566, %v1798
    %v1800 = vpop.f32.mrf.mxu0
    %v1801 = vadd.f32 %v1568, %v1800
    %1802 = vmatmul.bf16.gmra.mxu0 %v1694
    %v1803 = vpop.f32.mrf.mxu0
    %v1804 = vadd.f32 %v1571, %v1803
    %v1805 = vpop.f32.mrf.mxu0
    %v1806 = vadd.f32 %v1573, %v1805
    %1807 = vmatmul.bf16.gmra.mxu0 %v1695
    %v1808 = vpop.f32.mrf.mxu0
    %v1809 = vadd.f32 %v1576, %v1808
    %v1810 = vpop.f32.mrf.mxu0
    %v1811 = vadd.f32 %v1578, %v1810
    %1812 = vmatmul.bf16.gmra.mxu0 %v1696
    %v1813 = vpop.f32.mrf.mxu0
    %v1814 = vadd.f32 %v1581, %v1813
    %v1815 = vpop.f32.mrf.mxu0
    %v1816 = vadd.f32 %v1583, %v1815
    %1817 = vmatmul.bf16.gmra.mxu0 %v1697
    %v1818 = vpop.f32.mrf.mxu0
    %v1819 = vadd.f32 %v1586, %v1818
    %v1820 = vpop.f32.mrf.mxu0
    %v1821 = vadd.f32 %v1588, %v1820
    %1822 = vmatmul.bf16.gmra.mxu0 %v1698
    %v1823 = vpop.f32.mrf.mxu0
    %v1824 = vadd.f32 %v1591, %v1823
    %v1825 = vpop.f32.mrf.mxu0
    %v1826 = vadd.f32 %v1593, %v1825
    %1827 = vmatmul.bf16.gmra.mxu0 %v1699
    %v1828 = vpop.f32.mrf.mxu0
    %v1829 = vadd.f32 %v1596, %v1828
    %v1830 = vpop.f32.mrf.mxu0
    %v1831 = vadd.f32 %v1598, %v1830
    %1832 = vmatmul.bf16.gmra.mxu0 %v1700
    %v1833 = vpop.f32.mrf.mxu0
    %v1834 = vadd.f32 %v1601, %v1833
    %v1835 = vpop.f32.mrf.mxu0
    %v1836 = vadd.f32 %v1603, %v1835
    %1837 = vmatmul.bf16.gmra.mxu0 %v1701
    %v1838 = vpop.f32.mrf.mxu0
    %v1839 = vadd.f32 %v1606, %v1838
    %v1840 = vpop.f32.mrf.mxu0
    %v1841 = vadd.f32 %v1608, %v1840
    %1842 = vmatmul.bf16.gmra.mxu0 %v1702
    %v1843 = vpop.f32.mrf.mxu0
    %v1844 = vadd.f32 %v1611, %v1843
    %v1845 = vpop.f32.mrf.mxu0
    %v1846 = vadd.f32 %v1613, %v1845
    %1847 = vmatmul.bf16.gmra.mxu0 %v1703
    %v1848 = vpop.f32.mrf.mxu0
    %v1849 = vadd.f32 %v1616, %v1848
    %v1850 = vpop.f32.mrf.mxu0
    %v1851 = vadd.f32 %v1618, %v1850
    %1852 = vmatmul.bf16.gmra.mxu0 %v1704
    %v1853 = vpop.f32.mrf.mxu0
    %v1854 = vadd.f32 %v1621, %v1853
    %v1855 = vpop.f32.mrf.mxu0
    %v1856 = vadd.f32 %v1623, %v1855
    %1857 = vdwg.mxu0
    %v1858 = vld [vmem:[%s78] sm:$0xf]
    %v1859 = vld [vmem:[%s78 + $0x4] sm:$0xf]
    %v1860 = vld [vmem:[%s78 + $0x8] sm:$0xf]
    %v1861 = vld [vmem:[%s78 + $0xc] sm:$0xf]
    %v1862 = vld [vmem:[%s78 + $0x10] sm:$0xf]
    %v1863 = vld [vmem:[%s78 + $0x14] sm:$0xf]
    %v1864 = vld [vmem:[%s78 + $0x18] sm:$0xf]
    %v1865 = vld [vmem:[%s78 + $0x1c] sm:$0xf]
    %v1866 = vld [vmem:[%s78 + $0x20] sm:$0xf]
    %v1867 = vld [vmem:[%s78 + $0x24] sm:$0xf]
    %v1868 = vld [vmem:[%s78 + $0x28] sm:$0xf]
    %v1869 = vld [vmem:[%s78 + $0x2c] sm:$0xf]
    %v1870 = vld [vmem:[%s78 + $0x30] sm:$0xf]
    %v1871 = vld [vmem:[%s78 + $0x34] sm:$0xf]
    %v1872 = vld [vmem:[%s78 + $0x38] sm:$0xf]
    %v1873 = vld [vmem:[%s78 + $0x3c] sm:$0xf]
    %v1874 = vld [vmem:[%s78 + $0x40] sm:$0xf]
    %v1875 = vld [vmem:[%s78 + $0x44] sm:$0xf]
    %v1876 = vld [vmem:[%s78 + $0x48] sm:$0xf]
    %v1877 = vld [vmem:[%s78 + $0x4c] sm:$0xf]
    %v1878 = vld [vmem:[%s78 + $0x50] sm:$0xf]
    %v1879 = vld [vmem:[%s78 + $0x54] sm:$0xf]
    %v1880 = vld [vmem:[%s78 + $0x58] sm:$0xf]
    %v1881 = vld [vmem:[%s78 + $0x5c] sm:$0xf]
    %v1882 = vld [vmem:[%s78 + $0x60] sm:$0xf]
    %v1883 = vld [vmem:[%s78 + $0x64] sm:$0xf]
    %v1884 = vld [vmem:[%s78 + $0x68] sm:$0xf]
    %v1885 = vld [vmem:[%s78 + $0x6c] sm:$0xf]
    %v1886 = vld [vmem:[%s78 + $0x70] sm:$0xf]
    %v1887 = vld [vmem:[%s78 + $0x74] sm:$0xf]
    %v1888 = vld [vmem:[%s78 + $0x78] sm:$0xf]
    %v1889 = vld [vmem:[%s78 + $0x7c] sm:$0xf]
    %s1890 = scalar_lea.vmem [#allocation6], 128
    %v1891 = vld [vmem:[%s1890] sm:$0xf]
    %v1892 = vld [vmem:[%s1890 + $0x4] sm:$0xf]
    %v1893 = vld [vmem:[%s1890 + $0x8] sm:$0xf]
    %v1894 = vld [vmem:[%s1890 + $0xc] sm:$0xf]
    %v1895 = vld [vmem:[%s1890 + $0x10] sm:$0xf]
    %v1896 = vld [vmem:[%s1890 + $0x14] sm:$0xf]
    %v1897 = vld [vmem:[%s1890 + $0x18] sm:$0xf]
    %v1898 = vld [vmem:[%s1890 + $0x1c] sm:$0xf]
    %v1899 = vld [vmem:[%s1890 + $0x20] sm:$0xf]
    %v1900 = vld [vmem:[%s1890 + $0x24] sm:$0xf]
    %v1901 = vld [vmem:[%s1890 + $0x28] sm:$0xf]
    %v1902 = vld [vmem:[%s1890 + $0x2c] sm:$0xf]
    %v1903 = vld [vmem:[%s1890 + $0x30] sm:$0xf]
    %v1904 = vld [vmem:[%s1890 + $0x34] sm:$0xf]
    %v1905 = vld [vmem:[%s1890 + $0x38] sm:$0xf]
    %v1906 = vld [vmem:[%s1890 + $0x3c] sm:$0xf]
    %v1939 = vunpack.c.l.b16 %v1858
    %v1940 = vunpack.c.l.b16 %v1859
    %v1941 = vunpack.c.l.b16 %v1860
    %v1942 = vunpack.c.l.b16 %v1861
    %v1943 = vunpack.c.l.b16 %v1862
    %v1944 = vunpack.c.l.b16 %v1863
    %v1945 = vunpack.c.l.b16 %v1864
    %v1946 = vunpack.c.l.b16 %v1865
    %v1947 = vunpack.c.l.b16 %v1866
    %v1948 = vunpack.c.l.b16 %v1867
    %v1949 = vunpack.c.l.b16 %v1868
    %v1950 = vunpack.c.l.b16 %v1869
    %v1951 = vunpack.c.l.b16 %v1870
    %v1952 = vunpack.c.l.b16 %v1871
    %v1953 = vunpack.c.l.b16 %v1872
    %v1954 = vunpack.c.l.b16 %v1873
    %v1955 = vunpack.c.l.b16 %v1874
    %v1956 = vunpack.c.l.b16 %v1875
    %v1957 = vunpack.c.l.b16 %v1876
    %v1958 = vunpack.c.l.b16 %v1877
    %v1959 = vunpack.c.l.b16 %v1878
    %v1960 = vunpack.c.l.b16 %v1879
    %v1961 = vunpack.c.l.b16 %v1880
    %v1962 = vunpack.c.l.b16 %v1881
    %v1963 = vunpack.c.l.b16 %v1882
    %v1964 = vunpack.c.l.b16 %v1883
    %v1965 = vunpack.c.l.b16 %v1884
    %v1966 = vunpack.c.l.b16 %v1885
    %v1967 = vunpack.c.l.b16 %v1886
    %v1968 = vunpack.c.l.b16 %v1887
    %v1969 = vunpack.c.l.b16 %v1888
    %v1970 = vunpack.c.l.b16 %v1889
    %v1971 = vpack.c.b16 %v1940, %v1939
    %v1972 = vpack.c.b16 %v1942, %v1941
    %v1973 = vpack.c.b16 %v1944, %v1943
    %v1974 = vpack.c.b16 %v1946, %v1945
    %v1975 = vpack.c.b16 %v1948, %v1947
    %v1976 = vpack.c.b16 %v1950, %v1949
    %v1977 = vpack.c.b16 %v1952, %v1951
    %v1978 = vpack.c.b16 %v1954, %v1953
    %v1979 = vpack.c.b16 %v1956, %v1955
    %v1980 = vpack.c.b16 %v1958, %v1957
    %v1981 = vpack.c.b16 %v1960, %v1959
    %v1982 = vpack.c.b16 %v1962, %v1961
    %v1983 = vpack.c.b16 %v1964, %v1963
    %v1984 = vpack.c.b16 %v1966, %v1965
    %v1985 = vpack.c.b16 %v1968, %v1967
    %v1986 = vpack.c.b16 %v1970, %v1969
    %v2019 = vunpack.c.l.b16 %v1891
    %v2020 = vunpack.c.l.b16 %v1892
    %v2021 = vunpack.c.l.b16 %v1893
    %v2022 = vunpack.c.l.b16 %v1894
    %v2023 = vunpack.c.l.b16 %v1895
    %v2024 = vunpack.c.l.b16 %v1896
    %v2025 = vunpack.c.l.b16 %v1897
    %v2026 = vunpack.c.l.b16 %v1898
    %v2027 = vunpack.c.l.b16 %v1899
    %v2028 = vunpack.c.l.b16 %v1900
    %v2029 = vunpack.c.l.b16 %v1901
    %v2030 = vunpack.c.l.b16 %v1902
    %v2031 = vunpack.c.l.b16 %v1903
    %v2032 = vunpack.c.l.b16 %v1904
    %v2033 = vunpack.c.l.b16 %v1905
    %v2034 = vunpack.c.l.b16 %v1906
    %v2035 = vpack.c.b16 %v2020, %v2019
    %v2036 = vpack.c.b16 %v2022, %v2021
    %v2037 = vpack.c.b16 %v2024, %v2023
    %v2038 = vpack.c.b16 %v2026, %v2025
    %v2039 = vpack.c.b16 %v2028, %v2027
    %v2040 = vpack.c.b16 %v2030, %v2029
    %v2041 = vpack.c.b16 %v2032, %v2031
    %v2042 = vpack.c.b16 %v2034, %v2033
    %2051 = vmatpush.bf16.msra.mxu0 %v2042
    %2052 = vmatpush.bf16.msra.mxu0 %v2041
    %2053 = vmatpush.bf16.msra.mxu0 %v2040
    %2054 = vmatpush.bf16.msra.mxu0 %v2039
    %2055 = vmatpush.bf16.msra.mxu0 %v2038
    %2056 = vmatpush.bf16.msra.mxu0 %v2037
    %2057 = vmatpush.bf16.msra.mxu0 %v2036
    %2058 = vmatpush.bf16.msra.mxu0 %v2035
    %2059 = vmatmul.bf16.gmra.mxu0 %v1971
    %v2060 = vpop.f32.mrf.mxu0
    %v2061 = vadd.f32 0.0, %v2060
    %v2062 = vpop.f32.mrf.mxu0
    %v2063 = vadd.f32 0.0, %v2062
    %2064 = vmatmul.bf16.gmra.mxu0 %v1972
    %v2065 = vpop.f32.mrf.mxu0
    %v2066 = vadd.f32 0.0, %v2065
    %v2067 = vpop.f32.mrf.mxu0
    %v2068 = vadd.f32 0.0, %v2067
    %2069 = vmatmul.bf16.gmra.mxu0 %v1973
    %v2070 = vpop.f32.mrf.mxu0
    %v2071 = vadd.f32 0.0, %v2070
    %v2072 = vpop.f32.mrf.mxu0
    %v2073 = vadd.f32 0.0, %v2072
    %2074 = vmatmul.bf16.gmra.mxu0 %v1974
    %v2075 = vpop.f32.mrf.mxu0
    %v2076 = vadd.f32 0.0, %v2075
    %v2077 = vpop.f32.mrf.mxu0
    %v2078 = vadd.f32 0.0, %v2077
    %2079 = vmatmul.bf16.gmra.mxu0 %v1975
    %v2080 = vpop.f32.mrf.mxu0
    %v2081 = vadd.f32 0.0, %v2080
    %v2082 = vpop.f32.mrf.mxu0
    %v2083 = vadd.f32 0.0, %v2082
    %2084 = vmatmul.bf16.gmra.mxu0 %v1976
    %v2085 = vpop.f32.mrf.mxu0
    %v2086 = vadd.f32 0.0, %v2085
    %v2087 = vpop.f32.mrf.mxu0
    %v2088 = vadd.f32 0.0, %v2087
    %2089 = vmatmul.bf16.gmra.mxu0 %v1977
    %v2090 = vpop.f32.mrf.mxu0
    %v2091 = vadd.f32 0.0, %v2090
    %v2092 = vpop.f32.mrf.mxu0
    %v2093 = vadd.f32 0.0, %v2092
    %2094 = vmatmul.bf16.gmra.mxu0 %v1978
    %v2095 = vpop.f32.mrf.mxu0
    %v2096 = vadd.f32 0.0, %v2095
    %v2097 = vpop.f32.mrf.mxu0
    %v2098 = vadd.f32 0.0, %v2097
    %2099 = vmatmul.bf16.gmra.mxu0 %v1979
    %v2100 = vpop.f32.mrf.mxu0
    %v2101 = vadd.f32 0.0, %v2100
    %v2102 = vpop.f32.mrf.mxu0
    %v2103 = vadd.f32 0.0, %v2102
    %2104 = vmatmul.bf16.gmra.mxu0 %v1980
    %v2105 = vpop.f32.mrf.mxu0
    %v2106 = vadd.f32 0.0, %v2105
    %v2107 = vpop.f32.mrf.mxu0
    %v2108 = vadd.f32 0.0, %v2107
    %2109 = vmatmul.bf16.gmra.mxu0 %v1981
    %v2110 = vpop.f32.mrf.mxu0
    %v2111 = vadd.f32 0.0, %v2110
    %v2112 = vpop.f32.mrf.mxu0
    %v2113 = vadd.f32 0.0, %v2112
    %2114 = vmatmul.bf16.gmra.mxu0 %v1982
    %v2115 = vpop.f32.mrf.mxu0
    %v2116 = vadd.f32 0.0, %v2115
    %v2117 = vpop.f32.mrf.mxu0
    %v2118 = vadd.f32 0.0, %v2117
    %2119 = vmatmul.bf16.gmra.mxu0 %v1983
    %v2120 = vpop.f32.mrf.mxu0
    %v2121 = vadd.f32 0.0, %v2120
    %v2122 = vpop.f32.mrf.mxu0
    %v2123 = vadd.f32 0.0, %v2122
    %2124 = vmatmul.bf16.gmra.mxu0 %v1984
    %v2125 = vpop.f32.mrf.mxu0
    %v2126 = vadd.f32 0.0, %v2125
    %v2127 = vpop.f32.mrf.mxu0
    %v2128 = vadd.f32 0.0, %v2127
    %2129 = vmatmul.bf16.gmra.mxu0 %v1985
    %v2130 = vpop.f32.mrf.mxu0
    %v2131 = vadd.f32 0.0, %v2130
    %v2132 = vpop.f32.mrf.mxu0
    %v2133 = vadd.f32 0.0, %v2132
    %2134 = vmatmul.bf16.gmra.mxu0 %v1986
    %v2135 = vpop.f32.mrf.mxu0
    %v2136 = vadd.f32 0.0, %v2135
    %v2137 = vpop.f32.mrf.mxu0
    %v2138 = vadd.f32 0.0, %v2137
    %2139 = vdwg.mxu0
    %v2140 = vadd.f32 %v1779, %v2061
    %v2141 = vadd.f32 %v1781, %v2063
    %v2142 = vadd.f32 %v1784, %v2066
    %v2143 = vadd.f32 %v1786, %v2068
    %v2144 = vadd.f32 %v1789, %v2071
    %v2145 = vadd.f32 %v1791, %v2073
    %v2146 = vadd.f32 %v1794, %v2076
    %v2147 = vadd.f32 %v1796, %v2078
    %v2148 = vadd.f32 %v1799, %v2081
    %v2149 = vadd.f32 %v1801, %v2083
    %v2150 = vadd.f32 %v1804, %v2086
    %v2151 = vadd.f32 %v1806, %v2088
    %v2152 = vadd.f32 %v1809, %v2091
    %v2153 = vadd.f32 %v1811, %v2093
    %v2154 = vadd.f32 %v1814, %v2096
    %v2155 = vadd.f32 %v1816, %v2098
    %v2156 = vadd.f32 %v1819, %v2101
    %v2157 = vadd.f32 %v1821, %v2103
    %v2158 = vadd.f32 %v1824, %v2106
    %v2159 = vadd.f32 %v1826, %v2108
    %v2160 = vadd.f32 %v1829, %v2111
    %v2161 = vadd.f32 %v1831, %v2113
    %v2162 = vadd.f32 %v1834, %v2116
    %v2163 = vadd.f32 %v1836, %v2118
    %v2164 = vadd.f32 %v1839, %v2121
    %v2165 = vadd.f32 %v1841, %v2123
    %v2166 = vadd.f32 %v1844, %v2126
    %v2167 = vadd.f32 %v1846, %v2128
    %v2168 = vadd.f32 %v1849, %v2131
    %v2169 = vadd.f32 %v1851, %v2133
    %v2170 = vadd.f32 %v1854, %v2136
    %v2171 = vadd.f32 %v1856, %v2138
    %v2172 = vld [vmem:[#allocation2 + $0x8] sm:$0xf]
    %v2173 = vld [vmem:[#allocation2 + $0xc] sm:$0xf]
    %v2174 = vld [vmem:[#allocation2 + $0x10] sm:$0xf]
    %v2175 = vld [vmem:[#allocation2 + $0x14] sm:$0xf]
    %v2176 = vld [vmem:[#allocation2 + $0x18] sm:$0xf]
    %v2177 = vld [vmem:[#allocation2 + $0x1c] sm:$0xf]
    %v2178 = vld [vmem:[#allocation2 + $0x20] sm:$0xf]
    %v2179 = vld [vmem:[#allocation2 + $0x24] sm:$0xf]
    %v2180 = vld [vmem:[#allocation2 + $0x28] sm:$0xf]
    %v2181 = vld [vmem:[#allocation2 + $0x2c] sm:$0xf]
    %v2182 = vld [vmem:[#allocation2 + $0x30] sm:$0xf]
    %v2183 = vld [vmem:[#allocation2 + $0x34] sm:$0xf]
    %v2184 = vld [vmem:[#allocation2 + $0x38] sm:$0xf]
    %v2185 = vld [vmem:[#allocation2 + $0x3c] sm:$0xf]
    %v2186 = vld [vmem:[#allocation2 + $0x40] sm:$0xf]
    %v2187 = vld [vmem:[#allocation2 + $0x44] sm:$0xf]
    %v2188 = vld [vmem:[#allocation2 + $0x48] sm:$0xf]
    %v2189 = vld [vmem:[#allocation2 + $0x4c] sm:$0xf]
    %v2190 = vld [vmem:[#allocation2 + $0x50] sm:$0xf]
    %v2191 = vld [vmem:[#allocation2 + $0x54] sm:$0xf]
    %v2192 = vld [vmem:[#allocation2 + $0x58] sm:$0xf]
    %v2193 = vld [vmem:[#allocation2 + $0x5c] sm:$0xf]
    %v2194 = vld [vmem:[#allocation2 + $0x60] sm:$0xf]
    %v2195 = vld [vmem:[#allocation2 + $0x64] sm:$0xf]
    %v2196 = vld [vmem:[#allocation2 + $0x68] sm:$0xf]
    %v2197 = vld [vmem:[#allocation2 + $0x6c] sm:$0xf]
    %v2198 = vld [vmem:[#allocation2 + $0x70] sm:$0xf]
    %v2199 = vld [vmem:[#allocation2 + $0x74] sm:$0xf]
    %v2200 = vld [vmem:[#allocation2 + $0x78] sm:$0xf]
    %v2201 = vld [vmem:[#allocation2 + $0x7c] sm:$0xf]
    %v2202 = vld [vmem:[#allocation2 + $0x80] sm:$0xf]
    %v2203 = vld [vmem:[#allocation2 + $0x84] sm:$0xf]
    %s2204 = scalar_lea.vmem [#allocation6], 192
    %v2205 = vld [vmem:[%s2204] sm:$0xf]
    %v2206 = vld [vmem:[%s2204 + $0x4] sm:$0xf]
    %v2207 = vld [vmem:[%s2204 + $0x8] sm:$0xf]
    %v2208 = vld [vmem:[%s2204 + $0xc] sm:$0xf]
    %v2209 = vld [vmem:[%s2204 + $0x10] sm:$0xf]
    %v2210 = vld [vmem:[%s2204 + $0x14] sm:$0xf]
    %v2211 = vld [vmem:[%s2204 + $0x18] sm:$0xf]
    %v2212 = vld [vmem:[%s2204 + $0x1c] sm:$0xf]
    %v2213 = vld [vmem:[%s2204 + $0x20] sm:$0xf]
    %v2214 = vld [vmem:[%s2204 + $0x24] sm:$0xf]
    %v2215 = vld [vmem:[%s2204 + $0x28] sm:$0xf]
    %v2216 = vld [vmem:[%s2204 + $0x2c] sm:$0xf]
    %v2217 = vld [vmem:[%s2204 + $0x30] sm:$0xf]
    %v2218 = vld [vmem:[%s2204 + $0x34] sm:$0xf]
    %v2219 = vld [vmem:[%s2204 + $0x38] sm:$0xf]
    %v2220 = vld [vmem:[%s2204 + $0x3c] sm:$0xf]
    %v2253 = vunpack.c.l.b16 %v2172
    %v2254 = vunpack.c.l.b16 %v2173
    %v2255 = vunpack.c.l.b16 %v2174
    %v2256 = vunpack.c.l.b16 %v2175
    %v2257 = vunpack.c.l.b16 %v2176
    %v2258 = vunpack.c.l.b16 %v2177
    %v2259 = vunpack.c.l.b16 %v2178
    %v2260 = vunpack.c.l.b16 %v2179
    %v2261 = vunpack.c.l.b16 %v2180
    %v2262 = vunpack.c.l.b16 %v2181
    %v2263 = vunpack.c.l.b16 %v2182
    %v2264 = vunpack.c.l.b16 %v2183
    %v2265 = vunpack.c.l.b16 %v2184
    %v2266 = vunpack.c.l.b16 %v2185
    %v2267 = vunpack.c.l.b16 %v2186
    %v2268 = vunpack.c.l.b16 %v2187
    %v2269 = vunpack.c.l.b16 %v2188
    %v2270 = vunpack.c.l.b16 %v2189
    %v2271 = vunpack.c.l.b16 %v2190
    %v2272 = vunpack.c.l.b16 %v2191
    %v2273 = vunpack.c.l.b16 %v2192
    %v2274 = vunpack.c.l.b16 %v2193
    %v2275 = vunpack.c.l.b16 %v2194
    %v2276 = vunpack.c.l.b16 %v2195
    %v2277 = vunpack.c.l.b16 %v2196
    %v2278 = vunpack.c.l.b16 %v2197
    %v2279 = vunpack.c.l.b16 %v2198
    %v2280 = vunpack.c.l.b16 %v2199
    %v2281 = vunpack.c.l.b16 %v2200
    %v2282 = vunpack.c.l.b16 %v2201
    %v2283 = vunpack.c.l.b16 %v2202
    %v2284 = vunpack.c.l.b16 %v2203
    %v2285 = vpack.c.b16 %v2254, %v2253
    %v2286 = vpack.c.b16 %v2256, %v2255
    %v2287 = vpack.c.b16 %v2258, %v2257
    %v2288 = vpack.c.b16 %v2260, %v2259
    %v2289 = vpack.c.b16 %v2262, %v2261
    %v2290 = vpack.c.b16 %v2264, %v2263
    %v2291 = vpack.c.b16 %v2266, %v2265
    %v2292 = vpack.c.b16 %v2268, %v2267
    %v2293 = vpack.c.b16 %v2270, %v2269
    %v2294 = vpack.c.b16 %v2272, %v2271
    %v2295 = vpack.c.b16 %v2274, %v2273
    %v2296 = vpack.c.b16 %v2276, %v2275
    %v2297 = vpack.c.b16 %v2278, %v2277
    %v2298 = vpack.c.b16 %v2280, %v2279
    %v2299 = vpack.c.b16 %v2282, %v2281
    %v2300 = vpack.c.b16 %v2284, %v2283
    %v2333 = vunpack.c.l.b16 %v2205
    %v2334 = vunpack.c.l.b16 %v2206
    %v2335 = vunpack.c.l.b16 %v2207
    %v2336 = vunpack.c.l.b16 %v2208
    %v2337 = vunpack.c.l.b16 %v2209
    %v2338 = vunpack.c.l.b16 %v2210
    %v2339 = vunpack.c.l.b16 %v2211
    %v2340 = vunpack.c.l.b16 %v2212
    %v2341 = vunpack.c.l.b16 %v2213
    %v2342 = vunpack.c.l.b16 %v2214
    %v2343 = vunpack.c.l.b16 %v2215
    %v2344 = vunpack.c.l.b16 %v2216
    %v2345 = vunpack.c.l.b16 %v2217
    %v2346 = vunpack.c.l.b16 %v2218
    %v2347 = vunpack.c.l.b16 %v2219
    %v2348 = vunpack.c.l.b16 %v2220
    %v2349 = vpack.c.b16 %v2334, %v2333
    %v2350 = vpack.c.b16 %v2336, %v2335
    %v2351 = vpack.c.b16 %v2338, %v2337
    %v2352 = vpack.c.b16 %v2340, %v2339
    %v2353 = vpack.c.b16 %v2342, %v2341
    %v2354 = vpack.c.b16 %v2344, %v2343
    %v2355 = vpack.c.b16 %v2346, %v2345
    %v2356 = vpack.c.b16 %v2348, %v2347
    %2365 = vmatpush.bf16.msra.mxu0 %v2356
    %2366 = vmatpush.bf16.msra.mxu0 %v2355
    %2367 = vmatpush.bf16.msra.mxu0 %v2354
    %2368 = vmatpush.bf16.msra.mxu0 %v2353
    %2369 = vmatpush.bf16.msra.mxu0 %v2352
    %2370 = vmatpush.bf16.msra.mxu0 %v2351
    %2371 = vmatpush.bf16.msra.mxu0 %v2350
    %2372 = vmatpush.bf16.msra.mxu0 %v2349
    %2373 = vmatmul.bf16.gmra.mxu0 %v2285
    %v2374 = vpop.f32.mrf.mxu0
    %v2375 = vadd.f32 0.0, %v2374
    %v2376 = vpop.f32.mrf.mxu0
    %v2377 = vadd.f32 0.0, %v2376
    %2378 = vmatmul.bf16.gmra.mxu0 %v2286
    %v2379 = vpop.f32.mrf.mxu0
    %v2380 = vadd.f32 0.0, %v2379
    %v2381 = vpop.f32.mrf.mxu0
    %v2382 = vadd.f32 0.0, %v2381
    %2383 = vmatmul.bf16.gmra.mxu0 %v2287
    %v2384 = vpop.f32.mrf.mxu0
    %v2385 = vadd.f32 0.0, %v2384
    %v2386 = vpop.f32.mrf.mxu0
    %v2387 = vadd.f32 0.0, %v2386
    %2388 = vmatmul.bf16.gmra.mxu0 %v2288
    %v2389 = vpop.f32.mrf.mxu0
    %v2390 = vadd.f32 0.0, %v2389
    %v2391 = vpop.f32.mrf.mxu0
    %v2392 = vadd.f32 0.0, %v2391
    %2393 = vmatmul.bf16.gmra.mxu0 %v2289
    %v2394 = vpop.f32.mrf.mxu0
    %v2395 = vadd.f32 0.0, %v2394
    %v2396 = vpop.f32.mrf.mxu0
    %v2397 = vadd.f32 0.0, %v2396
    %2398 = vmatmul.bf16.gmra.mxu0 %v2290
    %v2399 = vpop.f32.mrf.mxu0
    %v2400 = vadd.f32 0.0, %v2399
    %v2401 = vpop.f32.mrf.mxu0
    %v2402 = vadd.f32 0.0, %v2401
    %2403 = vmatmul.bf16.gmra.mxu0 %v2291
    %v2404 = vpop.f32.mrf.mxu0
    %v2405 = vadd.f32 0.0, %v2404
    %v2406 = vpop.f32.mrf.mxu0
    %v2407 = vadd.f32 0.0, %v2406
    %2408 = vmatmul.bf16.gmra.mxu0 %v2292
    %v2409 = vpop.f32.mrf.mxu0
    %v2410 = vadd.f32 0.0, %v2409
    %v2411 = vpop.f32.mrf.mxu0
    %v2412 = vadd.f32 0.0, %v2411
    %2413 = vmatmul.bf16.gmra.mxu0 %v2293
    %v2414 = vpop.f32.mrf.mxu0
    %v2415 = vadd.f32 0.0, %v2414
    %v2416 = vpop.f32.mrf.mxu0
    %v2417 = vadd.f32 0.0, %v2416
    %2418 = vmatmul.bf16.gmra.mxu0 %v2294
    %v2419 = vpop.f32.mrf.mxu0
    %v2420 = vadd.f32 0.0, %v2419
    %v2421 = vpop.f32.mrf.mxu0
    %v2422 = vadd.f32 0.0, %v2421
    %2423 = vmatmul.bf16.gmra.mxu0 %v2295
    %v2424 = vpop.f32.mrf.mxu0
    %v2425 = vadd.f32 0.0, %v2424
    %v2426 = vpop.f32.mrf.mxu0
    %v2427 = vadd.f32 0.0, %v2426
    %2428 = vmatmul.bf16.gmra.mxu0 %v2296
    %v2429 = vpop.f32.mrf.mxu0
    %v2430 = vadd.f32 0.0, %v2429
    %v2431 = vpop.f32.mrf.mxu0
    %v2432 = vadd.f32 0.0, %v2431
    %2433 = vmatmul.bf16.gmra.mxu0 %v2297
    %v2434 = vpop.f32.mrf.mxu0
    %v2435 = vadd.f32 0.0, %v2434
    %v2436 = vpop.f32.mrf.mxu0
    %v2437 = vadd.f32 0.0, %v2436
    %2438 = vmatmul.bf16.gmra.mxu0 %v2298
    %v2439 = vpop.f32.mrf.mxu0
    %v2440 = vadd.f32 0.0, %v2439
    %v2441 = vpop.f32.mrf.mxu0
    %v2442 = vadd.f32 0.0, %v2441
    %2443 = vmatmul.bf16.gmra.mxu0 %v2299
    %v2444 = vpop.f32.mrf.mxu0
    %v2445 = vadd.f32 0.0, %v2444
    %v2446 = vpop.f32.mrf.mxu0
    %v2447 = vadd.f32 0.0, %v2446
    %2448 = vmatmul.bf16.gmra.mxu0 %v2300
    %v2449 = vpop.f32.mrf.mxu0
    %v2450 = vadd.f32 0.0, %v2449
    %v2451 = vpop.f32.mrf.mxu0
    %v2452 = vadd.f32 0.0, %v2451
    %2453 = vdwg.mxu0
    %v2454 = vadd.f32 %v2140, %v2375
    %v2455 = vadd.f32 %v2141, %v2377
    %v2456 = vadd.f32 %v2142, %v2380
    %v2457 = vadd.f32 %v2143, %v2382
    %v2458 = vadd.f32 %v2144, %v2385
    %v2459 = vadd.f32 %v2145, %v2387
    %v2460 = vadd.f32 %v2146, %v2390
    %v2461 = vadd.f32 %v2147, %v2392
    %v2462 = vadd.f32 %v2148, %v2395
    %v2463 = vadd.f32 %v2149, %v2397
    %v2464 = vadd.f32 %v2150, %v2400
    %v2465 = vadd.f32 %v2151, %v2402
    %v2466 = vadd.f32 %v2152, %v2405
    %v2467 = vadd.f32 %v2153, %v2407
    %v2468 = vadd.f32 %v2154, %v2410
    %v2469 = vadd.f32 %v2155, %v2412
    %v2470 = vadd.f32 %v2156, %v2415
    %v2471 = vadd.f32 %v2157, %v2417
    %v2472 = vadd.f32 %v2158, %v2420
    %v2473 = vadd.f32 %v2159, %v2422
    %v2474 = vadd.f32 %v2160, %v2425
    %v2475 = vadd.f32 %v2161, %v2427
    %v2476 = vadd.f32 %v2162, %v2430
    %v2477 = vadd.f32 %v2163, %v2432
    %v2478 = vadd.f32 %v2164, %v2435
    %v2479 = vadd.f32 %v2165, %v2437
    %v2480 = vadd.f32 %v2166, %v2440
    %v2481 = vadd.f32 %v2167, %v2442
    %v2482 = vadd.f32 %v2168, %v2445
    %v2483 = vadd.f32 %v2169, %v2447
    %v2484 = vadd.f32 %v2170, %v2450
    %v2485 = vadd.f32 %v2171, %v2452
    %v2486 = vld [vmem:[%s73 + $0x8] sm:$0xf]
    %v2487 = vld [vmem:[%s73 + $0xc] sm:$0xf]
    %v2488 = vld [vmem:[%s73 + $0x10] sm:$0xf]
    %v2489 = vld [vmem:[%s73 + $0x14] sm:$0xf]
    %v2490 = vld [vmem:[%s73 + $0x18] sm:$0xf]
    %v2491 = vld [vmem:[%s73 + $0x1c] sm:$0xf]
    %v2492 = vld [vmem:[%s73 + $0x20] sm:$0xf]
    %v2493 = vld [vmem:[%s73 + $0x24] sm:$0xf]
    %v2494 = vld [vmem:[%s73 + $0x28] sm:$0xf]
    %v2495 = vld [vmem:[%s73 + $0x2c] sm:$0xf]
    %v2496 = vld [vmem:[%s73 + $0x30] sm:$0xf]
    %v2497 = vld [vmem:[%s73 + $0x34] sm:$0xf]
    %v2498 = vld [vmem:[%s73 + $0x38] sm:$0xf]
    %v2499 = vld [vmem:[%s73 + $0x3c] sm:$0xf]
    %v2500 = vld [vmem:[%s73 + $0x40] sm:$0xf]
    %v2501 = vld [vmem:[%s73 + $0x44] sm:$0xf]
    %v2502 = vld [vmem:[%s73 + $0x48] sm:$0xf]
    %v2503 = vld [vmem:[%s73 + $0x4c] sm:$0xf]
    %v2504 = vld [vmem:[%s73 + $0x50] sm:$0xf]
    %v2505 = vld [vmem:[%s73 + $0x54] sm:$0xf]
    %v2506 = vld [vmem:[%s73 + $0x58] sm:$0xf]
    %v2507 = vld [vmem:[%s73 + $0x5c] sm:$0xf]
    %v2508 = vld [vmem:[%s73 + $0x60] sm:$0xf]
    %v2509 = vld [vmem:[%s73 + $0x64] sm:$0xf]
    %v2510 = vld [vmem:[%s73 + $0x68] sm:$0xf]
    %v2511 = vld [vmem:[%s73 + $0x6c] sm:$0xf]
    %v2512 = vld [vmem:[%s73 + $0x70] sm:$0xf]
    %v2513 = vld [vmem:[%s73 + $0x74] sm:$0xf]
    %v2514 = vld [vmem:[%s73 + $0x78] sm:$0xf]
    %v2515 = vld [vmem:[%s73 + $0x7c] sm:$0xf]
    %v2516 = vld [vmem:[%s73 + $0x80] sm:$0xf]
    %v2517 = vld [vmem:[%s73 + $0x84] sm:$0xf]
    %s2518 = scalar_lea.vmem [#allocation6], 256
    %v2519 = vld [vmem:[%s2518] sm:$0xf]
    %v2520 = vld [vmem:[%s2518 + $0x4] sm:$0xf]
    %v2521 = vld [vmem:[%s2518 + $0x8] sm:$0xf]
    %v2522 = vld [vmem:[%s2518 + $0xc] sm:$0xf]
    %v2523 = vld [vmem:[%s2518 + $0x10] sm:$0xf]
    %v2524 = vld [vmem:[%s2518 + $0x14] sm:$0xf]
    %v2525 = vld [vmem:[%s2518 + $0x18] sm:$0xf]
    %v2526 = vld [vmem:[%s2518 + $0x1c] sm:$0xf]
    %v2527 = vld [vmem:[%s2518 + $0x20] sm:$0xf]
    %v2528 = vld [vmem:[%s2518 + $0x24] sm:$0xf]
    %v2529 = vld [vmem:[%s2518 + $0x28] sm:$0xf]
    %v2530 = vld [vmem:[%s2518 + $0x2c] sm:$0xf]
    %v2531 = vld [vmem:[%s2518 + $0x30] sm:$0xf]
    %v2532 = vld [vmem:[%s2518 + $0x34] sm:$0xf]
    %v2533 = vld [vmem:[%s2518 + $0x38] sm:$0xf]
    %v2534 = vld [vmem:[%s2518 + $0x3c] sm:$0xf]
    %v2567 = vunpack.c.l.b16 %v2486
    %v2568 = vunpack.c.l.b16 %v2487
    %v2569 = vunpack.c.l.b16 %v2488
    %v2570 = vunpack.c.l.b16 %v2489
    %v2571 = vunpack.c.l.b16 %v2490
    %v2572 = vunpack.c.l.b16 %v2491
    %v2573 = vunpack.c.l.b16 %v2492
    %v2574 = vunpack.c.l.b16 %v2493
    %v2575 = vunpack.c.l.b16 %v2494
    %v2576 = vunpack.c.l.b16 %v2495
    %v2577 = vunpack.c.l.b16 %v2496
    %v2578 = vunpack.c.l.b16 %v2497
    %v2579 = vunpack.c.l.b16 %v2498
    %v2580 = vunpack.c.l.b16 %v2499
    %v2581 = vunpack.c.l.b16 %v2500
    %v2582 = vunpack.c.l.b16 %v2501
    %v2583 = vunpack.c.l.b16 %v2502
    %v2584 = vunpack.c.l.b16 %v2503
    %v2585 = vunpack.c.l.b16 %v2504
    %v2586 = vunpack.c.l.b16 %v2505
    %v2587 = vunpack.c.l.b16 %v2506
    %v2588 = vunpack.c.l.b16 %v2507
    %v2589 = vunpack.c.l.b16 %v2508
    %v2590 = vunpack.c.l.b16 %v2509
    %v2591 = vunpack.c.l.b16 %v2510
    %v2592 = vunpack.c.l.b16 %v2511
    %v2593 = vunpack.c.l.b16 %v2512
    %v2594 = vunpack.c.l.b16 %v2513
    %v2595 = vunpack.c.l.b16 %v2514
    %v2596 = vunpack.c.l.b16 %v2515
    %v2597 = vunpack.c.l.b16 %v2516
    %v2598 = vunpack.c.l.b16 %v2517
    %v2599 = vpack.c.b16 %v2568, %v2567
    %v2600 = vpack.c.b16 %v2570, %v2569
    %v2601 = vpack.c.b16 %v2572, %v2571
    %v2602 = vpack.c.b16 %v2574, %v2573
    %v2603 = vpack.c.b16 %v2576, %v2575
    %v2604 = vpack.c.b16 %v2578, %v2577
    %v2605 = vpack.c.b16 %v2580, %v2579
    %v2606 = vpack.c.b16 %v2582, %v2581
    %v2607 = vpack.c.b16 %v2584, %v2583
    %v2608 = vpack.c.b16 %v2586, %v2585
    %v2609 = vpack.c.b16 %v2588, %v2587
    %v2610 = vpack.c.b16 %v2590, %v2589
    %v2611 = vpack.c.b16 %v2592, %v2591
    %v2612 = vpack.c.b16 %v2594, %v2593
    %v2613 = vpack.c.b16 %v2596, %v2595
    %v2614 = vpack.c.b16 %v2598, %v2597
    %v2647 = vunpack.c.l.b16 %v2519
    %v2648 = vunpack.c.l.b16 %v2520
    %v2649 = vunpack.c.l.b16 %v2521
    %v2650 = vunpack.c.l.b16 %v2522
    %v2651 = vunpack.c.l.b16 %v2523
    %v2652 = vunpack.c.l.b16 %v2524
    %v2653 = vunpack.c.l.b16 %v2525
    %v2654 = vunpack.c.l.b16 %v2526
    %v2655 = vunpack.c.l.b16 %v2527
    %v2656 = vunpack.c.l.b16 %v2528
    %v2657 = vunpack.c.l.b16 %v2529
    %v2658 = vunpack.c.l.b16 %v2530
    %v2659 = vunpack.c.l.b16 %v2531
    %v2660 = vunpack.c.l.b16 %v2532
    %v2661 = vunpack.c.l.b16 %v2533
    %v2662 = vunpack.c.l.b16 %v2534
    %v2663 = vpack.c.b16 %v2648, %v2647
    %v2664 = vpack.c.b16 %v2650, %v2649
    %v2665 = vpack.c.b16 %v2652, %v2651
    %v2666 = vpack.c.b16 %v2654, %v2653
    %v2667 = vpack.c.b16 %v2656, %v2655
    %v2668 = vpack.c.b16 %v2658, %v2657
    %v2669 = vpack.c.b16 %v2660, %v2659
    %v2670 = vpack.c.b16 %v2662, %v2661
    %2679 = vmatpush.bf16.msra.mxu0 %v2670
    %2680 = vmatpush.bf16.msra.mxu0 %v2669
    %2681 = vmatpush.bf16.msra.mxu0 %v2668
    %2682 = vmatpush.bf16.msra.mxu0 %v2667
    %2683 = vmatpush.bf16.msra.mxu0 %v2666
    %2684 = vmatpush.bf16.msra.mxu0 %v2665
    %2685 = vmatpush.bf16.msra.mxu0 %v2664
    %2686 = vmatpush.bf16.msra.mxu0 %v2663
    %2687 = vmatmul.bf16.gmra.mxu0 %v2599
    %v2688 = vpop.f32.mrf.mxu0
    %v2689 = vadd.f32 0.0, %v2688
    %v2690 = vpop.f32.mrf.mxu0
    %v2691 = vadd.f32 0.0, %v2690
    %2692 = vmatmul.bf16.gmra.mxu0 %v2600
    %v2693 = vpop.f32.mrf.mxu0
    %v2694 = vadd.f32 0.0, %v2693
    %v2695 = vpop.f32.mrf.mxu0
    %v2696 = vadd.f32 0.0, %v2695
    %2697 = vmatmul.bf16.gmra.mxu0 %v2601
    %v2698 = vpop.f32.mrf.mxu0
    %v2699 = vadd.f32 0.0, %v2698
    %v2700 = vpop.f32.mrf.mxu0
    %v2701 = vadd.f32 0.0, %v2700
    %2702 = vmatmul.bf16.gmra.mxu0 %v2602
    %v2703 = vpop.f32.mrf.mxu0
    %v2704 = vadd.f32 0.0, %v2703
    %v2705 = vpop.f32.mrf.mxu0
    %v2706 = vadd.f32 0.0, %v2705
    %2707 = vmatmul.bf16.gmra.mxu0 %v2603
    %v2708 = vpop.f32.mrf.mxu0
    %v2709 = vadd.f32 0.0, %v2708
    %v2710 = vpop.f32.mrf.mxu0
    %v2711 = vadd.f32 0.0, %v2710
    %2712 = vmatmul.bf16.gmra.mxu0 %v2604
    %v2713 = vpop.f32.mrf.mxu0
    %v2714 = vadd.f32 0.0, %v2713
    %v2715 = vpop.f32.mrf.mxu0
    %v2716 = vadd.f32 0.0, %v2715
    %2717 = vmatmul.bf16.gmra.mxu0 %v2605
    %v2718 = vpop.f32.mrf.mxu0
    %v2719 = vadd.f32 0.0, %v2718
    %v2720 = vpop.f32.mrf.mxu0
    %v2721 = vadd.f32 0.0, %v2720
    %2722 = vmatmul.bf16.gmra.mxu0 %v2606
    %v2723 = vpop.f32.mrf.mxu0
    %v2724 = vadd.f32 0.0, %v2723
    %v2725 = vpop.f32.mrf.mxu0
    %v2726 = vadd.f32 0.0, %v2725
    %2727 = vmatmul.bf16.gmra.mxu0 %v2607
    %v2728 = vpop.f32.mrf.mxu0
    %v2729 = vadd.f32 0.0, %v2728
    %v2730 = vpop.f32.mrf.mxu0
    %v2731 = vadd.f32 0.0, %v2730
    %2732 = vmatmul.bf16.gmra.mxu0 %v2608
    %v2733 = vpop.f32.mrf.mxu0
    %v2734 = vadd.f32 0.0, %v2733
    %v2735 = vpop.f32.mrf.mxu0
    %v2736 = vadd.f32 0.0, %v2735
    %2737 = vmatmul.bf16.gmra.mxu0 %v2609
    %v2738 = vpop.f32.mrf.mxu0
    %v2739 = vadd.f32 0.0, %v2738
    %v2740 = vpop.f32.mrf.mxu0
    %v2741 = vadd.f32 0.0, %v2740
    %2742 = vmatmul.bf16.gmra.mxu0 %v2610
    %v2743 = vpop.f32.mrf.mxu0
    %v2744 = vadd.f32 0.0, %v2743
    %v2745 = vpop.f32.mrf.mxu0
    %v2746 = vadd.f32 0.0, %v2745
    %2747 = vmatmul.bf16.gmra.mxu0 %v2611
    %v2748 = vpop.f32.mrf.mxu0
    %v2749 = vadd.f32 0.0, %v2748
    %v2750 = vpop.f32.mrf.mxu0
    %v2751 = vadd.f32 0.0, %v2750
    %2752 = vmatmul.bf16.gmra.mxu0 %v2612
    %v2753 = vpop.f32.mrf.mxu0
    %v2754 = vadd.f32 0.0, %v2753
    %v2755 = vpop.f32.mrf.mxu0
    %v2756 = vadd.f32 0.0, %v2755
    %2757 = vmatmul.bf16.gmra.mxu0 %v2613
    %v2758 = vpop.f32.mrf.mxu0
    %v2759 = vadd.f32 0.0, %v2758
    %v2760 = vpop.f32.mrf.mxu0
    %v2761 = vadd.f32 0.0, %v2760
    %2762 = vmatmul.bf16.gmra.mxu0 %v2614
    %v2763 = vpop.f32.mrf.mxu0
    %v2764 = vadd.f32 0.0, %v2763
    %v2765 = vpop.f32.mrf.mxu0
    %v2766 = vadd.f32 0.0, %v2765
    %2767 = vdwg.mxu0
    %v2768 = vadd.f32 %v2454, %v2689
    %v2769 = vadd.f32 %v2455, %v2691
    %v2770 = vadd.f32 %v2456, %v2694
    %v2771 = vadd.f32 %v2457, %v2696
    %v2772 = vadd.f32 %v2458, %v2699
    %v2773 = vadd.f32 %v2459, %v2701
    %v2774 = vadd.f32 %v2460, %v2704
    %v2775 = vadd.f32 %v2461, %v2706
    %v2776 = vadd.f32 %v2462, %v2709
    %v2777 = vadd.f32 %v2463, %v2711
    %v2778 = vadd.f32 %v2464, %v2714
    %v2779 = vadd.f32 %v2465, %v2716
    %v2780 = vadd.f32 %v2466, %v2719
    %v2781 = vadd.f32 %v2467, %v2721
    %v2782 = vadd.f32 %v2468, %v2724
    %v2783 = vadd.f32 %v2469, %v2726
    %v2784 = vadd.f32 %v2470, %v2729
    %v2785 = vadd.f32 %v2471, %v2731
    %v2786 = vadd.f32 %v2472, %v2734
    %v2787 = vadd.f32 %v2473, %v2736
    %v2788 = vadd.f32 %v2474, %v2739
    %v2789 = vadd.f32 %v2475, %v2741
    %v2790 = vadd.f32 %v2476, %v2744
    %v2791 = vadd.f32 %v2477, %v2746
    %v2792 = vadd.f32 %v2478, %v2749
    %v2793 = vadd.f32 %v2479, %v2751
    %v2794 = vadd.f32 %v2480, %v2754
    %v2795 = vadd.f32 %v2481, %v2756
    %v2796 = vadd.f32 %v2482, %v2759
    %v2797 = vadd.f32 %v2483, %v2761
    %v2798 = vadd.f32 %v2484, %v2764
    %v2799 = vadd.f32 %v2485, %v2766
    %v2800 = vld [vmem:[%s78 + $0x8] sm:$0xf]
    %v2801 = vld [vmem:[%s78 + $0xc] sm:$0xf]
    %v2802 = vld [vmem:[%s78 + $0x10] sm:$0xf]
    %v2803 = vld [vmem:[%s78 + $0x14] sm:$0xf]
    %v2804 = vld [vmem:[%s78 + $0x18] sm:$0xf]
    %v2805 = vld [vmem:[%s78 + $0x1c] sm:$0xf]
    %v2806 = vld [vmem:[%s78 + $0x20] sm:$0xf]
    %v2807 = vld [vmem:[%s78 + $0x24] sm:$0xf]
    %v2808 = vld [vmem:[%s78 + $0x28] sm:$0xf]
    %v2809 = vld [vmem:[%s78 + $0x2c] sm:$0xf]
    %v2810 = vld [vmem:[%s78 + $0x30] sm:$0xf]
    %v2811 = vld [vmem:[%s78 + $0x34] sm:$0xf]
    %v2812 = vld [vmem:[%s78 + $0x38] sm:$0xf]
    %v2813 = vld [vmem:[%s78 + $0x3c] sm:$0xf]
    %v2814 = vld [vmem:[%s78 + $0x40] sm:$0xf]
    %v2815 = vld [vmem:[%s78 + $0x44] sm:$0xf]
    %v2816 = vld [vmem:[%s78 + $0x48] sm:$0xf]
    %v2817 = vld [vmem:[%s78 + $0x4c] sm:$0xf]
    %v2818 = vld [vmem:[%s78 + $0x50] sm:$0xf]
    %v2819 = vld [vmem:[%s78 + $0x54] sm:$0xf]
    %v2820 = vld [vmem:[%s78 + $0x58] sm:$0xf]
    %v2821 = vld [vmem:[%s78 + $0x5c] sm:$0xf]
    %v2822 = vld [vmem:[%s78 + $0x60] sm:$0xf]
    %v2823 = vld [vmem:[%s78 + $0x64] sm:$0xf]
    %v2824 = vld [vmem:[%s78 + $0x68] sm:$0xf]
    %v2825 = vld [vmem:[%s78 + $0x6c] sm:$0xf]
    %v2826 = vld [vmem:[%s78 + $0x70] sm:$0xf]
    %v2827 = vld [vmem:[%s78 + $0x74] sm:$0xf]
    %v2828 = vld [vmem:[%s78 + $0x78] sm:$0xf]
    %v2829 = vld [vmem:[%s78 + $0x7c] sm:$0xf]
    %v2830 = vld [vmem:[%s78 + $0x80] sm:$0xf]
    %v2831 = vld [vmem:[%s78 + $0x84] sm:$0xf]
    %s2832 = scalar_lea.vmem [#allocation6], 320
    %v2833 = vld [vmem:[%s2832] sm:$0xf]
    %v2834 = vld [vmem:[%s2832 + $0x4] sm:$0xf]
    %v2835 = vld [vmem:[%s2832 + $0x8] sm:$0xf]
    %v2836 = vld [vmem:[%s2832 + $0xc] sm:$0xf]
    %v2837 = vld [vmem:[%s2832 + $0x10] sm:$0xf]
    %v2838 = vld [vmem:[%s2832 + $0x14] sm:$0xf]
    %v2839 = vld [vmem:[%s2832 + $0x18] sm:$0xf]
    %v2840 = vld [vmem:[%s2832 + $0x1c] sm:$0xf]
    %v2841 = vld [vmem:[%s2832 + $0x20] sm:$0xf]
    %v2842 = vld [vmem:[%s2832 + $0x24] sm:$0xf]
    %v2843 = vld [vmem:[%s2832 + $0x28] sm:$0xf]
    %v2844 = vld [vmem:[%s2832 + $0x2c] sm:$0xf]
    %v2845 = vld [vmem:[%s2832 + $0x30] sm:$0xf]
    %v2846 = vld [vmem:[%s2832 + $0x34] sm:$0xf]
    %v2847 = vld [vmem:[%s2832 + $0x38] sm:$0xf]
    %v2848 = vld [vmem:[%s2832 + $0x3c] sm:$0xf]
    %v2881 = vunpack.c.l.b16 %v2800
    %v2882 = vunpack.c.l.b16 %v2801
    %v2883 = vunpack.c.l.b16 %v2802
    %v2884 = vunpack.c.l.b16 %v2803
    %v2885 = vunpack.c.l.b16 %v2804
    %v2886 = vunpack.c.l.b16 %v2805
    %v2887 = vunpack.c.l.b16 %v2806
    %v2888 = vunpack.c.l.b16 %v2807
    %v2889 = vunpack.c.l.b16 %v2808
    %v2890 = vunpack.c.l.b16 %v2809
    %v2891 = vunpack.c.l.b16 %v2810
    %v2892 = vunpack.c.l.b16 %v2811
    %v2893 = vunpack.c.l.b16 %v2812
    %v2894 = vunpack.c.l.b16 %v2813
    %v2895 = vunpack.c.l.b16 %v2814
    %v2896 = vunpack.c.l.b16 %v2815
    %v2897 = vunpack.c.l.b16 %v2816
    %v2898 = vunpack.c.l.b16 %v2817
    %v2899 = vunpack.c.l.b16 %v2818
    %v2900 = vunpack.c.l.b16 %v2819
    %v2901 = vunpack.c.l.b16 %v2820
    %v2902 = vunpack.c.l.b16 %v2821
    %v2903 = vunpack.c.l.b16 %v2822
    %v2904 = vunpack.c.l.b16 %v2823
    %v2905 = vunpack.c.l.b16 %v2824
    %v2906 = vunpack.c.l.b16 %v2825
    %v2907 = vunpack.c.l.b16 %v2826
    %v2908 = vunpack.c.l.b16 %v2827
    %v2909 = vunpack.c.l.b16 %v2828
    %v2910 = vunpack.c.l.b16 %v2829
    %v2911 = vunpack.c.l.b16 %v2830
    %v2912 = vunpack.c.l.b16 %v2831
    %v2913 = vpack.c.b16 %v2882, %v2881
    %v2914 = vpack.c.b16 %v2884, %v2883
    %v2915 = vpack.c.b16 %v2886, %v2885
    %v2916 = vpack.c.b16 %v2888, %v2887
    %v2917 = vpack.c.b16 %v2890, %v2889
    %v2918 = vpack.c.b16 %v2892, %v2891
    %v2919 = vpack.c.b16 %v2894, %v2893
    %v2920 = vpack.c.b16 %v2896, %v2895
    %v2921 = vpack.c.b16 %v2898, %v2897
    %v2922 = vpack.c.b16 %v2900, %v2899
    %v2923 = vpack.c.b16 %v2902, %v2901
    %v2924 = vpack.c.b16 %v2904, %v2903
    %v2925 = vpack.c.b16 %v2906, %v2905
    %v2926 = vpack.c.b16 %v2908, %v2907
    %v2927 = vpack.c.b16 %v2910, %v2909
    %v2928 = vpack.c.b16 %v2912, %v2911
    %v2961 = vunpack.c.l.b16 %v2833
    %v2962 = vunpack.c.l.b16 %v2834
    %v2963 = vunpack.c.l.b16 %v2835
    %v2964 = vunpack.c.l.b16 %v2836
    %v2965 = vunpack.c.l.b16 %v2837
    %v2966 = vunpack.c.l.b16 %v2838
    %v2967 = vunpack.c.l.b16 %v2839
    %v2968 = vunpack.c.l.b16 %v2840
    %v2969 = vunpack.c.l.b16 %v2841
    %v2970 = vunpack.c.l.b16 %v2842
    %v2971 = vunpack.c.l.b16 %v2843
    %v2972 = vunpack.c.l.b16 %v2844
    %v2973 = vunpack.c.l.b16 %v2845
    %v2974 = vunpack.c.l.b16 %v2846
    %v2975 = vunpack.c.l.b16 %v2847
    %v2976 = vunpack.c.l.b16 %v2848
    %v2977 = vpack.c.b16 %v2962, %v2961
    %v2978 = vpack.c.b16 %v2964, %v2963
    %v2979 = vpack.c.b16 %v2966, %v2965
    %v2980 = vpack.c.b16 %v2968, %v2967
    %v2981 = vpack.c.b16 %v2970, %v2969
    %v2982 = vpack.c.b16 %v2972, %v2971
    %v2983 = vpack.c.b16 %v2974, %v2973
    %v2984 = vpack.c.b16 %v2976, %v2975
    %2993 = vmatpush.bf16.msra.mxu0 %v2984
    %2994 = vmatpush.bf16.msra.mxu0 %v2983
    %2995 = vmatpush.bf16.msra.mxu0 %v2982
    %2996 = vmatpush.bf16.msra.mxu0 %v2981
    %2997 = vmatpush.bf16.msra.mxu0 %v2980
    %2998 = vmatpush.bf16.msra.mxu0 %v2979
    %2999 = vmatpush.bf16.msra.mxu0 %v2978
    %3000 = vmatpush.bf16.msra.mxu0 %v2977
    %3001 = vmatmul.bf16.gmra.mxu0 %v2913
    %v3002 = vpop.f32.mrf.mxu0
    %v3003 = vadd.f32 0.0, %v3002
    %v3004 = vpop.f32.mrf.mxu0
    %v3005 = vadd.f32 0.0, %v3004
    %3006 = vmatmul.bf16.gmra.mxu0 %v2914
    %v3007 = vpop.f32.mrf.mxu0
    %v3008 = vadd.f32 0.0, %v3007
    %v3009 = vpop.f32.mrf.mxu0
    %v3010 = vadd.f32 0.0, %v3009
    %3011 = vmatmul.bf16.gmra.mxu0 %v2915
    %v3012 = vpop.f32.mrf.mxu0
    %v3013 = vadd.f32 0.0, %v3012
    %v3014 = vpop.f32.mrf.mxu0
    %v3015 = vadd.f32 0.0, %v3014
    %3016 = vmatmul.bf16.gmra.mxu0 %v2916
    %v3017 = vpop.f32.mrf.mxu0
    %v3018 = vadd.f32 0.0, %v3017
    %v3019 = vpop.f32.mrf.mxu0
    %v3020 = vadd.f32 0.0, %v3019
    %3021 = vmatmul.bf16.gmra.mxu0 %v2917
    %v3022 = vpop.f32.mrf.mxu0
    %v3023 = vadd.f32 0.0, %v3022
    %v3024 = vpop.f32.mrf.mxu0
    %v3025 = vadd.f32 0.0, %v3024
    %3026 = vmatmul.bf16.gmra.mxu0 %v2918
    %v3027 = vpop.f32.mrf.mxu0
    %v3028 = vadd.f32 0.0, %v3027
    %v3029 = vpop.f32.mrf.mxu0
    %v3030 = vadd.f32 0.0, %v3029
    %3031 = vmatmul.bf16.gmra.mxu0 %v2919
    %v3032 = vpop.f32.mrf.mxu0
    %v3033 = vadd.f32 0.0, %v3032
    %v3034 = vpop.f32.mrf.mxu0
    %v3035 = vadd.f32 0.0, %v3034
    %3036 = vmatmul.bf16.gmra.mxu0 %v2920
    %v3037 = vpop.f32.mrf.mxu0
    %v3038 = vadd.f32 0.0, %v3037
    %v3039 = vpop.f32.mrf.mxu0
    %v3040 = vadd.f32 0.0, %v3039
    %3041 = vmatmul.bf16.gmra.mxu0 %v2921
    %v3042 = vpop.f32.mrf.mxu0
    %v3043 = vadd.f32 0.0, %v3042
    %v3044 = vpop.f32.mrf.mxu0
    %v3045 = vadd.f32 0.0, %v3044
    %3046 = vmatmul.bf16.gmra.mxu0 %v2922
    %v3047 = vpop.f32.mrf.mxu0
    %v3048 = vadd.f32 0.0, %v3047
    %v3049 = vpop.f32.mrf.mxu0
    %v3050 = vadd.f32 0.0, %v3049
    %3051 = vmatmul.bf16.gmra.mxu0 %v2923
    %v3052 = vpop.f32.mrf.mxu0
    %v3053 = vadd.f32 0.0, %v3052
    %v3054 = vpop.f32.mrf.mxu0
    %v3055 = vadd.f32 0.0, %v3054
    %3056 = vmatmul.bf16.gmra.mxu0 %v2924
    %v3057 = vpop.f32.mrf.mxu0
    %v3058 = vadd.f32 0.0, %v3057
    %v3059 = vpop.f32.mrf.mxu0
    %v3060 = vadd.f32 0.0, %v3059
    %3061 = vmatmul.bf16.gmra.mxu0 %v2925
    %v3062 = vpop.f32.mrf.mxu0
    %v3063 = vadd.f32 0.0, %v3062
    %v3064 = vpop.f32.mrf.mxu0
    %v3065 = vadd.f32 0.0, %v3064
    %3066 = vmatmul.bf16.gmra.mxu0 %v2926
    %v3067 = vpop.f32.mrf.mxu0
    %v3068 = vadd.f32 0.0, %v3067
    %v3069 = vpop.f32.mrf.mxu0
    %v3070 = vadd.f32 0.0, %v3069
    %3071 = vmatmul.bf16.gmra.mxu0 %v2927
    %v3072 = vpop.f32.mrf.mxu0
    %v3073 = vadd.f32 0.0, %v3072
    %v3074 = vpop.f32.mrf.mxu0
    %v3075 = vadd.f32 0.0, %v3074
    %3076 = vmatmul.bf16.gmra.mxu0 %v2928
    %v3077 = vpop.f32.mrf.mxu0
    %v3078 = vadd.f32 0.0, %v3077
    %v3079 = vpop.f32.mrf.mxu0
    %v3080 = vadd.f32 0.0, %v3079
    %3081 = vdwg.mxu0
    %v3082 = vadd.f32 %v2768, %v3003
    %v3083 = vadd.f32 %v2769, %v3005
    %v3084 = vadd.f32 %v2770, %v3008
    %v3085 = vadd.f32 %v2771, %v3010
    %v3086 = vadd.f32 %v2772, %v3013
    %v3087 = vadd.f32 %v2773, %v3015
    %v3088 = vadd.f32 %v2774, %v3018
    %v3089 = vadd.f32 %v2775, %v3020
    %v3090 = vadd.f32 %v2776, %v3023
    %v3091 = vadd.f32 %v2777, %v3025
    %v3092 = vadd.f32 %v2778, %v3028
    %v3093 = vadd.f32 %v2779, %v3030
    %v3094 = vadd.f32 %v2780, %v3033
    %v3095 = vadd.f32 %v2781, %v3035
    %v3096 = vadd.f32 %v2782, %v3038
    %v3097 = vadd.f32 %v2783, %v3040
    %v3098 = vadd.f32 %v2784, %v3043
    %v3099 = vadd.f32 %v2785, %v3045
    %v3100 = vadd.f32 %v2786, %v3048
    %v3101 = vadd.f32 %v2787, %v3050
    %v3102 = vadd.f32 %v2788, %v3053
    %v3103 = vadd.f32 %v2789, %v3055
    %v3104 = vadd.f32 %v2790, %v3058
    %v3105 = vadd.f32 %v2791, %v3060
    %v3106 = vadd.f32 %v2792, %v3063
    %v3107 = vadd.f32 %v2793, %v3065
    %v3108 = vadd.f32 %v2794, %v3068
    %v3109 = vadd.f32 %v2795, %v3070
    %v3110 = vadd.f32 %v2796, %v3073
    %v3111 = vadd.f32 %v2797, %v3075
    %v3112 = vadd.f32 %v2798, %v3078
    %v3113 = vadd.f32 %v2799, %v3080
    %v3114 = vld [vmem:[#allocation2 + $0x10] sm:$0xf]
    %v3115 = vld [vmem:[#allocation2 + $0x14] sm:$0xf]
    %v3116 = vld [vmem:[#allocation2 + $0x18] sm:$0xf]
    %v3117 = vld [vmem:[#allocation2 + $0x1c] sm:$0xf]
    %v3118 = vld [vmem:[#allocation2 + $0x20] sm:$0xf]
    %v3119 = vld [vmem:[#allocation2 + $0x24] sm:$0xf]
    %v3120 = vld [vmem:[#allocation2 + $0x28] sm:$0xf]
    %v3121 = vld [vmem:[#allocation2 + $0x2c] sm:$0xf]
    %v3122 = vld [vmem:[#allocation2 + $0x30] sm:$0xf]
    %v3123 = vld [vmem:[#allocation2 + $0x34] sm:$0xf]
    %v3124 = vld [vmem:[#allocation2 + $0x38] sm:$0xf]
    %v3125 = vld [vmem:[#allocation2 + $0x3c] sm:$0xf]
    %v3126 = vld [vmem:[#allocation2 + $0x40] sm:$0xf]
    %v3127 = vld [vmem:[#allocation2 + $0x44] sm:$0xf]
    %v3128 = vld [vmem:[#allocation2 + $0x48] sm:$0xf]
    %v3129 = vld [vmem:[#allocation2 + $0x4c] sm:$0xf]
    %v3130 = vld [vmem:[#allocation2 + $0x50] sm:$0xf]
    %v3131 = vld [vmem:[#allocation2 + $0x54] sm:$0xf]
    %v3132 = vld [vmem:[#allocation2 + $0x58] sm:$0xf]
    %v3133 = vld [vmem:[#allocation2 + $0x5c] sm:$0xf]
    %v3134 = vld [vmem:[#allocation2 + $0x60] sm:$0xf]
    %v3135 = vld [vmem:[#allocation2 + $0x64] sm:$0xf]
    %v3136 = vld [vmem:[#allocation2 + $0x68] sm:$0xf]
    %v3137 = vld [vmem:[#allocation2 + $0x6c] sm:$0xf]
    %v3138 = vld [vmem:[#allocation2 + $0x70] sm:$0xf]
    %v3139 = vld [vmem:[#allocation2 + $0x74] sm:$0xf]
    %v3140 = vld [vmem:[#allocation2 + $0x78] sm:$0xf]
    %v3141 = vld [vmem:[#allocation2 + $0x7c] sm:$0xf]
    %v3142 = vld [vmem:[#allocation2 + $0x80] sm:$0xf]
    %v3143 = vld [vmem:[#allocation2 + $0x84] sm:$0xf]
    %v3144 = vld [vmem:[#allocation2 + $0x88] sm:$0xf]
    %v3145 = vld [vmem:[#allocation2 + $0x8c] sm:$0xf]
    %s3146 = scalar_lea.vmem [#allocation6], 384
    %v3147 = vld [vmem:[%s3146] sm:$0xf]
    %v3148 = vld [vmem:[%s3146 + $0x4] sm:$0xf]
    %v3149 = vld [vmem:[%s3146 + $0x8] sm:$0xf]
    %v3150 = vld [vmem:[%s3146 + $0xc] sm:$0xf]
    %v3151 = vld [vmem:[%s3146 + $0x10] sm:$0xf]
    %v3152 = vld [vmem:[%s3146 + $0x14] sm:$0xf]
    %v3153 = vld [vmem:[%s3146 + $0x18] sm:$0xf]
    %v3154 = vld [vmem:[%s3146 + $0x1c] sm:$0xf]
    %v3155 = vld [vmem:[%s3146 + $0x20] sm:$0xf]
    %v3156 = vld [vmem:[%s3146 + $0x24] sm:$0xf]
    %v3157 = vld [vmem:[%s3146 + $0x28] sm:$0xf]
    %v3158 = vld [vmem:[%s3146 + $0x2c] sm:$0xf]
    %v3159 = vld [vmem:[%s3146 + $0x30] sm:$0xf]
    %v3160 = vld [vmem:[%s3146 + $0x34] sm:$0xf]
    %v3161 = vld [vmem:[%s3146 + $0x38] sm:$0xf]
    %v3162 = vld [vmem:[%s3146 + $0x3c] sm:$0xf]
    %v3195 = vunpack.c.l.b16 %v3114
    %v3196 = vunpack.c.l.b16 %v3115
    %v3197 = vunpack.c.l.b16 %v3116
    %v3198 = vunpack.c.l.b16 %v3117
    %v3199 = vunpack.c.l.b16 %v3118
    %v3200 = vunpack.c.l.b16 %v3119
    %v3201 = vunpack.c.l.b16 %v3120
    %v3202 = vunpack.c.l.b16 %v3121
    %v3203 = vunpack.c.l.b16 %v3122
    %v3204 = vunpack.c.l.b16 %v3123
    %v3205 = vunpack.c.l.b16 %v3124
    %v3206 = vunpack.c.l.b16 %v3125
    %v3207 = vunpack.c.l.b16 %v3126
    %v3208 = vunpack.c.l.b16 %v3127
    %v3209 = vunpack.c.l.b16 %v3128
    %v3210 = vunpack.c.l.b16 %v3129
    %v3211 = vunpack.c.l.b16 %v3130
    %v3212 = vunpack.c.l.b16 %v3131
    %v3213 = vunpack.c.l.b16 %v3132
    %v3214 = vunpack.c.l.b16 %v3133
    %v3215 = vunpack.c.l.b16 %v3134
    %v3216 = vunpack.c.l.b16 %v3135
    %v3217 = vunpack.c.l.b16 %v3136
    %v3218 = vunpack.c.l.b16 %v3137
    %v3219 = vunpack.c.l.b16 %v3138
    %v3220 = vunpack.c.l.b16 %v3139
    %v3221 = vunpack.c.l.b16 %v3140
    %v3222 = vunpack.c.l.b16 %v3141
    %v3223 = vunpack.c.l.b16 %v3142
    %v3224 = vunpack.c.l.b16 %v3143
    %v3225 = vunpack.c.l.b16 %v3144
    %v3226 = vunpack.c.l.b16 %v3145
    %v3227 = vpack.c.b16 %v3196, %v3195
    %v3228 = vpack.c.b16 %v3198, %v3197
    %v3229 = vpack.c.b16 %v3200, %v3199
    %v3230 = vpack.c.b16 %v3202, %v3201
    %v3231 = vpack.c.b16 %v3204, %v3203
    %v3232 = vpack.c.b16 %v3206, %v3205
    %v3233 = vpack.c.b16 %v3208, %v3207
    %v3234 = vpack.c.b16 %v3210, %v3209
    %v3235 = vpack.c.b16 %v3212, %v3211
    %v3236 = vpack.c.b16 %v3214, %v3213
    %v3237 = vpack.c.b16 %v3216, %v3215
    %v3238 = vpack.c.b16 %v3218, %v3217
    %v3239 = vpack.c.b16 %v3220, %v3219
    %v3240 = vpack.c.b16 %v3222, %v3221
    %v3241 = vpack.c.b16 %v3224, %v3223
    %v3242 = vpack.c.b16 %v3226, %v3225
    %v3275 = vunpack.c.l.b16 %v3147
    %v3276 = vunpack.c.l.b16 %v3148
    %v3277 = vunpack.c.l.b16 %v3149
    %v3278 = vunpack.c.l.b16 %v3150
    %v3279 = vunpack.c.l.b16 %v3151
    %v3280 = vunpack.c.l.b16 %v3152
    %v3281 = vunpack.c.l.b16 %v3153
    %v3282 = vunpack.c.l.b16 %v3154
    %v3283 = vunpack.c.l.b16 %v3155
    %v3284 = vunpack.c.l.b16 %v3156
    %v3285 = vunpack.c.l.b16 %v3157
    %v3286 = vunpack.c.l.b16 %v3158
    %v3287 = vunpack.c.l.b16 %v3159
    %v3288 = vunpack.c.l.b16 %v3160
    %v3289 = vunpack.c.l.b16 %v3161
    %v3290 = vunpack.c.l.b16 %v3162
    %v3291 = vpack.c.b16 %v3276, %v3275
    %v3292 = vpack.c.b16 %v3278, %v3277
    %v3293 = vpack.c.b16 %v3280, %v3279
    %v3294 = vpack.c.b16 %v3282, %v3281
    %v3295 = vpack.c.b16 %v3284, %v3283
    %v3296 = vpack.c.b16 %v3286, %v3285
    %v3297 = vpack.c.b16 %v3288, %v3287
    %v3298 = vpack.c.b16 %v3290, %v3289
    %3307 = vmatpush.bf16.msra.mxu0 %v3298
    %3308 = vmatpush.bf16.msra.mxu0 %v3297
    %3309 = vmatpush.bf16.msra.mxu0 %v3296
    %3310 = vmatpush.bf16.msra.mxu0 %v3295
    %3311 = vmatpush.bf16.msra.mxu0 %v3294
    %3312 = vmatpush.bf16.msra.mxu0 %v3293
    %3313 = vmatpush.bf16.msra.mxu0 %v3292
    %3314 = vmatpush.bf16.msra.mxu0 %v3291
    %3315 = vmatmul.bf16.gmra.mxu0 %v3227
    %v3316 = vpop.f32.mrf.mxu0
    %v3317 = vadd.f32 0.0, %v3316
    %v3318 = vpop.f32.mrf.mxu0
    %v3319 = vadd.f32 0.0, %v3318
    %3320 = vmatmul.bf16.gmra.mxu0 %v3228
    %v3321 = vpop.f32.mrf.mxu0
    %v3322 = vadd.f32 0.0, %v3321
    %v3323 = vpop.f32.mrf.mxu0
    %v3324 = vadd.f32 0.0, %v3323
    %3325 = vmatmul.bf16.gmra.mxu0 %v3229
    %v3326 = vpop.f32.mrf.mxu0
    %v3327 = vadd.f32 0.0, %v3326
    %v3328 = vpop.f32.mrf.mxu0
    %v3329 = vadd.f32 0.0, %v3328
    %3330 = vmatmul.bf16.gmra.mxu0 %v3230
    %v3331 = vpop.f32.mrf.mxu0
    %v3332 = vadd.f32 0.0, %v3331
    %v3333 = vpop.f32.mrf.mxu0
    %v3334 = vadd.f32 0.0, %v3333
    %3335 = vmatmul.bf16.gmra.mxu0 %v3231
    %v3336 = vpop.f32.mrf.mxu0
    %v3337 = vadd.f32 0.0, %v3336
    %v3338 = vpop.f32.mrf.mxu0
    %v3339 = vadd.f32 0.0, %v3338
    %3340 = vmatmul.bf16.gmra.mxu0 %v3232
    %v3341 = vpop.f32.mrf.mxu0
    %v3342 = vadd.f32 0.0, %v3341
    %v3343 = vpop.f32.mrf.mxu0
    %v3344 = vadd.f32 0.0, %v3343
    %3345 = vmatmul.bf16.gmra.mxu0 %v3233
    %v3346 = vpop.f32.mrf.mxu0
    %v3347 = vadd.f32 0.0, %v3346
    %v3348 = vpop.f32.mrf.mxu0
    %v3349 = vadd.f32 0.0, %v3348
    %3350 = vmatmul.bf16.gmra.mxu0 %v3234
    %v3351 = vpop.f32.mrf.mxu0
    %v3352 = vadd.f32 0.0, %v3351
    %v3353 = vpop.f32.mrf.mxu0
    %v3354 = vadd.f32 0.0, %v3353
    %3355 = vmatmul.bf16.gmra.mxu0 %v3235
    %v3356 = vpop.f32.mrf.mxu0
    %v3357 = vadd.f32 0.0, %v3356
    %v3358 = vpop.f32.mrf.mxu0
    %v3359 = vadd.f32 0.0, %v3358
    %3360 = vmatmul.bf16.gmra.mxu0 %v3236
    %v3361 = vpop.f32.mrf.mxu0
    %v3362 = vadd.f32 0.0, %v3361
    %v3363 = vpop.f32.mrf.mxu0
    %v3364 = vadd.f32 0.0, %v3363
    %3365 = vmatmul.bf16.gmra.mxu0 %v3237
    %v3366 = vpop.f32.mrf.mxu0
    %v3367 = vadd.f32 0.0, %v3366
    %v3368 = vpop.f32.mrf.mxu0
    %v3369 = vadd.f32 0.0, %v3368
    %3370 = vmatmul.bf16.gmra.mxu0 %v3238
    %v3371 = vpop.f32.mrf.mxu0
    %v3372 = vadd.f32 0.0, %v3371
    %v3373 = vpop.f32.mrf.mxu0
    %v3374 = vadd.f32 0.0, %v3373
    %3375 = vmatmul.bf16.gmra.mxu0 %v3239
    %v3376 = vpop.f32.mrf.mxu0
    %v3377 = vadd.f32 0.0, %v3376
    %v3378 = vpop.f32.mrf.mxu0
    %v3379 = vadd.f32 0.0, %v3378
    %3380 = vmatmul.bf16.gmra.mxu0 %v3240
    %v3381 = vpop.f32.mrf.mxu0
    %v3382 = vadd.f32 0.0, %v3381
    %v3383 = vpop.f32.mrf.mxu0
    %v3384 = vadd.f32 0.0, %v3383
    %3385 = vmatmul.bf16.gmra.mxu0 %v3241
    %v3386 = vpop.f32.mrf.mxu0
    %v3387 = vadd.f32 0.0, %v3386
    %v3388 = vpop.f32.mrf.mxu0
    %v3389 = vadd.f32 0.0, %v3388
    %3390 = vmatmul.bf16.gmra.mxu0 %v3242
    %v3391 = vpop.f32.mrf.mxu0
    %v3392 = vadd.f32 0.0, %v3391
    %v3393 = vpop.f32.mrf.mxu0
    %v3394 = vadd.f32 0.0, %v3393
    %3395 = vdwg.mxu0
    %v3396 = vadd.f32 %v3082, %v3317
    %v3397 = vadd.f32 %v3083, %v3319
    %v3398 = vadd.f32 %v3084, %v3322
    %v3399 = vadd.f32 %v3085, %v3324
    %v3400 = vadd.f32 %v3086, %v3327
    %v3401 = vadd.f32 %v3087, %v3329
    %v3402 = vadd.f32 %v3088, %v3332
    %v3403 = vadd.f32 %v3089, %v3334
    %v3404 = vadd.f32 %v3090, %v3337
    %v3405 = vadd.f32 %v3091, %v3339
    %v3406 = vadd.f32 %v3092, %v3342
    %v3407 = vadd.f32 %v3093, %v3344
    %v3408 = vadd.f32 %v3094, %v3347
    %v3409 = vadd.f32 %v3095, %v3349
    %v3410 = vadd.f32 %v3096, %v3352
    %v3411 = vadd.f32 %v3097, %v3354
    %v3412 = vadd.f32 %v3098, %v3357
    %v3413 = vadd.f32 %v3099, %v3359
    %v3414 = vadd.f32 %v3100, %v3362
    %v3415 = vadd.f32 %v3101, %v3364
    %v3416 = vadd.f32 %v3102, %v3367
    %v3417 = vadd.f32 %v3103, %v3369
    %v3418 = vadd.f32 %v3104, %v3372
    %v3419 = vadd.f32 %v3105, %v3374
    %v3420 = vadd.f32 %v3106, %v3377
    %v3421 = vadd.f32 %v3107, %v3379
    %v3422 = vadd.f32 %v3108, %v3382
    %v3423 = vadd.f32 %v3109, %v3384
    %v3424 = vadd.f32 %v3110, %v3387
    %v3425 = vadd.f32 %v3111, %v3389
    %v3426 = vadd.f32 %v3112, %v3392
    %v3427 = vadd.f32 %v3113, %v3394
    %v3428 = vld [vmem:[%s73 + $0x10] sm:$0xf]
    %v3429 = vld [vmem:[%s73 + $0x14] sm:$0xf]
    %v3430 = vld [vmem:[%s73 + $0x18] sm:$0xf]
    %v3431 = vld [vmem:[%s73 + $0x1c] sm:$0xf]
    %v3432 = vld [vmem:[%s73 + $0x20] sm:$0xf]
    %v3433 = vld [vmem:[%s73 + $0x24] sm:$0xf]
    %v3434 = vld [vmem:[%s73 + $0x28] sm:$0xf]
    %v3435 = vld [vmem:[%s73 + $0x2c] sm:$0xf]
    %v3436 = vld [vmem:[%s73 + $0x30] sm:$0xf]
    %v3437 = vld [vmem:[%s73 + $0x34] sm:$0xf]
    %v3438 = vld [vmem:[%s73 + $0x38] sm:$0xf]
    %v3439 = vld [vmem:[%s73 + $0x3c] sm:$0xf]
    %v3440 = vld [vmem:[%s73 + $0x40] sm:$0xf]
    %v3441 = vld [vmem:[%s73 + $0x44] sm:$0xf]
    %v3442 = vld [vmem:[%s73 + $0x48] sm:$0xf]
    %v3443 = vld [vmem:[%s73 + $0x4c] sm:$0xf]
    %v3444 = vld [vmem:[%s73 + $0x50] sm:$0xf]
    %v3445 = vld [vmem:[%s73 + $0x54] sm:$0xf]
    %v3446 = vld [vmem:[%s73 + $0x58] sm:$0xf]
    %v3447 = vld [vmem:[%s73 + $0x5c] sm:$0xf]
    %v3448 = vld [vmem:[%s73 + $0x60] sm:$0xf]
    %v3449 = vld [vmem:[%s73 + $0x64] sm:$0xf]
    %v3450 = vld [vmem:[%s73 + $0x68] sm:$0xf]
    %v3451 = vld [vmem:[%s73 + $0x6c] sm:$0xf]
    %v3452 = vld [vmem:[%s73 + $0x70] sm:$0xf]
    %v3453 = vld [vmem:[%s73 + $0x74] sm:$0xf]
    %v3454 = vld [vmem:[%s73 + $0x78] sm:$0xf]
    %v3455 = vld [vmem:[%s73 + $0x7c] sm:$0xf]
    %v3456 = vld [vmem:[%s73 + $0x80] sm:$0xf]
    %v3457 = vld [vmem:[%s73 + $0x84] sm:$0xf]
    %v3458 = vld [vmem:[%s73 + $0x88] sm:$0xf]
    %v3459 = vld [vmem:[%s73 + $0x8c] sm:$0xf]
    %s3460 = scalar_lea.vmem [#allocation6], 448
    %v3461 = vld [vmem:[%s3460] sm:$0xf]
    %v3462 = vld [vmem:[%s3460 + $0x4] sm:$0xf]
    %v3463 = vld [vmem:[%s3460 + $0x8] sm:$0xf]
    %v3464 = vld [vmem:[%s3460 + $0xc] sm:$0xf]
    %v3465 = vld [vmem:[%s3460 + $0x10] sm:$0xf]
    %v3466 = vld [vmem:[%s3460 + $0x14] sm:$0xf]
    %v3467 = vld [vmem:[%s3460 + $0x18] sm:$0xf]
    %v3468 = vld [vmem:[%s3460 + $0x1c] sm:$0xf]
    %v3469 = vld [vmem:[%s3460 + $0x20] sm:$0xf]
    %v3470 = vld [vmem:[%s3460 + $0x24] sm:$0xf]
    %v3471 = vld [vmem:[%s3460 + $0x28] sm:$0xf]
    %v3472 = vld [vmem:[%s3460 + $0x2c] sm:$0xf]
    %v3473 = vld [vmem:[%s3460 + $0x30] sm:$0xf]
    %v3474 = vld [vmem:[%s3460 + $0x34] sm:$0xf]
    %v3475 = vld [vmem:[%s3460 + $0x38] sm:$0xf]
    %v3476 = vld [vmem:[%s3460 + $0x3c] sm:$0xf]
    %v3509 = vunpack.c.l.b16 %v3428
    %v3510 = vunpack.c.l.b16 %v3429
    %v3511 = vunpack.c.l.b16 %v3430
    %v3512 = vunpack.c.l.b16 %v3431
    %v3513 = vunpack.c.l.b16 %v3432
    %v3514 = vunpack.c.l.b16 %v3433
    %v3515 = vunpack.c.l.b16 %v3434
    %v3516 = vunpack.c.l.b16 %v3435
    %v3517 = vunpack.c.l.b16 %v3436
    %v3518 = vunpack.c.l.b16 %v3437
    %v3519 = vunpack.c.l.b16 %v3438
    %v3520 = vunpack.c.l.b16 %v3439
    %v3521 = vunpack.c.l.b16 %v3440
    %v3522 = vunpack.c.l.b16 %v3441
    %v3523 = vunpack.c.l.b16 %v3442
    %v3524 = vunpack.c.l.b16 %v3443
    %v3525 = vunpack.c.l.b16 %v3444
    %v3526 = vunpack.c.l.b16 %v3445
    %v3527 = vunpack.c.l.b16 %v3446
    %v3528 = vunpack.c.l.b16 %v3447
    %v3529 = vunpack.c.l.b16 %v3448
    %v3530 = vunpack.c.l.b16 %v3449
    %v3531 = vunpack.c.l.b16 %v3450
    %v3532 = vunpack.c.l.b16 %v3451
    %v3533 = vunpack.c.l.b16 %v3452
    %v3534 = vunpack.c.l.b16 %v3453
    %v3535 = vunpack.c.l.b16 %v3454
    %v3536 = vunpack.c.l.b16 %v3455
    %v3537 = vunpack.c.l.b16 %v3456
    %v3538 = vunpack.c.l.b16 %v3457
    %v3539 = vunpack.c.l.b16 %v3458
    %v3540 = vunpack.c.l.b16 %v3459
    %v3541 = vpack.c.b16 %v3510, %v3509
    %v3542 = vpack.c.b16 %v3512, %v3511
    %v3543 = vpack.c.b16 %v3514, %v3513
    %v3544 = vpack.c.b16 %v3516, %v3515
    %v3545 = vpack.c.b16 %v3518, %v3517
    %v3546 = vpack.c.b16 %v3520, %v3519
    %v3547 = vpack.c.b16 %v3522, %v3521
    %v3548 = vpack.c.b16 %v3524, %v3523
    %v3549 = vpack.c.b16 %v3526, %v3525
    %v3550 = vpack.c.b16 %v3528, %v3527
    %v3551 = vpack.c.b16 %v3530, %v3529
    %v3552 = vpack.c.b16 %v3532, %v3531
    %v3553 = vpack.c.b16 %v3534, %v3533
    %v3554 = vpack.c.b16 %v3536, %v3535
    %v3555 = vpack.c.b16 %v3538, %v3537
    %v3556 = vpack.c.b16 %v3540, %v3539
    %v3589 = vunpack.c.l.b16 %v3461
    %v3590 = vunpack.c.l.b16 %v3462
    %v3591 = vunpack.c.l.b16 %v3463
    %v3592 = vunpack.c.l.b16 %v3464
    %v3593 = vunpack.c.l.b16 %v3465
    %v3594 = vunpack.c.l.b16 %v3466
    %v3595 = vunpack.c.l.b16 %v3467
    %v3596 = vunpack.c.l.b16 %v3468
    %v3597 = vunpack.c.l.b16 %v3469
    %v3598 = vunpack.c.l.b16 %v3470
    %v3599 = vunpack.c.l.b16 %v3471
    %v3600 = vunpack.c.l.b16 %v3472
    %v3601 = vunpack.c.l.b16 %v3473
    %v3602 = vunpack.c.l.b16 %v3474
    %v3603 = vunpack.c.l.b16 %v3475
    %v3604 = vunpack.c.l.b16 %v3476
    %v3605 = vpack.c.b16 %v3590, %v3589
    %v3606 = vpack.c.b16 %v3592, %v3591
    %v3607 = vpack.c.b16 %v3594, %v3593
    %v3608 = vpack.c.b16 %v3596, %v3595
    %v3609 = vpack.c.b16 %v3598, %v3597
    %v3610 = vpack.c.b16 %v3600, %v3599
    %v3611 = vpack.c.b16 %v3602, %v3601
    %v3612 = vpack.c.b16 %v3604, %v3603
    %3621 = vmatpush.bf16.msra.mxu0 %v3612
    %3622 = vmatpush.bf16.msra.mxu0 %v3611
    %3623 = vmatpush.bf16.msra.mxu0 %v3610
    %3624 = vmatpush.bf16.msra.mxu0 %v3609
    %3625 = vmatpush.bf16.msra.mxu0 %v3608
    %3626 = vmatpush.bf16.msra.mxu0 %v3607
    %3627 = vmatpush.bf16.msra.mxu0 %v3606
    %3628 = vmatpush.bf16.msra.mxu0 %v3605
    %3629 = vmatmul.bf16.gmra.mxu0 %v3541
    %v3630 = vpop.f32.mrf.mxu0
    %v3631 = vadd.f32 0.0, %v3630
    %v3632 = vpop.f32.mrf.mxu0
    %v3633 = vadd.f32 0.0, %v3632
    %3634 = vmatmul.bf16.gmra.mxu0 %v3542
    %v3635 = vpop.f32.mrf.mxu0
    %v3636 = vadd.f32 0.0, %v3635
    %v3637 = vpop.f32.mrf.mxu0
    %v3638 = vadd.f32 0.0, %v3637
    %3639 = vmatmul.bf16.gmra.mxu0 %v3543
    %v3640 = vpop.f32.mrf.mxu0
    %v3641 = vadd.f32 0.0, %v3640
    %v3642 = vpop.f32.mrf.mxu0
    %v3643 = vadd.f32 0.0, %v3642
    %3644 = vmatmul.bf16.gmra.mxu0 %v3544
    %v3645 = vpop.f32.mrf.mxu0
    %v3646 = vadd.f32 0.0, %v3645
    %v3647 = vpop.f32.mrf.mxu0
    %v3648 = vadd.f32 0.0, %v3647
    %3649 = vmatmul.bf16.gmra.mxu0 %v3545
    %v3650 = vpop.f32.mrf.mxu0
    %v3651 = vadd.f32 0.0, %v3650
    %v3652 = vpop.f32.mrf.mxu0
    %v3653 = vadd.f32 0.0, %v3652
    %3654 = vmatmul.bf16.gmra.mxu0 %v3546
    %v3655 = vpop.f32.mrf.mxu0
    %v3656 = vadd.f32 0.0, %v3655
    %v3657 = vpop.f32.mrf.mxu0
    %v3658 = vadd.f32 0.0, %v3657
    %3659 = vmatmul.bf16.gmra.mxu0 %v3547
    %v3660 = vpop.f32.mrf.mxu0
    %v3661 = vadd.f32 0.0, %v3660
    %v3662 = vpop.f32.mrf.mxu0
    %v3663 = vadd.f32 0.0, %v3662
    %3664 = vmatmul.bf16.gmra.mxu0 %v3548
    %v3665 = vpop.f32.mrf.mxu0
    %v3666 = vadd.f32 0.0, %v3665
    %v3667 = vpop.f32.mrf.mxu0
    %v3668 = vadd.f32 0.0, %v3667
    %3669 = vmatmul.bf16.gmra.mxu0 %v3549
    %v3670 = vpop.f32.mrf.mxu0
    %v3671 = vadd.f32 0.0, %v3670
    %v3672 = vpop.f32.mrf.mxu0
    %v3673 = vadd.f32 0.0, %v3672
    %3674 = vmatmul.bf16.gmra.mxu0 %v3550
    %v3675 = vpop.f32.mrf.mxu0
    %v3676 = vadd.f32 0.0, %v3675
    %v3677 = vpop.f32.mrf.mxu0
    %v3678 = vadd.f32 0.0, %v3677
    %3679 = vmatmul.bf16.gmra.mxu0 %v3551
    %v3680 = vpop.f32.mrf.mxu0
    %v3681 = vadd.f32 0.0, %v3680
    %v3682 = vpop.f32.mrf.mxu0
    %v3683 = vadd.f32 0.0, %v3682
    %3684 = vmatmul.bf16.gmra.mxu0 %v3552
    %v3685 = vpop.f32.mrf.mxu0
    %v3686 = vadd.f32 0.0, %v3685
    %v3687 = vpop.f32.mrf.mxu0
    %v3688 = vadd.f32 0.0, %v3687
    %3689 = vmatmul.bf16.gmra.mxu0 %v3553
    %v3690 = vpop.f32.mrf.mxu0
    %v3691 = vadd.f32 0.0, %v3690
    %v3692 = vpop.f32.mrf.mxu0
    %v3693 = vadd.f32 0.0, %v3692
    %3694 = vmatmul.bf16.gmra.mxu0 %v3554
    %v3695 = vpop.f32.mrf.mxu0
    %v3696 = vadd.f32 0.0, %v3695
    %v3697 = vpop.f32.mrf.mxu0
    %v3698 = vadd.f32 0.0, %v3697
    %3699 = vmatmul.bf16.gmra.mxu0 %v3555
    %v3700 = vpop.f32.mrf.mxu0
    %v3701 = vadd.f32 0.0, %v3700
    %v3702 = vpop.f32.mrf.mxu0
    %v3703 = vadd.f32 0.0, %v3702
    %3704 = vmatmul.bf16.gmra.mxu0 %v3556
    %v3705 = vpop.f32.mrf.mxu0
    %v3706 = vadd.f32 0.0, %v3705
    %v3707 = vpop.f32.mrf.mxu0
    %v3708 = vadd.f32 0.0, %v3707
    %3709 = vdwg.mxu0
    %v3710 = vadd.f32 %v3396, %v3631
    %v3711 = vadd.f32 %v3397, %v3633
    %v3712 = vadd.f32 %v3398, %v3636
    %v3713 = vadd.f32 %v3399, %v3638
    %v3714 = vadd.f32 %v3400, %v3641
    %v3715 = vadd.f32 %v3401, %v3643
    %v3716 = vadd.f32 %v3402, %v3646
    %v3717 = vadd.f32 %v3403, %v3648
    %v3718 = vadd.f32 %v3404, %v3651
    %v3719 = vadd.f32 %v3405, %v3653
    %v3720 = vadd.f32 %v3406, %v3656
    %v3721 = vadd.f32 %v3407, %v3658
    %v3722 = vadd.f32 %v3408, %v3661
    %v3723 = vadd.f32 %v3409, %v3663
    %v3724 = vadd.f32 %v3410, %v3666
    %v3725 = vadd.f32 %v3411, %v3668
    %v3726 = vadd.f32 %v3412, %v3671
    %v3727 = vadd.f32 %v3413, %v3673
    %v3728 = vadd.f32 %v3414, %v3676
    %v3729 = vadd.f32 %v3415, %v3678
    %v3730 = vadd.f32 %v3416, %v3681
    %v3731 = vadd.f32 %v3417, %v3683
    %v3732 = vadd.f32 %v3418, %v3686
    %v3733 = vadd.f32 %v3419, %v3688
    %v3734 = vadd.f32 %v3420, %v3691
    %v3735 = vadd.f32 %v3421, %v3693
    %v3736 = vadd.f32 %v3422, %v3696
    %v3737 = vadd.f32 %v3423, %v3698
    %v3738 = vadd.f32 %v3424, %v3701
    %v3739 = vadd.f32 %v3425, %v3703
    %v3740 = vadd.f32 %v3426, %v3706
    %v3741 = vadd.f32 %v3427, %v3708
    %v3742 = vld [vmem:[%s78 + $0x10] sm:$0xf]
    %v3743 = vld [vmem:[%s78 + $0x14] sm:$0xf]
    %v3744 = vld [vmem:[%s78 + $0x18] sm:$0xf]
    %v3745 = vld [vmem:[%s78 + $0x1c] sm:$0xf]
    %v3746 = vld [vmem:[%s78 + $0x20] sm:$0xf]
    %v3747 = vld [vmem:[%s78 + $0x24] sm:$0xf]
    %v3748 = vld [vmem:[%s78 + $0x28] sm:$0xf]
    %v3749 = vld [vmem:[%s78 + $0x2c] sm:$0xf]
    %v3750 = vld [vmem:[%s78 + $0x30] sm:$0xf]
    %v3751 = vld [vmem:[%s78 + $0x34] sm:$0xf]
    %v3752 = vld [vmem:[%s78 + $0x38] sm:$0xf]
    %v3753 = vld [vmem:[%s78 + $0x3c] sm:$0xf]
    %v3754 = vld [vmem:[%s78 + $0x40] sm:$0xf]
    %v3755 = vld [vmem:[%s78 + $0x44] sm:$0xf]
    %v3756 = vld [vmem:[%s78 + $0x48] sm:$0xf]
    %v3757 = vld [vmem:[%s78 + $0x4c] sm:$0xf]
    %v3758 = vld [vmem:[%s78 + $0x50] sm:$0xf]
    %v3759 = vld [vmem:[%s78 + $0x54] sm:$0xf]
    %v3760 = vld [vmem:[%s78 + $0x58] sm:$0xf]
    %v3761 = vld [vmem:[%s78 + $0x5c] sm:$0xf]
    %v3762 = vld [vmem:[%s78 + $0x60] sm:$0xf]
    %v3763 = vld [vmem:[%s78 + $0x64] sm:$0xf]
    %v3764 = vld [vmem:[%s78 + $0x68] sm:$0xf]
    %v3765 = vld [vmem:[%s78 + $0x6c] sm:$0xf]
    %v3766 = vld [vmem:[%s78 + $0x70] sm:$0xf]
    %v3767 = vld [vmem:[%s78 + $0x74] sm:$0xf]
    %v3768 = vld [vmem:[%s78 + $0x78] sm:$0xf]
    %v3769 = vld [vmem:[%s78 + $0x7c] sm:$0xf]
    %v3770 = vld [vmem:[%s78 + $0x80] sm:$0xf]
    %v3771 = vld [vmem:[%s78 + $0x84] sm:$0xf]
    %v3772 = vld [vmem:[%s78 + $0x88] sm:$0xf]
    %v3773 = vld [vmem:[%s78 + $0x8c] sm:$0xf]
    %s3774 = scalar_lea.vmem [#allocation6], 512
    %v3775 = vld [vmem:[%s3774] sm:$0xf]
    %v3776 = vld [vmem:[%s3774 + $0x4] sm:$0xf]
    %v3777 = vld [vmem:[%s3774 + $0x8] sm:$0xf]
    %v3778 = vld [vmem:[%s3774 + $0xc] sm:$0xf]
    %v3779 = vld [vmem:[%s3774 + $0x10] sm:$0xf]
    %v3780 = vld [vmem:[%s3774 + $0x14] sm:$0xf]
    %v3781 = vld [vmem:[%s3774 + $0x18] sm:$0xf]
    %v3782 = vld [vmem:[%s3774 + $0x1c] sm:$0xf]
    %v3783 = vld [vmem:[%s3774 + $0x20] sm:$0xf]
    %v3784 = vld [vmem:[%s3774 + $0x24] sm:$0xf]
    %v3785 = vld [vmem:[%s3774 + $0x28] sm:$0xf]
    %v3786 = vld [vmem:[%s3774 + $0x2c] sm:$0xf]
    %v3787 = vld [vmem:[%s3774 + $0x30] sm:$0xf]
    %v3788 = vld [vmem:[%s3774 + $0x34] sm:$0xf]
    %v3789 = vld [vmem:[%s3774 + $0x38] sm:$0xf]
    %v3790 = vld [vmem:[%s3774 + $0x3c] sm:$0xf]
    %v3823 = vunpack.c.l.b16 %v3742
    %v3824 = vunpack.c.l.b16 %v3743
    %v3825 = vunpack.c.l.b16 %v3744
    %v3826 = vunpack.c.l.b16 %v3745
    %v3827 = vunpack.c.l.b16 %v3746
    %v3828 = vunpack.c.l.b16 %v3747
    %v3829 = vunpack.c.l.b16 %v3748
    %v3830 = vunpack.c.l.b16 %v3749
    %v3831 = vunpack.c.l.b16 %v3750
    %v3832 = vunpack.c.l.b16 %v3751
    %v3833 = vunpack.c.l.b16 %v3752
    %v3834 = vunpack.c.l.b16 %v3753
    %v3835 = vunpack.c.l.b16 %v3754
    %v3836 = vunpack.c.l.b16 %v3755
    %v3837 = vunpack.c.l.b16 %v3756
    %v3838 = vunpack.c.l.b16 %v3757
    %v3839 = vunpack.c.l.b16 %v3758
    %v3840 = vunpack.c.l.b16 %v3759
    %v3841 = vunpack.c.l.b16 %v3760
    %v3842 = vunpack.c.l.b16 %v3761
    %v3843 = vunpack.c.l.b16 %v3762
    %v3844 = vunpack.c.l.b16 %v3763
    %v3845 = vunpack.c.l.b16 %v3764
    %v3846 = vunpack.c.l.b16 %v3765
    %v3847 = vunpack.c.l.b16 %v3766
    %v3848 = vunpack.c.l.b16 %v3767
    %v3849 = vunpack.c.l.b16 %v3768
    %v3850 = vunpack.c.l.b16 %v3769
    %v3851 = vunpack.c.l.b16 %v3770
    %v3852 = vunpack.c.l.b16 %v3771
    %v3853 = vunpack.c.l.b16 %v3772
    %v3854 = vunpack.c.l.b16 %v3773
    %v3855 = vpack.c.b16 %v3824, %v3823
    %v3856 = vpack.c.b16 %v3826, %v3825
    %v3857 = vpack.c.b16 %v3828, %v3827
    %v3858 = vpack.c.b16 %v3830, %v3829
    %v3859 = vpack.c.b16 %v3832, %v3831
    %v3860 = vpack.c.b16 %v3834, %v3833
    %v3861 = vpack.c.b16 %v3836, %v3835
    %v3862 = vpack.c.b16 %v3838, %v3837
    %v3863 = vpack.c.b16 %v3840, %v3839
    %v3864 = vpack.c.b16 %v3842, %v3841
    %v3865 = vpack.c.b16 %v3844, %v3843
    %v3866 = vpack.c.b16 %v3846, %v3845
    %v3867 = vpack.c.b16 %v3848, %v3847
    %v3868 = vpack.c.b16 %v3850, %v3849
    %v3869 = vpack.c.b16 %v3852, %v3851
    %v3870 = vpack.c.b16 %v3854, %v3853
    %v3903 = vunpack.c.l.b16 %v3775
    %v3904 = vunpack.c.l.b16 %v3776
    %v3905 = vunpack.c.l.b16 %v3777
    %v3906 = vunpack.c.l.b16 %v3778
    %v3907 = vunpack.c.l.b16 %v3779
    %v3908 = vunpack.c.l.b16 %v3780
    %v3909 = vunpack.c.l.b16 %v3781
    %v3910 = vunpack.c.l.b16 %v3782
    %v3911 = vunpack.c.l.b16 %v3783
    %v3912 = vunpack.c.l.b16 %v3784
    %v3913 = vunpack.c.l.b16 %v3785
    %v3914 = vunpack.c.l.b16 %v3786
    %v3915 = vunpack.c.l.b16 %v3787
    %v3916 = vunpack.c.l.b16 %v3788
    %v3917 = vunpack.c.l.b16 %v3789
    %v3918 = vunpack.c.l.b16 %v3790
    %v3919 = vpack.c.b16 %v3904, %v3903
    %v3920 = vpack.c.b16 %v3906, %v3905
    %v3921 = vpack.c.b16 %v3908, %v3907
    %v3922 = vpack.c.b16 %v3910, %v3909
    %v3923 = vpack.c.b16 %v3912, %v3911
    %v3924 = vpack.c.b16 %v3914, %v3913
    %v3925 = vpack.c.b16 %v3916, %v3915
    %v3926 = vpack.c.b16 %v3918, %v3917
    %3935 = vmatpush.bf16.msra.mxu0 %v3926
    %3936 = vmatpush.bf16.msra.mxu0 %v3925
    %3937 = vmatpush.bf16.msra.mxu0 %v3924
    %3938 = vmatpush.bf16.msra.mxu0 %v3923
    %3939 = vmatpush.bf16.msra.mxu0 %v3922
    %3940 = vmatpush.bf16.msra.mxu0 %v3921
    %3941 = vmatpush.bf16.msra.mxu0 %v3920
    %3942 = vmatpush.bf16.msra.mxu0 %v3919
    %3943 = vmatmul.bf16.gmra.mxu0 %v3855
    %v3944 = vpop.f32.mrf.mxu0
    %v3945 = vadd.f32 0.0, %v3944
    %v3946 = vpop.f32.mrf.mxu0
    %v3947 = vadd.f32 0.0, %v3946
    %3948 = vmatmul.bf16.gmra.mxu0 %v3856
    %v3949 = vpop.f32.mrf.mxu0
    %v3950 = vadd.f32 0.0, %v3949
    %v3951 = vpop.f32.mrf.mxu0
    %v3952 = vadd.f32 0.0, %v3951
    %3953 = vmatmul.bf16.gmra.mxu0 %v3857
    %v3954 = vpop.f32.mrf.mxu0
    %v3955 = vadd.f32 0.0, %v3954
    %v3956 = vpop.f32.mrf.mxu0
    %v3957 = vadd.f32 0.0, %v3956
    %3958 = vmatmul.bf16.gmra.mxu0 %v3858
    %v3959 = vpop.f32.mrf.mxu0
    %v3960 = vadd.f32 0.0, %v3959
    %v3961 = vpop.f32.mrf.mxu0
    %v3962 = vadd.f32 0.0, %v3961
    %3963 = vmatmul.bf16.gmra.mxu0 %v3859
    %v3964 = vpop.f32.mrf.mxu0
    %v3965 = vadd.f32 0.0, %v3964
    %v3966 = vpop.f32.mrf.mxu0
    %v3967 = vadd.f32 0.0, %v3966
    %3968 = vmatmul.bf16.gmra.mxu0 %v3860
    %v3969 = vpop.f32.mrf.mxu0
    %v3970 = vadd.f32 0.0, %v3969
    %v3971 = vpop.f32.mrf.mxu0
    %v3972 = vadd.f32 0.0, %v3971
    %3973 = vmatmul.bf16.gmra.mxu0 %v3861
    %v3974 = vpop.f32.mrf.mxu0
    %v3975 = vadd.f32 0.0, %v3974
    %v3976 = vpop.f32.mrf.mxu0
    %v3977 = vadd.f32 0.0, %v3976
    %3978 = vmatmul.bf16.gmra.mxu0 %v3862
    %v3979 = vpop.f32.mrf.mxu0
    %v3980 = vadd.f32 0.0, %v3979
    %v3981 = vpop.f32.mrf.mxu0
    %v3982 = vadd.f32 0.0, %v3981
    %3983 = vmatmul.bf16.gmra.mxu0 %v3863
    %v3984 = vpop.f32.mrf.mxu0
    %v3985 = vadd.f32 0.0, %v3984
    %v3986 = vpop.f32.mrf.mxu0
    %v3987 = vadd.f32 0.0, %v3986
    %3988 = vmatmul.bf16.gmra.mxu0 %v3864
    %v3989 = vpop.f32.mrf.mxu0
    %v3990 = vadd.f32 0.0, %v3989
    %v3991 = vpop.f32.mrf.mxu0
    %v3992 = vadd.f32 0.0, %v3991
    %3993 = vmatmul.bf16.gmra.mxu0 %v3865
    %v3994 = vpop.f32.mrf.mxu0
    %v3995 = vadd.f32 0.0, %v3994
    %v3996 = vpop.f32.mrf.mxu0
    %v3997 = vadd.f32 0.0, %v3996
    %3998 = vmatmul.bf16.gmra.mxu0 %v3866
    %v3999 = vpop.f32.mrf.mxu0
    %v4000 = vadd.f32 0.0, %v3999
    %v4001 = vpop.f32.mrf.mxu0
    %v4002 = vadd.f32 0.0, %v4001
    %4003 = vmatmul.bf16.gmra.mxu0 %v3867
    %v4004 = vpop.f32.mrf.mxu0
    %v4005 = vadd.f32 0.0, %v4004
    %v4006 = vpop.f32.mrf.mxu0
    %v4007 = vadd.f32 0.0, %v4006
    %4008 = vmatmul.bf16.gmra.mxu0 %v3868
    %v4009 = vpop.f32.mrf.mxu0
    %v4010 = vadd.f32 0.0, %v4009
    %v4011 = vpop.f32.mrf.mxu0
    %v4012 = vadd.f32 0.0, %v4011
    %4013 = vmatmul.bf16.gmra.mxu0 %v3869
    %v4014 = vpop.f32.mrf.mxu0
    %v4015 = vadd.f32 0.0, %v4014
    %v4016 = vpop.f32.mrf.mxu0
    %v4017 = vadd.f32 0.0, %v4016
    %4018 = vmatmul.bf16.gmra.mxu0 %v3870
    %v4019 = vpop.f32.mrf.mxu0
    %v4020 = vadd.f32 0.0, %v4019
    %v4021 = vpop.f32.mrf.mxu0
    %v4022 = vadd.f32 0.0, %v4021
    %4023 = vdwg.mxu0
    %v4024 = vadd.f32 %v3710, %v3945
    %v4025 = vadd.f32 %v3711, %v3947
    %v4026 = vadd.f32 %v3712, %v3950
    %v4027 = vadd.f32 %v3713, %v3952
    %v4028 = vadd.f32 %v3714, %v3955
    %v4029 = vadd.f32 %v3715, %v3957
    %v4030 = vadd.f32 %v3716, %v3960
    %v4031 = vadd.f32 %v3717, %v3962
    %v4032 = vadd.f32 %v3718, %v3965
    %v4033 = vadd.f32 %v3719, %v3967
    %v4034 = vadd.f32 %v3720, %v3970
    %v4035 = vadd.f32 %v3721, %v3972
    %v4036 = vadd.f32 %v3722, %v3975
    %v4037 = vadd.f32 %v3723, %v3977
    %v4038 = vadd.f32 %v3724, %v3980
    %v4039 = vadd.f32 %v3725, %v3982
    %v4040 = vadd.f32 %v3726, %v3985
    %v4041 = vadd.f32 %v3727, %v3987
    %v4042 = vadd.f32 %v3728, %v3990
    %v4043 = vadd.f32 %v3729, %v3992
    %v4044 = vadd.f32 %v3730, %v3995
    %v4045 = vadd.f32 %v3731, %v3997
    %v4046 = vadd.f32 %v3732, %v4000
    %v4047 = vadd.f32 %v3733, %v4002
    %v4048 = vadd.f32 %v3734, %v4005
    %v4049 = vadd.f32 %v3735, %v4007
    %v4050 = vadd.f32 %v3736, %v4010
    %v4051 = vadd.f32 %v3737, %v4012
    %v4052 = vadd.f32 %v3738, %v4015
    %v4053 = vadd.f32 %v3739, %v4017
    %v4054 = vadd.f32 %v3740, %v4020
    %v4055 = vadd.f32 %v3741, %v4022
    %v4056 = vld [vmem:[%s2] sm:$0x1]
    %v4058 = vperm.slane %v4056, 0
    %v4060 = vadd.f32 %v4024, %v4058
    %v4061 = vadd.f32 %v4025, %v4058
    %v4062 = vadd.f32 %v4026, %v4058
    %v4063 = vadd.f32 %v4027, %v4058
    %v4064 = vadd.f32 %v4028, %v4058
    %v4065 = vadd.f32 %v4029, %v4058
    %v4066 = vadd.f32 %v4030, %v4058
    %v4067 = vadd.f32 %v4031, %v4058
    %v4068 = vadd.f32 %v4032, %v4058
    %v4069 = vadd.f32 %v4033, %v4058
    %v4070 = vadd.f32 %v4034, %v4058
    %v4071 = vadd.f32 %v4035, %v4058
    %v4072 = vadd.f32 %v4036, %v4058
    %v4073 = vadd.f32 %v4037, %v4058
    %v4074 = vadd.f32 %v4038, %v4058
    %v4075 = vadd.f32 %v4039, %v4058
    %v4076 = vadd.f32 %v4040, %v4058
    %v4077 = vadd.f32 %v4041, %v4058
    %v4078 = vadd.f32 %v4042, %v4058
    %v4079 = vadd.f32 %v4043, %v4058
    %v4080 = vadd.f32 %v4044, %v4058
    %v4081 = vadd.f32 %v4045, %v4058
    %v4082 = vadd.f32 %v4046, %v4058
    %v4083 = vadd.f32 %v4047, %v4058
    %v4084 = vadd.f32 %v4048, %v4058
    %v4085 = vadd.f32 %v4049, %v4058
    %v4086 = vadd.f32 %v4050, %v4058
    %v4087 = vadd.f32 %v4051, %v4058
    %v4088 = vadd.f32 %v4052, %v4058
    %v4089 = vadd.f32 %v4053, %v4058
    %v4090 = vadd.f32 %v4054, %v4058
    %v4091 = vadd.f32 %v4055, %v4058
    %v4092 = vadd.f32 %v4060, %v4061
    %v4093 = vadd.f32 %v4092, %v4062
    %v4094 = vadd.f32 %v4093, %v4063
    %v4095 = vadd.f32 %v4094, %v4064
    %v4096 = vadd.f32 %v4095, %v4065
    %v4097 = vadd.f32 %v4096, %v4066
    %v4098 = vadd.f32 %v4097, %v4067
    %v4099 = vadd.f32 %v4098, %v4068
    %v4100 = vadd.f32 %v4099, %v4069
    %v4101 = vadd.f32 %v4100, %v4070
    %v4102 = vadd.f32 %v4101, %v4071
    %v4103 = vadd.f32 %v4102, %v4072
    %v4104 = vadd.f32 %v4103, %v4073
    %v4105 = vadd.f32 %v4104, %v4074
    %v4106 = vadd.f32 %v4105, %v4075
    %v4107 = vadd.f32 %v4106, %v4076
    %v4108 = vadd.f32 %v4107, %v4077
    %v4109 = vadd.f32 %v4108, %v4078
    %v4110 = vadd.f32 %v4109, %v4079
    %v4111 = vadd.f32 %v4110, %v4080
    %v4112 = vadd.f32 %v4111, %v4081
    %v4113 = vadd.f32 %v4112, %v4082
    %v4114 = vadd.f32 %v4113, %v4083
    %v4115 = vadd.f32 %v4114, %v4084
    %v4116 = vadd.f32 %v4115, %v4085
    %v4117 = vadd.f32 %v4116, %v4086
    %v4118 = vadd.f32 %v4117, %v4087
    %v4119 = vadd.f32 %v4118, %v4088
    %v4120 = vadd.f32 %v4119, %v4089
    %v4121 = vadd.f32 %v4120, %v4090
    %v4122 = vadd.f32 %v4121, %v4091
    %v4123 = vrot.slane %v4122, 4
    %v4124 = vadd.f32 %v4122, %v4123
    %v4125 = vrot.slane %v4124, 2
    %v4126 = vadd.f32 %v4124, %v4125
    %v4127 = vrot.slane %v4126, 1
    %v4128 = vadd.f32 %v4126, %v4127
    %v4129 = vmul.f32 %v4128, 0.00390625
    %v4130 = vmul.f32 %v4060, %v4060
    %v4131 = vmul.f32 %v4061, %v4061
    %v4132 = vmul.f32 %v4062, %v4062
    %v4133 = vmul.f32 %v4063, %v4063
    %v4134 = vmul.f32 %v4064, %v4064
    %v4135 = vmul.f32 %v4065, %v4065
    %v4136 = vmul.f32 %v4066, %v4066
    %v4137 = vmul.f32 %v4067, %v4067
    %v4138 = vmul.f32 %v4068, %v4068
    %v4139 = vmul.f32 %v4069, %v4069
    %v4140 = vmul.f32 %v4070, %v4070
    %v4141 = vmul.f32 %v4071, %v4071
    %v4142 = vmul.f32 %v4072, %v4072
    %v4143 = vmul.f32 %v4073, %v4073
    %v4144 = vmul.f32 %v4074, %v4074
    %v4145 = vmul.f32 %v4075, %v4075
    %v4146 = vmul.f32 %v4076, %v4076
    %v4147 = vmul.f32 %v4077, %v4077
    %v4148 = vmul.f32 %v4078, %v4078
    %v4149 = vmul.f32 %v4079, %v4079
    %v4150 = vmul.f32 %v4080, %v4080
    %v4151 = vmul.f32 %v4081, %v4081
    %v4152 = vmul.f32 %v4082, %v4082
    %v4153 = vmul.f32 %v4083, %v4083
    %v4154 = vmul.f32 %v4084, %v4084
    %v4155 = vmul.f32 %v4085, %v4085
    %v4156 = vmul.f32 %v4086, %v4086
    %v4157 = vmul.f32 %v4087, %v4087
    %v4158 = vmul.f32 %v4088, %v4088
    %v4159 = vmul.f32 %v4089, %v4089
    %v4160 = vmul.f32 %v4090, %v4090
    %v4161 = vmul.f32 %v4091, %v4091
    %v4162 = vadd.f32 %v4130, %v4131
    %v4163 = vadd.f32 %v4162, %v4132
    %v4164 = vadd.f32 %v4163, %v4133
    %v4165 = vadd.f32 %v4164, %v4134
    %v4166 = vadd.f32 %v4165, %v4135
    %v4167 = vadd.f32 %v4166, %v4136
    %v4168 = vadd.f32 %v4167, %v4137
    %v4169 = vadd.f32 %v4168, %v4138
    %v4170 = vadd.f32 %v4169, %v4139
    %v4171 = vadd.f32 %v4170, %v4140
    %v4172 = vadd.f32 %v4171, %v4141
    %v4173 = vadd.f32 %v4172, %v4142
    %v4174 = vadd.f32 %v4173, %v4143
    %v4175 = vadd.f32 %v4174, %v4144
    %v4176 = vadd.f32 %v4175, %v4145
    %v4177 = vadd.f32 %v4176, %v4146
    %v4178 = vadd.f32 %v4177, %v4147
    %v4179 = vadd.f32 %v4178, %v4148
    %v4180 = vadd.f32 %v4179, %v4149
    %v4181 = vadd.f32 %v4180, %v4150
    %v4182 = vadd.f32 %v4181, %v4151
    %v4183 = vadd.f32 %v4182, %v4152
    %v4184 = vadd.f32 %v4183, %v4153
    %v4185 = vadd.f32 %v4184, %v4154
    %v4186 = vadd.f32 %v4185, %v4155
    %v4187 = vadd.f32 %v4186, %v4156
    %v4188 = vadd.f32 %v4187, %v4157
    %v4189 = vadd.f32 %v4188, %v4158
    %v4190 = vadd.f32 %v4189, %v4159
    %v4191 = vadd.f32 %v4190, %v4160
    %v4192 = vadd.f32 %v4191, %v4161
    %v4193 = vrot.slane %v4192, 4
    %v4194 = vadd.f32 %v4192, %v4193
    %v4195 = vrot.slane %v4194, 2
    %v4196 = vadd.f32 %v4194, %v4195
    %v4197 = vrot.slane %v4196, 1
    %v4198 = vadd.f32 %v4196, %v4197
    %v4199 = vmul.f32 %v4198, 0.00390625
    %v4200 = vmul.f32 %v4129, %v4129
    %v4201 = vsub.f32 %v4199, %v4200
    %v4202 = vsub.f32 %v4060, %v4129
    %v4203 = vsub.f32 %v4061, %v4129
    %v4204 = vsub.f32 %v4062, %v4129
    %v4205 = vsub.f32 %v4063, %v4129
    %v4206 = vsub.f32 %v4064, %v4129
    %v4207 = vsub.f32 %v4065, %v4129
    %v4208 = vsub.f32 %v4066, %v4129
    %v4209 = vsub.f32 %v4067, %v4129
    %v4210 = vsub.f32 %v4068, %v4129
    %v4211 = vsub.f32 %v4069, %v4129
    %v4212 = vsub.f32 %v4070, %v4129
    %v4213 = vsub.f32 %v4071, %v4129
    %v4214 = vsub.f32 %v4072, %v4129
    %v4215 = vsub.f32 %v4073, %v4129
    %v4216 = vsub.f32 %v4074, %v4129
    %v4217 = vsub.f32 %v4075, %v4129
    %v4218 = vsub.f32 %v4076, %v4129
    %v4219 = vsub.f32 %v4077, %v4129
    %v4220 = vsub.f32 %v4078, %v4129
    %v4221 = vsub.f32 %v4079, %v4129
    %v4222 = vsub.f32 %v4080, %v4129
    %v4223 = vsub.f32 %v4081, %v4129
    %v4224 = vsub.f32 %v4082, %v4129
    %v4225 = vsub.f32 %v4083, %v4129
    %v4226 = vsub.f32 %v4084, %v4129
    %v4227 = vsub.f32 %v4085, %v4129
    %v4228 = vsub.f32 %v4086, %v4129
    %v4229 = vsub.f32 %v4087, %v4129
    %v4230 = vsub.f32 %v4088, %v4129
    %v4231 = vsub.f32 %v4089, %v4129
    %v4232 = vsub.f32 %v4090, %v4129
    %v4233 = vsub.f32 %v4091, %v4129
    %v4234 = vadd.f32 %v4201, 1e-05
    %v4235 = vrsqrt.pop %v4234
    %v4236 = vmul.f32 %v4235, %v4234
    %v4237 = vmul.f32 %v4236, %v4235
    %v4238 = vmul.f32 0.5, %v4237
    %v4239 = vsub.f32 1.5, %v4238
    %v4240 = vmul.f32 %v4235, %v4239
    %vm4241 = vweird.f32 %v4234
    %vm4242 = vweird.f32 %v4235
    %vm4243 = vmor %vm4241, %vm4242
    %v4244 = vsel %vm4243, %v4235, %v4240
    %v4245 = vmul.f32 %v4202, %v4244
    %v4246 = vmul.f32 %v4203, %v4244
    %v4247 = vmul.f32 %v4204, %v4244
    %v4248 = vmul.f32 %v4205, %v4244
    %v4249 = vmul.f32 %v4206, %v4244
    %v4250 = vmul.f32 %v4207, %v4244
    %v4251 = vmul.f32 %v4208, %v4244
    %v4252 = vmul.f32 %v4209, %v4244
    %v4253 = vmul.f32 %v4210, %v4244
    %v4254 = vmul.f32 %v4211, %v4244
    %v4255 = vmul.f32 %v4212, %v4244
    %v4256 = vmul.f32 %v4213, %v4244
    %v4257 = vmul.f32 %v4214, %v4244
    %v4258 = vmul.f32 %v4215, %v4244
    %v4259 = vmul.f32 %v4216, %v4244
    %v4260 = vmul.f32 %v4217, %v4244
    %v4261 = vmul.f32 %v4218, %v4244
    %v4262 = vmul.f32 %v4219, %v4244
    %v4263 = vmul.f32 %v4220, %v4244
    %v4264 = vmul.f32 %v4221, %v4244
    %v4265 = vmul.f32 %v4222, %v4244
    %v4266 = vmul.f32 %v4223, %v4244
    %v4267 = vmul.f32 %v4224, %v4244
    %v4268 = vmul.f32 %v4225, %v4244
    %v4269 = vmul.f32 %v4226, %v4244
    %v4270 = vmul.f32 %v4227, %v4244
    %v4271 = vmul.f32 %v4228, %v4244
    %v4272 = vmul.f32 %v4229, %v4244
    %v4273 = vmul.f32 %v4230, %v4244
    %v4274 = vmul.f32 %v4231, %v4244
    %v4275 = vmul.f32 %v4232, %v4244
    %v4276 = vmul.f32 %v4233, %v4244
    %v4277 = vmax.f32 %v4245, 0.0
    %v4278 = vmax.f32 %v4246, 0.0
    %v4279 = vmax.f32 %v4247, 0.0
    %v4280 = vmax.f32 %v4248, 0.0
    %v4281 = vmax.f32 %v4249, 0.0
    %v4282 = vmax.f32 %v4250, 0.0
    %v4283 = vmax.f32 %v4251, 0.0
    %v4284 = vmax.f32 %v4252, 0.0
    %v4285 = vmax.f32 %v4253, 0.0
    %v4286 = vmax.f32 %v4254, 0.0
    %v4287 = vmax.f32 %v4255, 0.0
    %v4288 = vmax.f32 %v4256, 0.0
    %v4289 = vmax.f32 %v4257, 0.0
    %v4290 = vmax.f32 %v4258, 0.0
    %v4291 = vmax.f32 %v4259, 0.0
    %v4292 = vmax.f32 %v4260, 0.0
    %v4293 = vmax.f32 %v4261, 0.0
    %v4294 = vmax.f32 %v4262, 0.0
    %v4295 = vmax.f32 %v4263, 0.0
    %v4296 = vmax.f32 %v4264, 0.0
    %v4297 = vmax.f32 %v4265, 0.0
    %v4298 = vmax.f32 %v4266, 0.0
    %v4299 = vmax.f32 %v4267, 0.0
    %v4300 = vmax.f32 %v4268, 0.0
    %v4301 = vmax.f32 %v4269, 0.0
    %v4302 = vmax.f32 %v4270, 0.0
    %v4303 = vmax.f32 %v4271, 0.0
    %v4304 = vmax.f32 %v4272, 0.0
    %v4305 = vmax.f32 %v4273, 0.0
    %v4306 = vmax.f32 %v4274, 0.0
    %v4307 = vmax.f32 %v4275, 0.0
    %v4308 = vmax.f32 %v4276, 0.0
    %v4309 = vpack.c.bf16 %v4277, %v4277
    %v4310 = vpack.c.bf16 %v4278, %v4278
    %v4311 = vpack.c.bf16 %v4279, %v4279
    %v4312 = vpack.c.bf16 %v4280, %v4280
    %v4313 = vpack.c.bf16 %v4281, %v4281
    %v4314 = vpack.c.bf16 %v4282, %v4282
    %v4315 = vpack.c.bf16 %v4283, %v4283
    %v4316 = vpack.c.bf16 %v4284, %v4284
    %v4317 = vpack.c.bf16 %v4285, %v4285
    %v4318 = vpack.c.bf16 %v4286, %v4286
    %v4319 = vpack.c.bf16 %v4287, %v4287
    %v4320 = vpack.c.bf16 %v4288, %v4288
    %v4321 = vpack.c.bf16 %v4289, %v4289
    %v4322 = vpack.c.bf16 %v4290, %v4290
    %v4323 = vpack.c.bf16 %v4291, %v4291
    %v4324 = vpack.c.bf16 %v4292, %v4292
    %v4325 = vpack.c.bf16 %v4293, %v4293
    %v4326 = vpack.c.bf16 %v4294, %v4294
    %v4327 = vpack.c.bf16 %v4295, %v4295
    %v4328 = vpack.c.bf16 %v4296, %v4296
    %v4329 = vpack.c.bf16 %v4297, %v4297
    %v4330 = vpack.c.bf16 %v4298, %v4298
    %v4331 = vpack.c.bf16 %v4299, %v4299
    %v4332 = vpack.c.bf16 %v4300, %v4300
    %v4333 = vpack.c.bf16 %v4301, %v4301
    %v4334 = vpack.c.bf16 %v4302, %v4302
    %v4335 = vpack.c.bf16 %v4303, %v4303
    %v4336 = vpack.c.bf16 %v4304, %v4304
    %v4337 = vpack.c.bf16 %v4305, %v4305
    %v4338 = vpack.c.bf16 %v4306, %v4306
    %v4339 = vpack.c.bf16 %v4307, %v4307
    %v4340 = vpack.c.bf16 %v4308, %v4308
    %4341 = vst [vmem:[%s73 + $0x8] sm:$0xf] %v4309
    %4342 = vst [vmem:[%s73 + $0xc] sm:$0xf] %v4310
    %4343 = vst [vmem:[%s73 + $0x10] sm:$0xf] %v4311
    %4344 = vst [vmem:[%s73 + $0x14] sm:$0xf] %v4312
    %4345 = vst [vmem:[%s73 + $0x18] sm:$0xf] %v4313
    %4346 = vst [vmem:[%s73 + $0x1c] sm:$0xf] %v4314
    %4347 = vst [vmem:[%s73 + $0x20] sm:$0xf] %v4315
    %4348 = vst [vmem:[%s73 + $0x24] sm:$0xf] %v4316
    %4349 = vst [vmem:[%s73 + $0x28] sm:$0xf] %v4317
    %4350 = vst [vmem:[%s73 + $0x2c] sm:$0xf] %v4318
    %4351 = vst [vmem:[%s73 + $0x30] sm:$0xf] %v4319
    %4352 = vst [vmem:[%s73 + $0x34] sm:$0xf] %v4320
    %4353 = vst [vmem:[%s73 + $0x38] sm:$0xf] %v4321
    %4354 = vst [vmem:[%s73 + $0x3c] sm:$0xf] %v4322
    %4355 = vst [vmem:[%s73 + $0x40] sm:$0xf] %v4323
    %4356 = vst [vmem:[%s73 + $0x44] sm:$0xf] %v4324
    %4357 = vst [vmem:[%s73 + $0x48] sm:$0xf] %v4325
    %4358 = vst [vmem:[%s73 + $0x4c] sm:$0xf] %v4326
    %4359 = vst [vmem:[%s73 + $0x50] sm:$0xf] %v4327
    %4360 = vst [vmem:[%s73 + $0x54] sm:$0xf] %v4328
    %4361 = vst [vmem:[%s73 + $0x58] sm:$0xf] %v4329
    %4362 = vst [vmem:[%s73 + $0x5c] sm:$0xf] %v4330
    %4363 = vst [vmem:[%s73 + $0x60] sm:$0xf] %v4331
    %4364 = vst [vmem:[%s73 + $0x64] sm:$0xf] %v4332
    %4365 = vst [vmem:[%s73 + $0x68] sm:$0xf] %v4333
    %4366 = vst [vmem:[%s73 + $0x6c] sm:$0xf] %v4334
    %4367 = vst [vmem:[%s73 + $0x70] sm:$0xf] %v4335
    %4368 = vst [vmem:[%s73 + $0x74] sm:$0xf] %v4336
    %4369 = vst [vmem:[%s73 + $0x78] sm:$0xf] %v4337
    %4370 = vst [vmem:[%s73 + $0x7c] sm:$0xf] %v4338
    %4371 = vst [vmem:[%s73 + $0x80] sm:$0xf] %v4339
    %4372 = vst [vmem:[%s73 + $0x84] sm:$0xf] %v4340
    %v4405 = vrot.slane %v4277, 7
    %v4406 = vrot.slane %v4278, 7
    %v4407 = vsel %vm845, %v4405, %v4406
    %v4408 = vrot.slane %v4279, 7
    %v4409 = vsel %vm845, %v4406, %v4408
    %v4410 = vrot.slane %v4280, 7
    %v4411 = vsel %vm845, %v4408, %v4410
    %v4412 = vrot.slane %v4281, 7
    %v4413 = vsel %vm845, %v4410, %v4412
    %v4414 = vrot.slane %v4282, 7
    %v4415 = vsel %vm845, %v4412, %v4414
    %v4416 = vrot.slane %v4283, 7
    %v4417 = vsel %vm845, %v4414, %v4416
    %v4418 = vrot.slane %v4284, 7
    %v4419 = vsel %vm845, %v4416, %v4418
    %v4420 = vrot.slane %v4285, 7
    %v4421 = vsel %vm845, %v4418, %v4420
    %v4422 = vrot.slane %v4286, 7
    %v4423 = vsel %vm845, %v4420, %v4422
    %v4424 = vrot.slane %v4287, 7
    %v4425 = vsel %vm845, %v4422, %v4424
    %v4426 = vrot.slane %v4288, 7
    %v4427 = vsel %vm845, %v4424, %v4426
    %v4428 = vrot.slane %v4289, 7
    %v4429 = vsel %vm845, %v4426, %v4428
    %v4430 = vrot.slane %v4290, 7
    %v4431 = vsel %vm845, %v4428, %v4430
    %v4432 = vrot.slane %v4291, 7
    %v4433 = vsel %vm845, %v4430, %v4432
    %v4434 = vrot.slane %v4292, 7
    %v4435 = vsel %vm845, %v4432, %v4434
    %v4436 = vrot.slane %v4293, 7
    %v4437 = vsel %vm845, %v4434, %v4436
    %v4438 = vrot.slane %v4294, 7
    %v4439 = vsel %vm845, %v4436, %v4438
    %v4440 = vrot.slane %v4295, 7
    %v4441 = vsel %vm845, %v4438, %v4440
    %v4442 = vrot.slane %v4296, 7
    %v4443 = vsel %vm845, %v4440, %v4442
    %v4444 = vrot.slane %v4297, 7
    %v4445 = vsel %vm845, %v4442, %v4444
    %v4446 = vrot.slane %v4298, 7
    %v4447 = vsel %vm845, %v4444, %v4446
    %v4448 = vrot.slane %v4299, 7
    %v4449 = vsel %vm845, %v4446, %v4448
    %v4450 = vrot.slane %v4300, 7
    %v4451 = vsel %vm845, %v4448, %v4450
    %v4452 = vrot.slane %v4301, 7
    %v4453 = vsel %vm845, %v4450, %v4452
    %v4454 = vrot.slane %v4302, 7
    %v4455 = vsel %vm845, %v4452, %v4454
    %v4456 = vrot.slane %v4303, 7
    %v4457 = vsel %vm845, %v4454, %v4456
    %v4458 = vrot.slane %v4304, 7
    %v4459 = vsel %vm845, %v4456, %v4458
    %v4460 = vrot.slane %v4305, 7
    %v4461 = vsel %vm845, %v4458, %v4460
    %v4462 = vrot.slane %v4306, 7
    %v4463 = vsel %vm845, %v4460, %v4462
    %v4464 = vrot.slane %v4307, 7
    %v4465 = vsel %vm845, %v4462, %v4464
    %v4466 = vrot.slane %v4308, 7
    %v4467 = vsel %vm845, %v4464, %v4466
    %v4500 = vsel %vm845, 0.0, %v4405
    %v4501 = vsel %vm942, %v4500, 0.0
    %v4502 = vsel %vm943, %v4407, 0.0
    %v4503 = vsel %vm944, %v4409, 0.0
    %v4504 = vsel %vm945, %v4411, 0.0
    %v4505 = vsel %vm946, %v4413, 0.0
    %v4506 = vsel %vm947, %v4415, 0.0
    %v4507 = vsel %vm948, %v4417, 0.0
    %v4508 = vsel %vm949, %v4419, 0.0
    %v4509 = vsel %vm950, %v4421, 0.0
    %v4510 = vsel %vm951, %v4423, 0.0
    %v4511 = vsel %vm952, %v4425, 0.0
    %v4512 = vsel %vm953, %v4427, 0.0
    %v4513 = vsel %vm954, %v4429, 0.0
    %v4514 = vsel %vm955, %v4431, 0.0
    %v4515 = vsel %vm956, %v4433, 0.0
    %v4516 = vsel %vm957, %v4435, 0.0
    %v4517 = vsel %vm958, %v4437, 0.0
    %v4518 = vsel %vm959, %v4439, 0.0
    %v4519 = vsel %vm960, %v4441, 0.0
    %v4520 = vsel %vm961, %v4443, 0.0
    %v4521 = vsel %vm962, %v4445, 0.0
    %v4522 = vsel %vm963, %v4447, 0.0
    %v4523 = vsel %vm964, %v4449, 0.0
    %v4524 = vsel %vm965, %v4451, 0.0
    %v4525 = vsel %vm966, %v4453, 0.0
    %v4526 = vsel %vm967, %v4455, 0.0
    %v4527 = vsel %vm968, %v4457, 0.0
    %v4528 = vsel %vm969, %v4459, 0.0
    %v4529 = vsel %vm970, %v4461, 0.0
    %v4530 = vsel %vm971, %v4463, 0.0
    %v4531 = vsel %vm972, %v4465, 0.0
    %v4532 = vsel %vm973, %v4467, 0.0
    %v4533 = vpack.c.bf16 %v4501, %v4501
    %v4534 = vpack.c.bf16 %v4502, %v4502
    %v4535 = vpack.c.bf16 %v4503, %v4503
    %v4536 = vpack.c.bf16 %v4504, %v4504
    %v4537 = vpack.c.bf16 %v4505, %v4505
    %v4538 = vpack.c.bf16 %v4506, %v4506
    %v4539 = vpack.c.bf16 %v4507, %v4507
    %v4540 = vpack.c.bf16 %v4508, %v4508
    %v4541 = vpack.c.bf16 %v4509, %v4509
    %v4542 = vpack.c.bf16 %v4510, %v4510
    %v4543 = vpack.c.bf16 %v4511, %v4511
    %v4544 = vpack.c.bf16 %v4512, %v4512
    %v4545 = vpack.c.bf16 %v4513, %v4513
    %v4546 = vpack.c.bf16 %v4514, %v4514
    %v4547 = vpack.c.bf16 %v4515, %v4515
    %v4548 = vpack.c.bf16 %v4516, %v4516
    %v4549 = vpack.c.bf16 %v4517, %v4517
    %v4550 = vpack.c.bf16 %v4518, %v4518
    %v4551 = vpack.c.bf16 %v4519, %v4519
    %v4552 = vpack.c.bf16 %v4520, %v4520
    %v4553 = vpack.c.bf16 %v4521, %v4521
    %v4554 = vpack.c.bf16 %v4522, %v4522
    %v4555 = vpack.c.bf16 %v4523, %v4523
    %v4556 = vpack.c.bf16 %v4524, %v4524
    %v4557 = vpack.c.bf16 %v4525, %v4525
    %v4558 = vpack.c.bf16 %v4526, %v4526
    %v4559 = vpack.c.bf16 %v4527, %v4527
    %v4560 = vpack.c.bf16 %v4528, %v4528
    %v4561 = vpack.c.bf16 %v4529, %v4529
    %v4562 = vpack.c.bf16 %v4530, %v4530
    %v4563 = vpack.c.bf16 %v4531, %v4531
    %v4564 = vpack.c.bf16 %v4532, %v4532
    %4565 = vst [vmem:[#allocation2 + $0x8] sm:$0xf] %v4533
    %4566 = vst [vmem:[#allocation2 + $0xc] sm:$0xf] %v4534
    %4567 = vst [vmem:[#allocation2 + $0x10] sm:$0xf] %v4535
    %4568 = vst [vmem:[#allocation2 + $0x14] sm:$0xf] %v4536
    %4569 = vst [vmem:[#allocation2 + $0x18] sm:$0xf] %v4537
    %4570 = vst [vmem:[#allocation2 + $0x1c] sm:$0xf] %v4538
    %4571 = vst [vmem:[#allocation2 + $0x20] sm:$0xf] %v4539
    %4572 = vst [vmem:[#allocation2 + $0x24] sm:$0xf] %v4540
    %4573 = vst [vmem:[#allocation2 + $0x28] sm:$0xf] %v4541
    %4574 = vst [vmem:[#allocation2 + $0x2c] sm:$0xf] %v4542
    %4575 = vst [vmem:[#allocation2 + $0x30] sm:$0xf] %v4543
    %4576 = vst [vmem:[#allocation2 + $0x34] sm:$0xf] %v4544
    %4577 = vst [vmem:[#allocation2 + $0x38] sm:$0xf] %v4545
    %4578 = vst [vmem:[#allocation2 + $0x3c] sm:$0xf] %v4546
    %4579 = vst [vmem:[#allocation2 + $0x40] sm:$0xf] %v4547
    %4580 = vst [vmem:[#allocation2 + $0x44] sm:$0xf] %v4548
    %4581 = vst [vmem:[#allocation2 + $0x48] sm:$0xf] %v4549
    %4582 = vst [vmem:[#allocation2 + $0x4c] sm:$0xf] %v4550
    %4583 = vst [vmem:[#allocation2 + $0x50] sm:$0xf] %v4551
    %4584 = vst [vmem:[#allocation2 + $0x54] sm:$0xf] %v4552
    %4585 = vst [vmem:[#allocation2 + $0x58] sm:$0xf] %v4553
    %4586 = vst [vmem:[#allocation2 + $0x5c] sm:$0xf] %v4554
    %4587 = vst [vmem:[#allocation2 + $0x60] sm:$0xf] %v4555
    %4588 = vst [vmem:[#allocation2 + $0x64] sm:$0xf] %v4556
    %4589 = vst [vmem:[#allocation2 + $0x68] sm:$0xf] %v4557
    %4590 = vst [vmem:[#allocation2 + $0x6c] sm:$0xf] %v4558
    %4591 = vst [vmem:[#allocation2 + $0x70] sm:$0xf] %v4559
    %4592 = vst [vmem:[#allocation2 + $0x74] sm:$0xf] %v4560
    %4593 = vst [vmem:[#allocation2 + $0x78] sm:$0xf] %v4561
    %4594 = vst [vmem:[#allocation2 + $0x7c] sm:$0xf] %v4562
    %4595 = vst [vmem:[#allocation2 + $0x80] sm:$0xf] %v4563
    %4596 = vst [vmem:[#allocation2 + $0x84] sm:$0xf] %v4564
    %v4597 = vrot.slane %v4277, 1
    %v4598 = vrot.slane %v4278, 1
    %v4599 = vsel %vm1070, %v4597, %v4598
    %v4600 = vrot.slane %v4279, 1
    %v4601 = vsel %vm1070, %v4598, %v4600
    %v4602 = vrot.slane %v4280, 1
    %v4603 = vsel %vm1070, %v4600, %v4602
    %v4604 = vrot.slane %v4281, 1
    %v4605 = vsel %vm1070, %v4602, %v4604
    %v4606 = vrot.slane %v4282, 1
    %v4607 = vsel %vm1070, %v4604, %v4606
    %v4608 = vrot.slane %v4283, 1
    %v4609 = vsel %vm1070, %v4606, %v4608
    %v4610 = vrot.slane %v4284, 1
    %v4611 = vsel %vm1070, %v4608, %v4610
    %v4612 = vrot.slane %v4285, 1
    %v4613 = vsel %vm1070, %v4610, %v4612
    %v4614 = vrot.slane %v4286, 1
    %v4615 = vsel %vm1070, %v4612, %v4614
    %v4616 = vrot.slane %v4287, 1
    %v4617 = vsel %vm1070, %v4614, %v4616
    %v4618 = vrot.slane %v4288, 1
    %v4619 = vsel %vm1070, %v4616, %v4618
    %v4620 = vrot.slane %v4289, 1
    %v4621 = vsel %vm1070, %v4618, %v4620
    %v4622 = vrot.slane %v4290, 1
    %v4623 = vsel %vm1070, %v4620, %v4622
    %v4624 = vrot.slane %v4291, 1
    %v4625 = vsel %vm1070, %v4622, %v4624
    %v4626 = vrot.slane %v4292, 1
    %v4627 = vsel %vm1070, %v4624, %v4626
    %v4628 = vrot.slane %v4293, 1
    %v4629 = vsel %vm1070, %v4626, %v4628
    %v4630 = vrot.slane %v4294, 1
    %v4631 = vsel %vm1070, %v4628, %v4630
    %v4632 = vrot.slane %v4295, 1
    %v4633 = vsel %vm1070, %v4630, %v4632
    %v4634 = vrot.slane %v4296, 1
    %v4635 = vsel %vm1070, %v4632, %v4634
    %v4636 = vrot.slane %v4297, 1
    %v4637 = vsel %vm1070, %v4634, %v4636
    %v4638 = vrot.slane %v4298, 1
    %v4639 = vsel %vm1070, %v4636, %v4638
    %v4640 = vrot.slane %v4299, 1
    %v4641 = vsel %vm1070, %v4638, %v4640
    %v4642 = vrot.slane %v4300, 1
    %v4643 = vsel %vm1070, %v4640, %v4642
    %v4644 = vrot.slane %v4301, 1
    %v4645 = vsel %vm1070, %v4642, %v4644
    %v4646 = vrot.slane %v4302, 1
    %v4647 = vsel %vm1070, %v4644, %v4646
    %v4648 = vrot.slane %v4303, 1
    %v4649 = vsel %vm1070, %v4646, %v4648
    %v4650 = vrot.slane %v4304, 1
    %v4651 = vsel %vm1070, %v4648, %v4650
    %v4652 = vrot.slane %v4305, 1
    %v4653 = vsel %vm1070, %v4650, %v4652
    %v4654 = vrot.slane %v4306, 1
    %v4655 = vsel %vm1070, %v4652, %v4654
    %v4656 = vrot.slane %v4307, 1
    %v4657 = vsel %vm1070, %v4654, %v4656
    %v4658 = vrot.slane %v4308, 1
    %v4659 = vsel %vm1070, %v4656, %v4658
    %v4692 = vsel %vm1070, %v4658, 0.0
    %v4693 = vsel %vm1167, %v4599, 0.0
    %v4694 = vsel %vm1168, %v4601, 0.0
    %v4695 = vsel %vm1169, %v4603, 0.0
    %v4696 = vsel %vm1170, %v4605, 0.0
    %v4697 = vsel %vm1171, %v4607, 0.0
    %v4698 = vsel %vm1172, %v4609, 0.0
    %v4699 = vsel %vm1173, %v4611, 0.0
    %v4700 = vsel %vm1174, %v4613, 0.0
    %v4701 = vsel %vm1175, %v4615, 0.0
    %v4702 = vsel %vm1176, %v4617, 0.0
    %v4703 = vsel %vm1177, %v4619, 0.0
    %v4704 = vsel %vm1178, %v4621, 0.0
    %v4705 = vsel %vm1179, %v4623, 0.0
    %v4706 = vsel %vm1180, %v4625, 0.0
    %v4707 = vsel %vm1181, %v4627, 0.0
    %v4708 = vsel %vm1182, %v4629, 0.0
    %v4709 = vsel %vm1183, %v4631, 0.0
    %v4710 = vsel %vm1184, %v4633, 0.0
    %v4711 = vsel %vm1185, %v4635, 0.0
    %v4712 = vsel %vm1186, %v4637, 0.0
    %v4713 = vsel %vm1187, %v4639, 0.0
    %v4714 = vsel %vm1188, %v4641, 0.0
    %v4715 = vsel %vm1189, %v4643, 0.0
    %v4716 = vsel %vm1190, %v4645, 0.0
    %v4717 = vsel %vm1191, %v4647, 0.0
    %v4718 = vsel %vm1192, %v4649, 0.0
    %v4719 = vsel %vm1193, %v4651, 0.0
    %v4720 = vsel %vm1194, %v4653, 0.0
    %v4721 = vsel %vm1195, %v4655, 0.0
    %v4722 = vsel %vm1196, %v4657, 0.0
    %v4723 = vsel %vm1197, %v4659, 0.0
    %v4724 = vsel %vm1198, %v4692, 0.0
    %v4725 = vpack.c.bf16 %v4693, %v4693
    %v4726 = vpack.c.bf16 %v4694, %v4694
    %v4727 = vpack.c.bf16 %v4695, %v4695
    %v4728 = vpack.c.bf16 %v4696, %v4696
    %v4729 = vpack.c.bf16 %v4697, %v4697
    %v4730 = vpack.c.bf16 %v4698, %v4698
    %v4731 = vpack.c.bf16 %v4699, %v4699
    %v4732 = vpack.c.bf16 %v4700, %v4700
    %v4733 = vpack.c.bf16 %v4701, %v4701
    %v4734 = vpack.c.bf16 %v4702, %v4702
    %v4735 = vpack.c.bf16 %v4703, %v4703
    %v4736 = vpack.c.bf16 %v4704, %v4704
    %v4737 = vpack.c.bf16 %v4705, %v4705
    %v4738 = vpack.c.bf16 %v4706, %v4706
    %v4739 = vpack.c.bf16 %v4707, %v4707
    %v4740 = vpack.c.bf16 %v4708, %v4708
    %v4741 = vpack.c.bf16 %v4709, %v4709
    %v4742 = vpack.c.bf16 %v4710, %v4710
    %v4743 = vpack.c.bf16 %v4711, %v4711
    %v4744 = vpack.c.bf16 %v4712, %v4712
    %v4745 = vpack.c.bf16 %v4713, %v4713
    %v4746 = vpack.c.bf16 %v4714, %v4714
    %v4747 = vpack.c.bf16 %v4715, %v4715
    %v4748 = vpack.c.bf16 %v4716, %v4716
    %v4749 = vpack.c.bf16 %v4717, %v4717
    %v4750 = vpack.c.bf16 %v4718, %v4718
    %v4751 = vpack.c.bf16 %v4719, %v4719
    %v4752 = vpack.c.bf16 %v4720, %v4720
    %v4753 = vpack.c.bf16 %v4721, %v4721
    %v4754 = vpack.c.bf16 %v4722, %v4722
    %v4755 = vpack.c.bf16 %v4723, %v4723
    %v4756 = vpack.c.bf16 %v4724, %v4724
    %4757 = vst [vmem:[%s78 + $0x8] sm:$0xf] %v4725
    %4758 = vst [vmem:[%s78 + $0xc] sm:$0xf] %v4726
    %4759 = vst [vmem:[%s78 + $0x10] sm:$0xf] %v4727
    %4760 = vst [vmem:[%s78 + $0x14] sm:$0xf] %v4728
    %4761 = vst [vmem:[%s78 + $0x18] sm:$0xf] %v4729
    %4762 = vst [vmem:[%s78 + $0x1c] sm:$0xf] %v4730
    %4763 = vst [vmem:[%s78 + $0x20] sm:$0xf] %v4731
    %4764 = vst [vmem:[%s78 + $0x24] sm:$0xf] %v4732
    %4765 = vst [vmem:[%s78 + $0x28] sm:$0xf] %v4733
    %4766 = vst [vmem:[%s78 + $0x2c] sm:$0xf] %v4734
    %4767 = vst [vmem:[%s78 + $0x30] sm:$0xf] %v4735
    %4768 = vst [vmem:[%s78 + $0x34] sm:$0xf] %v4736
    %4769 = vst [vmem:[%s78 + $0x38] sm:$0xf] %v4737
    %4770 = vst [vmem:[%s78 + $0x3c] sm:$0xf] %v4738
    %4771 = vst [vmem:[%s78 + $0x40] sm:$0xf] %v4739
    %4772 = vst [vmem:[%s78 + $0x44] sm:$0xf] %v4740
    %4773 = vst [vmem:[%s78 + $0x48] sm:$0xf] %v4741
    %4774 = vst [vmem:[%s78 + $0x4c] sm:$0xf] %v4742
    %4775 = vst [vmem:[%s78 + $0x50] sm:$0xf] %v4743
    %4776 = vst [vmem:[%s78 + $0x54] sm:$0xf] %v4744
    %4777 = vst [vmem:[%s78 + $0x58] sm:$0xf] %v4745
    %4778 = vst [vmem:[%s78 + $0x5c] sm:$0xf] %v4746
    %4779 = vst [vmem:[%s78 + $0x60] sm:$0xf] %v4747
    %4780 = vst [vmem:[%s78 + $0x64] sm:$0xf] %v4748
    %4781 = vst [vmem:[%s78 + $0x68] sm:$0xf] %v4749
    %4782 = vst [vmem:[%s78 + $0x6c] sm:$0xf] %v4750
    %4783 = vst [vmem:[%s78 + $0x70] sm:$0xf] %v4751
    %4784 = vst [vmem:[%s78 + $0x74] sm:$0xf] %v4752
    %4785 = vst [vmem:[%s78 + $0x78] sm:$0xf] %v4753
    %4786 = vst [vmem:[%s78 + $0x7c] sm:$0xf] %v4754
    %4787 = vst [vmem:[%s78 + $0x80] sm:$0xf] %v4755
    %4788 = vst [vmem:[%s78 + $0x84] sm:$0xf] %v4756
    %v4789 = vld [vmem:[#allocation2] sm:$0xf]
    %v4790 = vld [vmem:[#allocation2 + $0x4] sm:$0xf]
    %v4791 = vld [vmem:[#allocation2 + $0x8] sm:$0xf]
    %v4792 = vld [vmem:[#allocation2 + $0xc] sm:$0xf]
    %v4793 = vld [vmem:[#allocation2 + $0x10] sm:$0xf]
    %v4794 = vld [vmem:[#allocation2 + $0x14] sm:$0xf]
    %v4795 = vld [vmem:[#allocation2 + $0x18] sm:$0xf]
    %v4796 = vld [vmem:[#allocation2 + $0x1c] sm:$0xf]
    %v4797 = vld [vmem:[#allocation2 + $0x20] sm:$0xf]
    %v4798 = vld [vmem:[#allocation2 + $0x24] sm:$0xf]
    %v4799 = vld [vmem:[#allocation2 + $0x28] sm:$0xf]
    %v4800 = vld [vmem:[#allocation2 + $0x2c] sm:$0xf]
    %v4801 = vld [vmem:[#allocation2 + $0x30] sm:$0xf]
    %v4802 = vld [vmem:[#allocation2 + $0x34] sm:$0xf]
    %v4803 = vld [vmem:[#allocation2 + $0x38] sm:$0xf]
    %v4804 = vld [vmem:[#allocation2 + $0x3c] sm:$0xf]
    %v4805 = vld [vmem:[#allocation2 + $0x40] sm:$0xf]
    %v4806 = vld [vmem:[#allocation2 + $0x44] sm:$0xf]
    %v4807 = vld [vmem:[#allocation2 + $0x48] sm:$0xf]
    %v4808 = vld [vmem:[#allocation2 + $0x4c] sm:$0xf]
    %v4809 = vld [vmem:[#allocation2 + $0x50] sm:$0xf]
    %v4810 = vld [vmem:[#allocation2 + $0x54] sm:$0xf]
    %v4811 = vld [vmem:[#allocation2 + $0x58] sm:$0xf]
    %v4812 = vld [vmem:[#allocation2 + $0x5c] sm:$0xf]
    %v4813 = vld [vmem:[#allocation2 + $0x60] sm:$0xf]
    %v4814 = vld [vmem:[#allocation2 + $0x64] sm:$0xf]
    %v4815 = vld [vmem:[#allocation2 + $0x68] sm:$0xf]
    %v4816 = vld [vmem:[#allocation2 + $0x6c] sm:$0xf]
    %v4817 = vld [vmem:[#allocation2 + $0x70] sm:$0xf]
    %v4818 = vld [vmem:[#allocation2 + $0x74] sm:$0xf]
    %v4819 = vld [vmem:[#allocation2 + $0x78] sm:$0xf]
    %v4820 = vld [vmem:[#allocation2 + $0x7c] sm:$0xf]
    %v4821 = vld [vmem:[#allocation8] sm:$0xf]
    %v4822 = vld [vmem:[#allocation8 + $0x4] sm:$0xf]
    %v4823 = vld [vmem:[#allocation8 + $0x8] sm:$0xf]
    %v4824 = vld [vmem:[#allocation8 + $0xc] sm:$0xf]
    %v4825 = vld [vmem:[#allocation8 + $0x10] sm:$0xf]
    %v4826 = vld [vmem:[#allocation8 + $0x14] sm:$0xf]
    %v4827 = vld [vmem:[#allocation8 + $0x18] sm:$0xf]
    %v4828 = vld [vmem:[#allocation8 + $0x1c] sm:$0xf]
    %v4829 = vld [vmem:[#allocation8 + $0x20] sm:$0xf]
    %v4830 = vld [vmem:[#allocation8 + $0x24] sm:$0xf]
    %v4831 = vld [vmem:[#allocation8 + $0x28] sm:$0xf]
    %v4832 = vld [vmem:[#allocation8 + $0x2c] sm:$0xf]
    %v4833 = vld [vmem:[#allocation8 + $0x30] sm:$0xf]
    %v4834 = vld [vmem:[#allocation8 + $0x34] sm:$0xf]
    %v4835 = vld [vmem:[#allocation8 + $0x38] sm:$0xf]
    %v4836 = vld [vmem:[#allocation8 + $0x3c] sm:$0xf]
    %v4837 = vld [vmem:[%s73] sm:$0xf]
    %v4838 = vld [vmem:[%s73 + $0x4] sm:$0xf]
    %v4839 = vld [vmem:[%s73 + $0x8] sm:$0xf]
    %v4840 = vld [vmem:[%s73 + $0xc] sm:$0xf]
    %v4841 = vld [vmem:[%s73 + $0x10] sm:$0xf]
    %v4842 = vld [vmem:[%s73 + $0x14] sm:$0xf]
    %v4843 = vld [vmem:[%s73 + $0x18] sm:$0xf]
    %v4844 = vld [vmem:[%s73 + $0x1c] sm:$0xf]
    %v4845 = vld [vmem:[%s73 + $0x20] sm:$0xf]
    %v4846 = vld [vmem:[%s73 + $0x24] sm:$0xf]
    %v4847 = vld [vmem:[%s73 + $0x28] sm:$0xf]
    %v4848 = vld [vmem:[%s73 + $0x2c] sm:$0xf]
    %v4849 = vld [vmem:[%s73 + $0x30] sm:$0xf]
    %v4850 = vld [vmem:[%s73 + $0x34] sm:$0xf]
    %v4851 = vld [vmem:[%s73 + $0x38] sm:$0xf]
    %v4852 = vld [vmem:[%s73 + $0x3c] sm:$0xf]
    %v4853 = vld [vmem:[%s73 + $0x40] sm:$0xf]
    %v4854 = vld [vmem:[%s73 + $0x44] sm:$0xf]
    %v4855 = vld [vmem:[%s73 + $0x48] sm:$0xf]
    %v4856 = vld [vmem:[%s73 + $0x4c] sm:$0xf]
    %v4857 = vld [vmem:[%s73 + $0x50] sm:$0xf]
    %v4858 = vld [vmem:[%s73 + $0x54] sm:$0xf]
    %v4859 = vld [vmem:[%s73 + $0x58] sm:$0xf]
    %v4860 = vld [vmem:[%s73 + $0x5c] sm:$0xf]
    %v4861 = vld [vmem:[%s73 + $0x60] sm:$0xf]
    %v4862 = vld [vmem:[%s73 + $0x64] sm:$0xf]
    %v4863 = vld [vmem:[%s73 + $0x68] sm:$0xf]
    %v4864 = vld [vmem:[%s73 + $0x6c] sm:$0xf]
    %v4865 = vld [vmem:[%s73 + $0x70] sm:$0xf]
    %v4866 = vld [vmem:[%s73 + $0x74] sm:$0xf]
    %v4867 = vld [vmem:[%s73 + $0x78] sm:$0xf]
    %v4868 = vld [vmem:[%s73 + $0x7c] sm:$0xf]
    %s4869 = scalar_lea.vmem [#allocation8], 64
    %v4870 = vld [vmem:[%s4869] sm:$0xf]
    %v4871 = vld [vmem:[%s4869 + $0x4] sm:$0xf]
    %v4872 = vld [vmem:[%s4869 + $0x8] sm:$0xf]
    %v4873 = vld [vmem:[%s4869 + $0xc] sm:$0xf]
    %v4874 = vld [vmem:[%s4869 + $0x10] sm:$0xf]
    %v4875 = vld [vmem:[%s4869 + $0x14] sm:$0xf]
    %v4876 = vld [vmem:[%s4869 + $0x18] sm:$0xf]
    %v4877 = vld [vmem:[%s4869 + $0x1c] sm:$0xf]
    %v4878 = vld [vmem:[%s4869 + $0x20] sm:$0xf]
    %v4879 = vld [vmem:[%s4869 + $0x24] sm:$0xf]
    %v4880 = vld [vmem:[%s4869 + $0x28] sm:$0xf]
    %v4881 = vld [vmem:[%s4869 + $0x2c] sm:$0xf]
    %v4882 = vld [vmem:[%s4869 + $0x30] sm:$0xf]
    %v4883 = vld [vmem:[%s4869 + $0x34] sm:$0xf]
    %v4884 = vld [vmem:[%s4869 + $0x38] sm:$0xf]
    %v4885 = vld [vmem:[%s4869 + $0x3c] sm:$0xf]
    %v4918 = vunpack.c.l.b16 %v4837
    %v4919 = vunpack.c.l.b16 %v4838
    %v4920 = vunpack.c.l.b16 %v4839
    %v4921 = vunpack.c.l.b16 %v4840
    %v4922 = vunpack.c.l.b16 %v4841
    %v4923 = vunpack.c.l.b16 %v4842
    %v4924 = vunpack.c.l.b16 %v4843
    %v4925 = vunpack.c.l.b16 %v4844
    %v4926 = vunpack.c.l.b16 %v4845
    %v4927 = vunpack.c.l.b16 %v4846
    %v4928 = vunpack.c.l.b16 %v4847
    %v4929 = vunpack.c.l.b16 %v4848
    %v4930 = vunpack.c.l.b16 %v4849
    %v4931 = vunpack.c.l.b16 %v4850
    %v4932 = vunpack.c.l.b16 %v4851
    %v4933 = vunpack.c.l.b16 %v4852
    %v4934 = vunpack.c.l.b16 %v4853
    %v4935 = vunpack.c.l.b16 %v4854
    %v4936 = vunpack.c.l.b16 %v4855
    %v4937 = vunpack.c.l.b16 %v4856
    %v4938 = vunpack.c.l.b16 %v4857
    %v4939 = vunpack.c.l.b16 %v4858
    %v4940 = vunpack.c.l.b16 %v4859
    %v4941 = vunpack.c.l.b16 %v4860
    %v4942 = vunpack.c.l.b16 %v4861
    %v4943 = vunpack.c.l.b16 %v4862
    %v4944 = vunpack.c.l.b16 %v4863
    %v4945 = vunpack.c.l.b16 %v4864
    %v4946 = vunpack.c.l.b16 %v4865
    %v4947 = vunpack.c.l.b16 %v4866
    %v4948 = vunpack.c.l.b16 %v4867
    %v4949 = vunpack.c.l.b16 %v4868
    %v4950 = vpack.c.b16 %v4919, %v4918
    %v4951 = vpack.c.b16 %v4921, %v4920
    %v4952 = vpack.c.b16 %v4923, %v4922
    %v4953 = vpack.c.b16 %v4925, %v4924
    %v4954 = vpack.c.b16 %v4927, %v4926
    %v4955 = vpack.c.b16 %v4929, %v4928
    %v4956 = vpack.c.b16 %v4931, %v4930
    %v4957 = vpack.c.b16 %v4933, %v4932
    %v4958 = vpack.c.b16 %v4935, %v4934
    %v4959 = vpack.c.b16 %v4937, %v4936
    %v4960 = vpack.c.b16 %v4939, %v4938
    %v4961 = vpack.c.b16 %v4941, %v4940
    %v4962 = vpack.c.b16 %v4943, %v4942
    %v4963 = vpack.c.b16 %v4945, %v4944
    %v4964 = vpack.c.b16 %v4947, %v4946
    %v4965 = vpack.c.b16 %v4949, %v4948
    %v4998 = vunpack.c.l.b16 %v4870
    %v4999 = vunpack.c.l.b16 %v4871
    %v5000 = vunpack.c.l.b16 %v4872
    %v5001 = vunpack.c.l.b16 %v4873
    %v5002 = vunpack.c.l.b16 %v4874
    %v5003 = vunpack.c.l.b16 %v4875
    %v5004 = vunpack.c.l.b16 %v4876
    %v5005 = vunpack.c.l.b16 %v4877
    %v5006 = vunpack.c.l.b16 %v4878
    %v5007 = vunpack.c.l.b16 %v4879
    %v5008 = vunpack.c.l.b16 %v4880
    %v5009 = vunpack.c.l.b16 %v4881
    %v5010 = vunpack.c.l.b16 %v4882
    %v5011 = vunpack.c.l.b16 %v4883
    %v5012 = vunpack.c.l.b16 %v4884
    %v5013 = vunpack.c.l.b16 %v4885
    %v5014 = vpack.c.b16 %v4999, %v4998
    %v5015 = vpack.c.b16 %v5001, %v5000
    %v5016 = vpack.c.b16 %v5003, %v5002
    %v5017 = vpack.c.b16 %v5005, %v5004
    %v5018 = vpack.c.b16 %v5007, %v5006
    %v5019 = vpack.c.b16 %v5009, %v5008
    %v5020 = vpack.c.b16 %v5011, %v5010
    %v5021 = vpack.c.b16 %v5013, %v5012
    %5030 = vmatpush.bf16.msra.mxu0 %v5021
    %5031 = vmatpush.bf16.msra.mxu0 %v5020
    %5032 = vmatpush.bf16.msra.mxu0 %v5019
    %5033 = vmatpush.bf16.msra.mxu0 %v5018
    %5034 = vmatpush.bf16.msra.mxu0 %v5017
    %5035 = vmatpush.bf16.msra.mxu0 %v5016
    %5036 = vmatpush.bf16.msra.mxu0 %v5015
    %5037 = vmatpush.bf16.msra.mxu0 %v5014
    %5038 = vmatmul.bf16.gmra.mxu0 %v4950
    %v5039 = vpop.f32.mrf.mxu0
    %v5040 = vadd.f32 0.0, %v5039
    %v5041 = vpop.f32.mrf.mxu0
    %v5042 = vadd.f32 0.0, %v5041
    %5043 = vmatmul.bf16.gmra.mxu0 %v4951
    %v5044 = vpop.f32.mrf.mxu0
    %v5045 = vadd.f32 0.0, %v5044
    %v5046 = vpop.f32.mrf.mxu0
    %v5047 = vadd.f32 0.0, %v5046
    %5048 = vmatmul.bf16.gmra.mxu0 %v4952
    %v5049 = vpop.f32.mrf.mxu0
    %v5050 = vadd.f32 0.0, %v5049
    %v5051 = vpop.f32.mrf.mxu0
    %v5052 = vadd.f32 0.0, %v5051
    %5053 = vmatmul.bf16.gmra.mxu0 %v4953
    %v5054 = vpop.f32.mrf.mxu0
    %v5055 = vadd.f32 0.0, %v5054
    %v5056 = vpop.f32.mrf.mxu0
    %v5057 = vadd.f32 0.0, %v5056
    %5058 = vmatmul.bf16.gmra.mxu0 %v4954
    %v5059 = vpop.f32.mrf.mxu0
    %v5060 = vadd.f32 0.0, %v5059
    %v5061 = vpop.f32.mrf.mxu0
    %v5062 = vadd.f32 0.0, %v5061
    %5063 = vmatmul.bf16.gmra.mxu0 %v4955
    %v5064 = vpop.f32.mrf.mxu0
    %v5065 = vadd.f32 0.0, %v5064
    %v5066 = vpop.f32.mrf.mxu0
    %v5067 = vadd.f32 0.0, %v5066
    %5068 = vmatmul.bf16.gmra.mxu0 %v4956
    %v5069 = vpop.f32.mrf.mxu0
    %v5070 = vadd.f32 0.0, %v5069
    %v5071 = vpop.f32.mrf.mxu0
    %v5072 = vadd.f32 0.0, %v5071
    %5073 = vmatmul.bf16.gmra.mxu0 %v4957
    %v5074 = vpop.f32.mrf.mxu0
    %v5075 = vadd.f32 0.0, %v5074
    %v5076 = vpop.f32.mrf.mxu0
    %v5077 = vadd.f32 0.0, %v5076
    %5078 = vmatmul.bf16.gmra.mxu0 %v4958
    %v5079 = vpop.f32.mrf.mxu0
    %v5080 = vadd.f32 0.0, %v5079
    %v5081 = vpop.f32.mrf.mxu0
    %v5082 = vadd.f32 0.0, %v5081
    %5083 = vmatmul.bf16.gmra.mxu0 %v4959
    %v5084 = vpop.f32.mrf.mxu0
    %v5085 = vadd.f32 0.0, %v5084
    %v5086 = vpop.f32.mrf.mxu0
    %v5087 = vadd.f32 0.0, %v5086
    %5088 = vmatmul.bf16.gmra.mxu0 %v4960
    %v5089 = vpop.f32.mrf.mxu0
    %v5090 = vadd.f32 0.0, %v5089
    %v5091 = vpop.f32.mrf.mxu0
    %v5092 = vadd.f32 0.0, %v5091
    %5093 = vmatmul.bf16.gmra.mxu0 %v4961
    %v5094 = vpop.f32.mrf.mxu0
    %v5095 = vadd.f32 0.0, %v5094
    %v5096 = vpop.f32.mrf.mxu0
    %v5097 = vadd.f32 0.0, %v5096
    %5098 = vmatmul.bf16.gmra.mxu0 %v4962
    %v5099 = vpop.f32.mrf.mxu0
    %v5100 = vadd.f32 0.0, %v5099
    %v5101 = vpop.f32.mrf.mxu0
    %v5102 = vadd.f32 0.0, %v5101
    %5103 = vmatmul.bf16.gmra.mxu0 %v4963
    %v5104 = vpop.f32.mrf.mxu0
    %v5105 = vadd.f32 0.0, %v5104
    %v5106 = vpop.f32.mrf.mxu0
    %v5107 = vadd.f32 0.0, %v5106
    %5108 = vmatmul.bf16.gmra.mxu0 %v4964
    %v5109 = vpop.f32.mrf.mxu0
    %v5110 = vadd.f32 0.0, %v5109
    %v5111 = vpop.f32.mrf.mxu0
    %v5112 = vadd.f32 0.0, %v5111
    %5113 = vmatmul.bf16.gmra.mxu0 %v4965
    %v5114 = vpop.f32.mrf.mxu0
    %v5115 = vadd.f32 0.0, %v5114
    %v5116 = vpop.f32.mrf.mxu0
    %v5117 = vadd.f32 0.0, %v5116
    %5118 = vdwg.mxu0
    %v5151 = vunpack.c.l.b16 %v4789
    %v5152 = vunpack.c.l.b16 %v4790
    %v5153 = vunpack.c.l.b16 %v4791
    %v5154 = vunpack.c.l.b16 %v4792
    %v5155 = vunpack.c.l.b16 %v4793
    %v5156 = vunpack.c.l.b16 %v4794
    %v5157 = vunpack.c.l.b16 %v4795
    %v5158 = vunpack.c.l.b16 %v4796
    %v5159 = vunpack.c.l.b16 %v4797
    %v5160 = vunpack.c.l.b16 %v4798
    %v5161 = vunpack.c.l.b16 %v4799
    %v5162 = vunpack.c.l.b16 %v4800
    %v5163 = vunpack.c.l.b16 %v4801
    %v5164 = vunpack.c.l.b16 %v4802
    %v5165 = vunpack.c.l.b16 %v4803
    %v5166 = vunpack.c.l.b16 %v4804
    %v5167 = vunpack.c.l.b16 %v4805
    %v5168 = vunpack.c.l.b16 %v4806
    %v5169 = vunpack.c.l.b16 %v4807
    %v5170 = vunpack.c.l.b16 %v4808
    %v5171 = vunpack.c.l.b16 %v4809
    %v5172 = vunpack.c.l.b16 %v4810
    %v5173 = vunpack.c.l.b16 %v4811
    %v5174 = vunpack.c.l.b16 %v4812
    %v5175 = vunpack.c.l.b16 %v4813
    %v5176 = vunpack.c.l.b16 %v4814
    %v5177 = vunpack.c.l.b16 %v4815
    %v5178 = vunpack.c.l.b16 %v4816
    %v5179 = vunpack.c.l.b16 %v4817
    %v5180 = vunpack.c.l.b16 %v4818
    %v5181 = vunpack.c.l.b16 %v4819
    %v5182 = vunpack.c.l.b16 %v4820
    %v5183 = vpack.c.b16 %v5152, %v5151
    %v5184 = vpack.c.b16 %v5154, %v5153
    %v5185 = vpack.c.b16 %v5156, %v5155
    %v5186 = vpack.c.b16 %v5158, %v5157
    %v5187 = vpack.c.b16 %v5160, %v5159
    %v5188 = vpack.c.b16 %v5162, %v5161
    %v5189 = vpack.c.b16 %v5164, %v5163
    %v5190 = vpack.c.b16 %v5166, %v5165
    %v5191 = vpack.c.b16 %v5168, %v5167
    %v5192 = vpack.c.b16 %v5170, %v5169
    %v5193 = vpack.c.b16 %v5172, %v5171
    %v5194 = vpack.c.b16 %v5174, %v5173
    %v5195 = vpack.c.b16 %v5176, %v5175
    %v5196 = vpack.c.b16 %v5178, %v5177
    %v5197 = vpack.c.b16 %v5180, %v5179
    %v5198 = vpack.c.b16 %v5182, %v5181
    %v5231 = vunpack.c.l.b16 %v4821
    %v5232 = vunpack.c.l.b16 %v4822
    %v5233 = vunpack.c.l.b16 %v4823
    %v5234 = vunpack.c.l.b16 %v4824
    %v5235 = vunpack.c.l.b16 %v4825
    %v5236 = vunpack.c.l.b16 %v4826
    %v5237 = vunpack.c.l.b16 %v4827
    %v5238 = vunpack.c.l.b16 %v4828
    %v5239 = vunpack.c.l.b16 %v4829
    %v5240 = vunpack.c.l.b16 %v4830
    %v5241 = vunpack.c.l.b16 %v4831
    %v5242 = vunpack.c.l.b16 %v4832
    %v5243 = vunpack.c.l.b16 %v4833
    %v5244 = vunpack.c.l.b16 %v4834
    %v5245 = vunpack.c.l.b16 %v4835
    %v5246 = vunpack.c.l.b16 %v4836
    %v5247 = vpack.c.b16 %v5232, %v5231
    %v5248 = vpack.c.b16 %v5234, %v5233
    %v5249 = vpack.c.b16 %v5236, %v5235
    %v5250 = vpack.c.b16 %v5238, %v5237
    %v5251 = vpack.c.b16 %v5240, %v5239
    %v5252 = vpack.c.b16 %v5242, %v5241
    %v5253 = vpack.c.b16 %v5244, %v5243
    %v5254 = vpack.c.b16 %v5246, %v5245
    %5263 = vmatpush.bf16.msra.mxu0 %v5254
    %5264 = vmatpush.bf16.msra.mxu0 %v5253
    %5265 = vmatpush.bf16.msra.mxu0 %v5252
    %5266 = vmatpush.bf16.msra.mxu0 %v5251
    %5267 = vmatpush.bf16.msra.mxu0 %v5250
    %5268 = vmatpush.bf16.msra.mxu0 %v5249
    %5269 = vmatpush.bf16.msra.mxu0 %v5248
    %5270 = vmatpush.bf16.msra.mxu0 %v5247
    %5271 = vmatmul.bf16.gmra.mxu0 %v5183
    %v5272 = vpop.f32.mrf.mxu0
    %v5273 = vadd.f32 %v5040, %v5272
    %v5274 = vpop.f32.mrf.mxu0
    %v5275 = vadd.f32 %v5042, %v5274
    %5276 = vmatmul.bf16.gmra.mxu0 %v5184
    %v5277 = vpop.f32.mrf.mxu0
    %v5278 = vadd.f32 %v5045, %v5277
    %v5279 = vpop.f32.mrf.mxu0
    %v5280 = vadd.f32 %v5047, %v5279
    %5281 = vmatmul.bf16.gmra.mxu0 %v5185
    %v5282 = vpop.f32.mrf.mxu0
    %v5283 = vadd.f32 %v5050, %v5282
    %v5284 = vpop.f32.mrf.mxu0
    %v5285 = vadd.f32 %v5052, %v5284
    %5286 = vmatmul.bf16.gmra.mxu0 %v5186
    %v5287 = vpop.f32.mrf.mxu0
    %v5288 = vadd.f32 %v5055, %v5287
    %v5289 = vpop.f32.mrf.mxu0
    %v5290 = vadd.f32 %v5057, %v5289
    %5291 = vmatmul.bf16.gmra.mxu0 %v5187
    %v5292 = vpop.f32.mrf.mxu0
    %v5293 = vadd.f32 %v5060, %v5292
    %v5294 = vpop.f32.mrf.mxu0
    %v5295 = vadd.f32 %v5062, %v5294
    %5296 = vmatmul.bf16.gmra.mxu0 %v5188
    %v5297 = vpop.f32.mrf.mxu0
    %v5298 = vadd.f32 %v5065, %v5297
    %v5299 = vpop.f32.mrf.mxu0
    %v5300 = vadd.f32 %v5067, %v5299
    %5301 = vmatmul.bf16.gmra.mxu0 %v5189
    %v5302 = vpop.f32.mrf.mxu0
    %v5303 = vadd.f32 %v5070, %v5302
    %v5304 = vpop.f32.mrf.mxu0
    %v5305 = vadd.f32 %v5072, %v5304
    %5306 = vmatmul.bf16.gmra.mxu0 %v5190
    %v5307 = vpop.f32.mrf.mxu0
    %v5308 = vadd.f32 %v5075, %v5307
    %v5309 = vpop.f32.mrf.mxu0
    %v5310 = vadd.f32 %v5077, %v5309
    %5311 = vmatmul.bf16.gmra.mxu0 %v5191
    %v5312 = vpop.f32.mrf.mxu0
    %v5313 = vadd.f32 %v5080, %v5312
    %v5314 = vpop.f32.mrf.mxu0
    %v5315 = vadd.f32 %v5082, %v5314
    %5316 = vmatmul.bf16.gmra.mxu0 %v5192
    %v5317 = vpop.f32.mrf.mxu0
    %v5318 = vadd.f32 %v5085, %v5317
    %v5319 = vpop.f32.mrf.mxu0
    %v5320 = vadd.f32 %v5087, %v5319
    %5321 = vmatmul.bf16.gmra.mxu0 %v5193
    %v5322 = vpop.f32.mrf.mxu0
    %v5323 = vadd.f32 %v5090, %v5322
    %v5324 = vpop.f32.mrf.mxu0
    %v5325 = vadd.f32 %v5092, %v5324
    %5326 = vmatmul.bf16.gmra.mxu0 %v5194
    %v5327 = vpop.f32.mrf.mxu0
    %v5328 = vadd.f32 %v5095, %v5327
    %v5329 = vpop.f32.mrf.mxu0
    %v5330 = vadd.f32 %v5097, %v5329
    %5331 = vmatmul.bf16.gmra.mxu0 %v5195
    %v5332 = vpop.f32.mrf.mxu0
    %v5333 = vadd.f32 %v5100, %v5332
    %v5334 = vpop.f32.mrf.mxu0
    %v5335 = vadd.f32 %v5102, %v5334
    %5336 = vmatmul.bf16.gmra.mxu0 %v5196
    %v5337 = vpop.f32.mrf.mxu0
    %v5338 = vadd.f32 %v5105, %v5337
    %v5339 = vpop.f32.mrf.mxu0
    %v5340 = vadd.f32 %v5107, %v5339
    %5341 = vmatmul.bf16.gmra.mxu0 %v5197
    %v5342 = vpop.f32.mrf.mxu0
    %v5343 = vadd.f32 %v5110, %v5342
    %v5344 = vpop.f32.mrf.mxu0
    %v5345 = vadd.f32 %v5112, %v5344
    %5346 = vmatmul.bf16.gmra.mxu0 %v5198
    %v5347 = vpop.f32.mrf.mxu0
    %v5348 = vadd.f32 %v5115, %v5347
    %v5349 = vpop.f32.mrf.mxu0
    %v5350 = vadd.f32 %v5117, %v5349
    %5351 = vdwg.mxu0
    %v5352 = vld [vmem:[%s78] sm:$0xf]
    %v5353 = vld [vmem:[%s78 + $0x4] sm:$0xf]
    %v5354 = vld [vmem:[%s78 + $0x8] sm:$0xf]
    %v5355 = vld [vmem:[%s78 + $0xc] sm:$0xf]
    %v5356 = vld [vmem:[%s78 + $0x10] sm:$0xf]
    %v5357 = vld [vmem:[%s78 + $0x14] sm:$0xf]
    %v5358 = vld [vmem:[%s78 + $0x18] sm:$0xf]
    %v5359 = vld [vmem:[%s78 + $0x1c] sm:$0xf]
    %v5360 = vld [vmem:[%s78 + $0x20] sm:$0xf]
    %v5361 = vld [vmem:[%s78 + $0x24] sm:$0xf]
    %v5362 = vld [vmem:[%s78 + $0x28] sm:$0xf]
    %v5363 = vld [vmem:[%s78 + $0x2c] sm:$0xf]
    %v5364 = vld [vmem:[%s78 + $0x30] sm:$0xf]
    %v5365 = vld [vmem:[%s78 + $0x34] sm:$0xf]
    %v5366 = vld [vmem:[%s78 + $0x38] sm:$0xf]
    %v5367 = vld [vmem:[%s78 + $0x3c] sm:$0xf]
    %v5368 = vld [vmem:[%s78 + $0x40] sm:$0xf]
    %v5369 = vld [vmem:[%s78 + $0x44] sm:$0xf]
    %v5370 = vld [vmem:[%s78 + $0x48] sm:$0xf]
    %v5371 = vld [vmem:[%s78 + $0x4c] sm:$0xf]
    %v5372 = vld [vmem:[%s78 + $0x50] sm:$0xf]
    %v5373 = vld [vmem:[%s78 + $0x54] sm:$0xf]
    %v5374 = vld [vmem:[%s78 + $0x58] sm:$0xf]
    %v5375 = vld [vmem:[%s78 + $0x5c] sm:$0xf]
    %v5376 = vld [vmem:[%s78 + $0x60] sm:$0xf]
    %v5377 = vld [vmem:[%s78 + $0x64] sm:$0xf]
    %v5378 = vld [vmem:[%s78 + $0x68] sm:$0xf]
    %v5379 = vld [vmem:[%s78 + $0x6c] sm:$0xf]
    %v5380 = vld [vmem:[%s78 + $0x70] sm:$0xf]
    %v5381 = vld [vmem:[%s78 + $0x74] sm:$0xf]
    %v5382 = vld [vmem:[%s78 + $0x78] sm:$0xf]
    %v5383 = vld [vmem:[%s78 + $0x7c] sm:$0xf]
    %s5384 = scalar_lea.vmem [#allocation8], 128
    %v5385 = vld [vmem:[%s5384] sm:$0xf]
    %v5386 = vld [vmem:[%s5384 + $0x4] sm:$0xf]
    %v5387 = vld [vmem:[%s5384 + $0x8] sm:$0xf]
    %v5388 = vld [vmem:[%s5384 + $0xc] sm:$0xf]
    %v5389 = vld [vmem:[%s5384 + $0x10] sm:$0xf]
    %v5390 = vld [vmem:[%s5384 + $0x14] sm:$0xf]
    %v5391 = vld [vmem:[%s5384 + $0x18] sm:$0xf]
    %v5392 = vld [vmem:[%s5384 + $0x1c] sm:$0xf]
    %v5393 = vld [vmem:[%s5384 + $0x20] sm:$0xf]
    %v5394 = vld [vmem:[%s5384 + $0x24] sm:$0xf]
    %v5395 = vld [vmem:[%s5384 + $0x28] sm:$0xf]
    %v5396 = vld [vmem:[%s5384 + $0x2c] sm:$0xf]
    %v5397 = vld [vmem:[%s5384 + $0x30] sm:$0xf]
    %v5398 = vld [vmem:[%s5384 + $0x34] sm:$0xf]
    %v5399 = vld [vmem:[%s5384 + $0x38] sm:$0xf]
    %v5400 = vld [vmem:[%s5384 + $0x3c] sm:$0xf]
    %v5433 = vunpack.c.l.b16 %v5352
    %v5434 = vunpack.c.l.b16 %v5353
    %v5435 = vunpack.c.l.b16 %v5354
    %v5436 = vunpack.c.l.b16 %v5355
    %v5437 = vunpack.c.l.b16 %v5356
    %v5438 = vunpack.c.l.b16 %v5357
    %v5439 = vunpack.c.l.b16 %v5358
    %v5440 = vunpack.c.l.b16 %v5359
    %v5441 = vunpack.c.l.b16 %v5360
    %v5442 = vunpack.c.l.b16 %v5361
    %v5443 = vunpack.c.l.b16 %v5362
    %v5444 = vunpack.c.l.b16 %v5363
    %v5445 = vunpack.c.l.b16 %v5364
    %v5446 = vunpack.c.l.b16 %v5365
    %v5447 = vunpack.c.l.b16 %v5366
    %v5448 = vunpack.c.l.b16 %v5367
    %v5449 = vunpack.c.l.b16 %v5368
    %v5450 = vunpack.c.l.b16 %v5369
    %v5451 = vunpack.c.l.b16 %v5370
    %v5452 = vunpack.c.l.b16 %v5371
    %v5453 = vunpack.c.l.b16 %v5372
    %v5454 = vunpack.c.l.b16 %v5373
    %v5455 = vunpack.c.l.b16 %v5374
    %v5456 = vunpack.c.l.b16 %v5375
    %v5457 = vunpack.c.l.b16 %v5376
    %v5458 = vunpack.c.l.b16 %v5377
    %v5459 = vunpack.c.l.b16 %v5378
    %v5460 = vunpack.c.l.b16 %v5379
    %v5461 = vunpack.c.l.b16 %v5380
    %v5462 = vunpack.c.l.b16 %v5381
    %v5463 = vunpack.c.l.b16 %v5382
    %v5464 = vunpack.c.l.b16 %v5383
    %v5465 = vpack.c.b16 %v5434, %v5433
    %v5466 = vpack.c.b16 %v5436, %v5435
    %v5467 = vpack.c.b16 %v5438, %v5437
    %v5468 = vpack.c.b16 %v5440, %v5439
    %v5469 = vpack.c.b16 %v5442, %v5441
    %v5470 = vpack.c.b16 %v5444, %v5443
    %v5471 = vpack.c.b16 %v5446, %v5445
    %v5472 = vpack.c.b16 %v5448, %v5447
    %v5473 = vpack.c.b16 %v5450, %v5449
    %v5474 = vpack.c.b16 %v5452, %v5451
    %v5475 = vpack.c.b16 %v5454, %v5453
    %v5476 = vpack.c.b16 %v5456, %v5455
    %v5477 = vpack.c.b16 %v5458, %v5457
    %v5478 = vpack.c.b16 %v5460, %v5459
    %v5479 = vpack.c.b16 %v5462, %v5461
    %v5480 = vpack.c.b16 %v5464, %v5463
    %v5513 = vunpack.c.l.b16 %v5385
    %v5514 = vunpack.c.l.b16 %v5386
    %v5515 = vunpack.c.l.b16 %v5387
    %v5516 = vunpack.c.l.b16 %v5388
    %v5517 = vunpack.c.l.b16 %v5389
    %v5518 = vunpack.c.l.b16 %v5390
    %v5519 = vunpack.c.l.b16 %v5391
    %v5520 = vunpack.c.l.b16 %v5392
    %v5521 = vunpack.c.l.b16 %v5393
    %v5522 = vunpack.c.l.b16 %v5394
    %v5523 = vunpack.c.l.b16 %v5395
    %v5524 = vunpack.c.l.b16 %v5396
    %v5525 = vunpack.c.l.b16 %v5397
    %v5526 = vunpack.c.l.b16 %v5398
    %v5527 = vunpack.c.l.b16 %v5399
    %v5528 = vunpack.c.l.b16 %v5400
    %v5529 = vpack.c.b16 %v5514, %v5513
    %v5530 = vpack.c.b16 %v5516, %v5515
    %v5531 = vpack.c.b16 %v5518, %v5517
    %v5532 = vpack.c.b16 %v5520, %v5519
    %v5533 = vpack.c.b16 %v5522, %v5521
    %v5534 = vpack.c.b16 %v5524, %v5523
    %v5535 = vpack.c.b16 %v5526, %v5525
    %v5536 = vpack.c.b16 %v5528, %v5527
    %5545 = vmatpush.bf16.msra.mxu0 %v5536
    %5546 = vmatpush.bf16.msra.mxu0 %v5535
    %5547 = vmatpush.bf16.msra.mxu0 %v5534
    %5548 = vmatpush.bf16.msra.mxu0 %v5533
    %5549 = vmatpush.bf16.msra.mxu0 %v5532
    %5550 = vmatpush.bf16.msra.mxu0 %v5531
    %5551 = vmatpush.bf16.msra.mxu0 %v5530
    %5552 = vmatpush.bf16.msra.mxu0 %v5529
    %5553 = vmatmul.bf16.gmra.mxu0 %v5465
    %v5554 = vpop.f32.mrf.mxu0
    %v5555 = vadd.f32 0.0, %v5554
    %v5556 = vpop.f32.mrf.mxu0
    %v5557 = vadd.f32 0.0, %v5556
    %5558 = vmatmul.bf16.gmra.mxu0 %v5466
    %v5559 = vpop.f32.mrf.mxu0
    %v5560 = vadd.f32 0.0, %v5559
    %v5561 = vpop.f32.mrf.mxu0
    %v5562 = vadd.f32 0.0, %v5561
    %5563 = vmatmul.bf16.gmra.mxu0 %v5467
    %v5564 = vpop.f32.mrf.mxu0
    %v5565 = vadd.f32 0.0, %v5564
    %v5566 = vpop.f32.mrf.mxu0
    %v5567 = vadd.f32 0.0, %v5566
    %5568 = vmatmul.bf16.gmra.mxu0 %v5468
    %v5569 = vpop.f32.mrf.mxu0
    %v5570 = vadd.f32 0.0, %v5569
    %v5571 = vpop.f32.mrf.mxu0
    %v5572 = vadd.f32 0.0, %v5571
    %5573 = vmatmul.bf16.gmra.mxu0 %v5469
    %v5574 = vpop.f32.mrf.mxu0
    %v5575 = vadd.f32 0.0, %v5574
    %v5576 = vpop.f32.mrf.mxu0
    %v5577 = vadd.f32 0.0, %v5576
    %5578 = vmatmul.bf16.gmra.mxu0 %v5470
    %v5579 = vpop.f32.mrf.mxu0
    %v5580 = vadd.f32 0.0, %v5579
    %v5581 = vpop.f32.mrf.mxu0
    %v5582 = vadd.f32 0.0, %v5581
    %5583 = vmatmul.bf16.gmra.mxu0 %v5471
    %v5584 = vpop.f32.mrf.mxu0
    %v5585 = vadd.f32 0.0, %v5584
    %v5586 = vpop.f32.mrf.mxu0
    %v5587 = vadd.f32 0.0, %v5586
    %5588 = vmatmul.bf16.gmra.mxu0 %v5472
    %v5589 = vpop.f32.mrf.mxu0
    %v5590 = vadd.f32 0.0, %v5589
    %v5591 = vpop.f32.mrf.mxu0
    %v5592 = vadd.f32 0.0, %v5591
    %5593 = vmatmul.bf16.gmra.mxu0 %v5473
    %v5594 = vpop.f32.mrf.mxu0
    %v5595 = vadd.f32 0.0, %v5594
    %v5596 = vpop.f32.mrf.mxu0
    %v5597 = vadd.f32 0.0, %v5596
    %5598 = vmatmul.bf16.gmra.mxu0 %v5474
    %v5599 = vpop.f32.mrf.mxu0
    %v5600 = vadd.f32 0.0, %v5599
    %v5601 = vpop.f32.mrf.mxu0
    %v5602 = vadd.f32 0.0, %v5601
    %5603 = vmatmul.bf16.gmra.mxu0 %v5475
    %v5604 = vpop.f32.mrf.mxu0
    %v5605 = vadd.f32 0.0, %v5604
    %v5606 = vpop.f32.mrf.mxu0
    %v5607 = vadd.f32 0.0, %v5606
    %5608 = vmatmul.bf16.gmra.mxu0 %v5476
    %v5609 = vpop.f32.mrf.mxu0
    %v5610 = vadd.f32 0.0, %v5609
    %v5611 = vpop.f32.mrf.mxu0
    %v5612 = vadd.f32 0.0, %v5611
    %5613 = vmatmul.bf16.gmra.mxu0 %v5477
    %v5614 = vpop.f32.mrf.mxu0
    %v5615 = vadd.f32 0.0, %v5614
    %v5616 = vpop.f32.mrf.mxu0
    %v5617 = vadd.f32 0.0, %v5616
    %5618 = vmatmul.bf16.gmra.mxu0 %v5478
    %v5619 = vpop.f32.mrf.mxu0
    %v5620 = vadd.f32 0.0, %v5619
    %v5621 = vpop.f32.mrf.mxu0
    %v5622 = vadd.f32 0.0, %v5621
    %5623 = vmatmul.bf16.gmra.mxu0 %v5479
    %v5624 = vpop.f32.mrf.mxu0
    %v5625 = vadd.f32 0.0, %v5624
    %v5626 = vpop.f32.mrf.mxu0
    %v5627 = vadd.f32 0.0, %v5626
    %5628 = vmatmul.bf16.gmra.mxu0 %v5480
    %v5629 = vpop.f32.mrf.mxu0
    %v5630 = vadd.f32 0.0, %v5629
    %v5631 = vpop.f32.mrf.mxu0
    %v5632 = vadd.f32 0.0, %v5631
    %5633 = vdwg.mxu0
    %v5634 = vadd.f32 %v5273, %v5555
    %v5635 = vadd.f32 %v5275, %v5557
    %v5636 = vadd.f32 %v5278, %v5560
    %v5637 = vadd.f32 %v5280, %v5562
    %v5638 = vadd.f32 %v5283, %v5565
    %v5639 = vadd.f32 %v5285, %v5567
    %v5640 = vadd.f32 %v5288, %v5570
    %v5641 = vadd.f32 %v5290, %v5572
    %v5642 = vadd.f32 %v5293, %v5575
    %v5643 = vadd.f32 %v5295, %v5577
    %v5644 = vadd.f32 %v5298, %v5580
    %v5645 = vadd.f32 %v5300, %v5582
    %v5646 = vadd.f32 %v5303, %v5585
    %v5647 = vadd.f32 %v5305, %v5587
    %v5648 = vadd.f32 %v5308, %v5590
    %v5649 = vadd.f32 %v5310, %v5592
    %v5650 = vadd.f32 %v5313, %v5595
    %v5651 = vadd.f32 %v5315, %v5597
    %v5652 = vadd.f32 %v5318, %v5600
    %v5653 = vadd.f32 %v5320, %v5602
    %v5654 = vadd.f32 %v5323, %v5605
    %v5655 = vadd.f32 %v5325, %v5607
    %v5656 = vadd.f32 %v5328, %v5610
    %v5657 = vadd.f32 %v5330, %v5612
    %v5658 = vadd.f32 %v5333, %v5615
    %v5659 = vadd.f32 %v5335, %v5617
    %v5660 = vadd.f32 %v5338, %v5620
    %v5661 = vadd.f32 %v5340, %v5622
    %v5662 = vadd.f32 %v5343, %v5625
    %v5663 = vadd.f32 %v5345, %v5627
    %v5664 = vadd.f32 %v5348, %v5630
    %v5665 = vadd.f32 %v5350, %v5632
    %v5666 = vld [vmem:[#allocation2 + $0x8] sm:$0xf]
    %v5667 = vld [vmem:[#allocation2 + $0xc] sm:$0xf]
    %v5668 = vld [vmem:[#allocation2 + $0x10] sm:$0xf]
    %v5669 = vld [vmem:[#allocation2 + $0x14] sm:$0xf]
    %v5670 = vld [vmem:[#allocation2 + $0x18] sm:$0xf]
    %v5671 = vld [vmem:[#allocation2 + $0x1c] sm:$0xf]
    %v5672 = vld [vmem:[#allocation2 + $0x20] sm:$0xf]
    %v5673 = vld [vmem:[#allocation2 + $0x24] sm:$0xf]
    %v5674 = vld [vmem:[#allocation2 + $0x28] sm:$0xf]
    %v5675 = vld [vmem:[#allocation2 + $0x2c] sm:$0xf]
    %v5676 = vld [vmem:[#allocation2 + $0x30] sm:$0xf]
    %v5677 = vld [vmem:[#allocation2 + $0x34] sm:$0xf]
    %v5678 = vld [vmem:[#allocation2 + $0x38] sm:$0xf]
    %v5679 = vld [vmem:[#allocation2 + $0x3c] sm:$0xf]
    %v5680 = vld [vmem:[#allocation2 + $0x40] sm:$0xf]
    %v5681 = vld [vmem:[#allocation2 + $0x44] sm:$0xf]
    %v5682 = vld [vmem:[#allocation2 + $0x48] sm:$0xf]
    %v5683 = vld [vmem:[#allocation2 + $0x4c] sm:$0xf]
    %v5684 = vld [vmem:[#allocation2 + $0x50] sm:$0xf]
    %v5685 = vld [vmem:[#allocation2 + $0x54] sm:$0xf]
    %v5686 = vld [vmem:[#allocation2 + $0x58] sm:$0xf]
    %v5687 = vld [vmem:[#allocation2 + $0x5c] sm:$0xf]
    %v5688 = vld [vmem:[#allocation2 + $0x60] sm:$0xf]
    %v5689 = vld [vmem:[#allocation2 + $0x64] sm:$0xf]
    %v5690 = vld [vmem:[#allocation2 + $0x68] sm:$0xf]
    %v5691 = vld [vmem:[#allocation2 + $0x6c] sm:$0xf]
    %v5692 = vld [vmem:[#allocation2 + $0x70] sm:$0xf]
    %v5693 = vld [vmem:[#allocation2 + $0x74] sm:$0xf]
    %v5694 = vld [vmem:[#allocation2 + $0x78] sm:$0xf]
    %v5695 = vld [vmem:[#allocation2 + $0x7c] sm:$0xf]
    %v5696 = vld [vmem:[#allocation2 + $0x80] sm:$0xf]
    %v5697 = vld [vmem:[#allocation2 + $0x84] sm:$0xf]
    %s5698 = scalar_lea.vmem [#allocation8], 192
    %v5699 = vld [vmem:[%s5698] sm:$0xf]
    %v5700 = vld [vmem:[%s5698 + $0x4] sm:$0xf]
    %v5701 = vld [vmem:[%s5698 + $0x8] sm:$0xf]
    %v5702 = vld [vmem:[%s5698 + $0xc] sm:$0xf]
    %v5703 = vld [vmem:[%s5698 + $0x10] sm:$0xf]
    %v5704 = vld [vmem:[%s5698 + $0x14] sm:$0xf]
    %v5705 = vld [vmem:[%s5698 + $0x18] sm:$0xf]
    %v5706 = vld [vmem:[%s5698 + $0x1c] sm:$0xf]
    %v5707 = vld [vmem:[%s5698 + $0x20] sm:$0xf]
    %v5708 = vld [vmem:[%s5698 + $0x24] sm:$0xf]
    %v5709 = vld [vmem:[%s5698 + $0x28] sm:$0xf]
    %v5710 = vld [vmem:[%s5698 + $0x2c] sm:$0xf]
    %v5711 = vld [vmem:[%s5698 + $0x30] sm:$0xf]
    %v5712 = vld [vmem:[%s5698 + $0x34] sm:$0xf]
    %v5713 = vld [vmem:[%s5698 + $0x38] sm:$0xf]
    %v5714 = vld [vmem:[%s5698 + $0x3c] sm:$0xf]
    %v5747 = vunpack.c.l.b16 %v5666
    %v5748 = vunpack.c.l.b16 %v5667
    %v5749 = vunpack.c.l.b16 %v5668
    %v5750 = vunpack.c.l.b16 %v5669
    %v5751 = vunpack.c.l.b16 %v5670
    %v5752 = vunpack.c.l.b16 %v5671
    %v5753 = vunpack.c.l.b16 %v5672
    %v5754 = vunpack.c.l.b16 %v5673
    %v5755 = vunpack.c.l.b16 %v5674
    %v5756 = vunpack.c.l.b16 %v5675
    %v5757 = vunpack.c.l.b16 %v5676
    %v5758 = vunpack.c.l.b16 %v5677
    %v5759 = vunpack.c.l.b16 %v5678
    %v5760 = vunpack.c.l.b16 %v5679
    %v5761 = vunpack.c.l.b16 %v5680
    %v5762 = vunpack.c.l.b16 %v5681
    %v5763 = vunpack.c.l.b16 %v5682
    %v5764 = vunpack.c.l.b16 %v5683
    %v5765 = vunpack.c.l.b16 %v5684
    %v5766 = vunpack.c.l.b16 %v5685
    %v5767 = vunpack.c.l.b16 %v5686
    %v5768 = vunpack.c.l.b16 %v5687
    %v5769 = vunpack.c.l.b16 %v5688
    %v5770 = vunpack.c.l.b16 %v5689
    %v5771 = vunpack.c.l.b16 %v5690
    %v5772 = vunpack.c.l.b16 %v5691
    %v5773 = vunpack.c.l.b16 %v5692
    %v5774 = vunpack.c.l.b16 %v5693
    %v5775 = vunpack.c.l.b16 %v5694
    %v5776 = vunpack.c.l.b16 %v5695
    %v5777 = vunpack.c.l.b16 %v5696
    %v5778 = vunpack.c.l.b16 %v5697
    %v5779 = vpack.c.b16 %v5748, %v5747
    %v5780 = vpack.c.b16 %v5750, %v5749
    %v5781 = vpack.c.b16 %v5752, %v5751
    %v5782 = vpack.c.b16 %v5754, %v5753
    %v5783 = vpack.c.b16 %v5756, %v5755
    %v5784 = vpack.c.b16 %v5758, %v5757
    %v5785 = vpack.c.b16 %v5760, %v5759
    %v5786 = vpack.c.b16 %v5762, %v5761
    %v5787 = vpack.c.b16 %v5764, %v5763
    %v5788 = vpack.c.b16 %v5766, %v5765
    %v5789 = vpack.c.b16 %v5768, %v5767
    %v5790 = vpack.c.b16 %v5770, %v5769
    %v5791 = vpack.c.b16 %v5772, %v5771
    %v5792 = vpack.c.b16 %v5774, %v5773
    %v5793 = vpack.c.b16 %v5776, %v5775
    %v5794 = vpack.c.b16 %v5778, %v5777
    %v5827 = vunpack.c.l.b16 %v5699
    %v5828 = vunpack.c.l.b16 %v5700
    %v5829 = vunpack.c.l.b16 %v5701
    %v5830 = vunpack.c.l.b16 %v5702
    %v5831 = vunpack.c.l.b16 %v5703
    %v5832 = vunpack.c.l.b16 %v5704
    %v5833 = vunpack.c.l.b16 %v5705
    %v5834 = vunpack.c.l.b16 %v5706
    %v5835 = vunpack.c.l.b16 %v5707
    %v5836 = vunpack.c.l.b16 %v5708
    %v5837 = vunpack.c.l.b16 %v5709
    %v5838 = vunpack.c.l.b16 %v5710
    %v5839 = vunpack.c.l.b16 %v5711
    %v5840 = vunpack.c.l.b16 %v5712
    %v5841 = vunpack.c.l.b16 %v5713
    %v5842 = vunpack.c.l.b16 %v5714
    %v5843 = vpack.c.b16 %v5828, %v5827
    %v5844 = vpack.c.b16 %v5830, %v5829
    %v5845 = vpack.c.b16 %v5832, %v5831
    %v5846 = vpack.c.b16 %v5834, %v5833
    %v5847 = vpack.c.b16 %v5836, %v5835
    %v5848 = vpack.c.b16 %v5838, %v5837
    %v5849 = vpack.c.b16 %v5840, %v5839
    %v5850 = vpack.c.b16 %v5842, %v5841
    %5859 = vmatpush.bf16.msra.mxu0 %v5850
    %5860 = vmatpush.bf16.msra.mxu0 %v5849
    %5861 = vmatpush.bf16.msra.mxu0 %v5848
    %5862 = vmatpush.bf16.msra.mxu0 %v5847
    %5863 = vmatpush.bf16.msra.mxu0 %v5846
    %5864 = vmatpush.bf16.msra.mxu0 %v5845
    %5865 = vmatpush.bf16.msra.mxu0 %v5844
    %5866 = vmatpush.bf16.msra.mxu0 %v5843
    %5867 = vmatmul.bf16.gmra.mxu0 %v5779
    %v5868 = vpop.f32.mrf.mxu0
    %v5869 = vadd.f32 0.0, %v5868
    %v5870 = vpop.f32.mrf.mxu0
    %v5871 = vadd.f32 0.0, %v5870
    %5872 = vmatmul.bf16.gmra.mxu0 %v5780
    %v5873 = vpop.f32.mrf.mxu0
    %v5874 = vadd.f32 0.0, %v5873
    %v5875 = vpop.f32.mrf.mxu0
    %v5876 = vadd.f32 0.0, %v5875
    %5877 = vmatmul.bf16.gmra.mxu0 %v5781
    %v5878 = vpop.f32.mrf.mxu0
    %v5879 = vadd.f32 0.0, %v5878
    %v5880 = vpop.f32.mrf.mxu0
    %v5881 = vadd.f32 0.0, %v5880
    %5882 = vmatmul.bf16.gmra.mxu0 %v5782
    %v5883 = vpop.f32.mrf.mxu0
    %v5884 = vadd.f32 0.0, %v5883
    %v5885 = vpop.f32.mrf.mxu0
    %v5886 = vadd.f32 0.0, %v5885
    %5887 = vmatmul.bf16.gmra.mxu0 %v5783
    %v5888 = vpop.f32.mrf.mxu0
    %v5889 = vadd.f32 0.0, %v5888
    %v5890 = vpop.f32.mrf.mxu0
    %v5891 = vadd.f32 0.0, %v5890
    %5892 = vmatmul.bf16.gmra.mxu0 %v5784
    %v5893 = vpop.f32.mrf.mxu0
    %v5894 = vadd.f32 0.0, %v5893
    %v5895 = vpop.f32.mrf.mxu0
    %v5896 = vadd.f32 0.0, %v5895
    %5897 = vmatmul.bf16.gmra.mxu0 %v5785
    %v5898 = vpop.f32.mrf.mxu0
    %v5899 = vadd.f32 0.0, %v5898
    %v5900 = vpop.f32.mrf.mxu0
    %v5901 = vadd.f32 0.0, %v5900
    %5902 = vmatmul.bf16.gmra.mxu0 %v5786
    %v5903 = vpop.f32.mrf.mxu0
    %v5904 = vadd.f32 0.0, %v5903
    %v5905 = vpop.f32.mrf.mxu0
    %v5906 = vadd.f32 0.0, %v5905
    %5907 = vmatmul.bf16.gmra.mxu0 %v5787
    %v5908 = vpop.f32.mrf.mxu0
    %v5909 = vadd.f32 0.0, %v5908
    %v5910 = vpop.f32.mrf.mxu0
    %v5911 = vadd.f32 0.0, %v5910
    %5912 = vmatmul.bf16.gmra.mxu0 %v5788
    %v5913 = vpop.f32.mrf.mxu0
    %v5914 = vadd.f32 0.0, %v5913
    %v5915 = vpop.f32.mrf.mxu0
    %v5916 = vadd.f32 0.0, %v5915
    %5917 = vmatmul.bf16.gmra.mxu0 %v5789
    %v5918 = vpop.f32.mrf.mxu0
    %v5919 = vadd.f32 0.0, %v5918
    %v5920 = vpop.f32.mrf.mxu0
    %v5921 = vadd.f32 0.0, %v5920
    %5922 = vmatmul.bf16.gmra.mxu0 %v5790
    %v5923 = vpop.f32.mrf.mxu0
    %v5924 = vadd.f32 0.0, %v5923
    %v5925 = vpop.f32.mrf.mxu0
    %v5926 = vadd.f32 0.0, %v5925
    %5927 = vmatmul.bf16.gmra.mxu0 %v5791
    %v5928 = vpop.f32.mrf.mxu0
    %v5929 = vadd.f32 0.0, %v5928
    %v5930 = vpop.f32.mrf.mxu0
    %v5931 = vadd.f32 0.0, %v5930
    %5932 = vmatmul.bf16.gmra.mxu0 %v5792
    %v5933 = vpop.f32.mrf.mxu0
    %v5934 = vadd.f32 0.0, %v5933
    %v5935 = vpop.f32.mrf.mxu0
    %v5936 = vadd.f32 0.0, %v5935
    %5937 = vmatmul.bf16.gmra.mxu0 %v5793
    %v5938 = vpop.f32.mrf.mxu0
    %v5939 = vadd.f32 0.0, %v5938
    %v5940 = vpop.f32.mrf.mxu0
    %v5941 = vadd.f32 0.0, %v5940
    %5942 = vmatmul.bf16.gmra.mxu0 %v5794
    %v5943 = vpop.f32.mrf.mxu0
    %v5944 = vadd.f32 0.0, %v5943
    %v5945 = vpop.f32.mrf.mxu0
    %v5946 = vadd.f32 0.0, %v5945
    %5947 = vdwg.mxu0
    %v5948 = vadd.f32 %v5634, %v5869
    %v5949 = vadd.f32 %v5635, %v5871
    %v5950 = vadd.f32 %v5636, %v5874
    %v5951 = vadd.f32 %v5637, %v5876
    %v5952 = vadd.f32 %v5638, %v5879
    %v5953 = vadd.f32 %v5639, %v5881
    %v5954 = vadd.f32 %v5640, %v5884
    %v5955 = vadd.f32 %v5641, %v5886
    %v5956 = vadd.f32 %v5642, %v5889
    %v5957 = vadd.f32 %v5643, %v5891
    %v5958 = vadd.f32 %v5644, %v5894
    %v5959 = vadd.f32 %v5645, %v5896
    %v5960 = vadd.f32 %v5646, %v5899
    %v5961 = vadd.f32 %v5647, %v5901
    %v5962 = vadd.f32 %v5648, %v5904
    %v5963 = vadd.f32 %v5649, %v5906
    %v5964 = vadd.f32 %v5650, %v5909
    %v5965 = vadd.f32 %v5651, %v5911
    %v5966 = vadd.f32 %v5652, %v5914
    %v5967 = vadd.f32 %v5653, %v5916
    %v5968 = vadd.f32 %v5654, %v5919
    %v5969 = vadd.f32 %v5655, %v5921
    %v5970 = vadd.f32 %v5656, %v5924
    %v5971 = vadd.f32 %v5657, %v5926
    %v5972 = vadd.f32 %v5658, %v5929
    %v5973 = vadd.f32 %v5659, %v5931
    %v5974 = vadd.f32 %v5660, %v5934
    %v5975 = vadd.f32 %v5661, %v5936
    %v5976 = vadd.f32 %v5662, %v5939
    %v5977 = vadd.f32 %v5663, %v5941
    %v5978 = vadd.f32 %v5664, %v5944
    %v5979 = vadd.f32 %v5665, %v5946
    %v5980 = vld [vmem:[%s73 + $0x8] sm:$0xf]
    %v5981 = vld [vmem:[%s73 + $0xc] sm:$0xf]
    %v5982 = vld [vmem:[%s73 + $0x10] sm:$0xf]
    %v5983 = vld [vmem:[%s73 + $0x14] sm:$0xf]
    %v5984 = vld [vmem:[%s73 + $0x18] sm:$0xf]
    %v5985 = vld [vmem:[%s73 + $0x1c] sm:$0xf]
    %v5986 = vld [vmem:[%s73 + $0x20] sm:$0xf]
    %v5987 = vld [vmem:[%s73 + $0x24] sm:$0xf]
    %v5988 = vld [vmem:[%s73 + $0x28] sm:$0xf]
    %v5989 = vld [vmem:[%s73 + $0x2c] sm:$0xf]
    %v5990 = vld [vmem:[%s73 + $0x30] sm:$0xf]
    %v5991 = vld [vmem:[%s73 + $0x34] sm:$0xf]
    %v5992 = vld [vmem:[%s73 + $0x38] sm:$0xf]
    %v5993 = vld [vmem:[%s73 + $0x3c] sm:$0xf]
    %v5994 = vld [vmem:[%s73 + $0x40] sm:$0xf]
    %v5995 = vld [vmem:[%s73 + $0x44] sm:$0xf]
    %v5996 = vld [vmem:[%s73 + $0x48] sm:$0xf]
    %v5997 = vld [vmem:[%s73 + $0x4c] sm:$0xf]
    %v5998 = vld [vmem:[%s73 + $0x50] sm:$0xf]
    %v5999 = vld [vmem:[%s73 + $0x54] sm:$0xf]
    %v6000 = vld [vmem:[%s73 + $0x58] sm:$0xf]
    %v6001 = vld [vmem:[%s73 + $0x5c] sm:$0xf]
    %v6002 = vld [vmem:[%s73 + $0x60] sm:$0xf]
    %v6003 = vld [vmem:[%s73 + $0x64] sm:$0xf]
    %v6004 = vld [vmem:[%s73 + $0x68] sm:$0xf]
    %v6005 = vld [vmem:[%s73 + $0x6c] sm:$0xf]
    %v6006 = vld [vmem:[%s73 + $0x70] sm:$0xf]
    %v6007 = vld [vmem:[%s73 + $0x74] sm:$0xf]
    %v6008 = vld [vmem:[%s73 + $0x78] sm:$0xf]
    %v6009 = vld [vmem:[%s73 + $0x7c] sm:$0xf]
    %v6010 = vld [vmem:[%s73 + $0x80] sm:$0xf]
    %v6011 = vld [vmem:[%s73 + $0x84] sm:$0xf]
    %s6012 = scalar_lea.vmem [#allocation8], 256
    %v6013 = vld [vmem:[%s6012] sm:$0xf]
    %v6014 = vld [vmem:[%s6012 + $0x4] sm:$0xf]
    %v6015 = vld [vmem:[%s6012 + $0x8] sm:$0xf]
    %v6016 = vld [vmem:[%s6012 + $0xc] sm:$0xf]
    %v6017 = vld [vmem:[%s6012 + $0x10] sm:$0xf]
    %v6018 = vld [vmem:[%s6012 + $0x14] sm:$0xf]
    %v6019 = vld [vmem:[%s6012 + $0x18] sm:$0xf]
    %v6020 = vld [vmem:[%s6012 + $0x1c] sm:$0xf]
    %v6021 = vld [vmem:[%s6012 + $0x20] sm:$0xf]
    %v6022 = vld [vmem:[%s6012 + $0x24] sm:$0xf]
    %v6023 = vld [vmem:[%s6012 + $0x28] sm:$0xf]
    %v6024 = vld [vmem:[%s6012 + $0x2c] sm:$0xf]
    %v6025 = vld [vmem:[%s6012 + $0x30] sm:$0xf]
    %v6026 = vld [vmem:[%s6012 + $0x34] sm:$0xf]
    %v6027 = vld [vmem:[%s6012 + $0x38] sm:$0xf]
    %v6028 = vld [vmem:[%s6012 + $0x3c] sm:$0xf]
    %v6061 = vunpack.c.l.b16 %v5980
    %v6062 = vunpack.c.l.b16 %v5981
    %v6063 = vunpack.c.l.b16 %v5982
    %v6064 = vunpack.c.l.b16 %v5983
    %v6065 = vunpack.c.l.b16 %v5984
    %v6066 = vunpack.c.l.b16 %v5985
    %v6067 = vunpack.c.l.b16 %v5986
    %v6068 = vunpack.c.l.b16 %v5987
    %v6069 = vunpack.c.l.b16 %v5988
    %v6070 = vunpack.c.l.b16 %v5989
    %v6071 = vunpack.c.l.b16 %v5990
    %v6072 = vunpack.c.l.b16 %v5991
    %v6073 = vunpack.c.l.b16 %v5992
    %v6074 = vunpack.c.l.b16 %v5993
    %v6075 = vunpack.c.l.b16 %v5994
    %v6076 = vunpack.c.l.b16 %v5995
    %v6077 = vunpack.c.l.b16 %v5996
    %v6078 = vunpack.c.l.b16 %v5997
    %v6079 = vunpack.c.l.b16 %v5998
    %v6080 = vunpack.c.l.b16 %v5999
    %v6081 = vunpack.c.l.b16 %v6000
    %v6082 = vunpack.c.l.b16 %v6001
    %v6083 = vunpack.c.l.b16 %v6002
    %v6084 = vunpack.c.l.b16 %v6003
    %v6085 = vunpack.c.l.b16 %v6004
    %v6086 = vunpack.c.l.b16 %v6005
    %v6087 = vunpack.c.l.b16 %v6006
    %v6088 = vunpack.c.l.b16 %v6007
    %v6089 = vunpack.c.l.b16 %v6008
    %v6090 = vunpack.c.l.b16 %v6009
    %v6091 = vunpack.c.l.b16 %v6010
    %v6092 = vunpack.c.l.b16 %v6011
    %v6093 = vpack.c.b16 %v6062, %v6061
    %v6094 = vpack.c.b16 %v6064, %v6063
    %v6095 = vpack.c.b16 %v6066, %v6065
    %v6096 = vpack.c.b16 %v6068, %v6067
    %v6097 = vpack.c.b16 %v6070, %v6069
    %v6098 = vpack.c.b16 %v6072, %v6071
    %v6099 = vpack.c.b16 %v6074, %v6073
    %v6100 = vpack.c.b16 %v6076, %v6075
    %v6101 = vpack.c.b16 %v6078, %v6077
    %v6102 = vpack.c.b16 %v6080, %v6079
    %v6103 = vpack.c.b16 %v6082, %v6081
    %v6104 = vpack.c.b16 %v6084, %v6083
    %v6105 = vpack.c.b16 %v6086, %v6085
    %v6106 = vpack.c.b16 %v6088, %v6087
    %v6107 = vpack.c.b16 %v6090, %v6089
    %v6108 = vpack.c.b16 %v6092, %v6091
    %v6141 = vunpack.c.l.b16 %v6013
    %v6142 = vunpack.c.l.b16 %v6014
    %v6143 = vunpack.c.l.b16 %v6015
    %v6144 = vunpack.c.l.b16 %v6016
    %v6145 = vunpack.c.l.b16 %v6017
    %v6146 = vunpack.c.l.b16 %v6018
    %v6147 = vunpack.c.l.b16 %v6019
    %v6148 = vunpack.c.l.b16 %v6020
    %v6149 = vunpack.c.l.b16 %v6021
    %v6150 = vunpack.c.l.b16 %v6022
    %v6151 = vunpack.c.l.b16 %v6023
    %v6152 = vunpack.c.l.b16 %v6024
    %v6153 = vunpack.c.l.b16 %v6025
    %v6154 = vunpack.c.l.b16 %v6026
    %v6155 = vunpack.c.l.b16 %v6027
    %v6156 = vunpack.c.l.b16 %v6028
    %v6157 = vpack.c.b16 %v6142, %v6141
    %v6158 = vpack.c.b16 %v6144, %v6143
    %v6159 = vpack.c.b16 %v6146, %v6145
    %v6160 = vpack.c.b16 %v6148, %v6147
    %v6161 = vpack.c.b16 %v6150, %v6149
    %v6162 = vpack.c.b16 %v6152, %v6151
    %v6163 = vpack.c.b16 %v6154, %v6153
    %v6164 = vpack.c.b16 %v6156, %v6155
    %6173 = vmatpush.bf16.msra.mxu0 %v6164
    %6174 = vmatpush.bf16.msra.mxu0 %v6163
    %6175 = vmatpush.bf16.msra.mxu0 %v6162
    %6176 = vmatpush.bf16.msra.mxu0 %v6161
    %6177 = vmatpush.bf16.msra.mxu0 %v6160
    %6178 = vmatpush.bf16.msra.mxu0 %v6159
    %6179 = vmatpush.bf16.msra.mxu0 %v6158
    %6180 = vmatpush.bf16.msra.mxu0 %v6157
    %6181 = vmatmul.bf16.gmra.mxu0 %v6093
    %v6182 = vpop.f32.mrf.mxu0
    %v6183 = vadd.f32 0.0, %v6182
    %v6184 = vpop.f32.mrf.mxu0
    %v6185 = vadd.f32 0.0, %v6184
    %6186 = vmatmul.bf16.gmra.mxu0 %v6094
    %v6187 = vpop.f32.mrf.mxu0
    %v6188 = vadd.f32 0.0, %v6187
    %v6189 = vpop.f32.mrf.mxu0
    %v6190 = vadd.f32 0.0, %v6189
    %6191 = vmatmul.bf16.gmra.mxu0 %v6095
    %v6192 = vpop.f32.mrf.mxu0
    %v6193 = vadd.f32 0.0, %v6192
    %v6194 = vpop.f32.mrf.mxu0
    %v6195 = vadd.f32 0.0, %v6194
    %6196 = vmatmul.bf16.gmra.mxu0 %v6096
    %v6197 = vpop.f32.mrf.mxu0
    %v6198 = vadd.f32 0.0, %v6197
    %v6199 = vpop.f32.mrf.mxu0
    %v6200 = vadd.f32 0.0, %v6199
    %6201 = vmatmul.bf16.gmra.mxu0 %v6097
    %v6202 = vpop.f32.mrf.mxu0
    %v6203 = vadd.f32 0.0, %v6202
    %v6204 = vpop.f32.mrf.mxu0
    %v6205 = vadd.f32 0.0, %v6204
    %6206 = vmatmul.bf16.gmra.mxu0 %v6098
    %v6207 = vpop.f32.mrf.mxu0
    %v6208 = vadd.f32 0.0, %v6207
    %v6209 = vpop.f32.mrf.mxu0
    %v6210 = vadd.f32 0.0, %v6209
    %6211 = vmatmul.bf16.gmra.mxu0 %v6099
    %v6212 = vpop.f32.mrf.mxu0
    %v6213 = vadd.f32 0.0, %v6212
    %v6214 = vpop.f32.mrf.mxu0
    %v6215 = vadd.f32 0.0, %v6214
    %6216 = vmatmul.bf16.gmra.mxu0 %v6100
    %v6217 = vpop.f32.mrf.mxu0
    %v6218 = vadd.f32 0.0, %v6217
    %v6219 = vpop.f32.mrf.mxu0
    %v6220 = vadd.f32 0.0, %v6219
    %6221 = vmatmul.bf16.gmra.mxu0 %v6101
    %v6222 = vpop.f32.mrf.mxu0
    %v6223 = vadd.f32 0.0, %v6222
    %v6224 = vpop.f32.mrf.mxu0
    %v6225 = vadd.f32 0.0, %v6224
    %6226 = vmatmul.bf16.gmra.mxu0 %v6102
    %v6227 = vpop.f32.mrf.mxu0
    %v6228 = vadd.f32 0.0, %v6227
    %v6229 = vpop.f32.mrf.mxu0
    %v6230 = vadd.f32 0.0, %v6229
    %6231 = vmatmul.bf16.gmra.mxu0 %v6103
    %v6232 = vpop.f32.mrf.mxu0
    %v6233 = vadd.f32 0.0, %v6232
    %v6234 = vpop.f32.mrf.mxu0
    %v6235 = vadd.f32 0.0, %v6234
    %6236 = vmatmul.bf16.gmra.mxu0 %v6104
    %v6237 = vpop.f32.mrf.mxu0
    %v6238 = vadd.f32 0.0, %v6237
    %v6239 = vpop.f32.mrf.mxu0
    %v6240 = vadd.f32 0.0, %v6239
    %6241 = vmatmul.bf16.gmra.mxu0 %v6105
    %v6242 = vpop.f32.mrf.mxu0
    %v6243 = vadd.f32 0.0, %v6242
    %v6244 = vpop.f32.mrf.mxu0
    %v6245 = vadd.f32 0.0, %v6244
    %6246 = vmatmul.bf16.gmra.mxu0 %v6106
    %v6247 = vpop.f32.mrf.mxu0
    %v6248 = vadd.f32 0.0, %v6247
    %v6249 = vpop.f32.mrf.mxu0
    %v6250 = vadd.f32 0.0, %v6249
    %6251 = vmatmul.bf16.gmra.mxu0 %v6107
    %v6252 = vpop.f32.mrf.mxu0
    %v6253 = vadd.f32 0.0, %v6252
    %v6254 = vpop.f32.mrf.mxu0
    %v6255 = vadd.f32 0.0, %v6254
    %6256 = vmatmul.bf16.gmra.mxu0 %v6108
    %v6257 = vpop.f32.mrf.mxu0
    %v6258 = vadd.f32 0.0, %v6257
    %v6259 = vpop.f32.mrf.mxu0
    %v6260 = vadd.f32 0.0, %v6259
    %6261 = vdwg.mxu0
    %v6262 = vadd.f32 %v5948, %v6183
    %v6263 = vadd.f32 %v5949, %v6185
    %v6264 = vadd.f32 %v5950, %v6188
    %v6265 = vadd.f32 %v5951, %v6190
    %v6266 = vadd.f32 %v5952, %v6193
    %v6267 = vadd.f32 %v5953, %v6195
    %v6268 = vadd.f32 %v5954, %v6198
    %v6269 = vadd.f32 %v5955, %v6200
    %v6270 = vadd.f32 %v5956, %v6203
    %v6271 = vadd.f32 %v5957, %v6205
    %v6272 = vadd.f32 %v5958, %v6208
    %v6273 = vadd.f32 %v5959, %v6210
    %v6274 = vadd.f32 %v5960, %v6213
    %v6275 = vadd.f32 %v5961, %v6215
    %v6276 = vadd.f32 %v5962, %v6218
    %v6277 = vadd.f32 %v5963, %v6220
    %v6278 = vadd.f32 %v5964, %v6223
    %v6279 = vadd.f32 %v5965, %v6225
    %v6280 = vadd.f32 %v5966, %v6228
    %v6281 = vadd.f32 %v5967, %v6230
    %v6282 = vadd.f32 %v5968, %v6233
    %v6283 = vadd.f32 %v5969, %v6235
    %v6284 = vadd.f32 %v5970, %v6238
    %v6285 = vadd.f32 %v5971, %v6240
    %v6286 = vadd.f32 %v5972, %v6243
    %v6287 = vadd.f32 %v5973, %v6245
    %v6288 = vadd.f32 %v5974, %v6248
    %v6289 = vadd.f32 %v5975, %v6250
    %v6290 = vadd.f32 %v5976, %v6253
    %v6291 = vadd.f32 %v5977, %v6255
    %v6292 = vadd.f32 %v5978, %v6258
    %v6293 = vadd.f32 %v5979, %v6260
    %v6294 = vld [vmem:[%s78 + $0x8] sm:$0xf]
    %v6295 = vld [vmem:[%s78 + $0xc] sm:$0xf]
    %v6296 = vld [vmem:[%s78 + $0x10] sm:$0xf]
    %v6297 = vld [vmem:[%s78 + $0x14] sm:$0xf]
    %v6298 = vld [vmem:[%s78 + $0x18] sm:$0xf]
    %v6299 = vld [vmem:[%s78 + $0x1c] sm:$0xf]
    %v6300 = vld [vmem:[%s78 + $0x20] sm:$0xf]
    %v6301 = vld [vmem:[%s78 + $0x24] sm:$0xf]
    %v6302 = vld [vmem:[%s78 + $0x28] sm:$0xf]
    %v6303 = vld [vmem:[%s78 + $0x2c] sm:$0xf]
    %v6304 = vld [vmem:[%s78 + $0x30] sm:$0xf]
    %v6305 = vld [vmem:[%s78 + $0x34] sm:$0xf]
    %v6306 = vld [vmem:[%s78 + $0x38] sm:$0xf]
    %v6307 = vld [vmem:[%s78 + $0x3c] sm:$0xf]
    %v6308 = vld [vmem:[%s78 + $0x40] sm:$0xf]
    %v6309 = vld [vmem:[%s78 + $0x44] sm:$0xf]
    %v6310 = vld [vmem:[%s78 + $0x48] sm:$0xf]
    %v6311 = vld [vmem:[%s78 + $0x4c] sm:$0xf]
    %v6312 = vld [vmem:[%s78 + $0x50] sm:$0xf]
    %v6313 = vld [vmem:[%s78 + $0x54] sm:$0xf]
    %v6314 = vld [vmem:[%s78 + $0x58] sm:$0xf]
    %v6315 = vld [vmem:[%s78 + $0x5c] sm:$0xf]
    %v6316 = vld [vmem:[%s78 + $0x60] sm:$0xf]
    %v6317 = vld [vmem:[%s78 + $0x64] sm:$0xf]
    %v6318 = vld [vmem:[%s78 + $0x68] sm:$0xf]
    %v6319 = vld [vmem:[%s78 + $0x6c] sm:$0xf]
    %v6320 = vld [vmem:[%s78 + $0x70] sm:$0xf]
    %v6321 = vld [vmem:[%s78 + $0x74] sm:$0xf]
    %v6322 = vld [vmem:[%s78 + $0x78] sm:$0xf]
    %v6323 = vld [vmem:[%s78 + $0x7c] sm:$0xf]
    %v6324 = vld [vmem:[%s78 + $0x80] sm:$0xf]
    %v6325 = vld [vmem:[%s78 + $0x84] sm:$0xf]
    %s6326 = scalar_lea.vmem [#allocation8], 320
    %v6327 = vld [vmem:[%s6326] sm:$0xf]
    %v6328 = vld [vmem:[%s6326 + $0x4] sm:$0xf]
    %v6329 = vld [vmem:[%s6326 + $0x8] sm:$0xf]
    %v6330 = vld [vmem:[%s6326 + $0xc] sm:$0xf]
    %v6331 = vld [vmem:[%s6326 + $0x10] sm:$0xf]
    %v6332 = vld [vmem:[%s6326 + $0x14] sm:$0xf]
    %v6333 = vld [vmem:[%s6326 + $0x18] sm:$0xf]
    %v6334 = vld [vmem:[%s6326 + $0x1c] sm:$0xf]
    %v6335 = vld [vmem:[%s6326 + $0x20] sm:$0xf]
    %v6336 = vld [vmem:[%s6326 + $0x24] sm:$0xf]
    %v6337 = vld [vmem:[%s6326 + $0x28] sm:$0xf]
    %v6338 = vld [vmem:[%s6326 + $0x2c] sm:$0xf]
    %v6339 = vld [vmem:[%s6326 + $0x30] sm:$0xf]
    %v6340 = vld [vmem:[%s6326 + $0x34] sm:$0xf]
    %v6341 = vld [vmem:[%s6326 + $0x38] sm:$0xf]
    %v6342 = vld [vmem:[%s6326 + $0x3c] sm:$0xf]
    %v6375 = vunpack.c.l.b16 %v6294
    %v6376 = vunpack.c.l.b16 %v6295
    %v6377 = vunpack.c.l.b16 %v6296
    %v6378 = vunpack.c.l.b16 %v6297
    %v6379 = vunpack.c.l.b16 %v6298
    %v6380 = vunpack.c.l.b16 %v6299
    %v6381 = vunpack.c.l.b16 %v6300
    %v6382 = vunpack.c.l.b16 %v6301
    %v6383 = vunpack.c.l.b16 %v6302
    %v6384 = vunpack.c.l.b16 %v6303
    %v6385 = vunpack.c.l.b16 %v6304
    %v6386 = vunpack.c.l.b16 %v6305
    %v6387 = vunpack.c.l.b16 %v6306
    %v6388 = vunpack.c.l.b16 %v6307
    %v6389 = vunpack.c.l.b16 %v6308
    %v6390 = vunpack.c.l.b16 %v6309
    %v6391 = vunpack.c.l.b16 %v6310
    %v6392 = vunpack.c.l.b16 %v6311
    %v6393 = vunpack.c.l.b16 %v6312
    %v6394 = vunpack.c.l.b16 %v6313
    %v6395 = vunpack.c.l.b16 %v6314
    %v6396 = vunpack.c.l.b16 %v6315
    %v6397 = vunpack.c.l.b16 %v6316
    %v6398 = vunpack.c.l.b16 %v6317
    %v6399 = vunpack.c.l.b16 %v6318
    %v6400 = vunpack.c.l.b16 %v6319
    %v6401 = vunpack.c.l.b16 %v6320
    %v6402 = vunpack.c.l.b16 %v6321
    %v6403 = vunpack.c.l.b16 %v6322
    %v6404 = vunpack.c.l.b16 %v6323
    %v6405 = vunpack.c.l.b16 %v6324
    %v6406 = vunpack.c.l.b16 %v6325
    %v6407 = vpack.c.b16 %v6376, %v6375
    %v6408 = vpack.c.b16 %v6378, %v6377
    %v6409 = vpack.c.b16 %v6380, %v6379
    %v6410 = vpack.c.b16 %v6382, %v6381
    %v6411 = vpack.c.b16 %v6384, %v6383
    %v6412 = vpack.c.b16 %v6386, %v6385
    %v6413 = vpack.c.b16 %v6388, %v6387
    %v6414 = vpack.c.b16 %v6390, %v6389
    %v6415 = vpack.c.b16 %v6392, %v6391
    %v6416 = vpack.c.b16 %v6394, %v6393
    %v6417 = vpack.c.b16 %v6396, %v6395
    %v6418 = vpack.c.b16 %v6398, %v6397
    %v6419 = vpack.c.b16 %v6400, %v6399
    %v6420 = vpack.c.b16 %v6402, %v6401
    %v6421 = vpack.c.b16 %v6404, %v6403
    %v6422 = vpack.c.b16 %v6406, %v6405
    %v6455 = vunpack.c.l.b16 %v6327
    %v6456 = vunpack.c.l.b16 %v6328
    %v6457 = vunpack.c.l.b16 %v6329
    %v6458 = vunpack.c.l.b16 %v6330
    %v6459 = vunpack.c.l.b16 %v6331
    %v6460 = vunpack.c.l.b16 %v6332
    %v6461 = vunpack.c.l.b16 %v6333
    %v6462 = vunpack.c.l.b16 %v6334
    %v6463 = vunpack.c.l.b16 %v6335
    %v6464 = vunpack.c.l.b16 %v6336
    %v6465 = vunpack.c.l.b16 %v6337
    %v6466 = vunpack.c.l.b16 %v6338
    %v6467 = vunpack.c.l.b16 %v6339
    %v6468 = vunpack.c.l.b16 %v6340
    %v6469 = vunpack.c.l.b16 %v6341
    %v6470 = vunpack.c.l.b16 %v6342
    %v6471 = vpack.c.b16 %v6456, %v6455
    %v6472 = vpack.c.b16 %v6458, %v6457
    %v6473 = vpack.c.b16 %v6460, %v6459
    %v6474 = vpack.c.b16 %v6462, %v6461
    %v6475 = vpack.c.b16 %v6464, %v6463
    %v6476 = vpack.c.b16 %v6466, %v6465
    %v6477 = vpack.c.b16 %v6468, %v6467
    %v6478 = vpack.c.b16 %v6470, %v6469
    %6487 = vmatpush.bf16.msra.mxu0 %v6478
    %6488 = vmatpush.bf16.msra.mxu0 %v6477
    %6489 = vmatpush.bf16.msra.mxu0 %v6476
    %6490 = vmatpush.bf16.msra.mxu0 %v6475
    %6491 = vmatpush.bf16.msra.mxu0 %v6474
    %6492 = vmatpush.bf16.msra.mxu0 %v6473
    %6493 = vmatpush.bf16.msra.mxu0 %v6472
    %6494 = vmatpush.bf16.msra.mxu0 %v6471
    %6495 = vmatmul.bf16.gmra.mxu0 %v6407
    %v6496 = vpop.f32.mrf.mxu0
    %v6497 = vadd.f32 0.0, %v6496
    %v6498 = vpop.f32.mrf.mxu0
    %v6499 = vadd.f32 0.0, %v6498
    %6500 = vmatmul.bf16.gmra.mxu0 %v6408
    %v6501 = vpop.f32.mrf.mxu0
    %v6502 = vadd.f32 0.0, %v6501
    %v6503 = vpop.f32.mrf.mxu0
    %v6504 = vadd.f32 0.0, %v6503
    %6505 = vmatmul.bf16.gmra.mxu0 %v6409
    %v6506 = vpop.f32.mrf.mxu0
    %v6507 = vadd.f32 0.0, %v6506
    %v6508 = vpop.f32.mrf.mxu0
    %v6509 = vadd.f32 0.0, %v6508
    %6510 = vmatmul.bf16.gmra.mxu0 %v6410
    %v6511 = vpop.f32.mrf.mxu0
    %v6512 = vadd.f32 0.0, %v6511
    %v6513 = vpop.f32.mrf.mxu0
    %v6514 = vadd.f32 0.0, %v6513
    %6515 = vmatmul.bf16.gmra.mxu0 %v6411
    %v6516 = vpop.f32.mrf.mxu0
    %v6517 = vadd.f32 0.0, %v6516
    %v6518 = vpop.f32.mrf.mxu0
    %v6519 = vadd.f32 0.0, %v6518
    %6520 = vmatmul.bf16.gmra.mxu0 %v6412
    %v6521 = vpop.f32.mrf.mxu0
    %v6522 = vadd.f32 0.0, %v6521
    %v6523 = vpop.f32.mrf.mxu0
    %v6524 = vadd.f32 0.0, %v6523
    %6525 = vmatmul.bf16.gmra.mxu0 %v6413
    %v6526 = vpop.f32.mrf.mxu0
    %v6527 = vadd.f32 0.0, %v6526
    %v6528 = vpop.f32.mrf.mxu0
    %v6529 = vadd.f32 0.0, %v6528
    %6530 = vmatmul.bf16.gmra.mxu0 %v6414
    %v6531 = vpop.f32.mrf.mxu0
    %v6532 = vadd.f32 0.0, %v6531
    %v6533 = vpop.f32.mrf.mxu0
    %v6534 = vadd.f32 0.0, %v6533
    %6535 = vmatmul.bf16.gmra.mxu0 %v6415
    %v6536 = vpop.f32.mrf.mxu0
    %v6537 = vadd.f32 0.0, %v6536
    %v6538 = vpop.f32.mrf.mxu0
    %v6539 = vadd.f32 0.0, %v6538
    %6540 = vmatmul.bf16.gmra.mxu0 %v6416
    %v6541 = vpop.f32.mrf.mxu0
    %v6542 = vadd.f32 0.0, %v6541
    %v6543 = vpop.f32.mrf.mxu0
    %v6544 = vadd.f32 0.0, %v6543
    %6545 = vmatmul.bf16.gmra.mxu0 %v6417
    %v6546 = vpop.f32.mrf.mxu0
    %v6547 = vadd.f32 0.0, %v6546
    %v6548 = vpop.f32.mrf.mxu0
    %v6549 = vadd.f32 0.0, %v6548
    %6550 = vmatmul.bf16.gmra.mxu0 %v6418
    %v6551 = vpop.f32.mrf.mxu0
    %v6552 = vadd.f32 0.0, %v6551
    %v6553 = vpop.f32.mrf.mxu0
    %v6554 = vadd.f32 0.0, %v6553
    %6555 = vmatmul.bf16.gmra.mxu0 %v6419
    %v6556 = vpop.f32.mrf.mxu0
    %v6557 = vadd.f32 0.0, %v6556
    %v6558 = vpop.f32.mrf.mxu0
    %v6559 = vadd.f32 0.0, %v6558
    %6560 = vmatmul.bf16.gmra.mxu0 %v6420
    %v6561 = vpop.f32.mrf.mxu0
    %v6562 = vadd.f32 0.0, %v6561
    %v6563 = vpop.f32.mrf.mxu0
    %v6564 = vadd.f32 0.0, %v6563
    %6565 = vmatmul.bf16.gmra.mxu0 %v6421
    %v6566 = vpop.f32.mrf.mxu0
    %v6567 = vadd.f32 0.0, %v6566
    %v6568 = vpop.f32.mrf.mxu0
    %v6569 = vadd.f32 0.0, %v6568
    %6570 = vmatmul.bf16.gmra.mxu0 %v6422
    %v6571 = vpop.f32.mrf.mxu0
    %v6572 = vadd.f32 0.0, %v6571
    %v6573 = vpop.f32.mrf.mxu0
    %v6574 = vadd.f32 0.0, %v6573
    %6575 = vdwg.mxu0
    %v6576 = vadd.f32 %v6262, %v6497
    %v6577 = vadd.f32 %v6263, %v6499
    %v6578 = vadd.f32 %v6264, %v6502
    %v6579 = vadd.f32 %v6265, %v6504
    %v6580 = vadd.f32 %v6266, %v6507
    %v6581 = vadd.f32 %v6267, %v6509
    %v6582 = vadd.f32 %v6268, %v6512
    %v6583 = vadd.f32 %v6269, %v6514
    %v6584 = vadd.f32 %v6270, %v6517
    %v6585 = vadd.f32 %v6271, %v6519
    %v6586 = vadd.f32 %v6272, %v6522
    %v6587 = vadd.f32 %v6273, %v6524
    %v6588 = vadd.f32 %v6274, %v6527
    %v6589 = vadd.f32 %v6275, %v6529
    %v6590 = vadd.f32 %v6276, %v6532
    %v6591 = vadd.f32 %v6277, %v6534
    %v6592 = vadd.f32 %v6278, %v6537
    %v6593 = vadd.f32 %v6279, %v6539
    %v6594 = vadd.f32 %v6280, %v6542
    %v6595 = vadd.f32 %v6281, %v6544
    %v6596 = vadd.f32 %v6282, %v6547
    %v6597 = vadd.f32 %v6283, %v6549
    %v6598 = vadd.f32 %v6284, %v6552
    %v6599 = vadd.f32 %v6285, %v6554
    %v6600 = vadd.f32 %v6286, %v6557
    %v6601 = vadd.f32 %v6287, %v6559
    %v6602 = vadd.f32 %v6288, %v6562
    %v6603 = vadd.f32 %v6289, %v6564
    %v6604 = vadd.f32 %v6290, %v6567
    %v6605 = vadd.f32 %v6291, %v6569
    %v6606 = vadd.f32 %v6292, %v6572
    %v6607 = vadd.f32 %v6293, %v6574
    %v6608 = vld [vmem:[#allocation2 + $0x10] sm:$0xf]
    %v6609 = vld [vmem:[#allocation2 + $0x14] sm:$0xf]
    %v6610 = vld [vmem:[#allocation2 + $0x18] sm:$0xf]
    %v6611 = vld [vmem:[#allocation2 + $0x1c] sm:$0xf]
    %v6612 = vld [vmem:[#allocation2 + $0x20] sm:$0xf]
    %v6613 = vld [vmem:[#allocation2 + $0x24] sm:$0xf]
    %v6614 = vld [vmem:[#allocation2 + $0x28] sm:$0xf]
    %v6615 = vld [vmem:[#allocation2 + $0x2c] sm:$0xf]
    %v6616 = vld [vmem:[#allocation2 + $0x30] sm:$0xf]
    %v6617 = vld [vmem:[#allocation2 + $0x34] sm:$0xf]
    %v6618 = vld [vmem:[#allocation2 + $0x38] sm:$0xf]
    %v6619 = vld [vmem:[#allocation2 + $0x3c] sm:$0xf]
    %v6620 = vld [vmem:[#allocation2 + $0x40] sm:$0xf]
    %v6621 = vld [vmem:[#allocation2 + $0x44] sm:$0xf]
    %v6622 = vld [vmem:[#allocation2 + $0x48] sm:$0xf]
    %v6623 = vld [vmem:[#allocation2 + $0x4c] sm:$0xf]
    %v6624 = vld [vmem:[#allocation2 + $0x50] sm:$0xf]
    %v6625 = vld [vmem:[#allocation2 + $0x54] sm:$0xf]
    %v6626 = vld [vmem:[#allocation2 + $0x58] sm:$0xf]
    %v6627 = vld [vmem:[#allocation2 + $0x5c] sm:$0xf]
    %v6628 = vld [vmem:[#allocation2 + $0x60] sm:$0xf]
    %v6629 = vld [vmem:[#allocation2 + $0x64] sm:$0xf]
    %v6630 = vld [vmem:[#allocation2 + $0x68] sm:$0xf]
    %v6631 = vld [vmem:[#allocation2 + $0x6c] sm:$0xf]
    %v6632 = vld [vmem:[#allocation2 + $0x70] sm:$0xf]
    %v6633 = vld [vmem:[#allocation2 + $0x74] sm:$0xf]
    %v6634 = vld [vmem:[#allocation2 + $0x78] sm:$0xf]
    %v6635 = vld [vmem:[#allocation2 + $0x7c] sm:$0xf]
    %v6636 = vld [vmem:[#allocation2 + $0x80] sm:$0xf]
    %v6637 = vld [vmem:[#allocation2 + $0x84] sm:$0xf]
    %v6638 = vld [vmem:[#allocation2 + $0x88] sm:$0xf]
    %v6639 = vld [vmem:[#allocation2 + $0x8c] sm:$0xf]
    %s6640 = scalar_lea.vmem [#allocation8], 384
    %v6641 = vld [vmem:[%s6640] sm:$0xf]
    %v6642 = vld [vmem:[%s6640 + $0x4] sm:$0xf]
    %v6643 = vld [vmem:[%s6640 + $0x8] sm:$0xf]
    %v6644 = vld [vmem:[%s6640 + $0xc] sm:$0xf]
    %v6645 = vld [vmem:[%s6640 + $0x10] sm:$0xf]
    %v6646 = vld [vmem:[%s6640 + $0x14] sm:$0xf]
    %v6647 = vld [vmem:[%s6640 + $0x18] sm:$0xf]
    %v6648 = vld [vmem:[%s6640 + $0x1c] sm:$0xf]
    %v6649 = vld [vmem:[%s6640 + $0x20] sm:$0xf]
    %v6650 = vld [vmem:[%s6640 + $0x24] sm:$0xf]
    %v6651 = vld [vmem:[%s6640 + $0x28] sm:$0xf]
    %v6652 = vld [vmem:[%s6640 + $0x2c] sm:$0xf]
    %v6653 = vld [vmem:[%s6640 + $0x30] sm:$0xf]
    %v6654 = vld [vmem:[%s6640 + $0x34] sm:$0xf]
    %v6655 = vld [vmem:[%s6640 + $0x38] sm:$0xf]
    %v6656 = vld [vmem:[%s6640 + $0x3c] sm:$0xf]
    %v6689 = vunpack.c.l.b16 %v6608
    %v6690 = vunpack.c.l.b16 %v6609
    %v6691 = vunpack.c.l.b16 %v6610
    %v6692 = vunpack.c.l.b16 %v6611
    %v6693 = vunpack.c.l.b16 %v6612
    %v6694 = vunpack.c.l.b16 %v6613
    %v6695 = vunpack.c.l.b16 %v6614
    %v6696 = vunpack.c.l.b16 %v6615
    %v6697 = vunpack.c.l.b16 %v6616
    %v6698 = vunpack.c.l.b16 %v6617
    %v6699 = vunpack.c.l.b16 %v6618
    %v6700 = vunpack.c.l.b16 %v6619
    %v6701 = vunpack.c.l.b16 %v6620
    %v6702 = vunpack.c.l.b16 %v6621
    %v6703 = vunpack.c.l.b16 %v6622
    %v6704 = vunpack.c.l.b16 %v6623
    %v6705 = vunpack.c.l.b16 %v6624
    %v6706 = vunpack.c.l.b16 %v6625
    %v6707 = vunpack.c.l.b16 %v6626
    %v6708 = vunpack.c.l.b16 %v6627
    %v6709 = vunpack.c.l.b16 %v6628
    %v6710 = vunpack.c.l.b16 %v6629
    %v6711 = vunpack.c.l.b16 %v6630
    %v6712 = vunpack.c.l.b16 %v6631
    %v6713 = vunpack.c.l.b16 %v6632
    %v6714 = vunpack.c.l.b16 %v6633
    %v6715 = vunpack.c.l.b16 %v6634
    %v6716 = vunpack.c.l.b16 %v6635
    %v6717 = vunpack.c.l.b16 %v6636
    %v6718 = vunpack.c.l.b16 %v6637
    %v6719 = vunpack.c.l.b16 %v6638
    %v6720 = vunpack.c.l.b16 %v6639
    %v6721 = vpack.c.b16 %v6690, %v6689
    %v6722 = vpack.c.b16 %v6692, %v6691
    %v6723 = vpack.c.b16 %v6694, %v6693
    %v6724 = vpack.c.b16 %v6696, %v6695
    %v6725 = vpack.c.b16 %v6698, %v6697
    %v6726 = vpack.c.b16 %v6700, %v6699
    %v6727 = vpack.c.b16 %v6702, %v6701
    %v6728 = vpack.c.b16 %v6704, %v6703
    %v6729 = vpack.c.b16 %v6706, %v6705
    %v6730 = vpack.c.b16 %v6708, %v6707
    %v6731 = vpack.c.b16 %v6710, %v6709
    %v6732 = vpack.c.b16 %v6712, %v6711
    %v6733 = vpack.c.b16 %v6714, %v6713
    %v6734 = vpack.c.b16 %v6716, %v6715
    %v6735 = vpack.c.b16 %v6718, %v6717
    %v6736 = vpack.c.b16 %v6720, %v6719
    %v6769 = vunpack.c.l.b16 %v6641
    %v6770 = vunpack.c.l.b16 %v6642
    %v6771 = vunpack.c.l.b16 %v6643
    %v6772 = vunpack.c.l.b16 %v6644
    %v6773 = vunpack.c.l.b16 %v6645
    %v6774 = vunpack.c.l.b16 %v6646
    %v6775 = vunpack.c.l.b16 %v6647
    %v6776 = vunpack.c.l.b16 %v6648
    %v6777 = vunpack.c.l.b16 %v6649
    %v6778 = vunpack.c.l.b16 %v6650
    %v6779 = vunpack.c.l.b16 %v6651
    %v6780 = vunpack.c.l.b16 %v6652
    %v6781 = vunpack.c.l.b16 %v6653
    %v6782 = vunpack.c.l.b16 %v6654
    %v6783 = vunpack.c.l.b16 %v6655
    %v6784 = vunpack.c.l.b16 %v6656
    %v6785 = vpack.c.b16 %v6770, %v6769
    %v6786 = vpack.c.b16 %v6772, %v6771
    %v6787 = vpack.c.b16 %v6774, %v6773
    %v6788 = vpack.c.b16 %v6776, %v6775
    %v6789 = vpack.c.b16 %v6778, %v6777
    %v6790 = vpack.c.b16 %v6780, %v6779
    %v6791 = vpack.c.b16 %v6782, %v6781
    %v6792 = vpack.c.b16 %v6784, %v6783
    %6801 = vmatpush.bf16.msra.mxu0 %v6792
    %6802 = vmatpush.bf16.msra.mxu0 %v6791
    %6803 = vmatpush.bf16.msra.mxu0 %v6790
    %6804 = vmatpush.bf16.msra.mxu0 %v6789
    %6805 = vmatpush.bf16.msra.mxu0 %v6788
    %6806 = vmatpush.bf16.msra.mxu0 %v6787
    %6807 = vmatpush.bf16.msra.mxu0 %v6786
    %6808 = vmatpush.bf16.msra.mxu0 %v6785
    %6809 = vmatmul.bf16.gmra.mxu0 %v6721
    %v6810 = vpop.f32.mrf.mxu0
    %v6811 = vadd.f32 0.0, %v6810
    %v6812 = vpop.f32.mrf.mxu0
    %v6813 = vadd.f32 0.0, %v6812
    %6814 = vmatmul.bf16.gmra.mxu0 %v6722
    %v6815 = vpop.f32.mrf.mxu0
    %v6816 = vadd.f32 0.0, %v6815
    %v6817 = vpop.f32.mrf.mxu0
    %v6818 = vadd.f32 0.0, %v6817
    %6819 = vmatmul.bf16.gmra.mxu0 %v6723
    %v6820 = vpop.f32.mrf.mxu0
    %v6821 = vadd.f32 0.0, %v6820
    %v6822 = vpop.f32.mrf.mxu0
    %v6823 = vadd.f32 0.0, %v6822
    %6824 = vmatmul.bf16.gmra.mxu0 %v6724
    %v6825 = vpop.f32.mrf.mxu0
    %v6826 = vadd.f32 0.0, %v6825
    %v6827 = vpop.f32.mrf.mxu0
    %v6828 = vadd.f32 0.0, %v6827
    %6829 = vmatmul.bf16.gmra.mxu0 %v6725
    %v6830 = vpop.f32.mrf.mxu0
    %v6831 = vadd.f32 0.0, %v6830
    %v6832 = vpop.f32.mrf.mxu0
    %v6833 = vadd.f32 0.0, %v6832
    %6834 = vmatmul.bf16.gmra.mxu0 %v6726
    %v6835 = vpop.f32.mrf.mxu0
    %v6836 = vadd.f32 0.0, %v6835
    %v6837 = vpop.f32.mrf.mxu0
    %v6838 = vadd.f32 0.0, %v6837
    %6839 = vmatmul.bf16.gmra.mxu0 %v6727
    %v6840 = vpop.f32.mrf.mxu0
    %v6841 = vadd.f32 0.0, %v6840
    %v6842 = vpop.f32.mrf.mxu0
    %v6843 = vadd.f32 0.0, %v6842
    %6844 = vmatmul.bf16.gmra.mxu0 %v6728
    %v6845 = vpop.f32.mrf.mxu0
    %v6846 = vadd.f32 0.0, %v6845
    %v6847 = vpop.f32.mrf.mxu0
    %v6848 = vadd.f32 0.0, %v6847
    %6849 = vmatmul.bf16.gmra.mxu0 %v6729
    %v6850 = vpop.f32.mrf.mxu0
    %v6851 = vadd.f32 0.0, %v6850
    %v6852 = vpop.f32.mrf.mxu0
    %v6853 = vadd.f32 0.0, %v6852
    %6854 = vmatmul.bf16.gmra.mxu0 %v6730
    %v6855 = vpop.f32.mrf.mxu0
    %v6856 = vadd.f32 0.0, %v6855
    %v6857 = vpop.f32.mrf.mxu0
    %v6858 = vadd.f32 0.0, %v6857
    %6859 = vmatmul.bf16.gmra.mxu0 %v6731
    %v6860 = vpop.f32.mrf.mxu0
    %v6861 = vadd.f32 0.0, %v6860
    %v6862 = vpop.f32.mrf.mxu0
    %v6863 = vadd.f32 0.0, %v6862
    %6864 = vmatmul.bf16.gmra.mxu0 %v6732
    %v6865 = vpop.f32.mrf.mxu0
    %v6866 = vadd.f32 0.0, %v6865
    %v6867 = vpop.f32.mrf.mxu0
    %v6868 = vadd.f32 0.0, %v6867
    %6869 = vmatmul.bf16.gmra.mxu0 %v6733
    %v6870 = vpop.f32.mrf.mxu0
    %v6871 = vadd.f32 0.0, %v6870
    %v6872 = vpop.f32.mrf.mxu0
    %v6873 = vadd.f32 0.0, %v6872
    %6874 = vmatmul.bf16.gmra.mxu0 %v6734
    %v6875 = vpop.f32.mrf.mxu0
    %v6876 = vadd.f32 0.0, %v6875
    %v6877 = vpop.f32.mrf.mxu0
    %v6878 = vadd.f32 0.0, %v6877
    %6879 = vmatmul.bf16.gmra.mxu0 %v6735
    %v6880 = vpop.f32.mrf.mxu0
    %v6881 = vadd.f32 0.0, %v6880
    %v6882 = vpop.f32.mrf.mxu0
    %v6883 = vadd.f32 0.0, %v6882
    %6884 = vmatmul.bf16.gmra.mxu0 %v6736
    %v6885 = vpop.f32.mrf.mxu0
    %v6886 = vadd.f32 0.0, %v6885
    %v6887 = vpop.f32.mrf.mxu0
    %v6888 = vadd.f32 0.0, %v6887
    %6889 = vdwg.mxu0
    %v6890 = vadd.f32 %v6576, %v6811
    %v6891 = vadd.f32 %v6577, %v6813
    %v6892 = vadd.f32 %v6578, %v6816
    %v6893 = vadd.f32 %v6579, %v6818
    %v6894 = vadd.f32 %v6580, %v6821
    %v6895 = vadd.f32 %v6581, %v6823
    %v6896 = vadd.f32 %v6582, %v6826
    %v6897 = vadd.f32 %v6583, %v6828
    %v6898 = vadd.f32 %v6584, %v6831
    %v6899 = vadd.f32 %v6585, %v6833
    %v6900 = vadd.f32 %v6586, %v6836
    %v6901 = vadd.f32 %v6587, %v6838
    %v6902 = vadd.f32 %v6588, %v6841
    %v6903 = vadd.f32 %v6589, %v6843
    %v6904 = vadd.f32 %v6590, %v6846
    %v6905 = vadd.f32 %v6591, %v6848
    %v6906 = vadd.f32 %v6592, %v6851
    %v6907 = vadd.f32 %v6593, %v6853
    %v6908 = vadd.f32 %v6594, %v6856
    %v6909 = vadd.f32 %v6595, %v6858
    %v6910 = vadd.f32 %v6596, %v6861
    %v6911 = vadd.f32 %v6597, %v6863
    %v6912 = vadd.f32 %v6598, %v6866
    %v6913 = vadd.f32 %v6599, %v6868
    %v6914 = vadd.f32 %v6600, %v6871
    %v6915 = vadd.f32 %v6601, %v6873
    %v6916 = vadd.f32 %v6602, %v6876
    %v6917 = vadd.f32 %v6603, %v6878
    %v6918 = vadd.f32 %v6604, %v6881
    %v6919 = vadd.f32 %v6605, %v6883
    %v6920 = vadd.f32 %v6606, %v6886
    %v6921 = vadd.f32 %v6607, %v6888
    %v6922 = vld [vmem:[%s73 + $0x10] sm:$0xf]
    %v6923 = vld [vmem:[%s73 + $0x14] sm:$0xf]
    %v6924 = vld [vmem:[%s73 + $0x18] sm:$0xf]
    %v6925 = vld [vmem:[%s73 + $0x1c] sm:$0xf]
    %v6926 = vld [vmem:[%s73 + $0x20] sm:$0xf]
    %v6927 = vld [vmem:[%s73 + $0x24] sm:$0xf]
    %v6928 = vld [vmem:[%s73 + $0x28] sm:$0xf]
    %v6929 = vld [vmem:[%s73 + $0x2c] sm:$0xf]
    %v6930 = vld [vmem:[%s73 + $0x30] sm:$0xf]
    %v6931 = vld [vmem:[%s73 + $0x34] sm:$0xf]
    %v6932 = vld [vmem:[%s73 + $0x38] sm:$0xf]
    %v6933 = vld [vmem:[%s73 + $0x3c] sm:$0xf]
    %v6934 = vld [vmem:[%s73 + $0x40] sm:$0xf]
    %v6935 = vld [vmem:[%s73 + $0x44] sm:$0xf]
    %v6936 = vld [vmem:[%s73 + $0x48] sm:$0xf]
    %v6937 = vld [vmem:[%s73 + $0x4c] sm:$0xf]
    %v6938 = vld [vmem:[%s73 + $0x50] sm:$0xf]
    %v6939 = vld [vmem:[%s73 + $0x54] sm:$0xf]
    %v6940 = vld [vmem:[%s73 + $0x58] sm:$0xf]
    %v6941 = vld [vmem:[%s73 + $0x5c] sm:$0xf]
    %v6942 = vld [vmem:[%s73 + $0x60] sm:$0xf]
    %v6943 = vld [vmem:[%s73 + $0x64] sm:$0xf]
    %v6944 = vld [vmem:[%s73 + $0x68] sm:$0xf]
    %v6945 = vld [vmem:[%s73 + $0x6c] sm:$0xf]
    %v6946 = vld [vmem:[%s73 + $0x70] sm:$0xf]
    %v6947 = vld [vmem:[%s73 + $0x74] sm:$0xf]
    %v6948 = vld [vmem:[%s73 + $0x78] sm:$0xf]
    %v6949 = vld [vmem:[%s73 + $0x7c] sm:$0xf]
    %v6950 = vld [vmem:[%s73 + $0x80] sm:$0xf]
    %v6951 = vld [vmem:[%s73 + $0x84] sm:$0xf]
    %v6952 = vld [vmem:[%s73 + $0x88] sm:$0xf]
    %v6953 = vld [vmem:[%s73 + $0x8c] sm:$0xf]
    %s6954 = scalar_lea.vmem [#allocation8], 448
    %v6955 = vld [vmem:[%s6954] sm:$0xf]
    %v6956 = vld [vmem:[%s6954 + $0x4] sm:$0xf]
    %v6957 = vld [vmem:[%s6954 + $0x8] sm:$0xf]
    %v6958 = vld [vmem:[%s6954 + $0xc] sm:$0xf]
    %v6959 = vld [vmem:[%s6954 + $0x10] sm:$0xf]
    %v6960 = vld [vmem:[%s6954 + $0x14] sm:$0xf]
    %v6961 = vld [vmem:[%s6954 + $0x18] sm:$0xf]
    %v6962 = vld [vmem:[%s6954 + $0x1c] sm:$0xf]
    %v6963 = vld [vmem:[%s6954 + $0x20] sm:$0xf]
    %v6964 = vld [vmem:[%s6954 + $0x24] sm:$0xf]
    %v6965 = vld [vmem:[%s6954 + $0x28] sm:$0xf]
    %v6966 = vld [vmem:[%s6954 + $0x2c] sm:$0xf]
    %v6967 = vld [vmem:[%s6954 + $0x30] sm:$0xf]
    %v6968 = vld [vmem:[%s6954 + $0x34] sm:$0xf]
    %v6969 = vld [vmem:[%s6954 + $0x38] sm:$0xf]
    %v6970 = vld [vmem:[%s6954 + $0x3c] sm:$0xf]
    %v7003 = vunpack.c.l.b16 %v6922
    %v7004 = vunpack.c.l.b16 %v6923
    %v7005 = vunpack.c.l.b16 %v6924
    %v7006 = vunpack.c.l.b16 %v6925
    %v7007 = vunpack.c.l.b16 %v6926
    %v7008 = vunpack.c.l.b16 %v6927
    %v7009 = vunpack.c.l.b16 %v6928
    %v7010 = vunpack.c.l.b16 %v6929
    %v7011 = vunpack.c.l.b16 %v6930
    %v7012 = vunpack.c.l.b16 %v6931
    %v7013 = vunpack.c.l.b16 %v6932
    %v7014 = vunpack.c.l.b16 %v6933
    %v7015 = vunpack.c.l.b16 %v6934
    %v7016 = vunpack.c.l.b16 %v6935
    %v7017 = vunpack.c.l.b16 %v6936
    %v7018 = vunpack.c.l.b16 %v6937
    %v7019 = vunpack.c.l.b16 %v6938
    %v7020 = vunpack.c.l.b16 %v6939
    %v7021 = vunpack.c.l.b16 %v6940
    %v7022 = vunpack.c.l.b16 %v6941
    %v7023 = vunpack.c.l.b16 %v6942
    %v7024 = vunpack.c.l.b16 %v6943
    %v7025 = vunpack.c.l.b16 %v6944
    %v7026 = vunpack.c.l.b16 %v6945
    %v7027 = vunpack.c.l.b16 %v6946
    %v7028 = vunpack.c.l.b16 %v6947
    %v7029 = vunpack.c.l.b16 %v6948
    %v7030 = vunpack.c.l.b16 %v6949
    %v7031 = vunpack.c.l.b16 %v6950
    %v7032 = vunpack.c.l.b16 %v6951
    %v7033 = vunpack.c.l.b16 %v6952
    %v7034 = vunpack.c.l.b16 %v6953
    %v7035 = vpack.c.b16 %v7004, %v7003
    %v7036 = vpack.c.b16 %v7006, %v7005
    %v7037 = vpack.c.b16 %v7008, %v7007
    %v7038 = vpack.c.b16 %v7010, %v7009
    %v7039 = vpack.c.b16 %v7012, %v7011
    %v7040 = vpack.c.b16 %v7014, %v7013
    %v7041 = vpack.c.b16 %v7016, %v7015
    %v7042 = vpack.c.b16 %v7018, %v7017
    %v7043 = vpack.c.b16 %v7020, %v7019
    %v7044 = vpack.c.b16 %v7022, %v7021
    %v7045 = vpack.c.b16 %v7024, %v7023
    %v7046 = vpack.c.b16 %v7026, %v7025
    %v7047 = vpack.c.b16 %v7028, %v7027
    %v7048 = vpack.c.b16 %v7030, %v7029
    %v7049 = vpack.c.b16 %v7032, %v7031
    %v7050 = vpack.c.b16 %v7034, %v7033
    %v7083 = vunpack.c.l.b16 %v6955
    %v7084 = vunpack.c.l.b16 %v6956
    %v7085 = vunpack.c.l.b16 %v6957
    %v7086 = vunpack.c.l.b16 %v6958
    %v7087 = vunpack.c.l.b16 %v6959
    %v7088 = vunpack.c.l.b16 %v6960
    %v7089 = vunpack.c.l.b16 %v6961
    %v7090 = vunpack.c.l.b16 %v6962
    %v7091 = vunpack.c.l.b16 %v6963
    %v7092 = vunpack.c.l.b16 %v6964
    %v7093 = vunpack.c.l.b16 %v6965
    %v7094 = vunpack.c.l.b16 %v6966
    %v7095 = vunpack.c.l.b16 %v6967
    %v7096 = vunpack.c.l.b16 %v6968
    %v7097 = vunpack.c.l.b16 %v6969
    %v7098 = vunpack.c.l.b16 %v6970
    %v7099 = vpack.c.b16 %v7084, %v7083
    %v7100 = vpack.c.b16 %v7086, %v7085
    %v7101 = vpack.c.b16 %v7088, %v7087
    %v7102 = vpack.c.b16 %v7090, %v7089
    %v7103 = vpack.c.b16 %v7092, %v7091
    %v7104 = vpack.c.b16 %v7094, %v7093
    %v7105 = vpack.c.b16 %v7096, %v7095
    %v7106 = vpack.c.b16 %v7098, %v7097
    %7115 = vmatpush.bf16.msra.mxu0 %v7106
    %7116 = vmatpush.bf16.msra.mxu0 %v7105
    %7117 = vmatpush.bf16.msra.mxu0 %v7104
    %7118 = vmatpush.bf16.msra.mxu0 %v7103
    %7119 = vmatpush.bf16.msra.mxu0 %v7102
    %7120 = vmatpush.bf16.msra.mxu0 %v7101
    %7121 = vmatpush.bf16.msra.mxu0 %v7100
    %7122 = vmatpush.bf16.msra.mxu0 %v7099
    %7123 = vmatmul.bf16.gmra.mxu0 %v7035
    %v7124 = vpop.f32.mrf.mxu0
    %v7125 = vadd.f32 0.0, %v7124
    %v7126 = vpop.f32.mrf.mxu0
    %v7127 = vadd.f32 0.0, %v7126
    %7128 = vmatmul.bf16.gmra.mxu0 %v7036
    %v7129 = vpop.f32.mrf.mxu0
    %v7130 = vadd.f32 0.0, %v7129
    %v7131 = vpop.f32.mrf.mxu0
    %v7132 = vadd.f32 0.0, %v7131
    %7133 = vmatmul.bf16.gmra.mxu0 %v7037
    %v7134 = vpop.f32.mrf.mxu0
    %v7135 = vadd.f32 0.0, %v7134
    %v7136 = vpop.f32.mrf.mxu0
    %v7137 = vadd.f32 0.0, %v7136
    %7138 = vmatmul.bf16.gmra.mxu0 %v7038
    %v7139 = vpop.f32.mrf.mxu0
    %v7140 = vadd.f32 0.0, %v7139
    %v7141 = vpop.f32.mrf.mxu0
    %v7142 = vadd.f32 0.0, %v7141
    %7143 = vmatmul.bf16.gmra.mxu0 %v7039
    %v7144 = vpop.f32.mrf.mxu0
    %v7145 = vadd.f32 0.0, %v7144
    %v7146 = vpop.f32.mrf.mxu0
    %v7147 = vadd.f32 0.0, %v7146
    %7148 = vmatmul.bf16.gmra.mxu0 %v7040
    %v7149 = vpop.f32.mrf.mxu0
    %v7150 = vadd.f32 0.0, %v7149
    %v7151 = vpop.f32.mrf.mxu0
    %v7152 = vadd.f32 0.0, %v7151
    %7153 = vmatmul.bf16.gmra.mxu0 %v7041
    %v7154 = vpop.f32.mrf.mxu0
    %v7155 = vadd.f32 0.0, %v7154
    %v7156 = vpop.f32.mrf.mxu0
    %v7157 = vadd.f32 0.0, %v7156
    %7158 = vmatmul.bf16.gmra.mxu0 %v7042
    %v7159 = vpop.f32.mrf.mxu0
    %v7160 = vadd.f32 0.0, %v7159
    %v7161 = vpop.f32.mrf.mxu0
    %v7162 = vadd.f32 0.0, %v7161
    %7163 = vmatmul.bf16.gmra.mxu0 %v7043
    %v7164 = vpop.f32.mrf.mxu0
    %v7165 = vadd.f32 0.0, %v7164
    %v7166 = vpop.f32.mrf.mxu0
    %v7167 = vadd.f32 0.0, %v7166
    %7168 = vmatmul.bf16.gmra.mxu0 %v7044
    %v7169 = vpop.f32.mrf.mxu0
    %v7170 = vadd.f32 0.0, %v7169
    %v7171 = vpop.f32.mrf.mxu0
    %v7172 = vadd.f32 0.0, %v7171
    %7173 = vmatmul.bf16.gmra.mxu0 %v7045
    %v7174 = vpop.f32.mrf.mxu0
    %v7175 = vadd.f32 0.0, %v7174
    %v7176 = vpop.f32.mrf.mxu0
    %v7177 = vadd.f32 0.0, %v7176
    %7178 = vmatmul.bf16.gmra.mxu0 %v7046
    %v7179 = vpop.f32.mrf.mxu0
    %v7180 = vadd.f32 0.0, %v7179
    %v7181 = vpop.f32.mrf.mxu0
    %v7182 = vadd.f32 0.0, %v7181
    %7183 = vmatmul.bf16.gmra.mxu0 %v7047
    %v7184 = vpop.f32.mrf.mxu0
    %v7185 = vadd.f32 0.0, %v7184
    %v7186 = vpop.f32.mrf.mxu0
    %v7187 = vadd.f32 0.0, %v7186
    %7188 = vmatmul.bf16.gmra.mxu0 %v7048
    %v7189 = vpop.f32.mrf.mxu0
    %v7190 = vadd.f32 0.0, %v7189
    %v7191 = vpop.f32.mrf.mxu0
    %v7192 = vadd.f32 0.0, %v7191
    %7193 = vmatmul.bf16.gmra.mxu0 %v7049
    %v7194 = vpop.f32.mrf.mxu0
    %v7195 = vadd.f32 0.0, %v7194
    %v7196 = vpop.f32.mrf.mxu0
    %v7197 = vadd.f32 0.0, %v7196
    %7198 = vmatmul.bf16.gmra.mxu0 %v7050
    %v7199 = vpop.f32.mrf.mxu0
    %v7200 = vadd.f32 0.0, %v7199
    %v7201 = vpop.f32.mrf.mxu0
    %v7202 = vadd.f32 0.0, %v7201
    %7203 = vdwg.mxu0
    %v7204 = vadd.f32 %v6890, %v7125
    %v7205 = vadd.f32 %v6891, %v7127
    %v7206 = vadd.f32 %v6892, %v7130
    %v7207 = vadd.f32 %v6893, %v7132
    %v7208 = vadd.f32 %v6894, %v7135
    %v7209 = vadd.f32 %v6895, %v7137
    %v7210 = vadd.f32 %v6896, %v7140
    %v7211 = vadd.f32 %v6897, %v7142
    %v7212 = vadd.f32 %v6898, %v7145
    %v7213 = vadd.f32 %v6899, %v7147
    %v7214 = vadd.f32 %v6900, %v7150
    %v7215 = vadd.f32 %v6901, %v7152
    %v7216 = vadd.f32 %v6902, %v7155
    %v7217 = vadd.f32 %v6903, %v7157
    %v7218 = vadd.f32 %v6904, %v7160
    %v7219 = vadd.f32 %v6905, %v7162
    %v7220 = vadd.f32 %v6906, %v7165
    %v7221 = vadd.f32 %v6907, %v7167
    %v7222 = vadd.f32 %v6908, %v7170
    %v7223 = vadd.f32 %v6909, %v7172
    %v7224 = vadd.f32 %v6910, %v7175
    %v7225 = vadd.f32 %v6911, %v7177
    %v7226 = vadd.f32 %v6912, %v7180
    %v7227 = vadd.f32 %v6913, %v7182
    %v7228 = vadd.f32 %v6914, %v7185
    %v7229 = vadd.f32 %v6915, %v7187
    %v7230 = vadd.f32 %v6916, %v7190
    %v7231 = vadd.f32 %v6917, %v7192
    %v7232 = vadd.f32 %v6918, %v7195
    %v7233 = vadd.f32 %v6919, %v7197
    %v7234 = vadd.f32 %v6920, %v7200
    %v7235 = vadd.f32 %v6921, %v7202
    %v7236 = vld [vmem:[%s78 + $0x10] sm:$0xf]
    %v7237 = vld [vmem:[%s78 + $0x14] sm:$0xf]
    %v7238 = vld [vmem:[%s78 + $0x18] sm:$0xf]
    %v7239 = vld [vmem:[%s78 + $0x1c] sm:$0xf]
    %v7240 = vld [vmem:[%s78 + $0x20] sm:$0xf]
    %v7241 = vld [vmem:[%s78 + $0x24] sm:$0xf]
    %v7242 = vld [vmem:[%s78 + $0x28] sm:$0xf]
    %v7243 = vld [vmem:[%s78 + $0x2c] sm:$0xf]
    %v7244 = vld [vmem:[%s78 + $0x30] sm:$0xf]
    %v7245 = vld [vmem:[%s78 + $0x34] sm:$0xf]
    %v7246 = vld [vmem:[%s78 + $0x38] sm:$0xf]
    %v7247 = vld [vmem:[%s78 + $0x3c] sm:$0xf]
    %v7248 = vld [vmem:[%s78 + $0x40] sm:$0xf]
    %v7249 = vld [vmem:[%s78 + $0x44] sm:$0xf]
    %v7250 = vld [vmem:[%s78 + $0x48] sm:$0xf]
    %v7251 = vld [vmem:[%s78 + $0x4c] sm:$0xf]
    %v7252 = vld [vmem:[%s78 + $0x50] sm:$0xf]
    %v7253 = vld [vmem:[%s78 + $0x54] sm:$0xf]
    %v7254 = vld [vmem:[%s78 + $0x58] sm:$0xf]
    %v7255 = vld [vmem:[%s78 + $0x5c] sm:$0xf]
    %v7256 = vld [vmem:[%s78 + $0x60] sm:$0xf]
    %v7257 = vld [vmem:[%s78 + $0x64] sm:$0xf]
    %v7258 = vld [vmem:[%s78 + $0x68] sm:$0xf]
    %v7259 = vld [vmem:[%s78 + $0x6c] sm:$0xf]
    %v7260 = vld [vmem:[%s78 + $0x70] sm:$0xf]
    %v7261 = vld [vmem:[%s78 + $0x74] sm:$0xf]
    %v7262 = vld [vmem:[%s78 + $0x78] sm:$0xf]
    %v7263 = vld [vmem:[%s78 + $0x7c] sm:$0xf]
    %v7264 = vld [vmem:[%s78 + $0x80] sm:$0xf]
    %v7265 = vld [vmem:[%s78 + $0x84] sm:$0xf]
    %v7266 = vld [vmem:[%s78 + $0x88] sm:$0xf]
    %v7267 = vld [vmem:[%s78 + $0x8c] sm:$0xf]
    %s7268 = scalar_lea.vmem [#allocation8], 512
    %v7269 = vld [vmem:[%s7268] sm:$0xf]
    %v7270 = vld [vmem:[%s7268 + $0x4] sm:$0xf]
    %v7271 = vld [vmem:[%s7268 + $0x8] sm:$0xf]
    %v7272 = vld [vmem:[%s7268 + $0xc] sm:$0xf]
    %v7273 = vld [vmem:[%s7268 + $0x10] sm:$0xf]
    %v7274 = vld [vmem:[%s7268 + $0x14] sm:$0xf]
    %v7275 = vld [vmem:[%s7268 + $0x18] sm:$0xf]
    %v7276 = vld [vmem:[%s7268 + $0x1c] sm:$0xf]
    %v7277 = vld [vmem:[%s7268 + $0x20] sm:$0xf]
    %v7278 = vld [vmem:[%s7268 + $0x24] sm:$0xf]
    %v7279 = vld [vmem:[%s7268 + $0x28] sm:$0xf]
    %v7280 = vld [vmem:[%s7268 + $0x2c] sm:$0xf]
    %v7281 = vld [vmem:[%s7268 + $0x30] sm:$0xf]
    %v7282 = vld [vmem:[%s7268 + $0x34] sm:$0xf]
    %v7283 = vld [vmem:[%s7268 + $0x38] sm:$0xf]
    %v7284 = vld [vmem:[%s7268 + $0x3c] sm:$0xf]
    %v7317 = vunpack.c.l.b16 %v7236
    %v7318 = vunpack.c.l.b16 %v7237
    %v7319 = vunpack.c.l.b16 %v7238
    %v7320 = vunpack.c.l.b16 %v7239
    %v7321 = vunpack.c.l.b16 %v7240
    %v7322 = vunpack.c.l.b16 %v7241
    %v7323 = vunpack.c.l.b16 %v7242
    %v7324 = vunpack.c.l.b16 %v7243
    %v7325 = vunpack.c.l.b16 %v7244
    %v7326 = vunpack.c.l.b16 %v7245
    %v7327 = vunpack.c.l.b16 %v7246
    %v7328 = vunpack.c.l.b16 %v7247
    %v7329 = vunpack.c.l.b16 %v7248
    %v7330 = vunpack.c.l.b16 %v7249
    %v7331 = vunpack.c.l.b16 %v7250
    %v7332 = vunpack.c.l.b16 %v7251
    %v7333 = vunpack.c.l.b16 %v7252
    %v7334 = vunpack.c.l.b16 %v7253
    %v7335 = vunpack.c.l.b16 %v7254
    %v7336 = vunpack.c.l.b16 %v7255
    %v7337 = vunpack.c.l.b16 %v7256
    %v7338 = vunpack.c.l.b16 %v7257
    %v7339 = vunpack.c.l.b16 %v7258
    %v7340 = vunpack.c.l.b16 %v7259
    %v7341 = vunpack.c.l.b16 %v7260
    %v7342 = vunpack.c.l.b16 %v7261
    %v7343 = vunpack.c.l.b16 %v7262
    %v7344 = vunpack.c.l.b16 %v7263
    %v7345 = vunpack.c.l.b16 %v7264
    %v7346 = vunpack.c.l.b16 %v7265
    %v7347 = vunpack.c.l.b16 %v7266
    %v7348 = vunpack.c.l.b16 %v7267
    %v7349 = vpack.c.b16 %v7318, %v7317
    %v7350 = vpack.c.b16 %v7320, %v7319
    %v7351 = vpack.c.b16 %v7322, %v7321
    %v7352 = vpack.c.b16 %v7324, %v7323
    %v7353 = vpack.c.b16 %v7326, %v7325
    %v7354 = vpack.c.b16 %v7328, %v7327
    %v7355 = vpack.c.b16 %v7330, %v7329
    %v7356 = vpack.c.b16 %v7332, %v7331
    %v7357 = vpack.c.b16 %v7334, %v7333
    %v7358 = vpack.c.b16 %v7336, %v7335
    %v7359 = vpack.c.b16 %v7338, %v7337
    %v7360 = vpack.c.b16 %v7340, %v7339
    %v7361 = vpack.c.b16 %v7342, %v7341
    %v7362 = vpack.c.b16 %v7344, %v7343
    %v7363 = vpack.c.b16 %v7346, %v7345
    %v7364 = vpack.c.b16 %v7348, %v7347
    %v7397 = vunpack.c.l.b16 %v7269
    %v7398 = vunpack.c.l.b16 %v7270
    %v7399 = vunpack.c.l.b16 %v7271
    %v7400 = vunpack.c.l.b16 %v7272
    %v7401 = vunpack.c.l.b16 %v7273
    %v7402 = vunpack.c.l.b16 %v7274
    %v7403 = vunpack.c.l.b16 %v7275
    %v7404 = vunpack.c.l.b16 %v7276
    %v7405 = vunpack.c.l.b16 %v7277
    %v7406 = vunpack.c.l.b16 %v7278
    %v7407 = vunpack.c.l.b16 %v7279
    %v7408 = vunpack.c.l.b16 %v7280
    %v7409 = vunpack.c.l.b16 %v7281
    %v7410 = vunpack.c.l.b16 %v7282
    %v7411 = vunpack.c.l.b16 %v7283
    %v7412 = vunpack.c.l.b16 %v7284
    %v7413 = vpack.c.b16 %v7398, %v7397
    %v7414 = vpack.c.b16 %v7400, %v7399
    %v7415 = vpack.c.b16 %v7402, %v7401
    %v7416 = vpack.c.b16 %v7404, %v7403
    %v7417 = vpack.c.b16 %v7406, %v7405
    %v7418 = vpack.c.b16 %v7408, %v7407
    %v7419 = vpack.c.b16 %v7410, %v7409
    %v7420 = vpack.c.b16 %v7412, %v7411
    %7429 = vmatpush.bf16.msra.mxu0 %v7420
    %7430 = vmatpush.bf16.msra.mxu0 %v7419
    %7431 = vmatpush.bf16.msra.mxu0 %v7418
    %7432 = vmatpush.bf16.msra.mxu0 %v7417
    %7433 = vmatpush.bf16.msra.mxu0 %v7416
    %7434 = vmatpush.bf16.msra.mxu0 %v7415
    %7435 = vmatpush.bf16.msra.mxu0 %v7414
    %7436 = vmatpush.bf16.msra.mxu0 %v7413
    %7437 = vmatmul.bf16.gmra.mxu0 %v7349
    %v7438 = vpop.f32.mrf.mxu0
    %v7439 = vadd.f32 0.0, %v7438
    %v7440 = vpop.f32.mrf.mxu0
    %v7441 = vadd.f32 0.0, %v7440
    %7442 = vmatmul.bf16.gmra.mxu0 %v7350
    %v7443 = vpop.f32.mrf.mxu0
    %v7444 = vadd.f32 0.0, %v7443
    %v7445 = vpop.f32.mrf.mxu0
    %v7446 = vadd.f32 0.0, %v7445
    %7447 = vmatmul.bf16.gmra.mxu0 %v7351
    %v7448 = vpop.f32.mrf.mxu0
    %v7449 = vadd.f32 0.0, %v7448
    %v7450 = vpop.f32.mrf.mxu0
    %v7451 = vadd.f32 0.0, %v7450
    %7452 = vmatmul.bf16.gmra.mxu0 %v7352
    %v7453 = vpop.f32.mrf.mxu0
    %v7454 = vadd.f32 0.0, %v7453
    %v7455 = vpop.f32.mrf.mxu0
    %v7456 = vadd.f32 0.0, %v7455
    %7457 = vmatmul.bf16.gmra.mxu0 %v7353
    %v7458 = vpop.f32.mrf.mxu0
    %v7459 = vadd.f32 0.0, %v7458
    %v7460 = vpop.f32.mrf.mxu0
    %v7461 = vadd.f32 0.0, %v7460
    %7462 = vmatmul.bf16.gmra.mxu0 %v7354
    %v7463 = vpop.f32.mrf.mxu0
    %v7464 = vadd.f32 0.0, %v7463
    %v7465 = vpop.f32.mrf.mxu0
    %v7466 = vadd.f32 0.0, %v7465
    %7467 = vmatmul.bf16.gmra.mxu0 %v7355
    %v7468 = vpop.f32.mrf.mxu0
    %v7469 = vadd.f32 0.0, %v7468
    %v7470 = vpop.f32.mrf.mxu0
    %v7471 = vadd.f32 0.0, %v7470
    %7472 = vmatmul.bf16.gmra.mxu0 %v7356
    %v7473 = vpop.f32.mrf.mxu0
    %v7474 = vadd.f32 0.0, %v7473
    %v7475 = vpop.f32.mrf.mxu0
    %v7476 = vadd.f32 0.0, %v7475
    %7477 = vmatmul.bf16.gmra.mxu0 %v7357
    %v7478 = vpop.f32.mrf.mxu0
    %v7479 = vadd.f32 0.0, %v7478
    %v7480 = vpop.f32.mrf.mxu0
    %v7481 = vadd.f32 0.0, %v7480
    %7482 = vmatmul.bf16.gmra.mxu0 %v7358
    %v7483 = vpop.f32.mrf.mxu0
    %v7484 = vadd.f32 0.0, %v7483
    %v7485 = vpop.f32.mrf.mxu0
    %v7486 = vadd.f32 0.0, %v7485
    %7487 = vmatmul.bf16.gmra.mxu0 %v7359
    %v7488 = vpop.f32.mrf.mxu0
    %v7489 = vadd.f32 0.0, %v7488
    %v7490 = vpop.f32.mrf.mxu0
    %v7491 = vadd.f32 0.0, %v7490
    %7492 = vmatmul.bf16.gmra.mxu0 %v7360
    %v7493 = vpop.f32.mrf.mxu0
    %v7494 = vadd.f32 0.0, %v7493
    %v7495 = vpop.f32.mrf.mxu0
    %v7496 = vadd.f32 0.0, %v7495
    %7497 = vmatmul.bf16.gmra.mxu0 %v7361
    %v7498 = vpop.f32.mrf.mxu0
    %v7499 = vadd.f32 0.0, %v7498
    %v7500 = vpop.f32.mrf.mxu0
    %v7501 = vadd.f32 0.0, %v7500
    %7502 = vmatmul.bf16.gmra.mxu0 %v7362
    %v7503 = vpop.f32.mrf.mxu0
    %v7504 = vadd.f32 0.0, %v7503
    %v7505 = vpop.f32.mrf.mxu0
    %v7506 = vadd.f32 0.0, %v7505
    %7507 = vmatmul.bf16.gmra.mxu0 %v7363
    %v7508 = vpop.f32.mrf.mxu0
    %v7509 = vadd.f32 0.0, %v7508
    %v7510 = vpop.f32.mrf.mxu0
    %v7511 = vadd.f32 0.0, %v7510
    %7512 = vmatmul.bf16.gmra.mxu0 %v7364
    %v7513 = vpop.f32.mrf.mxu0
    %v7514 = vadd.f32 0.0, %v7513
    %v7515 = vpop.f32.mrf.mxu0
    %v7516 = vadd.f32 0.0, %v7515
    %7517 = vdwg.mxu0
    %v7518 = vadd.f32 %v7204, %v7439
    %v7519 = vadd.f32 %v7205, %v7441
    %v7520 = vadd.f32 %v7206, %v7444
    %v7521 = vadd.f32 %v7207, %v7446
    %v7522 = vadd.f32 %v7208, %v7449
    %v7523 = vadd.f32 %v7209, %v7451
    %v7524 = vadd.f32 %v7210, %v7454
    %v7525 = vadd.f32 %v7211, %v7456
    %v7526 = vadd.f32 %v7212, %v7459
    %v7527 = vadd.f32 %v7213, %v7461
    %v7528 = vadd.f32 %v7214, %v7464
    %v7529 = vadd.f32 %v7215, %v7466
    %v7530 = vadd.f32 %v7216, %v7469
    %v7531 = vadd.f32 %v7217, %v7471
    %v7532 = vadd.f32 %v7218, %v7474
    %v7533 = vadd.f32 %v7219, %v7476
    %v7534 = vadd.f32 %v7220, %v7479
    %v7535 = vadd.f32 %v7221, %v7481
    %v7536 = vadd.f32 %v7222, %v7484
    %v7537 = vadd.f32 %v7223, %v7486
    %v7538 = vadd.f32 %v7224, %v7489
    %v7539 = vadd.f32 %v7225, %v7491
    %v7540 = vadd.f32 %v7226, %v7494
    %v7541 = vadd.f32 %v7227, %v7496
    %v7542 = vadd.f32 %v7228, %v7499
    %v7543 = vadd.f32 %v7229, %v7501
    %v7544 = vadd.f32 %v7230, %v7504
    %v7545 = vadd.f32 %v7231, %v7506
    %v7546 = vadd.f32 %v7232, %v7509
    %v7547 = vadd.f32 %v7233, %v7511
    %v7548 = vadd.f32 %v7234, %v7514
    %v7549 = vadd.f32 %v7235, %v7516
    %v7550 = vld [vmem:[%s4] sm:$0x1]
    %v7552 = vperm.slane %v7550, 0
    %v7554 = vadd.f32 %v7518, %v7552
    %v7555 = vadd.f32 %v7519, %v7552
    %v7556 = vadd.f32 %v7520, %v7552
    %v7557 = vadd.f32 %v7521, %v7552
    %v7558 = vadd.f32 %v7522, %v7552
    %v7559 = vadd.f32 %v7523, %v7552
    %v7560 = vadd.f32 %v7524, %v7552
    %v7561 = vadd.f32 %v7525, %v7552
    %v7562 = vadd.f32 %v7526, %v7552
    %v7563 = vadd.f32 %v7527, %v7552
    %v7564 = vadd.f32 %v7528, %v7552
    %v7565 = vadd.f32 %v7529, %v7552
    %v7566 = vadd.f32 %v7530, %v7552
    %v7567 = vadd.f32 %v7531, %v7552
    %v7568 = vadd.f32 %v7532, %v7552
    %v7569 = vadd.f32 %v7533, %v7552
    %v7570 = vadd.f32 %v7534, %v7552
    %v7571 = vadd.f32 %v7535, %v7552
    %v7572 = vadd.f32 %v7536, %v7552
    %v7573 = vadd.f32 %v7537, %v7552
    %v7574 = vadd.f32 %v7538, %v7552
    %v7575 = vadd.f32 %v7539, %v7552
    %v7576 = vadd.f32 %v7540, %v7552
    %v7577 = vadd.f32 %v7541, %v7552
    %v7578 = vadd.f32 %v7542, %v7552
    %v7579 = vadd.f32 %v7543, %v7552
    %v7580 = vadd.f32 %v7544, %v7552
    %v7581 = vadd.f32 %v7545, %v7552
    %v7582 = vadd.f32 %v7546, %v7552
    %v7583 = vadd.f32 %v7547, %v7552
    %v7584 = vadd.f32 %v7548, %v7552
    %v7585 = vadd.f32 %v7549, %v7552
    %v7586 = vld [vmem:[#allocation3] sm:$0xff]
    %v7587 = vld [vmem:[#allocation3 + $0x8] sm:$0xff]
    %v7588 = vld [vmem:[#allocation3 + $0x10] sm:$0xff]
    %v7589 = vld [vmem:[#allocation3 + $0x18] sm:$0xff]
    %v7590 = vld [vmem:[#allocation3 + $0x20] sm:$0xff]
    %v7591 = vld [vmem:[#allocation3 + $0x28] sm:$0xff]
    %v7592 = vld [vmem:[#allocation3 + $0x30] sm:$0xff]
    %v7593 = vld [vmem:[#allocation3 + $0x38] sm:$0xff]
    %v7594 = vld [vmem:[#allocation3 + $0x40] sm:$0xff]
    %v7595 = vld [vmem:[#allocation3 + $0x48] sm:$0xff]
    %v7596 = vld [vmem:[#allocation3 + $0x50] sm:$0xff]
    %v7597 = vld [vmem:[#allocation3 + $0x58] sm:$0xff]
    %v7598 = vld [vmem:[#allocation3 + $0x60] sm:$0xff]
    %v7599 = vld [vmem:[#allocation3 + $0x68] sm:$0xff]
    %v7600 = vld [vmem:[#allocation3 + $0x70] sm:$0xff]
    %v7601 = vld [vmem:[#allocation3 + $0x78] sm:$0xff]
    %v7602 = vld [vmem:[#allocation3 + $0x80] sm:$0xff]
    %v7603 = vld [vmem:[#allocation3 + $0x88] sm:$0xff]
    %v7604 = vld [vmem:[#allocation3 + $0x90] sm:$0xff]
    %v7605 = vld [vmem:[#allocation3 + $0x98] sm:$0xff]
    %v7606 = vld [vmem:[#allocation3 + $0xa0] sm:$0xff]
    %v7607 = vld [vmem:[#allocation3 + $0xa8] sm:$0xff]
    %v7608 = vld [vmem:[#allocation3 + $0xb0] sm:$0xff]
    %v7609 = vld [vmem:[#allocation3 + $0xb8] sm:$0xff]
    %v7610 = vld [vmem:[#allocation3 + $0xc0] sm:$0xff]
    %v7611 = vld [vmem:[#allocation3 + $0xc8] sm:$0xff]
    %v7612 = vld [vmem:[#allocation3 + $0xd0] sm:$0xff]
    %v7613 = vld [vmem:[#allocation3 + $0xd8] sm:$0xff]
    %v7614 = vld [vmem:[#allocation3 + $0xe0] sm:$0xff]
    %v7615 = vld [vmem:[#allocation3 + $0xe8] sm:$0xff]
    %v7616 = vld [vmem:[#allocation3 + $0xf0] sm:$0xff]
    %v7617 = vld [vmem:[#allocation3 + $0xf8] sm:$0xff]
    %v7618 = vadd.f32 %v7554, %v7586
    %v7619 = vadd.f32 %v7555, %v7587
    %v7620 = vadd.f32 %v7556, %v7588
    %v7621 = vadd.f32 %v7557, %v7589
    %v7622 = vadd.f32 %v7558, %v7590
    %v7623 = vadd.f32 %v7559, %v7591
    %v7624 = vadd.f32 %v7560, %v7592
    %v7625 = vadd.f32 %v7561, %v7593
    %v7626 = vadd.f32 %v7562, %v7594
    %v7627 = vadd.f32 %v7563, %v7595
    %v7628 = vadd.f32 %v7564, %v7596
    %v7629 = vadd.f32 %v7565, %v7597
    %v7630 = vadd.f32 %v7566, %v7598
    %v7631 = vadd.f32 %v7567, %v7599
    %v7632 = vadd.f32 %v7568, %v7600
    %v7633 = vadd.f32 %v7569, %v7601
    %v7634 = vadd.f32 %v7570, %v7602
    %v7635 = vadd.f32 %v7571, %v7603
    %v7636 = vadd.f32 %v7572, %v7604
    %v7637 = vadd.f32 %v7573, %v7605
    %v7638 = vadd.f32 %v7574, %v7606
    %v7639 = vadd.f32 %v7575, %v7607
    %v7640 = vadd.f32 %v7576, %v7608
    %v7641 = vadd.f32 %v7577, %v7609
    %v7642 = vadd.f32 %v7578, %v7610
    %v7643 = vadd.f32 %v7579, %v7611
    %v7644 = vadd.f32 %v7580, %v7612
    %v7645 = vadd.f32 %v7581, %v7613
    %v7646 = vadd.f32 %v7582, %v7614
    %v7647 = vadd.f32 %v7583, %v7615
    %v7648 = vadd.f32 %v7584, %v7616
    %v7649 = vadd.f32 %v7585, %v7617
    %7650 = vst [vmem:[#allocation9] sm:$0xff] %v7618
    %7651 = vst [vmem:[#allocation9 + $0x8] sm:$0xff] %v7619
    %7652 = vst [vmem:[#allocation9 + $0x10] sm:$0xff] %v7620
    %7653 = vst [vmem:[#allocation9 + $0x18] sm:$0xff] %v7621
    %7654 = vst [vmem:[#allocation9 + $0x20] sm:$0xff] %v7622
    %7655 = vst [vmem:[#allocation9 + $0x28] sm:$0xff] %v7623
    %7656 = vst [vmem:[#allocation9 + $0x30] sm:$0xff] %v7624
    %7657 = vst [vmem:[#allocation9 + $0x38] sm:$0xff] %v7625
    %7658 = vst [vmem:[#allocation9 + $0x40] sm:$0xff] %v7626
    %7659 = vst [vmem:[#allocation9 + $0x48] sm:$0xff] %v7627
    %7660 = vst [vmem:[#allocation9 + $0x50] sm:$0xff] %v7628
    %7661 = vst [vmem:[#allocation9 + $0x58] sm:$0xff] %v7629
    %7662 = vst [vmem:[#allocation9 + $0x60] sm:$0xff] %v7630
    %7663 = vst [vmem:[#allocation9 + $0x68] sm:$0xff] %v7631
    %7664 = vst [vmem:[#allocation9 + $0x70] sm:$0xff] %v7632
    %7665 = vst [vmem:[#allocation9 + $0x78] sm:$0xff] %v7633
    %7666 = vst [vmem:[#allocation9 + $0x80] sm:$0xff] %v7634
    %7667 = vst [vmem:[#allocation9 + $0x88] sm:$0xff] %v7635
    %7668 = vst [vmem:[#allocation9 + $0x90] sm:$0xff] %v7636
    %7669 = vst [vmem:[#allocation9 + $0x98] sm:$0xff] %v7637
    %7670 = vst [vmem:[#allocation9 + $0xa0] sm:$0xff] %v7638
    %7671 = vst [vmem:[#allocation9 + $0xa8] sm:$0xff] %v7639
    %7672 = vst [vmem:[#allocation9 + $0xb0] sm:$0xff] %v7640
    %7673 = vst [vmem:[#allocation9 + $0xb8] sm:$0xff] %v7641
    %7674 = vst [vmem:[#allocation9 + $0xc0] sm:$0xff] %v7642
    %7675 = vst [vmem:[#allocation9 + $0xc8] sm:$0xff] %v7643
    %7676 = vst [vmem:[#allocation9 + $0xd0] sm:$0xff] %v7644
    %7677 = vst [vmem:[#allocation9 + $0xd8] sm:$0xff] %v7645
    %7678 = vst [vmem:[#allocation9 + $0xe0] sm:$0xff] %v7646
    %7679 = vst [vmem:[#allocation9 + $0xe8] sm:$0xff] %v7647
    %7680 = vst [vmem:[#allocation9 + $0xf0] sm:$0xff] %v7648
    %7681 = vst [vmem:[#allocation9 + $0xf8] sm:$0xff] %v7649
    // Predicated region
    $region34: #{tpu_custom_call.1} parent=1 // pred_check
      _
    $region35: #{tpu_custom_call.1} parent=1 // pred_check_branch
      %7683 = sbr.rel (0) target = $region37
    $region36: #{tpu_custom_call.1} parent=1 // pred_region
      %7685 = vsyncadd [#allocation5], 0
      %s7686 = sshll.u32 [#allocation9], 4
      %s7687 = int_to_ptr.vmem [resolvable:$true] %s7686
      %s7688 = sshll.u32 %s5, 4
      %s7689 = int_to_ptr.hbm [resolvable:$true] %s7688
      %7694 = dma.vmem_to_hbm [thread:$0]  %s7687, 4096, %s7689, [#allocation5], 128, 128, 8
    $region37: #{tpu_custom_call.1} parent=1 // pred_fallthru
      _
    // Predicated region
    $region38: #{tpu_custom_call.1} parent=1 // pred_check
      _
    $region39: #{tpu_custom_call.1} parent=1 // pred_check_branch
      %7696 = sbr.rel (0) target = $region41
    $region40: #{tpu_custom_call.1} parent=1 // pred_region
      %7698 = dma.done [#allocation5], 4096
    $region41: #{tpu_custom_call.1} parent=1 // pred_fallthru
      _
    %7699 = vsyncpa [#allocation4], 1
    %7700 = vsyncpa [#allocation7], 1
    %7701 = vsyncpa [#allocation5], 1

</llo_original>
